<compile_context>
chip_gen: v6e
topology: v6e:2x2x1
jax: 0.10.0
libtpu: 0.0.40
codegen_flags: <defaults>
</compile_context>

<pallas_src>
import numpy as np
import jax
import jax.numpy as jnp
from jax.experimental import pallas as pl
from jax.experimental.pallas import tpu as pltpu

LATENT_DIM = 2
IMG_H = IMG_W = 28


# ----------------------------------------------------------------------------
# Fused decoder kernel: 4 x (matmul + bias + activation), all in VMEM.
# ----------------------------------------------------------------------------
def _decoder_kernel(z_ref, w1_ref, b1_ref, w2_ref, b2_ref, w3_ref, b3_ref,
                    w4_ref, b4_ref, out_ref):
    def dense(h, w_ref, b_ref):
        # bf16 x bf16 MXU matmul with f32 accumulation; bias added in f32.
        return jnp.dot(h.astype(w_ref.dtype), w_ref[...],
                       preferred_element_type=jnp.float32) + b_ref[...]

    h = z_ref[...].astype(jnp.float32)
    h = jnp.maximum(dense(h, w1_ref, b1_ref), 0.0)   # Linear (+) ConvT1, ReLU
    h = jnp.maximum(dense(h, w2_ref, b2_ref), 0.0)   # ConvT2, ReLU
    h = jnp.maximum(dense(h, w3_ref, b3_ref), 0.0)   # ConvT3, ReLU
    logits = dense(h, w4_ref, b4_ref)                # ConvT4
    # Sigmoid via EUP exp + EUP approximate reciprocal, clamped to [0, 1].
    sig = pl.reciprocal(1.0 + jnp.exp(-logits), approx=True)
    sig = jnp.minimum(jnp.maximum(sig, 0.0), 1.0)
    out_ref[...] = sig.astype(out_ref.dtype)


def _round_up(x, m):
    return -(-x // m) * m


def decoder_forward(folded, latent_input, *, batch_tile=128):
    """folded: dict from fold_decoder_params; latent_input: (B, latent_dim)."""
    z = latent_input.astype(jnp.float32)
    batch = z.shape[0]
    tile = min(_round_up(batch, 8), _round_up(batch_tile, 8))
    batch_pad = _round_up(batch, tile)
    if batch_pad != batch:
        z = jnp.pad(z, ((0, batch_pad - batch), (0, 0)))

    latent = z.shape[1]
    n_out = folded["w4"].shape[1]                    # 28*28 = 784 (lane-dense)

    row = lambda i: (i, 0)      # batch-tiled operands
    rep = lambda i: (0, 0)      # VMEM-resident weights/biases (same block)

    out_flat = pl.pallas_call(
        _decoder_kernel,
        out_shape=jax.ShapeDtypeStruct((batch_pad, n_out), jnp.float32),
        grid=(batch_pad // tile,),
        in_specs=[
            pl.BlockSpec((tile, latent), row),
            pl.BlockSpec(folded["w1"].shape, rep),
            pl.BlockSpec(folded["b1"].shape, rep),
            pl.BlockSpec(folded["w2"].shape, rep),
            pl.BlockSpec(folded["b2"].shape, rep),
            pl.BlockSpec(folded["w3"].shape, rep),
            pl.BlockSpec(folded["b3"].shape, rep),
            pl.BlockSpec(folded["w4"].shape, rep),
            pl.BlockSpec(folded["b4"].shape, rep),
        ],
        out_specs=pl.BlockSpec((tile, n_out), row),
        compiler_params=pltpu.CompilerParams(
            dimension_semantics=("parallel",),
            vmem_limit_bytes=32 * 1024 * 1024,
        ),
    )(z, folded["w1"], folded["b1"], folded["w2"], folded["b2"],
      folded["w3"], folded["b3"], folded["w4"], folded["b4"])

    img = out_flat[:batch].reshape(batch, IMG_H, IMG_W)
    return img[:, None, :, :]                        # NCHW (B, 1, 28, 28)


# ----------------------------------------------------------------------------
# Host-side parameter folding (done ONCE): each ConvTranspose2d on a fixed
# spatial size is an exact linear map on the NHWC-flattened feature vector.
# ----------------------------------------------------------------------------
def _convt_dense_matrix(w_t, h_in, w_in, stride, padding, output_padding):
    """Dense (Hi*Wi*Cin, Ho*Wo*Cout) matrix realizing PyTorch ConvTranspose2d.

    w_t: PyTorch-layout weight (C_in, C_out, kH, kW). Flattening order is NHWC:
    index = (y*W + x)*C + c for both input and output vectors.
    """
    w_np = np.asarray(w_t, np.float32)
    c_in, c_out, k_h, k_w = w_np.shape
    h_out = (h_in - 1) * stride - 2 * padding + k_h + output_padding
    w_out = (w_in - 1) * stride - 2 * padding + k_w + output_padding
    mat = np.zeros((h_in, w_in, c_in, h_out, w_out, c_out), np.float32)
    for iy in range(h_in):
        for ky in range(k_h):
            oy = iy * stride - padding + ky
            if not 0 <= oy < h_out:
                continue
            for ix in range(w_in):
                for kx in range(k_w):
                    ox = ix * stride - padding + kx
                    if not 0 <= ox < w_out:
                        continue
                    mat[iy, ix, :, oy, ox, :] += w_np[:, :, ky, kx]
    return mat.reshape(h_in * w_in * c_in, h_out * w_out * c_out), (h_out, w_out)


def fold_decoder_params(params, weight_dtype=jnp.bfloat16):
    """Fold Linear+ConvT1, densify ConvT2..4 -> lane-dense matmul weights."""
    lin_w = np.asarray(params["lin_w"], np.float32)          # (latent, 64)
    lin_b = np.asarray(params["lin_b"], np.float32)          # (64,)

    m1, (h1, wd1) = _convt_dense_matrix(params["ct1_w"], 1, 1, 2, 0, 0)     # (64, 288)
    m2, (h2, wd2) = _convt_dense_matrix(params["ct2_w"], h1, wd1, 2, 1, 1)  # (288, 784)
    m3, (h3, wd3) = _convt_dense_matrix(params["ct3_w"], h2, wd2, 2, 1, 0)  # (784, 1568)
    m4, (h4, wd4) = _convt_dense_matrix(params["ct4_w"], h3, wd3, 2, 1, 0)  # (1568, 784)
    assert (h4, wd4) == (IMG_H, IMG_W), (h4, wd4)

    def bias_tile(name, hw):
        return np.tile(np.asarray(params[name], np.float32), hw)  # (H*W*C,), c fastest

    # No activation between Linear and ConvT1 -> fold them into one matmul.
    w1_eff = lin_w @ m1                                      # (latent, 288)
    b1_eff = lin_b @ m1 + bias_tile("ct1_b", h1 * wd1)

    as_w = lambda x: jnp.asarray(x, weight_dtype)
    as_b = lambda x: jnp.asarray(x, jnp.float32).reshape(1, -1)

    return {
        "w1": as_w(w1_eff), "b1": as_b(b1_eff),
        "w2": as_w(m2), "b2": as_b(bias_tile("ct2_b", h2 * wd2)),
        "w3": as_w(m3), "b3": as_b(bias_tile("ct3_b", h3 * wd3)),
        "w4": as_w(m4), "b4": as_b(bias_tile("ct4_b", h4 * wd4)),
    }


# ----------------------------------------------------------------------------
# Parameter init (deterministic, PyTorch-style uniform bounds)
# ----------------------------------------------------------------------------
def _uniform(key, shape, fan_in):
    bound = 1.0 / (fan_in ** 0.5)
    return jax.random.uniform(key, shape, jnp.float32, -bound, bound)


def init_decoder_params(key, latent_dim=LATENT_DIM):
    ks = jax.random.split(key, 10)
    params = {
        # Linear(latent_dim, 64), stored (in, out) so forward is z @ W + b.
        "lin_w": _uniform(ks[0], (latent_dim, 64), latent_dim),
        "lin_b": _uniform(ks[1], (64,), latent_dim),
    }
    conv_cfg = [("ct1", 64, 32, 3), ("ct2", 32, 16, 4),
                ("ct3", 16, 8, 4), ("ct4", 8, 1, 4)]
    for i, (name, cin, cout, k) in enumerate(conv_cfg):
        fan_in = cout * k * k        # PyTorch fan_in convention for ConvTranspose2d
        params[name + "_w"] = _uniform(ks[2 + 2 * i], (cin, cout, k, k), fan_in)
        params[name + "_b"] = _uniform(ks[3 + 2 * i], (cout,), fan_in)
    return params


# ----------------------------------------------------------------------------
# Pure-XLA reference of the ORIGINAL (unfolded) decoder, for validation only.
# ----------------------------------------------------------------------------
def _convt_ref(x, w_t, b, stride, padding, output_padding):
    # x: (B, C_in, H, W); w_t: PyTorch layout (C_in, C_out, kH, kW).
    k_h, k_w = w_t.shape[2], w_t.shape[3]
    rhs = jnp.transpose(w_t, (1, 0, 2, 3))[:, :, ::-1, ::-1]   # (C_out, C_in, kH, kW)
    pad = ((k_h - 1 - padding, k_h - 1 - padding + output_padding),
           (k_w - 1 - padding, k_w - 1 - padding + output_padding))
    y = jax.lax.conv_general_dilated(
        x, rhs, window_strides=(1, 1), padding=pad,
        lhs_dilation=(stride, stride), rhs_dilation=(1, 1),
        dimension_numbers=("NCHW", "OIHW", "NCHW"))
    return y + b[None, :, None, None]


def decoder_forward_ref(params, latent_input):
    h = latent_input @ params["lin_w"] + params["lin_b"]
    x = h.reshape(-1, 64, 1, 1)
    x = jax.nn.relu(_convt_ref(x, params["ct1_w"], params["ct1_b"], 2, 0, 0))
    x = jax.nn.relu(_convt_ref(x, params["ct2_w"], params["ct2_b"], 2, 1, 1))
    x = jax.nn.relu(_convt_ref(x, params["ct3_w"], params["ct3_b"], 2, 1, 0))
    x = _convt_ref(x, params["ct4_w"], params["ct4_b"], 2, 1, 0)
    return jax.nn.sigmoid(x)


if __name__ == "__main__":
    key = jax.random.PRNGKey(0)
    k_params, k_input = jax.random.split(key)

    params = init_decoder_params(k_params, LATENT_DIM)
    folded = fold_decoder_params(params)                     # host-side, once
    latent_input = jax.random.normal(k_input, (2, LATENT_DIM), jnp.float32)

    decoded = jax.jit(decoder_forward)(folded, latent_input)
    decoded = jax.block_until_ready(decoded)

    assert decoded.shape == (2, 1, IMG_H, IMG_W), decoded.shape
    assert bool(jnp.all(jnp.isfinite(decoded)))
    assert bool(jnp.all((decoded >= 0.0) & (decoded <= 1.0)))

    # Validate against the pure-XLA reference of the original decoder
    # (tolerance covers bf16 weights + approximate reciprocal).
    ref = decoder_forward_ref(params, latent_input)
    max_err = float(jnp.max(jnp.abs(decoded - ref)))
    assert max_err < 3e-2, max_err

    print("KERNEL_OK")
</pallas_src>

<mosaic_0001>
module attributes {stable_mosaic.version = 11 : i64} {
  func.func @_decoder_kernel(%arg0: i32, %arg1: memref<8x2xf32, #tpu.memory_space<vmem>>, %arg2: memref<2x288xbf16, #tpu.memory_space<vmem>>, %arg3: memref<1x288xf32, #tpu.memory_space<vmem>>, %arg4: memref<288x784xbf16, #tpu.memory_space<vmem>>, %arg5: memref<1x784xf32, #tpu.memory_space<vmem>>, %arg6: memref<784x1568xbf16, #tpu.memory_space<vmem>>, %arg7: memref<1x1568xf32, #tpu.memory_space<vmem>>, %arg8: memref<1568x784xbf16, #tpu.memory_space<vmem>>, %arg9: memref<1x784xf32, #tpu.memory_space<vmem>>, %arg10: memref<8x784xf32, #tpu.memory_space<vmem>>) attributes {dimension_semantics = [#tpu.dimension_semantics<parallel>], iteration_bounds = array<i64: 1>, scalar_prefetch = 0 : i64, scratch_operands = 0 : i64, tpu.core_type = #tpu.core_type<tc>, window_params = [{transform_indices = @transform_0, window_bounds = array<i64: 8, 2>}, {pipeline_mode = #tpu.pipeline_mode<synchronous>, transform_indices = @transform_1, window_bounds = array<i64: 2, 288>}, {pipeline_mode = #tpu.pipeline_mode<synchronous>, transform_indices = @transform_2, window_bounds = array<i64: 1, 288>}, {pipeline_mode = #tpu.pipeline_mode<synchronous>, transform_indices = @transform_3, window_bounds = array<i64: 288, 784>}, {pipeline_mode = #tpu.pipeline_mode<synchronous>, transform_indices = @transform_4, window_bounds = array<i64: 1, 784>}, {pipeline_mode = #tpu.pipeline_mode<synchronous>, transform_indices = @transform_5, window_bounds = array<i64: 784, 1568>}, {pipeline_mode = #tpu.pipeline_mode<synchronous>, transform_indices = @transform_6, window_bounds = array<i64: 1, 1568>}, {pipeline_mode = #tpu.pipeline_mode<synchronous>, transform_indices = @transform_7, window_bounds = array<i64: 1568, 784>}, {pipeline_mode = #tpu.pipeline_mode<synchronous>, transform_indices = @transform_8, window_bounds = array<i64: 1, 784>}, {transform_indices = @transform_9, window_bounds = array<i64: 8, 784>}]} {
    %c0 = arith.constant 0 : index
    %c0_0 = arith.constant 0 : index
    %0 = vector.load %arg1[%c0, %c0_0] : memref<8x2xf32, #tpu.memory_space<vmem>>, vector<8x2xf32>
    %1 = arith.truncf %0 : vector<8x2xf32> to vector<8x2xbf16>
    %c0_1 = arith.constant 0 : index
    %c0_2 = arith.constant 0 : index
    %2 = vector.load %arg2[%c0_1, %c0_2] : memref<2x288xbf16, #tpu.memory_space<vmem>>, vector<2x288xbf16>
    %cst = arith.constant dense<0.000000e+00> : vector<8x288xf32>
    %3 = tpu.matmul %1, %2, %cst {dimension_numbers = #tpu.dot_dimension_numbers<[1], [0], [0], [1], [0, 0, 1, 1], [], []>} : vector<8x2xbf16>, vector<2x288xbf16>, vector<8x288xf32> -> vector<8x288xf32>
    %c0_3 = arith.constant 0 : index
    %c0_4 = arith.constant 0 : index
    %4 = vector.load %arg3[%c0_3, %c0_4] : memref<1x288xf32, #tpu.memory_space<vmem>>, vector<1x288xf32>
    %5 = vector.broadcast %4 : vector<1x288xf32> to vector<8x288xf32>
    %6 = arith.addf %3, %5 : vector<8x288xf32>
    %cst_5 = arith.constant 0.000000e+00 : f32
    %7 = vector.broadcast %cst_5 : f32 to vector<8x288xf32>
    %8 = arith.maximumf %6, %7 : vector<8x288xf32>
    %9 = arith.truncf %8 : vector<8x288xf32> to vector<8x288xbf16>
    %c0_6 = arith.constant 0 : index
    %c0_7 = arith.constant 0 : index
    %10 = vector.load %arg4[%c0_6, %c0_7] : memref<288x784xbf16, #tpu.memory_space<vmem>>, vector<288x784xbf16>
    %cst_8 = arith.constant dense<0.000000e+00> : vector<8x784xf32>
    %11 = tpu.matmul %9, %10, %cst_8 {dimension_numbers = #tpu.dot_dimension_numbers<[1], [0], [0], [1], [0, 0, 1, 1], [], []>} : vector<8x288xbf16>, vector<288x784xbf16>, vector<8x784xf32> -> vector<8x784xf32>
    %c0_9 = arith.constant 0 : index
    %c0_10 = arith.constant 0 : index
    %12 = vector.load %arg5[%c0_9, %c0_10] : memref<1x784xf32, #tpu.memory_space<vmem>>, vector<1x784xf32>
    %13 = vector.broadcast %12 : vector<1x784xf32> to vector<8x784xf32>
    %14 = arith.addf %11, %13 : vector<8x784xf32>
    %cst_11 = arith.constant 0.000000e+00 : f32
    %15 = vector.broadcast %cst_11 : f32 to vector<8x784xf32>
    %16 = arith.maximumf %14, %15 : vector<8x784xf32>
    %17 = arith.truncf %16 : vector<8x784xf32> to vector<8x784xbf16>
    %c0_12 = arith.constant 0 : index
    %c0_13 = arith.constant 0 : index
    %18 = vector.load %arg6[%c0_12, %c0_13] : memref<784x1568xbf16, #tpu.memory_space<vmem>>, vector<784x1568xbf16>
    %cst_14 = arith.constant dense<0.000000e+00> : vector<8x1568xf32>
    %19 = tpu.matmul %17, %18, %cst_14 {dimension_numbers = #tpu.dot_dimension_numbers<[1], [0], [0], [1], [0, 0, 1, 1], [], []>} : vector<8x784xbf16>, vector<784x1568xbf16>, vector<8x1568xf32> -> vector<8x1568xf32>
    %c0_15 = arith.constant 0 : index
    %c0_16 = arith.constant 0 : index
    %20 = vector.load %arg7[%c0_15, %c0_16] : memref<1x1568xf32, #tpu.memory_space<vmem>>, vector<1x1568xf32>
    %21 = vector.broadcast %20 : vector<1x1568xf32> to vector<8x1568xf32>
    %22 = arith.addf %19, %21 : vector<8x1568xf32>
    %cst_17 = arith.constant 0.000000e+00 : f32
    %23 = vector.broadcast %cst_17 : f32 to vector<8x1568xf32>
    %24 = arith.maximumf %22, %23 : vector<8x1568xf32>
    %25 = arith.truncf %24 : vector<8x1568xf32> to vector<8x1568xbf16>
    %c0_18 = arith.constant 0 : index
    %c0_19 = arith.constant 0 : index
    %26 = vector.load %arg8[%c0_18, %c0_19] : memref<1568x784xbf16, #tpu.memory_space<vmem>>, vector<1568x784xbf16>
    %cst_20 = arith.constant dense<0.000000e+00> : vector<8x784xf32>
    %27 = tpu.matmul %25, %26, %cst_20 {dimension_numbers = #tpu.dot_dimension_numbers<[1], [0], [0], [1], [0, 0, 1, 1], [], []>} : vector<8x1568xbf16>, vector<1568x784xbf16>, vector<8x784xf32> -> vector<8x784xf32>
    %c0_21 = arith.constant 0 : index
    %c0_22 = arith.constant 0 : index
    %28 = vector.load %arg9[%c0_21, %c0_22] : memref<1x784xf32, #tpu.memory_space<vmem>>, vector<1x784xf32>
    %29 = vector.broadcast %28 : vector<1x784xf32> to vector<8x784xf32>
    %30 = arith.addf %27, %29 : vector<8x784xf32>
    %cst_23 = arith.constant 0.000000e+00 : f32
    %31 = vector.broadcast %cst_23 : f32 to vector<8x784xf32>
    %32 = arith.subf %31, %30 : vector<8x784xf32>
    %33 = math.exp %32 : vector<8x784xf32>
    %cst_24 = arith.constant 1.000000e+00 : f32
    %34 = vector.broadcast %cst_24 : f32 to vector<8x784xf32>
    %35 = arith.addf %34, %33 : vector<8x784xf32>
    %36 = tpu.reciprocal %35 {approx = true} : vector<8x784xf32> -> vector<8x784xf32>
    %cst_25 = arith.constant 0.000000e+00 : f32
    %37 = vector.broadcast %cst_25 : f32 to vector<8x784xf32>
    %38 = arith.maximumf %36, %37 : vector<8x784xf32>
    %cst_26 = arith.constant 1.000000e+00 : f32
    %39 = vector.broadcast %cst_26 : f32 to vector<8x784xf32>
    %40 = arith.minimumf %38, %39 : vector<8x784xf32>
    %c0_27 = arith.constant 0 : index
    %c0_28 = arith.constant 0 : index
    %41 = vector.load %arg10[%c0_27, %c0_28] : memref<8x784xf32, #tpu.memory_space<vmem>>, vector<8x784xf32>
    tpu.vector_store %arg10[%c0_27, %c0_28], %40 {strides = array<i32>} : memref<8x784xf32, #tpu.memory_space<vmem>>, vector<8x784xf32>,
    return
  }
  func.func @transform_0(%arg0: i32) -> (i32, i32) {
    %c0_i32 = arith.constant 0 : i32
    %c0_i32_0 = arith.constant 0 : i32
    return %arg0, %c0_i32 : i32, i32
  }
  func.func @transform_1(%arg0: i32) -> (i32, i32) {
    %c0_i32 = arith.constant 0 : i32
    %c0_i32_0 = arith.constant 0 : i32
    %c0_i32_1 = arith.constant 0 : i32
    return %c0_i32, %c0_i32_0 : i32, i32
  }
  func.func @transform_2(%arg0: i32) -> (i32, i32) {
    %c0_i32 = arith.constant 0 : i32
    %c0_i32_0 = arith.constant 0 : i32
    %c0_i32_1 = arith.constant 0 : i32
    return %c0_i32, %c0_i32_0 : i32, i32
  }
  func.func @transform_3(%arg0: i32) -> (i32, i32) {
    %c0_i32 = arith.constant 0 : i32
    %c0_i32_0 = arith.constant 0 : i32
    %c0_i32_1 = arith.constant 0 : i32
    return %c0_i32, %c0_i32_0 : i32, i32
  }
  func.func @transform_4(%arg0: i32) -> (i32, i32) {
    %c0_i32 = arith.constant 0 : i32
    %c0_i32_0 = arith.constant 0 : i32
    %c0_i32_1 = arith.constant 0 : i32
    return %c0_i32, %c0_i32_0 : i32, i32
  }
  func.func @transform_5(%arg0: i32) -> (i32, i32) {
    %c0_i32 = arith.constant 0 : i32
    %c0_i32_0 = arith.constant 0 : i32
    %c0_i32_1 = arith.constant 0 : i32
    return %c0_i32, %c0_i32_0 : i32, i32
  }
  func.func @transform_6(%arg0: i32) -> (i32, i32) {
    %c0_i32 = arith.constant 0 : i32
    %c0_i32_0 = arith.constant 0 : i32
    %c0_i32_1 = arith.constant 0 : i32
    return %c0_i32, %c0_i32_0 : i32, i32
  }
  func.func @transform_7(%arg0: i32) -> (i32, i32) {
    %c0_i32 = arith.constant 0 : i32
    %c0_i32_0 = arith.constant 0 : i32
    %c0_i32_1 = arith.constant 0 : i32
    return %c0_i32, %c0_i32_0 : i32, i32
  }
  func.func @transform_8(%arg0: i32) -> (i32, i32) {
    %c0_i32 = arith.constant 0 : i32
    %c0_i32_0 = arith.constant 0 : i32
    %c0_i32_1 = arith.constant 0 : i32
    return %c0_i32, %c0_i32_0 : i32, i32
  }
  func.func @transform_9(%arg0: i32) -> (i32, i32) {
    %c0_i32 = arith.constant 0 : i32
    %c0_i32_0 = arith.constant 0 : i32
    return %arg0, %c0_i32 : i32, i32
  }
}

</mosaic_0001>

<llo_original>
// kernel: decoder_forward.1
$region0: #{decoder_forward.1}
  #allocation0 [shape = 'u32[]', space=smem, size = 0x4, offset = 0x4, fixed_abs, tag = 'smem constant byte address 0x4 - core index']
  #allocation1 [shape = 'u32[144,128]{1,0:T(1,128)}', space=vmem, size = 0x12000, scoped, tag = 'internal scratch']
  %s0 = inlined_call_operand.vmem [shape: f32[8,2], index: 0, kind: input, shape index: {}]
  %s1 = inlined_call_operand.vmem [shape: bf16[2,288], index: 1, kind: input, shape index: {}]
  %s2 = inlined_call_operand.vmem [shape: f32[1,288], index: 2, kind: input, shape index: {}]
  %s3 = inlined_call_operand.vmem [shape: bf16[288,784], index: 3, kind: input, shape index: {}]
  %s4 = inlined_call_operand.vmem [shape: f32[1,784], index: 4, kind: input, shape index: {}]
  %s5 = inlined_call_operand.vmem [shape: bf16[784,1568], index: 5, kind: input, shape index: {}]
  %s6 = inlined_call_operand.vmem [shape: f32[1,1568], index: 6, kind: input, shape index: {}]
  %s7 = inlined_call_operand.vmem [shape: bf16[1568,784], index: 7, kind: input, shape index: {}]
  %s8 = inlined_call_operand.vmem [shape: f32[1,784], index: 8, kind: input, shape index: {}]
  %s9 = inlined_call_operand.vmem [shape: f32[8,784], index: 9, kind: output, shape index: {}]
  %s10 = sld [smem:[#allocation0]]
  $region46: #{decoder_forward.1} parent=0
    _
  %s12 = ssub.s32 1, %s10
  %s13 = scalar_select 0, %s12, %s10
  // Predicated region
  $region2: #{decoder_forward.1} parent=0 // pred_check
    _
  $region3: #{decoder_forward.1} parent=0 // pred_check_branch
    %15 = sbr.rel (0) target = $region5
  $region4: #{decoder_forward.1} parent=0 // pred_region
    _
  $region5: #{decoder_forward.1} parent=0 // pred_fallthru
    _
  // Predicated region
  $region6: #{decoder_forward.1} parent=0 // pred_check
    _
  $region7: #{decoder_forward.1} parent=0 // pred_check_branch
    %17 = sbr.rel (0) target = $region9
  $region8: #{decoder_forward.1} parent=0 // pred_region
    _
  $region9: #{decoder_forward.1} parent=0 // pred_fallthru
    _
  // Predicated region
  $region10: #{decoder_forward.1} parent=0 // pred_check
    _
  $region11: #{decoder_forward.1} parent=0 // pred_check_branch
    %19 = sbr.rel (0) target = $region13
  $region12: #{decoder_forward.1} parent=0 // pred_region
    _
  $region13: #{decoder_forward.1} parent=0 // pred_fallthru
    _
  // Predicated region
  $region14: #{decoder_forward.1} parent=0 // pred_check
    _
  $region15: #{decoder_forward.1} parent=0 // pred_check_branch
    %21 = sbr.rel (0) target = $region17
  $region16: #{decoder_forward.1} parent=0 // pred_region
    _
  $region17: #{decoder_forward.1} parent=0 // pred_fallthru
    _
  // Predicated region
  $region18: #{decoder_forward.1} parent=0 // pred_check
    _
  $region19: #{decoder_forward.1} parent=0 // pred_check_branch
    %23 = sbr.rel (0) target = $region21
  $region20: #{decoder_forward.1} parent=0 // pred_region
    _
  $region21: #{decoder_forward.1} parent=0 // pred_fallthru
    _
  // Predicated region
  $region22: #{decoder_forward.1} parent=0 // pred_check
    _
  $region23: #{decoder_forward.1} parent=0 // pred_check_branch
    %25 = sbr.rel (0) target = $region25
  $region24: #{decoder_forward.1} parent=0 // pred_region
    _
  $region25: #{decoder_forward.1} parent=0 // pred_fallthru
    _
  // Predicated region
  $region26: #{decoder_forward.1} parent=0 // pred_check
    _
  $region27: #{decoder_forward.1} parent=0 // pred_check_branch
    %27 = sbr.rel (0) target = $region29
  $region28: #{decoder_forward.1} parent=0 // pred_region
    _
  $region29: #{decoder_forward.1} parent=0 // pred_fallthru
    _
  // Predicated region
  $region30: #{decoder_forward.1} parent=0 // pred_check
    _
  $region31: #{decoder_forward.1} parent=0 // pred_check_branch
    %29 = sbr.rel (0) target = $region33
  $region32: #{decoder_forward.1} parent=0 // pred_region
    _
  $region33: #{decoder_forward.1} parent=0 // pred_fallthru
    _
  // Predicated region
  $region34: #{decoder_forward.1} parent=0 // pred_check
    _
  $region35: #{decoder_forward.1} parent=0 // pred_check_branch
    %31 = sbr.rel (0) target = $region37
  $region36: #{decoder_forward.1} parent=0 // pred_region
    _
  $region37: #{decoder_forward.1} parent=0 // pred_fallthru
    _
  %v33 = vld [vmem:[%s0] sm:$0xff]
  %v34 = vpack.c.bf16 %v33, %v33
  %v35 = vld [vmem:[%s1] sm:$0x7]
  %v36 = vld [vmem:[%s2] sm:$0x7]
  %v38 = vlaneseq
  %v39 = vshrl.u32 %v38, 7
  %v40 = vsub.s32 0, %v39
  %v41 = vrot.slane %v36, %v40
  %v42 = vlaneseq
  %v43 = vshrl.u32 %v42, 7
  %v44 = vsub.s32 1, %v43
  %v45 = vrot.slane %v36, %v44
  %v46 = vlaneseq
  %v47 = vshrl.u32 %v46, 7
  %v48 = vsub.s32 2, %v47
  %v49 = vrot.slane %v36, %v48
  %v55 = vunpack.c.l.s4 1966171168
  %v56 = vunpack.c.0.s8 %v55
  %v57 = vlaneseq
  %v58 = vshrl.u32 %v57, 7
  %v59 = vsub.s32 %v56, %v58
  %v60 = vrot.slane %v35, %v59
  %v61 = vcombine.high %v60, %v60
  %v63 = vunpack.c.l.s4 1966171168
  %v64 = vunpack.c.0.s8 %v63
  %v65 = vlaneseq
  %v66 = vshrl.u32 %v65, 7
  %v67 = vsub.s32 %v64, %v66
  %v68 = vrot.slane %v60, %v67
  %v70 = vunpack.c.l.s4 1966171168
  %v71 = vunpack.c.0.s8 %v70
  %v72 = vlaneseq
  %v73 = vshrl.u32 %v72, 7
  %v74 = vsub.s32 %v71, %v73
  %v75 = vrot.slane %v61, %v74
  %v76 = vcombine.high %v68, %v68
  %vm77 = vcmask 15360
  %v79 = vsel %vm77, %v34, 0
  %vm81 = vcmask 1040384
  %v83 = vsel %vm81, %v68, 0
  %v86 = vsel %vm81, %v75, 0
  %v89 = vsel %vm81, %v76, 0
  %91 = vmatprep.subr.bf16.mxu0 0
  %92 = vmatpush1.bf16.msra.mxu0 0
  %93 = vmatprep.subr.bf16.mxu0 0
  %94 = vmatpush1.bf16.msra.mxu0 0
  %95 = vmatprep.subr.bf16.mxu0 0
  %96 = vmatpush1.bf16.msra.mxu0 0
  %97 = vmatprep.subr.bf16.mxu0 0
  %98 = vmatpush1.bf16.msra.mxu0 0
  %99 = vmatprep.subr.bf16.mxu0 0
  %100 = vmatpush1.bf16.msra.mxu0 0
  %101 = vmatprep.subr.bf16.mxu0 0
  %102 = vmatpush1.bf16.msra.mxu0 0
  %103 = vmatprep.subr.bf16.mxu0 0
  %104 = vmatpush1.bf16.msra.mxu0 0
  %105 = vmatprep.subr.bf16.mxu0 %v86
  %106 = vmatpush1.bf16.msra.mxu0 %v83
  %107 = vmatprep.subr.bf16.mxu0 0
  %108 = vmatpush2.bf16.msra.mxu0 0
  %109 = vmatprep.subr.bf16.mxu0 0
  %110 = vmatpush2.bf16.msra.mxu0 0
  %111 = vmatprep.subr.bf16.mxu0 0
  %112 = vmatpush2.bf16.msra.mxu0 0
  %113 = vmatprep.subr.bf16.mxu0 0
  %114 = vmatpush2.bf16.msra.mxu0 0
  %115 = vmatprep.subr.bf16.mxu0 0
  %116 = vmatpush2.bf16.msra.mxu0 0
  %117 = vmatprep.subr.bf16.mxu0 0
  %118 = vmatpush2.bf16.msra.mxu0 0
  %119 = vmatprep.subr.bf16.mxu0 0
  %120 = vmatpush2.bf16.msra.mxu0 0
  %121 = vmatprep.subr.bf16.mxu0 0
  %122 = vmatpush2.bf16.msra.mxu0 0
  %123 = vmatprep.mubr.bf16.mxu0 0
  %124 = vmatmul.mubr.bf16.gmra.mxu0 %v79
  %v125 = vpop.f32.mrf.mxu0
  %v126 = vadd.f32 %v41, %v125
  %v127 = vpop.f32.mrf.mxu0
  %v128 = vadd.f32 %v45, %v127
  %v129 = vpop.f32.mrf.mxu0
  %v130 = vpop.f32.mrf.mxu0
  %131 = vdwg.mxu0
  %132 = vmatprep.subr.bf16.mxu0 0
  %133 = vmatpush1.bf16.msra.mxu0 0
  %134 = vmatprep.subr.bf16.mxu0 0
  %135 = vmatpush1.bf16.msra.mxu0 0
  %136 = vmatprep.subr.bf16.mxu0 0
  %137 = vmatpush1.bf16.msra.mxu0 0
  %138 = vmatprep.subr.bf16.mxu0 0
  %139 = vmatpush1.bf16.msra.mxu0 0
  %140 = vmatprep.subr.bf16.mxu0 0
  %141 = vmatpush1.bf16.msra.mxu0 0
  %142 = vmatprep.subr.bf16.mxu0 0
  %143 = vmatpush1.bf16.msra.mxu0 0
  %144 = vmatprep.subr.bf16.mxu0 0
  %145 = vmatpush1.bf16.msra.mxu0 0
  %146 = vmatprep.subr.bf16.mxu0 0
  %147 = vmatpush1.bf16.msra.mxu0 %v89
  %148 = vmatprep.subr.bf16.mxu0 0
  %149 = vmatpush2.bf16.msra.mxu0 0
  %150 = vmatprep.subr.bf16.mxu0 0
  %151 = vmatpush2.bf16.msra.mxu0 0
  %152 = vmatprep.subr.bf16.mxu0 0
  %153 = vmatpush2.bf16.msra.mxu0 0
  %154 = vmatprep.subr.bf16.mxu0 0
  %155 = vmatpush2.bf16.msra.mxu0 0
  %156 = vmatprep.subr.bf16.mxu0 0
  %157 = vmatpush2.bf16.msra.mxu0 0
  %158 = vmatprep.subr.bf16.mxu0 0
  %159 = vmatpush2.bf16.msra.mxu0 0
  %160 = vmatprep.subr.bf16.mxu0 0
  %161 = vmatpush2.bf16.msra.mxu0 0
  %162 = vmatprep.subr.bf16.mxu0 0
  %163 = vmatpush2.bf16.msra.mxu0 0
  %164 = vmatprep.mubr.bf16.mxu0 0
  %165 = vmatmul.mubr.bf16.gmra.mxu0 %v79
  %v166 = vpop.f32.mrf.mxu0
  %v167 = vadd.f32 %v49, %v166
  %v168 = vpop.f32.mrf.mxu0
  %v169 = vpop.f32.mrf.mxu0
  %v170 = vpop.f32.mrf.mxu0
  %171 = vdwg.mxu0
  %v172 = vmax.f32 %v126, 0.0
  %v173 = vmax.f32 %v128, 0.0
  %v174 = vmax.f32 %v167, 0.0
  %v175 = vpack.c.bf16 %v172, %v172
  %v176 = vpack.c.bf16 %v173, %v173
  %v177 = vpack.c.bf16 %v174, %v174
  %v178 = vld [vmem:[%s3] sm:$0xff]
  %v179 = vld [vmem:[%s3 + $0x8] sm:$0xff]
  %v180 = vld [vmem:[%s3 + $0x10] sm:$0xff]
  %v181 = vld [vmem:[%s3 + $0x18] sm:$0xf]
  %v182 = vld [vmem:[%s3 + $0x1c] sm:$0xff]
  %v183 = vld [vmem:[%s3 + $0x24] sm:$0xff]
  %v184 = vld [vmem:[%s3 + $0x2c] sm:$0xff]
  %v185 = vld [vmem:[%s3 + $0x34] sm:$0xf]
  %v186 = vld [vmem:[%s3 + $0x38] sm:$0xff]
  %v187 = vld [vmem:[%s3 + $0x40] sm:$0xff]
  %v188 = vld [vmem:[%s3 + $0x48] sm:$0xff]
  %v189 = vld [vmem:[%s3 + $0x50] sm:$0xf]
  %v190 = vld [vmem:[%s3 + $0x54] sm:$0xff]
  %v191 = vld [vmem:[%s3 + $0x5c] sm:$0xff]
  %v192 = vld [vmem:[%s3 + $0x64] sm:$0xff]
  %v193 = vld [vmem:[%s3 + $0x6c] sm:$0xf]
  %v194 = vld [vmem:[%s3 + $0x70] sm:$0xff]
  %v195 = vld [vmem:[%s3 + $0x78] sm:$0xff]
  %v196 = vld [vmem:[%s3 + $0x80] sm:$0xff]
  %v197 = vld [vmem:[%s3 + $0x88] sm:$0xf]
  %v198 = vld [vmem:[%s3 + $0x8c] sm:$0xff]
  %v199 = vld [vmem:[%s3 + $0x94] sm:$0xff]
  %v200 = vld [vmem:[%s3 + $0x9c] sm:$0xff]
  %v201 = vld [vmem:[%s3 + $0xa4] sm:$0xf]
  %v202 = vld [vmem:[%s3 + $0xa8] sm:$0xff]
  %v203 = vld [vmem:[%s3 + $0xb0] sm:$0xff]
  %v204 = vld [vmem:[%s3 + $0xb8] sm:$0xff]
  %v205 = vld [vmem:[%s3 + $0xc0] sm:$0xf]
  %v206 = vld [vmem:[%s3 + $0xc4] sm:$0xff]
  %v207 = vld [vmem:[%s3 + $0xcc] sm:$0xff]
  %v208 = vld [vmem:[%s3 + $0xd4] sm:$0xff]
  %v209 = vld [vmem:[%s3 + $0xdc] sm:$0xf]
  %v210 = vld [vmem:[%s3 + $0xe0] sm:$0xff]
  %v211 = vld [vmem:[%s3 + $0xe8] sm:$0xff]
  %v212 = vld [vmem:[%s3 + $0xf0] sm:$0xff]
  %v213 = vld [vmem:[%s3 + $0xf8] sm:$0xf]
  %v214 = vld [vmem:[%s3 + $0xfc] sm:$0xff]
  %v215 = vld [vmem:[%s3 + $0x104] sm:$0xff]
  %v216 = vld [vmem:[%s3 + $0x10c] sm:$0xff]
  %v217 = vld [vmem:[%s3 + $0x114] sm:$0xf]
  %v218 = vld [vmem:[%s3 + $0x118] sm:$0xff]
  %v219 = vld [vmem:[%s3 + $0x120] sm:$0xff]
  %v220 = vld [vmem:[%s3 + $0x128] sm:$0xff]
  %v221 = vld [vmem:[%s3 + $0x130] sm:$0xf]
  %v222 = vld [vmem:[%s3 + $0x134] sm:$0xff]
  %v223 = vld [vmem:[%s3 + $0x13c] sm:$0xff]
  %v224 = vld [vmem:[%s3 + $0x144] sm:$0xff]
  %v225 = vld [vmem:[%s3 + $0x14c] sm:$0xf]
  %v226 = vld [vmem:[%s3 + $0x150] sm:$0xff]
  %v227 = vld [vmem:[%s3 + $0x158] sm:$0xff]
  %v228 = vld [vmem:[%s3 + $0x160] sm:$0xff]
  %v229 = vld [vmem:[%s3 + $0x168] sm:$0xf]
  %v230 = vld [vmem:[%s3 + $0x16c] sm:$0xff]
  %v231 = vld [vmem:[%s3 + $0x174] sm:$0xff]
  %v232 = vld [vmem:[%s3 + $0x17c] sm:$0xff]
  %v233 = vld [vmem:[%s3 + $0x184] sm:$0xf]
  %v234 = vld [vmem:[%s3 + $0x188] sm:$0xff]
  %v235 = vld [vmem:[%s3 + $0x190] sm:$0xff]
  %v236 = vld [vmem:[%s3 + $0x198] sm:$0xff]
  %v237 = vld [vmem:[%s3 + $0x1a0] sm:$0xf]
  %v238 = vld [vmem:[%s3 + $0x1a4] sm:$0xff]
  %v239 = vld [vmem:[%s3 + $0x1ac] sm:$0xff]
  %v240 = vld [vmem:[%s3 + $0x1b4] sm:$0xff]
  %v241 = vld [vmem:[%s3 + $0x1bc] sm:$0xf]
  %v242 = vld [vmem:[%s3 + $0x1c0] sm:$0xff]
  %v243 = vld [vmem:[%s3 + $0x1c8] sm:$0xff]
  %v244 = vld [vmem:[%s3 + $0x1d0] sm:$0xff]
  %v245 = vld [vmem:[%s3 + $0x1d8] sm:$0xf]
  %v246 = vld [vmem:[%s3 + $0x1dc] sm:$0xff]
  %v247 = vld [vmem:[%s3 + $0x1e4] sm:$0xff]
  %v248 = vld [vmem:[%s3 + $0x1ec] sm:$0xff]
  %v249 = vld [vmem:[%s3 + $0x1f4] sm:$0xf]
  %v250 = vld [vmem:[%s3 + $0x1f8] sm:$0xff]
  %v251 = vld [vmem:[%s3 + $0x200] sm:$0xff]
  %v252 = vld [vmem:[%s3 + $0x208] sm:$0xff]
  %v253 = vld [vmem:[%s3 + $0x210] sm:$0xf]
  %v254 = vld [vmem:[%s3 + $0x214] sm:$0xff]
  %v255 = vld [vmem:[%s3 + $0x21c] sm:$0xff]
  %v256 = vld [vmem:[%s3 + $0x224] sm:$0xff]
  %v257 = vld [vmem:[%s3 + $0x22c] sm:$0xf]
  %v258 = vld [vmem:[%s3 + $0x230] sm:$0xff]
  %v259 = vld [vmem:[%s3 + $0x238] sm:$0xff]
  %v260 = vld [vmem:[%s3 + $0x240] sm:$0xff]
  %v261 = vld [vmem:[%s3 + $0x248] sm:$0xf]
  %v262 = vld [vmem:[%s3 + $0x24c] sm:$0xff]
  %v263 = vld [vmem:[%s3 + $0x254] sm:$0xff]
  %v264 = vld [vmem:[%s3 + $0x25c] sm:$0xff]
  %v265 = vld [vmem:[%s3 + $0x264] sm:$0xf]
  %v266 = vld [vmem:[%s3 + $0x268] sm:$0xff]
  %v267 = vld [vmem:[%s3 + $0x270] sm:$0xff]
  %v268 = vld [vmem:[%s3 + $0x278] sm:$0xff]
  %v269 = vld [vmem:[%s3 + $0x280] sm:$0xf]
  %v270 = vld [vmem:[%s3 + $0x284] sm:$0xff]
  %v271 = vld [vmem:[%s3 + $0x28c] sm:$0xff]
  %v272 = vld [vmem:[%s3 + $0x294] sm:$0xff]
  %v273 = vld [vmem:[%s3 + $0x29c] sm:$0xf]
  %v274 = vld [vmem:[%s3 + $0x2a0] sm:$0xff]
  %v275 = vld [vmem:[%s3 + $0x2a8] sm:$0xff]
  %v276 = vld [vmem:[%s3 + $0x2b0] sm:$0xff]
  %v277 = vld [vmem:[%s3 + $0x2b8] sm:$0xf]
  %v278 = vld [vmem:[%s3 + $0x2bc] sm:$0xff]
  %v279 = vld [vmem:[%s3 + $0x2c4] sm:$0xff]
  %v280 = vld [vmem:[%s3 + $0x2cc] sm:$0xff]
  %v281 = vld [vmem:[%s3 + $0x2d4] sm:$0xf]
  %v282 = vld [vmem:[%s3 + $0x2d8] sm:$0xff]
  %v283 = vld [vmem:[%s3 + $0x2e0] sm:$0xff]
  %v284 = vld [vmem:[%s3 + $0x2e8] sm:$0xff]
  %v285 = vld [vmem:[%s3 + $0x2f0] sm:$0xf]
  %v286 = vld [vmem:[%s3 + $0x2f4] sm:$0xff]
  %v287 = vld [vmem:[%s3 + $0x2fc] sm:$0xff]
  %v288 = vld [vmem:[%s3 + $0x304] sm:$0xff]
  %v289 = vld [vmem:[%s3 + $0x30c] sm:$0xf]
  %v290 = vld [vmem:[%s3 + $0x310] sm:$0xff]
  %v291 = vld [vmem:[%s3 + $0x318] sm:$0xff]
  %v292 = vld [vmem:[%s3 + $0x320] sm:$0xff]
  %v293 = vld [vmem:[%s3 + $0x328] sm:$0xf]
  %v294 = vld [vmem:[%s3 + $0x32c] sm:$0xff]
  %v295 = vld [vmem:[%s3 + $0x334] sm:$0xff]
  %v296 = vld [vmem:[%s3 + $0x33c] sm:$0xff]
  %v297 = vld [vmem:[%s3 + $0x344] sm:$0xf]
  %v298 = vld [vmem:[%s3 + $0x348] sm:$0xff]
  %v299 = vld [vmem:[%s3 + $0x350] sm:$0xff]
  %v300 = vld [vmem:[%s3 + $0x358] sm:$0xff]
  %v301 = vld [vmem:[%s3 + $0x360] sm:$0xf]
  %v302 = vld [vmem:[%s3 + $0x364] sm:$0xff]
  %v303 = vld [vmem:[%s3 + $0x36c] sm:$0xff]
  %v304 = vld [vmem:[%s3 + $0x374] sm:$0xff]
  %v305 = vld [vmem:[%s3 + $0x37c] sm:$0xf]
  %v306 = vld [vmem:[%s3 + $0x380] sm:$0xff]
  %v307 = vld [vmem:[%s3 + $0x388] sm:$0xff]
  %v308 = vld [vmem:[%s3 + $0x390] sm:$0xff]
  %v309 = vld [vmem:[%s3 + $0x398] sm:$0xf]
  %v310 = vld [vmem:[%s3 + $0x39c] sm:$0xff]
  %v311 = vld [vmem:[%s3 + $0x3a4] sm:$0xff]
  %v312 = vld [vmem:[%s3 + $0x3ac] sm:$0xff]
  %v313 = vld [vmem:[%s3 + $0x3b4] sm:$0xf]
  %v314 = vld [vmem:[%s3 + $0x3b8] sm:$0xff]
  %v315 = vld [vmem:[%s3 + $0x3c0] sm:$0xff]
  %v316 = vld [vmem:[%s3 + $0x3c8] sm:$0xff]
  %v317 = vld [vmem:[%s3 + $0x3d0] sm:$0xf]
  %v318 = vld [vmem:[%s3 + $0x3d4] sm:$0xff]
  %v319 = vld [vmem:[%s3 + $0x3dc] sm:$0xff]
  %v320 = vld [vmem:[%s3 + $0x3e4] sm:$0xff]
  %v321 = vld [vmem:[%s3 + $0x3ec] sm:$0xf]
  %v322 = vld [vmem:[%s4] sm:$0x7f]
  %v324 = vlaneseq
  %v325 = vshrl.u32 %v324, 7
  %v326 = vsub.s32 0, %v325
  %v327 = vrot.slane %v322, %v326
  %v328 = vlaneseq
  %v329 = vshrl.u32 %v328, 7
  %v330 = vsub.s32 1, %v329
  %v331 = vrot.slane %v322, %v330
  %v332 = vlaneseq
  %v333 = vshrl.u32 %v332, 7
  %v334 = vsub.s32 2, %v333
  %v335 = vrot.slane %v322, %v334
  %v336 = vlaneseq
  %v337 = vshrl.u32 %v336, 7
  %v338 = vsub.s32 3, %v337
  %v339 = vrot.slane %v322, %v338
  %v340 = vlaneseq
  %v341 = vshrl.u32 %v340, 7
  %v342 = vsub.s32 4, %v341
  %v343 = vrot.slane %v322, %v342
  %v344 = vlaneseq
  %v345 = vshrl.u32 %v344, 7
  %v346 = vsub.s32 5, %v345
  %v347 = vrot.slane %v322, %v346
  %v348 = vlaneseq
  %v349 = vshrl.u32 %v348, 7
  %v350 = vsub.s32 6, %v349
  %v351 = vrot.slane %v322, %v350
  %v503 = vunpack.c.l.b16 %v178
  %v504 = vunpack.c.h.b16 %v178
  %v505 = vunpack.c.l.b16 %v179
  %v506 = vunpack.c.h.b16 %v179
  %v507 = vunpack.c.l.b16 %v180
  %v508 = vunpack.c.h.b16 %v180
  %v509 = vunpack.c.l.b16 %v181
  %v510 = vunpack.c.l.b16 %v182
  %v511 = vunpack.c.h.b16 %v182
  %v512 = vunpack.c.l.b16 %v183
  %v513 = vunpack.c.h.b16 %v183
  %v514 = vunpack.c.l.b16 %v184
  %v515 = vunpack.c.h.b16 %v184
  %v516 = vunpack.c.l.b16 %v185
  %v517 = vunpack.c.l.b16 %v186
  %v518 = vunpack.c.h.b16 %v186
  %v519 = vunpack.c.l.b16 %v187
  %v520 = vunpack.c.h.b16 %v187
  %v521 = vunpack.c.l.b16 %v188
  %v522 = vunpack.c.h.b16 %v188
  %v523 = vunpack.c.l.b16 %v189
  %v524 = vunpack.c.l.b16 %v190
  %v525 = vunpack.c.h.b16 %v190
  %v526 = vunpack.c.l.b16 %v191
  %v527 = vunpack.c.h.b16 %v191
  %v528 = vunpack.c.l.b16 %v192
  %v529 = vunpack.c.h.b16 %v192
  %v530 = vunpack.c.l.b16 %v193
  %v531 = vunpack.c.l.b16 %v194
  %v532 = vunpack.c.h.b16 %v194
  %v533 = vunpack.c.l.b16 %v195
  %v534 = vunpack.c.h.b16 %v195
  %v535 = vunpack.c.l.b16 %v196
  %v536 = vunpack.c.h.b16 %v196
  %v537 = vunpack.c.l.b16 %v197
  %v538 = vunpack.c.l.b16 %v198
  %v539 = vunpack.c.h.b16 %v198
  %v540 = vunpack.c.l.b16 %v199
  %v541 = vunpack.c.h.b16 %v199
  %v542 = vunpack.c.l.b16 %v200
  %v543 = vunpack.c.h.b16 %v200
  %v544 = vunpack.c.l.b16 %v201
  %v545 = vunpack.c.l.b16 %v202
  %v546 = vunpack.c.h.b16 %v202
  %v547 = vunpack.c.l.b16 %v203
  %v548 = vunpack.c.h.b16 %v203
  %v549 = vunpack.c.l.b16 %v204
  %v550 = vunpack.c.h.b16 %v204
  %v551 = vunpack.c.l.b16 %v205
  %v552 = vunpack.c.l.b16 %v206
  %v553 = vunpack.c.h.b16 %v206
  %v554 = vunpack.c.l.b16 %v207
  %v555 = vunpack.c.h.b16 %v207
  %v556 = vunpack.c.l.b16 %v208
  %v557 = vunpack.c.h.b16 %v208
  %v558 = vunpack.c.l.b16 %v209
  %v559 = vunpack.c.l.b16 %v210
  %v560 = vunpack.c.h.b16 %v210
  %v561 = vunpack.c.l.b16 %v211
  %v562 = vunpack.c.h.b16 %v211
  %v563 = vunpack.c.l.b16 %v212
  %v564 = vunpack.c.h.b16 %v212
  %v565 = vunpack.c.l.b16 %v213
  %v566 = vunpack.c.l.b16 %v214
  %v567 = vunpack.c.h.b16 %v214
  %v568 = vunpack.c.l.b16 %v215
  %v569 = vunpack.c.h.b16 %v215
  %v570 = vunpack.c.l.b16 %v216
  %v571 = vunpack.c.h.b16 %v216
  %v572 = vunpack.c.l.b16 %v217
  %v573 = vunpack.c.l.b16 %v218
  %v574 = vunpack.c.h.b16 %v218
  %v575 = vunpack.c.l.b16 %v219
  %v576 = vunpack.c.h.b16 %v219
  %v577 = vunpack.c.l.b16 %v220
  %v578 = vunpack.c.h.b16 %v220
  %v579 = vunpack.c.l.b16 %v221
  %v580 = vunpack.c.l.b16 %v222
  %v581 = vunpack.c.h.b16 %v222
  %v582 = vunpack.c.l.b16 %v223
  %v583 = vunpack.c.h.b16 %v223
  %v584 = vunpack.c.l.b16 %v224
  %v585 = vunpack.c.h.b16 %v224
  %v586 = vunpack.c.l.b16 %v225
  %v587 = vunpack.c.l.b16 %v226
  %v588 = vunpack.c.h.b16 %v226
  %v589 = vunpack.c.l.b16 %v227
  %v590 = vunpack.c.h.b16 %v227
  %v591 = vunpack.c.l.b16 %v228
  %v592 = vunpack.c.h.b16 %v228
  %v593 = vunpack.c.l.b16 %v229
  %v594 = vunpack.c.l.b16 %v230
  %v595 = vunpack.c.h.b16 %v230
  %v596 = vunpack.c.l.b16 %v231
  %v597 = vunpack.c.h.b16 %v231
  %v598 = vunpack.c.l.b16 %v232
  %v599 = vunpack.c.h.b16 %v232
  %v600 = vunpack.c.l.b16 %v233
  %v601 = vunpack.c.l.b16 %v234
  %v602 = vunpack.c.h.b16 %v234
  %v603 = vunpack.c.l.b16 %v235
  %v604 = vunpack.c.h.b16 %v235
  %v605 = vunpack.c.l.b16 %v236
  %v606 = vunpack.c.h.b16 %v236
  %v607 = vunpack.c.l.b16 %v237
  %v608 = vunpack.c.l.b16 %v238
  %v609 = vunpack.c.h.b16 %v238
  %v610 = vunpack.c.l.b16 %v239
  %v611 = vunpack.c.h.b16 %v239
  %v612 = vunpack.c.l.b16 %v240
  %v613 = vunpack.c.h.b16 %v240
  %v614 = vunpack.c.l.b16 %v241
  %v615 = vunpack.c.l.b16 %v242
  %v616 = vunpack.c.h.b16 %v242
  %v617 = vunpack.c.l.b16 %v243
  %v618 = vunpack.c.h.b16 %v243
  %v619 = vunpack.c.l.b16 %v244
  %v620 = vunpack.c.h.b16 %v244
  %v621 = vunpack.c.l.b16 %v245
  %v622 = vunpack.c.l.b16 %v246
  %v623 = vunpack.c.h.b16 %v246
  %v624 = vunpack.c.l.b16 %v247
  %v625 = vunpack.c.h.b16 %v247
  %v626 = vunpack.c.l.b16 %v248
  %v627 = vunpack.c.h.b16 %v248
  %v628 = vunpack.c.l.b16 %v249
  %v629 = vunpack.c.l.b16 %v250
  %v630 = vunpack.c.h.b16 %v250
  %v631 = vunpack.c.l.b16 %v251
  %v632 = vunpack.c.h.b16 %v251
  %v633 = vunpack.c.l.b16 %v252
  %v634 = vunpack.c.h.b16 %v252
  %v635 = vunpack.c.l.b16 %v253
  %v636 = vunpack.c.l.b16 %v254
  %v637 = vunpack.c.h.b16 %v254
  %v638 = vunpack.c.l.b16 %v255
  %v639 = vunpack.c.h.b16 %v255
  %v640 = vunpack.c.l.b16 %v256
  %v641 = vunpack.c.h.b16 %v256
  %v642 = vunpack.c.l.b16 %v257
  %v643 = vunpack.c.l.b16 %v258
  %v644 = vunpack.c.h.b16 %v258
  %v645 = vunpack.c.l.b16 %v259
  %v646 = vunpack.c.h.b16 %v259
  %v647 = vunpack.c.l.b16 %v260
  %v648 = vunpack.c.h.b16 %v260
  %v649 = vunpack.c.l.b16 %v261
  %v650 = vunpack.c.l.b16 %v262
  %v651 = vunpack.c.h.b16 %v262
  %v652 = vunpack.c.l.b16 %v263
  %v653 = vunpack.c.h.b16 %v263
  %v654 = vunpack.c.l.b16 %v264
  %v655 = vunpack.c.h.b16 %v264
  %v656 = vunpack.c.l.b16 %v265
  %v657 = vunpack.c.l.b16 %v266
  %v658 = vunpack.c.h.b16 %v266
  %v659 = vunpack.c.l.b16 %v267
  %v660 = vunpack.c.h.b16 %v267
  %v661 = vunpack.c.l.b16 %v268
  %v662 = vunpack.c.h.b16 %v268
  %v663 = vunpack.c.l.b16 %v269
  %v664 = vunpack.c.l.b16 %v270
  %v665 = vunpack.c.h.b16 %v270
  %v666 = vunpack.c.l.b16 %v271
  %v667 = vunpack.c.h.b16 %v271
  %v668 = vunpack.c.l.b16 %v272
  %v669 = vunpack.c.h.b16 %v272
  %v670 = vunpack.c.l.b16 %v273
  %v671 = vunpack.c.l.b16 %v274
  %v672 = vunpack.c.h.b16 %v274
  %v673 = vunpack.c.l.b16 %v275
  %v674 = vunpack.c.h.b16 %v275
  %v675 = vunpack.c.l.b16 %v276
  %v676 = vunpack.c.h.b16 %v276
  %v677 = vunpack.c.l.b16 %v277
  %v678 = vunpack.c.l.b16 %v278
  %v679 = vunpack.c.h.b16 %v278
  %v680 = vunpack.c.l.b16 %v279
  %v681 = vunpack.c.h.b16 %v279
  %v682 = vunpack.c.l.b16 %v280
  %v683 = vunpack.c.h.b16 %v280
  %v684 = vunpack.c.l.b16 %v281
  %v685 = vunpack.c.l.b16 %v282
  %v686 = vunpack.c.h.b16 %v282
  %v687 = vunpack.c.l.b16 %v283
  %v688 = vunpack.c.h.b16 %v283
  %v689 = vunpack.c.l.b16 %v284
  %v690 = vunpack.c.h.b16 %v284
  %v691 = vunpack.c.l.b16 %v285
  %v692 = vunpack.c.l.b16 %v286
  %v693 = vunpack.c.h.b16 %v286
  %v694 = vunpack.c.l.b16 %v287
  %v695 = vunpack.c.h.b16 %v287
  %v696 = vunpack.c.l.b16 %v288
  %v697 = vunpack.c.h.b16 %v288
  %v698 = vunpack.c.l.b16 %v289
  %v699 = vunpack.c.l.b16 %v290
  %v700 = vunpack.c.h.b16 %v290
  %v701 = vunpack.c.l.b16 %v291
  %v702 = vunpack.c.h.b16 %v291
  %v703 = vunpack.c.l.b16 %v292
  %v704 = vunpack.c.h.b16 %v292
  %v705 = vunpack.c.l.b16 %v293
  %v706 = vunpack.c.l.b16 %v294
  %v707 = vunpack.c.h.b16 %v294
  %v708 = vunpack.c.l.b16 %v295
  %v709 = vunpack.c.h.b16 %v295
  %v710 = vunpack.c.l.b16 %v296
  %v711 = vunpack.c.h.b16 %v296
  %v712 = vunpack.c.l.b16 %v297
  %v713 = vunpack.c.l.b16 %v298
  %v714 = vunpack.c.h.b16 %v298
  %v715 = vunpack.c.l.b16 %v299
  %v716 = vunpack.c.h.b16 %v299
  %v717 = vunpack.c.l.b16 %v300
  %v718 = vunpack.c.h.b16 %v300
  %v719 = vunpack.c.l.b16 %v301
  %v720 = vunpack.c.l.b16 %v302
  %v721 = vunpack.c.h.b16 %v302
  %v722 = vunpack.c.l.b16 %v303
  %v723 = vunpack.c.h.b16 %v303
  %v724 = vunpack.c.l.b16 %v304
  %v725 = vunpack.c.h.b16 %v304
  %v726 = vunpack.c.l.b16 %v305
  %v727 = vunpack.c.l.b16 %v306
  %v728 = vunpack.c.h.b16 %v306
  %v729 = vunpack.c.l.b16 %v307
  %v730 = vunpack.c.h.b16 %v307
  %v731 = vunpack.c.l.b16 %v308
  %v732 = vunpack.c.h.b16 %v308
  %v733 = vunpack.c.l.b16 %v309
  %v734 = vunpack.c.l.b16 %v310
  %v735 = vunpack.c.h.b16 %v310
  %v736 = vunpack.c.l.b16 %v311
  %v737 = vunpack.c.h.b16 %v311
  %v738 = vunpack.c.l.b16 %v312
  %v739 = vunpack.c.h.b16 %v312
  %v740 = vunpack.c.l.b16 %v313
  %v741 = vunpack.c.l.b16 %v314
  %v742 = vunpack.c.h.b16 %v314
  %v743 = vunpack.c.l.b16 %v315
  %v744 = vunpack.c.h.b16 %v315
  %v745 = vunpack.c.l.b16 %v316
  %v746 = vunpack.c.h.b16 %v316
  %v747 = vunpack.c.l.b16 %v317
  %v748 = vunpack.c.l.b16 %v318
  %v749 = vunpack.c.h.b16 %v318
  %v750 = vunpack.c.l.b16 %v319
  %v751 = vunpack.c.h.b16 %v319
  %v752 = vunpack.c.l.b16 %v320
  %v753 = vunpack.c.h.b16 %v320
  %v754 = vunpack.c.l.b16 %v321
  %v755 = vpack.c.b16 %v510, %v503
  %v756 = vpack.c.b16 %v511, %v504
  %v757 = vpack.c.b16 %v512, %v505
  %v758 = vpack.c.b16 %v513, %v506
  %v759 = vpack.c.b16 %v514, %v507
  %v760 = vpack.c.b16 %v515, %v508
  %v761 = vpack.c.b16 %v516, %v509
  %v762 = vpack.c.b16 %v524, %v517
  %v763 = vpack.c.b16 %v525, %v518
  %v764 = vpack.c.b16 %v526, %v519
  %v765 = vpack.c.b16 %v527, %v520
  %v766 = vpack.c.b16 %v528, %v521
  %v767 = vpack.c.b16 %v529, %v522
  %v768 = vpack.c.b16 %v530, %v523
  %v769 = vpack.c.b16 %v538, %v531
  %v770 = vpack.c.b16 %v539, %v532
  %v771 = vpack.c.b16 %v540, %v533
  %v772 = vpack.c.b16 %v541, %v534
  %v773 = vpack.c.b16 %v542, %v535
  %v774 = vpack.c.b16 %v543, %v536
  %v775 = vpack.c.b16 %v544, %v537
  %v776 = vpack.c.b16 %v552, %v545
  %v777 = vpack.c.b16 %v553, %v546
  %v778 = vpack.c.b16 %v554, %v547
  %v779 = vpack.c.b16 %v555, %v548
  %v780 = vpack.c.b16 %v556, %v549
  %v781 = vpack.c.b16 %v557, %v550
  %v782 = vpack.c.b16 %v558, %v551
  %v783 = vpack.c.b16 %v566, %v559
  %v784 = vpack.c.b16 %v567, %v560
  %v785 = vpack.c.b16 %v568, %v561
  %v786 = vpack.c.b16 %v569, %v562
  %v787 = vpack.c.b16 %v570, %v563
  %v788 = vpack.c.b16 %v571, %v564
  %v789 = vpack.c.b16 %v572, %v565
  %v790 = vpack.c.b16 %v580, %v573
  %v791 = vpack.c.b16 %v581, %v574
  %v792 = vpack.c.b16 %v582, %v575
  %v793 = vpack.c.b16 %v583, %v576
  %v794 = vpack.c.b16 %v584, %v577
  %v795 = vpack.c.b16 %v585, %v578
  %v796 = vpack.c.b16 %v586, %v579
  %v797 = vpack.c.b16 %v594, %v587
  %v798 = vpack.c.b16 %v595, %v588
  %v799 = vpack.c.b16 %v596, %v589
  %v800 = vpack.c.b16 %v597, %v590
  %v801 = vpack.c.b16 %v598, %v591
  %v802 = vpack.c.b16 %v599, %v592
  %v803 = vpack.c.b16 %v600, %v593
  %v804 = vpack.c.b16 %v608, %v601
  %v805 = vpack.c.b16 %v609, %v602
  %v806 = vpack.c.b16 %v610, %v603
  %v807 = vpack.c.b16 %v611, %v604
  %v808 = vpack.c.b16 %v612, %v605
  %v809 = vpack.c.b16 %v613, %v606
  %v810 = vpack.c.b16 %v614, %v607
  %v811 = vpack.c.b16 %v622, %v615
  %v812 = vpack.c.b16 %v623, %v616
  %v813 = vpack.c.b16 %v624, %v617
  %v814 = vpack.c.b16 %v625, %v618
  %v815 = vpack.c.b16 %v626, %v619
  %v816 = vpack.c.b16 %v627, %v620
  %v817 = vpack.c.b16 %v628, %v621
  %v818 = vpack.c.b16 %v636, %v629
  %v819 = vpack.c.b16 %v637, %v630
  %v820 = vpack.c.b16 %v638, %v631
  %v821 = vpack.c.b16 %v639, %v632
  %v822 = vpack.c.b16 %v640, %v633
  %v823 = vpack.c.b16 %v641, %v634
  %v824 = vpack.c.b16 %v642, %v635
  %v825 = vpack.c.b16 %v650, %v643
  %v826 = vpack.c.b16 %v651, %v644
  %v827 = vpack.c.b16 %v652, %v645
  %v828 = vpack.c.b16 %v653, %v646
  %v829 = vpack.c.b16 %v654, %v647
  %v830 = vpack.c.b16 %v655, %v648
  %v831 = vpack.c.b16 %v656, %v649
  %v832 = vpack.c.b16 %v664, %v657
  %v833 = vpack.c.b16 %v665, %v658
  %v834 = vpack.c.b16 %v666, %v659
  %v835 = vpack.c.b16 %v667, %v660
  %v836 = vpack.c.b16 %v668, %v661
  %v837 = vpack.c.b16 %v669, %v662
  %v838 = vpack.c.b16 %v670, %v663
  %v839 = vpack.c.b16 %v678, %v671
  %v840 = vpack.c.b16 %v679, %v672
  %v841 = vpack.c.b16 %v680, %v673
  %v842 = vpack.c.b16 %v681, %v674
  %v843 = vpack.c.b16 %v682, %v675
  %v844 = vpack.c.b16 %v683, %v676
  %v845 = vpack.c.b16 %v684, %v677
  %v846 = vpack.c.b16 %v692, %v685
  %v847 = vpack.c.b16 %v693, %v686
  %v848 = vpack.c.b16 %v694, %v687
  %v849 = vpack.c.b16 %v695, %v688
  %v850 = vpack.c.b16 %v696, %v689
  %v851 = vpack.c.b16 %v697, %v690
  %v852 = vpack.c.b16 %v698, %v691
  %v853 = vpack.c.b16 %v706, %v699
  %v854 = vpack.c.b16 %v707, %v700
  %v855 = vpack.c.b16 %v708, %v701
  %v856 = vpack.c.b16 %v709, %v702
  %v857 = vpack.c.b16 %v710, %v703
  %v858 = vpack.c.b16 %v711, %v704
  %v859 = vpack.c.b16 %v712, %v705
  %v860 = vpack.c.b16 %v720, %v713
  %v861 = vpack.c.b16 %v721, %v714
  %v862 = vpack.c.b16 %v722, %v715
  %v863 = vpack.c.b16 %v723, %v716
  %v864 = vpack.c.b16 %v724, %v717
  %v865 = vpack.c.b16 %v725, %v718
  %v866 = vpack.c.b16 %v726, %v719
  %v867 = vpack.c.b16 %v734, %v727
  %v868 = vpack.c.b16 %v735, %v728
  %v869 = vpack.c.b16 %v736, %v729
  %v870 = vpack.c.b16 %v737, %v730
  %v871 = vpack.c.b16 %v738, %v731
  %v872 = vpack.c.b16 %v739, %v732
  %v873 = vpack.c.b16 %v740, %v733
  %v874 = vpack.c.b16 %v748, %v741
  %v875 = vpack.c.b16 %v749, %v742
  %v876 = vpack.c.b16 %v750, %v743
  %v877 = vpack.c.b16 %v751, %v744
  %v878 = vpack.c.b16 %v752, %v745
  %v879 = vpack.c.b16 %v753, %v746
  %v880 = vpack.c.b16 %v754, %v747
  %vm1007 = vcmask 261120
  %v1009 = vsel %vm1007, %v177, 0
  %1011 = vmatprep.subr.bf16.mxu0 %v805
  %1012 = vmatpush1.bf16.msra.mxu0 %v804
  %1013 = vmatprep.subr.bf16.mxu0 %v798
  %1014 = vmatpush1.bf16.msra.mxu0 %v797
  %1015 = vmatprep.subr.bf16.mxu0 %v791
  %1016 = vmatpush1.bf16.msra.mxu0 %v790
  %1017 = vmatprep.subr.bf16.mxu0 %v784
  %1018 = vmatpush1.bf16.msra.mxu0 %v783
  %1019 = vmatprep.subr.bf16.mxu0 %v777
  %1020 = vmatpush1.bf16.msra.mxu0 %v776
  %1021 = vmatprep.subr.bf16.mxu0 %v770
  %1022 = vmatpush1.bf16.msra.mxu0 %v769
  %1023 = vmatprep.subr.bf16.mxu0 %v763
  %1024 = vmatpush1.bf16.msra.mxu0 %v762
  %1025 = vmatprep.subr.bf16.mxu0 %v756
  %1026 = vmatpush1.bf16.msra.mxu0 %v755
  %1027 = vmatprep.subr.bf16.mxu0 %v861
  %1028 = vmatpush2.bf16.msra.mxu0 %v860
  %1029 = vmatprep.subr.bf16.mxu0 %v854
  %1030 = vmatpush2.bf16.msra.mxu0 %v853
  %1031 = vmatprep.subr.bf16.mxu0 %v847
  %1032 = vmatpush2.bf16.msra.mxu0 %v846
  %1033 = vmatprep.subr.bf16.mxu0 %v840
  %1034 = vmatpush2.bf16.msra.mxu0 %v839
  %1035 = vmatprep.subr.bf16.mxu0 %v833
  %1036 = vmatpush2.bf16.msra.mxu0 %v832
  %1037 = vmatprep.subr.bf16.mxu0 %v826
  %1038 = vmatpush2.bf16.msra.mxu0 %v825
  %1039 = vmatprep.subr.bf16.mxu0 %v819
  %1040 = vmatpush2.bf16.msra.mxu0 %v818
  %1041 = vmatprep.subr.bf16.mxu0 %v812
  %1042 = vmatpush2.bf16.msra.mxu0 %v811
  %1043 = vmatprep.mubr.bf16.mxu0 %v176
  %1044 = vmatmul.mubr.bf16.gmra.mxu0 %v175
  %v1045 = vpop.f32.mrf.mxu0
  %v1046 = vadd.f32 %v327, %v1045
  %v1047 = vpop.f32.mrf.mxu0
  %v1048 = vadd.f32 %v331, %v1047
  %v1049 = vpop.f32.mrf.mxu0
  %v1050 = vpop.f32.mrf.mxu0
  %1051 = vdwg.mxu0
  %1052 = vmatprep.subr.bf16.mxu0 0
  %1053 = vmatpush1.bf16.msra.mxu0 0
  %1054 = vmatprep.subr.bf16.mxu0 0
  %1055 = vmatpush1.bf16.msra.mxu0 0
  %1056 = vmatprep.subr.bf16.mxu0 0
  %1057 = vmatpush1.bf16.msra.mxu0 0
  %1058 = vmatprep.subr.bf16.mxu0 0
  %1059 = vmatpush1.bf16.msra.mxu0 0
  %1060 = vmatprep.subr.bf16.mxu0 0
  %1061 = vmatpush1.bf16.msra.mxu0 0
  %1062 = vmatprep.subr.bf16.mxu0 0
  %1063 = vmatpush1.bf16.msra.mxu0 0
  %1064 = vmatprep.subr.bf16.mxu0 %v875
  %1065 = vmatpush1.bf16.msra.mxu0 %v874
  %1066 = vmatprep.subr.bf16.mxu0 %v868
  %1067 = vmatpush1.bf16.msra.mxu0 %v867
  %1068 = vmatprep.subr.bf16.mxu0 0
  %1069 = vmatpush2.bf16.msra.mxu0 0
  %1070 = vmatprep.subr.bf16.mxu0 0
  %1071 = vmatpush2.bf16.msra.mxu0 0
  %1072 = vmatprep.subr.bf16.mxu0 0
  %1073 = vmatpush2.bf16.msra.mxu0 0
  %1074 = vmatprep.subr.bf16.mxu0 0
  %1075 = vmatpush2.bf16.msra.mxu0 0
  %1076 = vmatprep.subr.bf16.mxu0 0
  %1077 = vmatpush2.bf16.msra.mxu0 0
  %1078 = vmatprep.subr.bf16.mxu0 0
  %1079 = vmatpush2.bf16.msra.mxu0 0
  %1080 = vmatprep.subr.bf16.mxu0 0
  %1081 = vmatpush2.bf16.msra.mxu0 0
  %1082 = vmatprep.subr.bf16.mxu0 0
  %1083 = vmatpush2.bf16.msra.mxu0 0
  %1084 = vmatprep.mubr.bf16.mxu0 0
  %1085 = vmatmul.mubr.bf16.gmra.mxu0 %v1009
  %v1086 = vpop.f32.mrf.mxu0
  %v1087 = vadd.f32 %v1046, %v1086
  %v1088 = vpop.f32.mrf.mxu0
  %v1089 = vadd.f32 %v1048, %v1088
  %v1090 = vpop.f32.mrf.mxu0
  %v1091 = vpop.f32.mrf.mxu0
  %1092 = vdwg.mxu0
  %1093 = vmatprep.subr.bf16.mxu0 %v807
  %1094 = vmatpush1.bf16.msra.mxu0 %v806
  %1095 = vmatprep.subr.bf16.mxu0 %v800
  %1096 = vmatpush1.bf16.msra.mxu0 %v799
  %1097 = vmatprep.subr.bf16.mxu0 %v793
  %1098 = vmatpush1.bf16.msra.mxu0 %v792
  %1099 = vmatprep.subr.bf16.mxu0 %v786
  %1100 = vmatpush1.bf16.msra.mxu0 %v785
  %1101 = vmatprep.subr.bf16.mxu0 %v779
  %1102 = vmatpush1.bf16.msra.mxu0 %v778
  %1103 = vmatprep.subr.bf16.mxu0 %v772
  %1104 = vmatpush1.bf16.msra.mxu0 %v771
  %1105 = vmatprep.subr.bf16.mxu0 %v765
  %1106 = vmatpush1.bf16.msra.mxu0 %v764
  %1107 = vmatprep.subr.bf16.mxu0 %v758
  %1108 = vmatpush1.bf16.msra.mxu0 %v757
  %1109 = vmatprep.subr.bf16.mxu0 %v863
  %1110 = vmatpush2.bf16.msra.mxu0 %v862
  %1111 = vmatprep.subr.bf16.mxu0 %v856
  %1112 = vmatpush2.bf16.msra.mxu0 %v855
  %1113 = vmatprep.subr.bf16.mxu0 %v849
  %1114 = vmatpush2.bf16.msra.mxu0 %v848
  %1115 = vmatprep.subr.bf16.mxu0 %v842
  %1116 = vmatpush2.bf16.msra.mxu0 %v841
  %1117 = vmatprep.subr.bf16.mxu0 %v835
  %1118 = vmatpush2.bf16.msra.mxu0 %v834
  %1119 = vmatprep.subr.bf16.mxu0 %v828
  %1120 = vmatpush2.bf16.msra.mxu0 %v827
  %1121 = vmatprep.subr.bf16.mxu0 %v821
  %1122 = vmatpush2.bf16.msra.mxu0 %v820
  %1123 = vmatprep.subr.bf16.mxu0 %v814
  %1124 = vmatpush2.bf16.msra.mxu0 %v813
  %1125 = vmatprep.mubr.bf16.mxu0 %v176
  %1126 = vmatmul.mubr.bf16.gmra.mxu0 %v175
  %v1127 = vpop.f32.mrf.mxu0
  %v1128 = vadd.f32 %v335, %v1127
  %v1129 = vpop.f32.mrf.mxu0
  %v1130 = vadd.f32 %v339, %v1129
  %v1131 = vpop.f32.mrf.mxu0
  %v1132 = vpop.f32.mrf.mxu0
  %1133 = vdwg.mxu0
  %1134 = vmatprep.subr.bf16.mxu0 0
  %1135 = vmatpush1.bf16.msra.mxu0 0
  %1136 = vmatprep.subr.bf16.mxu0 0
  %1137 = vmatpush1.bf16.msra.mxu0 0
  %1138 = vmatprep.subr.bf16.mxu0 0
  %1139 = vmatpush1.bf16.msra.mxu0 0
  %1140 = vmatprep.subr.bf16.mxu0 0
  %1141 = vmatpush1.bf16.msra.mxu0 0
  %1142 = vmatprep.subr.bf16.mxu0 0
  %1143 = vmatpush1.bf16.msra.mxu0 0
  %1144 = vmatprep.subr.bf16.mxu0 0
  %1145 = vmatpush1.bf16.msra.mxu0 0
  %1146 = vmatprep.subr.bf16.mxu0 %v877
  %1147 = vmatpush1.bf16.msra.mxu0 %v876
  %1148 = vmatprep.subr.bf16.mxu0 %v870
  %1149 = vmatpush1.bf16.msra.mxu0 %v869
  %1150 = vmatprep.subr.bf16.mxu0 0
  %1151 = vmatpush2.bf16.msra.mxu0 0
  %1152 = vmatprep.subr.bf16.mxu0 0
  %1153 = vmatpush2.bf16.msra.mxu0 0
  %1154 = vmatprep.subr.bf16.mxu0 0
  %1155 = vmatpush2.bf16.msra.mxu0 0
  %1156 = vmatprep.subr.bf16.mxu0 0
  %1157 = vmatpush2.bf16.msra.mxu0 0
  %1158 = vmatprep.subr.bf16.mxu0 0
  %1159 = vmatpush2.bf16.msra.mxu0 0
  %1160 = vmatprep.subr.bf16.mxu0 0
  %1161 = vmatpush2.bf16.msra.mxu0 0
  %1162 = vmatprep.subr.bf16.mxu0 0
  %1163 = vmatpush2.bf16.msra.mxu0 0
  %1164 = vmatprep.subr.bf16.mxu0 0
  %1165 = vmatpush2.bf16.msra.mxu0 0
  %1166 = vmatprep.mubr.bf16.mxu0 0
  %1167 = vmatmul.mubr.bf16.gmra.mxu0 %v1009
  %v1168 = vpop.f32.mrf.mxu0
  %v1169 = vadd.f32 %v1128, %v1168
  %v1170 = vpop.f32.mrf.mxu0
  %v1171 = vadd.f32 %v1130, %v1170
  %v1172 = vpop.f32.mrf.mxu0
  %v1173 = vpop.f32.mrf.mxu0
  %1174 = vdwg.mxu0
  %1175 = vmatprep.subr.bf16.mxu0 %v809
  %1176 = vmatpush1.bf16.msra.mxu0 %v808
  %1177 = vmatprep.subr.bf16.mxu0 %v802
  %1178 = vmatpush1.bf16.msra.mxu0 %v801
  %1179 = vmatprep.subr.bf16.mxu0 %v795
  %1180 = vmatpush1.bf16.msra.mxu0 %v794
  %1181 = vmatprep.subr.bf16.mxu0 %v788
  %1182 = vmatpush1.bf16.msra.mxu0 %v787
  %1183 = vmatprep.subr.bf16.mxu0 %v781
  %1184 = vmatpush1.bf16.msra.mxu0 %v780
  %1185 = vmatprep.subr.bf16.mxu0 %v774
  %1186 = vmatpush1.bf16.msra.mxu0 %v773
  %1187 = vmatprep.subr.bf16.mxu0 %v767
  %1188 = vmatpush1.bf16.msra.mxu0 %v766
  %1189 = vmatprep.subr.bf16.mxu0 %v760
  %1190 = vmatpush1.bf16.msra.mxu0 %v759
  %1191 = vmatprep.subr.bf16.mxu0 %v865
  %1192 = vmatpush2.bf16.msra.mxu0 %v864
  %1193 = vmatprep.subr.bf16.mxu0 %v858
  %1194 = vmatpush2.bf16.msra.mxu0 %v857
  %1195 = vmatprep.subr.bf16.mxu0 %v851
  %1196 = vmatpush2.bf16.msra.mxu0 %v850
  %1197 = vmatprep.subr.bf16.mxu0 %v844
  %1198 = vmatpush2.bf16.msra.mxu0 %v843
  %1199 = vmatprep.subr.bf16.mxu0 %v837
  %1200 = vmatpush2.bf16.msra.mxu0 %v836
  %1201 = vmatprep.subr.bf16.mxu0 %v830
  %1202 = vmatpush2.bf16.msra.mxu0 %v829
  %1203 = vmatprep.subr.bf16.mxu0 %v823
  %1204 = vmatpush2.bf16.msra.mxu0 %v822
  %1205 = vmatprep.subr.bf16.mxu0 %v816
  %1206 = vmatpush2.bf16.msra.mxu0 %v815
  %1207 = vmatprep.mubr.bf16.mxu0 %v176
  %1208 = vmatmul.mubr.bf16.gmra.mxu0 %v175
  %v1209 = vpop.f32.mrf.mxu0
  %v1210 = vadd.f32 %v343, %v1209
  %v1211 = vpop.f32.mrf.mxu0
  %v1212 = vadd.f32 %v347, %v1211
  %v1213 = vpop.f32.mrf.mxu0
  %v1214 = vpop.f32.mrf.mxu0
  %1215 = vdwg.mxu0
  %1216 = vmatprep.subr.bf16.mxu0 0
  %1217 = vmatpush1.bf16.msra.mxu0 0
  %1218 = vmatprep.subr.bf16.mxu0 0
  %1219 = vmatpush1.bf16.msra.mxu0 0
  %1220 = vmatprep.subr.bf16.mxu0 0
  %1221 = vmatpush1.bf16.msra.mxu0 0
  %1222 = vmatprep.subr.bf16.mxu0 0
  %1223 = vmatpush1.bf16.msra.mxu0 0
  %1224 = vmatprep.subr.bf16.mxu0 0
  %1225 = vmatpush1.bf16.msra.mxu0 0
  %1226 = vmatprep.subr.bf16.mxu0 0
  %1227 = vmatpush1.bf16.msra.mxu0 0
  %1228 = vmatprep.subr.bf16.mxu0 %v879
  %1229 = vmatpush1.bf16.msra.mxu0 %v878
  %1230 = vmatprep.subr.bf16.mxu0 %v872
  %1231 = vmatpush1.bf16.msra.mxu0 %v871
  %1232 = vmatprep.subr.bf16.mxu0 0
  %1233 = vmatpush2.bf16.msra.mxu0 0
  %1234 = vmatprep.subr.bf16.mxu0 0
  %1235 = vmatpush2.bf16.msra.mxu0 0
  %1236 = vmatprep.subr.bf16.mxu0 0
  %1237 = vmatpush2.bf16.msra.mxu0 0
  %1238 = vmatprep.subr.bf16.mxu0 0
  %1239 = vmatpush2.bf16.msra.mxu0 0
  %1240 = vmatprep.subr.bf16.mxu0 0
  %1241 = vmatpush2.bf16.msra.mxu0 0
  %1242 = vmatprep.subr.bf16.mxu0 0
  %1243 = vmatpush2.bf16.msra.mxu0 0
  %1244 = vmatprep.subr.bf16.mxu0 0
  %1245 = vmatpush2.bf16.msra.mxu0 0
  %1246 = vmatprep.subr.bf16.mxu0 0
  %1247 = vmatpush2.bf16.msra.mxu0 0
  %1248 = vmatprep.mubr.bf16.mxu0 0
  %1249 = vmatmul.mubr.bf16.gmra.mxu0 %v1009
  %v1250 = vpop.f32.mrf.mxu0
  %v1251 = vadd.f32 %v1210, %v1250
  %v1252 = vpop.f32.mrf.mxu0
  %v1253 = vadd.f32 %v1212, %v1252
  %v1254 = vpop.f32.mrf.mxu0
  %v1255 = vpop.f32.mrf.mxu0
  %1256 = vdwg.mxu0
  %1257 = vmatprep.subr.bf16.mxu0 0
  %1258 = vmatpush1.bf16.msra.mxu0 %v810
  %1259 = vmatprep.subr.bf16.mxu0 0
  %1260 = vmatpush1.bf16.msra.mxu0 %v803
  %1261 = vmatprep.subr.bf16.mxu0 0
  %1262 = vmatpush1.bf16.msra.mxu0 %v796
  %1263 = vmatprep.subr.bf16.mxu0 0
  %1264 = vmatpush1.bf16.msra.mxu0 %v789
  %1265 = vmatprep.subr.bf16.mxu0 0
  %1266 = vmatpush1.bf16.msra.mxu0 %v782
  %1267 = vmatprep.subr.bf16.mxu0 0
  %1268 = vmatpush1.bf16.msra.mxu0 %v775
  %1269 = vmatprep.subr.bf16.mxu0 0
  %1270 = vmatpush1.bf16.msra.mxu0 %v768
  %1271 = vmatprep.subr.bf16.mxu0 0
  %1272 = vmatpush1.bf16.msra.mxu0 %v761
  %1273 = vmatprep.subr.bf16.mxu0 0
  %1274 = vmatpush2.bf16.msra.mxu0 %v866
  %1275 = vmatprep.subr.bf16.mxu0 0
  %1276 = vmatpush2.bf16.msra.mxu0 %v859
  %1277 = vmatprep.subr.bf16.mxu0 0
  %1278 = vmatpush2.bf16.msra.mxu0 %v852
  %1279 = vmatprep.subr.bf16.mxu0 0
  %1280 = vmatpush2.bf16.msra.mxu0 %v845
  %1281 = vmatprep.subr.bf16.mxu0 0
  %1282 = vmatpush2.bf16.msra.mxu0 %v838
  %1283 = vmatprep.subr.bf16.mxu0 0
  %1284 = vmatpush2.bf16.msra.mxu0 %v831
  %1285 = vmatprep.subr.bf16.mxu0 0
  %1286 = vmatpush2.bf16.msra.mxu0 %v824
  %1287 = vmatprep.subr.bf16.mxu0 0
  %1288 = vmatpush2.bf16.msra.mxu0 %v817
  %1289 = vmatprep.mubr.bf16.mxu0 %v176
  %1290 = vmatmul.mubr.bf16.gmra.mxu0 %v175
  %v1291 = vpop.f32.mrf.mxu0
  %v1292 = vadd.f32 %v351, %v1291
  %v1293 = vpop.f32.mrf.mxu0
  %v1294 = vpop.f32.mrf.mxu0
  %v1295 = vpop.f32.mrf.mxu0
  %1296 = vdwg.mxu0
  %1297 = vmatprep.subr.bf16.mxu0 0
  %1298 = vmatpush1.bf16.msra.mxu0 0
  %1299 = vmatprep.subr.bf16.mxu0 0
  %1300 = vmatpush1.bf16.msra.mxu0 0
  %1301 = vmatprep.subr.bf16.mxu0 0
  %1302 = vmatpush1.bf16.msra.mxu0 0
  %1303 = vmatprep.subr.bf16.mxu0 0
  %1304 = vmatpush1.bf16.msra.mxu0 0
  %1305 = vmatprep.subr.bf16.mxu0 0
  %1306 = vmatpush1.bf16.msra.mxu0 0
  %1307 = vmatprep.subr.bf16.mxu0 0
  %1308 = vmatpush1.bf16.msra.mxu0 0
  %1309 = vmatprep.subr.bf16.mxu0 0
  %1310 = vmatpush1.bf16.msra.mxu0 %v880
  %1311 = vmatprep.subr.bf16.mxu0 0
  %1312 = vmatpush1.bf16.msra.mxu0 %v873
  %1313 = vmatprep.subr.bf16.mxu0 0
  %1314 = vmatpush2.bf16.msra.mxu0 0
  %1315 = vmatprep.subr.bf16.mxu0 0
  %1316 = vmatpush2.bf16.msra.mxu0 0
  %1317 = vmatprep.subr.bf16.mxu0 0
  %1318 = vmatpush2.bf16.msra.mxu0 0
  %1319 = vmatprep.subr.bf16.mxu0 0
  %1320 = vmatpush2.bf16.msra.mxu0 0
  %1321 = vmatprep.subr.bf16.mxu0 0
  %1322 = vmatpush2.bf16.msra.mxu0 0
  %1323 = vmatprep.subr.bf16.mxu0 0
  %1324 = vmatpush2.bf16.msra.mxu0 0
  %1325 = vmatprep.subr.bf16.mxu0 0
  %1326 = vmatpush2.bf16.msra.mxu0 0
  %1327 = vmatprep.subr.bf16.mxu0 0
  %1328 = vmatpush2.bf16.msra.mxu0 0
  %1329 = vmatprep.mubr.bf16.mxu0 0
  %1330 = vmatmul.mubr.bf16.gmra.mxu0 %v1009
  %v1331 = vpop.f32.mrf.mxu0
  %v1332 = vadd.f32 %v1292, %v1331
  %v1333 = vpop.f32.mrf.mxu0
  %v1334 = vpop.f32.mrf.mxu0
  %v1335 = vpop.f32.mrf.mxu0
  %1336 = vdwg.mxu0
  %v1337 = vmax.f32 %v1087, 0.0
  %v1338 = vmax.f32 %v1089, 0.0
  %v1339 = vmax.f32 %v1169, 0.0
  %v1340 = vmax.f32 %v1171, 0.0
  %v1341 = vmax.f32 %v1251, 0.0
  %v1342 = vmax.f32 %v1253, 0.0
  %v1343 = vmax.f32 %v1332, 0.0
  %v1344 = vpack.c.bf16 %v1337, %v1337
  %v1345 = vpack.c.bf16 %v1338, %v1338
  %v1346 = vpack.c.bf16 %v1339, %v1339
  %v1347 = vpack.c.bf16 %v1340, %v1340
  %v1348 = vpack.c.bf16 %v1341, %v1341
  %v1349 = vpack.c.bf16 %v1342, %v1342
  %v1350 = vpack.c.bf16 %v1343, %v1343
  %v1351 = vld [vmem:[%s5] sm:$0xff]
  %v1352 = vld [vmem:[%s5 + $0x8] sm:$0xff]
  %v1353 = vld [vmem:[%s5 + $0x10] sm:$0xff]
  %v1354 = vld [vmem:[%s5 + $0x18] sm:$0xff]
  %v1355 = vld [vmem:[%s5 + $0x20] sm:$0xff]
  %v1356 = vld [vmem:[%s5 + $0x28] sm:$0xff]
  %v1357 = vld [vmem:[%s5 + $0x30] sm:$0xf]
  %v1358 = vld [vmem:[%s5 + $0x34] sm:$0xff]
  %v1359 = vld [vmem:[%s5 + $0x3c] sm:$0xff]
  %v1360 = vld [vmem:[%s5 + $0x44] sm:$0xff]
  %v1361 = vld [vmem:[%s5 + $0x4c] sm:$0xff]
  %v1362 = vld [vmem:[%s5 + $0x54] sm:$0xff]
  %v1363 = vld [vmem:[%s5 + $0x5c] sm:$0xff]
  %v1364 = vld [vmem:[%s5 + $0x64] sm:$0xf]
  %v1365 = vld [vmem:[%s5 + $0x68] sm:$0xff]
  %v1366 = vld [vmem:[%s5 + $0x70] sm:$0xff]
  %v1367 = vld [vmem:[%s5 + $0x78] sm:$0xff]
  %v1368 = vld [vmem:[%s5 + $0x80] sm:$0xff]
  %v1369 = vld [vmem:[%s5 + $0x88] sm:$0xff]
  %v1370 = vld [vmem:[%s5 + $0x90] sm:$0xff]
  %v1371 = vld [vmem:[%s5 + $0x98] sm:$0xf]
  %v1372 = vld [vmem:[%s5 + $0x9c] sm:$0xff]
  %v1373 = vld [vmem:[%s5 + $0xa4] sm:$0xff]
  %v1374 = vld [vmem:[%s5 + $0xac] sm:$0xff]
  %v1375 = vld [vmem:[%s5 + $0xb4] sm:$0xff]
  %v1376 = vld [vmem:[%s5 + $0xbc] sm:$0xff]
  %v1377 = vld [vmem:[%s5 + $0xc4] sm:$0xff]
  %v1378 = vld [vmem:[%s5 + $0xcc] sm:$0xf]
  %v1379 = vld [vmem:[%s5 + $0xd0] sm:$0xff]
  %v1380 = vld [vmem:[%s5 + $0xd8] sm:$0xff]
  %v1381 = vld [vmem:[%s5 + $0xe0] sm:$0xff]
  %v1382 = vld [vmem:[%s5 + $0xe8] sm:$0xff]
  %v1383 = vld [vmem:[%s5 + $0xf0] sm:$0xff]
  %v1384 = vld [vmem:[%s5 + $0xf8] sm:$0xff]
  %v1385 = vld [vmem:[%s5 + $0x100] sm:$0xf]
  %v1386 = vld [vmem:[%s5 + $0x104] sm:$0xff]
  %v1387 = vld [vmem:[%s5 + $0x10c] sm:$0xff]
  %v1388 = vld [vmem:[%s5 + $0x114] sm:$0xff]
  %v1389 = vld [vmem:[%s5 + $0x11c] sm:$0xff]
  %v1390 = vld [vmem:[%s5 + $0x124] sm:$0xff]
  %v1391 = vld [vmem:[%s5 + $0x12c] sm:$0xff]
  %v1392 = vld [vmem:[%s5 + $0x134] sm:$0xf]
  %v1393 = vld [vmem:[%s5 + $0x138] sm:$0xff]
  %v1394 = vld [vmem:[%s5 + $0x140] sm:$0xff]
  %v1395 = vld [vmem:[%s5 + $0x148] sm:$0xff]
  %v1396 = vld [vmem:[%s5 + $0x150] sm:$0xff]
  %v1397 = vld [vmem:[%s5 + $0x158] sm:$0xff]
  %v1398 = vld [vmem:[%s5 + $0x160] sm:$0xff]
  %v1399 = vld [vmem:[%s5 + $0x168] sm:$0xf]
  %v1400 = vld [vmem:[%s5 + $0x16c] sm:$0xff]
  %v1401 = vld [vmem:[%s5 + $0x174] sm:$0xff]
  %v1402 = vld [vmem:[%s5 + $0x17c] sm:$0xff]
  %v1403 = vld [vmem:[%s5 + $0x184] sm:$0xff]
  %v1404 = vld [vmem:[%s5 + $0x18c] sm:$0xff]
  %v1405 = vld [vmem:[%s5 + $0x194] sm:$0xff]
  %v1406 = vld [vmem:[%s5 + $0x19c] sm:$0xf]
  %v1407 = vld [vmem:[%s5 + $0x1a0] sm:$0xff]
  %v1408 = vld [vmem:[%s5 + $0x1a8] sm:$0xff]
  %v1409 = vld [vmem:[%s5 + $0x1b0] sm:$0xff]
  %v1410 = vld [vmem:[%s5 + $0x1b8] sm:$0xff]
  %v1411 = vld [vmem:[%s5 + $0x1c0] sm:$0xff]
  %v1412 = vld [vmem:[%s5 + $0x1c8] sm:$0xff]
  %v1413 = vld [vmem:[%s5 + $0x1d0] sm:$0xf]
  %v1414 = vld [vmem:[%s5 + $0x1d4] sm:$0xff]
  %v1415 = vld [vmem:[%s5 + $0x1dc] sm:$0xff]
  %v1416 = vld [vmem:[%s5 + $0x1e4] sm:$0xff]
  %v1417 = vld [vmem:[%s5 + $0x1ec] sm:$0xff]
  %v1418 = vld [vmem:[%s5 + $0x1f4] sm:$0xff]
  %v1419 = vld [vmem:[%s5 + $0x1fc] sm:$0xff]
  %v1420 = vld [vmem:[%s5 + $0x204] sm:$0xf]
  %v1421 = vld [vmem:[%s5 + $0x208] sm:$0xff]
  %v1422 = vld [vmem:[%s5 + $0x210] sm:$0xff]
  %v1423 = vld [vmem:[%s5 + $0x218] sm:$0xff]
  %v1424 = vld [vmem:[%s5 + $0x220] sm:$0xff]
  %v1425 = vld [vmem:[%s5 + $0x228] sm:$0xff]
  %v1426 = vld [vmem:[%s5 + $0x230] sm:$0xff]
  %v1427 = vld [vmem:[%s5 + $0x238] sm:$0xf]
  %v1428 = vld [vmem:[%s5 + $0x23c] sm:$0xff]
  %v1429 = vld [vmem:[%s5 + $0x244] sm:$0xff]
  %v1430 = vld [vmem:[%s5 + $0x24c] sm:$0xff]
  %v1431 = vld [vmem:[%s5 + $0x254] sm:$0xff]
  %v1432 = vld [vmem:[%s5 + $0x25c] sm:$0xff]
  %v1433 = vld [vmem:[%s5 + $0x264] sm:$0xff]
  %v1434 = vld [vmem:[%s5 + $0x26c] sm:$0xf]
  %v1435 = vld [vmem:[%s5 + $0x270] sm:$0xff]
  %v1436 = vld [vmem:[%s5 + $0x278] sm:$0xff]
  %v1437 = vld [vmem:[%s5 + $0x280] sm:$0xff]
  %v1438 = vld [vmem:[%s5 + $0x288] sm:$0xff]
  %v1439 = vld [vmem:[%s5 + $0x290] sm:$0xff]
  %v1440 = vld [vmem:[%s5 + $0x298] sm:$0xff]
  %v1441 = vld [vmem:[%s5 + $0x2a0] sm:$0xf]
  %v1442 = vld [vmem:[%s5 + $0x2a4] sm:$0xff]
  %v1443 = vld [vmem:[%s5 + $0x2ac] sm:$0xff]
  %v1444 = vld [vmem:[%s5 + $0x2b4] sm:$0xff]
  %v1445 = vld [vmem:[%s5 + $0x2bc] sm:$0xff]
  %v1446 = vld [vmem:[%s5 + $0x2c4] sm:$0xff]
  %v1447 = vld [vmem:[%s5 + $0x2cc] sm:$0xff]
  %v1448 = vld [vmem:[%s5 + $0x2d4] sm:$0xf]
  %v1449 = vld [vmem:[%s5 + $0x2d8] sm:$0xff]
  %v1450 = vld [vmem:[%s5 + $0x2e0] sm:$0xff]
  %v1451 = vld [vmem:[%s5 + $0x2e8] sm:$0xff]
  %v1452 = vld [vmem:[%s5 + $0x2f0] sm:$0xff]
  %v1453 = vld [vmem:[%s5 + $0x2f8] sm:$0xff]
  %v1454 = vld [vmem:[%s5 + $0x300] sm:$0xff]
  %v1455 = vld [vmem:[%s5 + $0x308] sm:$0xf]
  %v1456 = vld [vmem:[%s5 + $0x30c] sm:$0xff]
  %v1457 = vld [vmem:[%s5 + $0x314] sm:$0xff]
  %v1458 = vld [vmem:[%s5 + $0x31c] sm:$0xff]
  %v1459 = vld [vmem:[%s5 + $0x324] sm:$0xff]
  %v1460 = vld [vmem:[%s5 + $0x32c] sm:$0xff]
  %v1461 = vld [vmem:[%s5 + $0x334] sm:$0xff]
  %v1462 = vld [vmem:[%s5 + $0x33c] sm:$0xf]
  %v1463 = vld [vmem:[%s5 + $0x340] sm:$0xff]
  %v1464 = vld [vmem:[%s5 + $0x348] sm:$0xff]
  %v1465 = vld [vmem:[%s5 + $0x350] sm:$0xff]
  %v1466 = vld [vmem:[%s5 + $0x358] sm:$0xff]
  %v1467 = vld [vmem:[%s5 + $0x360] sm:$0xff]
  %v1468 = vld [vmem:[%s5 + $0x368] sm:$0xff]
  %v1469 = vld [vmem:[%s5 + $0x370] sm:$0xf]
  %v1470 = vld [vmem:[%s5 + $0x374] sm:$0xff]
  %v1471 = vld [vmem:[%s5 + $0x37c] sm:$0xff]
  %v1472 = vld [vmem:[%s5 + $0x384] sm:$0xff]
  %v1473 = vld [vmem:[%s5 + $0x38c] sm:$0xff]
  %v1474 = vld [vmem:[%s5 + $0x394] sm:$0xff]
  %v1475 = vld [vmem:[%s5 + $0x39c] sm:$0xff]
  %v1476 = vld [vmem:[%s5 + $0x3a4] sm:$0xf]
  %v1477 = vld [vmem:[%s5 + $0x3a8] sm:$0xff]
  %v1478 = vld [vmem:[%s5 + $0x3b0] sm:$0xff]
  %v1479 = vld [vmem:[%s5 + $0x3b8] sm:$0xff]
  %v1480 = vld [vmem:[%s5 + $0x3c0] sm:$0xff]
  %v1481 = vld [vmem:[%s5 + $0x3c8] sm:$0xff]
  %v1482 = vld [vmem:[%s5 + $0x3d0] sm:$0xff]
  %v1483 = vld [vmem:[%s5 + $0x3d8] sm:$0xf]
  %v1484 = vld [vmem:[%s5 + $0x3dc] sm:$0xff]
  %v1485 = vld [vmem:[%s5 + $0x3e4] sm:$0xff]
  %v1486 = vld [vmem:[%s5 + $0x3ec] sm:$0xff]
  %v1487 = vld [vmem:[%s5 + $0x3f4] sm:$0xff]
  %v1488 = vld [vmem:[%s5 + $0x3fc] sm:$0xff]
  %v1489 = vld [vmem:[%s5 + $0x404] sm:$0xff]
  %v1490 = vld [vmem:[%s5 + $0x40c] sm:$0xf]
  %v1491 = vld [vmem:[%s5 + $0x410] sm:$0xff]
  %v1492 = vld [vmem:[%s5 + $0x418] sm:$0xff]
  %v1493 = vld [vmem:[%s5 + $0x420] sm:$0xff]
  %v1494 = vld [vmem:[%s5 + $0x428] sm:$0xff]
  %v1495 = vld [vmem:[%s5 + $0x430] sm:$0xff]
  %v1496 = vld [vmem:[%s5 + $0x438] sm:$0xff]
  %v1497 = vld [vmem:[%s5 + $0x440] sm:$0xf]
  %v1498 = vld [vmem:[%s5 + $0x444] sm:$0xff]
  %v1499 = vld [vmem:[%s5 + $0x44c] sm:$0xff]
  %v1500 = vld [vmem:[%s5 + $0x454] sm:$0xff]
  %v1501 = vld [vmem:[%s5 + $0x45c] sm:$0xff]
  %v1502 = vld [vmem:[%s5 + $0x464] sm:$0xff]
  %v1503 = vld [vmem:[%s5 + $0x46c] sm:$0xff]
  %v1504 = vld [vmem:[%s5 + $0x474] sm:$0xf]
  %v1505 = vld [vmem:[%s5 + $0x478] sm:$0xff]
  %v1506 = vld [vmem:[%s5 + $0x480] sm:$0xff]
  %v1507 = vld [vmem:[%s5 + $0x488] sm:$0xff]
  %v1508 = vld [vmem:[%s5 + $0x490] sm:$0xff]
  %v1509 = vld [vmem:[%s5 + $0x498] sm:$0xff]
  %v1510 = vld [vmem:[%s5 + $0x4a0] sm:$0xff]
  %v1511 = vld [vmem:[%s5 + $0x4a8] sm:$0xf]
  %v1512 = vld [vmem:[%s5 + $0x4ac] sm:$0xff]
  %v1513 = vld [vmem:[%s5 + $0x4b4] sm:$0xff]
  %v1514 = vld [vmem:[%s5 + $0x4bc] sm:$0xff]
  %v1515 = vld [vmem:[%s5 + $0x4c4] sm:$0xff]
  %v1516 = vld [vmem:[%s5 + $0x4cc] sm:$0xff]
  %v1517 = vld [vmem:[%s5 + $0x4d4] sm:$0xff]
  %v1518 = vld [vmem:[%s5 + $0x4dc] sm:$0xf]
  %v1519 = vld [vmem:[%s5 + $0x4e0] sm:$0xff]
  %v1520 = vld [vmem:[%s5 + $0x4e8] sm:$0xff]
  %v1521 = vld [vmem:[%s5 + $0x4f0] sm:$0xff]
  %v1522 = vld [vmem:[%s5 + $0x4f8] sm:$0xff]
  %v1523 = vld [vmem:[%s5 + $0x500] sm:$0xff]
  %v1524 = vld [vmem:[%s5 + $0x508] sm:$0xff]
  %v1525 = vld [vmem:[%s5 + $0x510] sm:$0xf]
  %v1526 = vld [vmem:[%s5 + $0x514] sm:$0xff]
  %v1527 = vld [vmem:[%s5 + $0x51c] sm:$0xff]
  %v1528 = vld [vmem:[%s5 + $0x524] sm:$0xff]
  %v1529 = vld [vmem:[%s5 + $0x52c] sm:$0xff]
  %v1530 = vld [vmem:[%s5 + $0x534] sm:$0xff]
  %v1531 = vld [vmem:[%s5 + $0x53c] sm:$0xff]
  %v1532 = vld [vmem:[%s5 + $0x544] sm:$0xf]
  %v1533 = vld [vmem:[%s5 + $0x548] sm:$0xff]
  %v1534 = vld [vmem:[%s5 + $0x550] sm:$0xff]
  %v1535 = vld [vmem:[%s5 + $0x558] sm:$0xff]
  %v1536 = vld [vmem:[%s5 + $0x560] sm:$0xff]
  %v1537 = vld [vmem:[%s5 + $0x568] sm:$0xff]
  %v1538 = vld [vmem:[%s5 + $0x570] sm:$0xff]
  %v1539 = vld [vmem:[%s5 + $0x578] sm:$0xf]
  %v1540 = vld [vmem:[%s5 + $0x57c] sm:$0xff]
  %v1541 = vld [vmem:[%s5 + $0x584] sm:$0xff]
  %v1542 = vld [vmem:[%s5 + $0x58c] sm:$0xff]
  %v1543 = vld [vmem:[%s5 + $0x594] sm:$0xff]
  %v1544 = vld [vmem:[%s5 + $0x59c] sm:$0xff]
  %v1545 = vld [vmem:[%s5 + $0x5a4] sm:$0xff]
  %v1546 = vld [vmem:[%s5 + $0x5ac] sm:$0xf]
  %v1547 = vld [vmem:[%s5 + $0x5b0] sm:$0xff]
  %v1548 = vld [vmem:[%s5 + $0x5b8] sm:$0xff]
  %v1549 = vld [vmem:[%s5 + $0x5c0] sm:$0xff]
  %v1550 = vld [vmem:[%s5 + $0x5c8] sm:$0xff]
  %v1551 = vld [vmem:[%s5 + $0x5d0] sm:$0xff]
  %v1552 = vld [vmem:[%s5 + $0x5d8] sm:$0xff]
  %v1553 = vld [vmem:[%s5 + $0x5e0] sm:$0xf]
  %v1554 = vld [vmem:[%s5 + $0x5e4] sm:$0xff]
  %v1555 = vld [vmem:[%s5 + $0x5ec] sm:$0xff]
  %v1556 = vld [vmem:[%s5 + $0x5f4] sm:$0xff]
  %v1557 = vld [vmem:[%s5 + $0x5fc] sm:$0xff]
  %v1558 = vld [vmem:[%s5 + $0x604] sm:$0xff]
  %v1559 = vld [vmem:[%s5 + $0x60c] sm:$0xff]
  %v1560 = vld [vmem:[%s5 + $0x614] sm:$0xf]
  %v1561 = vld [vmem:[%s5 + $0x618] sm:$0xff]
  %v1562 = vld [vmem:[%s5 + $0x620] sm:$0xff]
  %v1563 = vld [vmem:[%s5 + $0x628] sm:$0xff]
  %v1564 = vld [vmem:[%s5 + $0x630] sm:$0xff]
  %v1565 = vld [vmem:[%s5 + $0x638] sm:$0xff]
  %v1566 = vld [vmem:[%s5 + $0x640] sm:$0xff]
  %v1567 = vld [vmem:[%s5 + $0x648] sm:$0xf]
  %v1568 = vld [vmem:[%s5 + $0x64c] sm:$0xff]
  %v1569 = vld [vmem:[%s5 + $0x654] sm:$0xff]
  %v1570 = vld [vmem:[%s5 + $0x65c] sm:$0xff]
  %v1571 = vld [vmem:[%s5 + $0x664] sm:$0xff]
  %v1572 = vld [vmem:[%s5 + $0x66c] sm:$0xff]
  %v1573 = vld [vmem:[%s5 + $0x674] sm:$0xff]
  %v1574 = vld [vmem:[%s5 + $0x67c] sm:$0xf]
  %v1575 = vld [vmem:[%s5 + $0x680] sm:$0xff]
  %v1576 = vld [vmem:[%s5 + $0x688] sm:$0xff]
  %v1577 = vld [vmem:[%s5 + $0x690] sm:$0xff]
  %v1578 = vld [vmem:[%s5 + $0x698] sm:$0xff]
  %v1579 = vld [vmem:[%s5 + $0x6a0] sm:$0xff]
  %v1580 = vld [vmem:[%s5 + $0x6a8] sm:$0xff]
  %v1581 = vld [vmem:[%s5 + $0x6b0] sm:$0xf]
  %v1582 = vld [vmem:[%s5 + $0x6b4] sm:$0xff]
  %v1583 = vld [vmem:[%s5 + $0x6bc] sm:$0xff]
  %v1584 = vld [vmem:[%s5 + $0x6c4] sm:$0xff]
  %v1585 = vld [vmem:[%s5 + $0x6cc] sm:$0xff]
  %v1586 = vld [vmem:[%s5 + $0x6d4] sm:$0xff]
  %v1587 = vld [vmem:[%s5 + $0x6dc] sm:$0xff]
  %v1588 = vld [vmem:[%s5 + $0x6e4] sm:$0xf]
  %v1589 = vld [vmem:[%s5 + $0x6e8] sm:$0xff]
  %v1590 = vld [vmem:[%s5 + $0x6f0] sm:$0xff]
  %v1591 = vld [vmem:[%s5 + $0x6f8] sm:$0xff]
  %v1592 = vld [vmem:[%s5 + $0x700] sm:$0xff]
  %v1593 = vld [vmem:[%s5 + $0x708] sm:$0xff]
  %v1594 = vld [vmem:[%s5 + $0x710] sm:$0xff]
  %v1595 = vld [vmem:[%s5 + $0x718] sm:$0xf]
  %v1596 = vld [vmem:[%s5 + $0x71c] sm:$0xff]
  %v1597 = vld [vmem:[%s5 + $0x724] sm:$0xff]
  %v1598 = vld [vmem:[%s5 + $0x72c] sm:$0xff]
  %v1599 = vld [vmem:[%s5 + $0x734] sm:$0xff]
  %v1600 = vld [vmem:[%s5 + $0x73c] sm:$0xff]
  %v1601 = vld [vmem:[%s5 + $0x744] sm:$0xff]
  %v1602 = vld [vmem:[%s5 + $0x74c] sm:$0xf]
  %v1603 = vld [vmem:[%s5 + $0x750] sm:$0xff]
  %v1604 = vld [vmem:[%s5 + $0x758] sm:$0xff]
  %v1605 = vld [vmem:[%s5 + $0x760] sm:$0xff]
  %v1606 = vld [vmem:[%s5 + $0x768] sm:$0xff]
  %v1607 = vld [vmem:[%s5 + $0x770] sm:$0xff]
  %v1608 = vld [vmem:[%s5 + $0x778] sm:$0xff]
  %v1609 = vld [vmem:[%s5 + $0x780] sm:$0xf]
  %v1610 = vld [vmem:[%s5 + $0x784] sm:$0xff]
  %v1611 = vld [vmem:[%s5 + $0x78c] sm:$0xff]
  %v1612 = vld [vmem:[%s5 + $0x794] sm:$0xff]
  %v1613 = vld [vmem:[%s5 + $0x79c] sm:$0xff]
  %v1614 = vld [vmem:[%s5 + $0x7a4] sm:$0xff]
  %v1615 = vld [vmem:[%s5 + $0x7ac] sm:$0xff]
  %v1616 = vld [vmem:[%s5 + $0x7b4] sm:$0xf]
  %v1617 = vld [vmem:[%s5 + $0x7b8] sm:$0xff]
  %v1618 = vld [vmem:[%s5 + $0x7c0] sm:$0xff]
  %v1619 = vld [vmem:[%s5 + $0x7c8] sm:$0xff]
  %v1620 = vld [vmem:[%s5 + $0x7d0] sm:$0xff]
  %v1621 = vld [vmem:[%s5 + $0x7d8] sm:$0xff]
  %v1622 = vld [vmem:[%s5 + $0x7e0] sm:$0xff]
  %v1623 = vld [vmem:[%s5 + $0x7e8] sm:$0xf]
  %v1624 = vld [vmem:[%s5 + $0x7ec] sm:$0xff]
  %v1625 = vld [vmem:[%s5 + $0x7f4] sm:$0xff]
  %v1626 = vld [vmem:[%s5 + $0x7fc] sm:$0xff]
  %v1627 = vld [vmem:[%s5 + $0x804] sm:$0xff]
  %v1628 = vld [vmem:[%s5 + $0x80c] sm:$0xff]
  %v1629 = vld [vmem:[%s5 + $0x814] sm:$0xff]
  %v1630 = vld [vmem:[%s5 + $0x81c] sm:$0xf]
  %v1631 = vld [vmem:[%s5 + $0x820] sm:$0xff]
  %v1632 = vld [vmem:[%s5 + $0x828] sm:$0xff]
  %v1633 = vld [vmem:[%s5 + $0x830] sm:$0xff]
  %v1634 = vld [vmem:[%s5 + $0x838] sm:$0xff]
  %v1635 = vld [vmem:[%s5 + $0x840] sm:$0xff]
  %v1636 = vld [vmem:[%s5 + $0x848] sm:$0xff]
  %v1637 = vld [vmem:[%s5 + $0x850] sm:$0xf]
  %v1638 = vld [vmem:[%s5 + $0x854] sm:$0xff]
  %v1639 = vld [vmem:[%s5 + $0x85c] sm:$0xff]
  %v1640 = vld [vmem:[%s5 + $0x864] sm:$0xff]
  %v1641 = vld [vmem:[%s5 + $0x86c] sm:$0xff]
  %v1642 = vld [vmem:[%s5 + $0x874] sm:$0xff]
  %v1643 = vld [vmem:[%s5 + $0x87c] sm:$0xff]
  %v1644 = vld [vmem:[%s5 + $0x884] sm:$0xf]
  %v1645 = vld [vmem:[%s5 + $0x888] sm:$0xff]
  %v1646 = vld [vmem:[%s5 + $0x890] sm:$0xff]
  %v1647 = vld [vmem:[%s5 + $0x898] sm:$0xff]
  %v1648 = vld [vmem:[%s5 + $0x8a0] sm:$0xff]
  %v1649 = vld [vmem:[%s5 + $0x8a8] sm:$0xff]
  %v1650 = vld [vmem:[%s5 + $0x8b0] sm:$0xff]
  %v1651 = vld [vmem:[%s5 + $0x8b8] sm:$0xf]
  %v1652 = vld [vmem:[%s5 + $0x8bc] sm:$0xff]
  %v1653 = vld [vmem:[%s5 + $0x8c4] sm:$0xff]
  %v1654 = vld [vmem:[%s5 + $0x8cc] sm:$0xff]
  %v1655 = vld [vmem:[%s5 + $0x8d4] sm:$0xff]
  %v1656 = vld [vmem:[%s5 + $0x8dc] sm:$0xff]
  %v1657 = vld [vmem:[%s5 + $0x8e4] sm:$0xff]
  %v1658 = vld [vmem:[%s5 + $0x8ec] sm:$0xf]
  %v1659 = vld [vmem:[%s5 + $0x8f0] sm:$0xff]
  %v1660 = vld [vmem:[%s5 + $0x8f8] sm:$0xff]
  %v1661 = vld [vmem:[%s5 + $0x900] sm:$0xff]
  %v1662 = vld [vmem:[%s5 + $0x908] sm:$0xff]
  %v1663 = vld [vmem:[%s5 + $0x910] sm:$0xff]
  %v1664 = vld [vmem:[%s5 + $0x918] sm:$0xff]
  %v1665 = vld [vmem:[%s5 + $0x920] sm:$0xf]
  %v1666 = vld [vmem:[%s5 + $0x924] sm:$0xff]
  %v1667 = vld [vmem:[%s5 + $0x92c] sm:$0xff]
  %v1668 = vld [vmem:[%s5 + $0x934] sm:$0xff]
  %v1669 = vld [vmem:[%s5 + $0x93c] sm:$0xff]
  %v1670 = vld [vmem:[%s5 + $0x944] sm:$0xff]
  %v1671 = vld [vmem:[%s5 + $0x94c] sm:$0xff]
  %v1672 = vld [vmem:[%s5 + $0x954] sm:$0xf]
  %v1673 = vld [vmem:[%s5 + $0x958] sm:$0xff]
  %v1674 = vld [vmem:[%s5 + $0x960] sm:$0xff]
  %v1675 = vld [vmem:[%s5 + $0x968] sm:$0xff]
  %v1676 = vld [vmem:[%s5 + $0x970] sm:$0xff]
  %v1677 = vld [vmem:[%s5 + $0x978] sm:$0xff]
  %v1678 = vld [vmem:[%s5 + $0x980] sm:$0xff]
  %v1679 = vld [vmem:[%s5 + $0x988] sm:$0xf]
  %v1680 = vld [vmem:[%s5 + $0x98c] sm:$0xff]
  %v1681 = vld [vmem:[%s5 + $0x994] sm:$0xff]
  %v1682 = vld [vmem:[%s5 + $0x99c] sm:$0xff]
  %v1683 = vld [vmem:[%s5 + $0x9a4] sm:$0xff]
  %v1684 = vld [vmem:[%s5 + $0x9ac] sm:$0xff]
  %v1685 = vld [vmem:[%s5 + $0x9b4] sm:$0xff]
  %v1686 = vld [vmem:[%s5 + $0x9bc] sm:$0xf]
  %v1687 = vld [vmem:[%s5 + $0x9c0] sm:$0xff]
  %v1688 = vld [vmem:[%s5 + $0x9c8] sm:$0xff]
  %v1689 = vld [vmem:[%s5 + $0x9d0] sm:$0xff]
  %v1690 = vld [vmem:[%s5 + $0x9d8] sm:$0xff]
  %v1691 = vld [vmem:[%s5 + $0x9e0] sm:$0xff]
  %v1692 = vld [vmem:[%s5 + $0x9e8] sm:$0xff]
  %v1693 = vld [vmem:[%s5 + $0x9f0] sm:$0xf]
  %v1694 = vld [vmem:[%s5 + $0x9f4] sm:$0xff]
  %v1695 = vld [vmem:[%s5 + $0x9fc] sm:$0xff]
  %v1696 = vld [vmem:[%s5 + $0xa04] sm:$0xff]
  %v1697 = vld [vmem:[%s5 + $0xa0c] sm:$0xff]
  %v1698 = vld [vmem:[%s5 + $0xa14] sm:$0xff]
  %v1699 = vld [vmem:[%s5 + $0xa1c] sm:$0xff]
  %v1700 = vld [vmem:[%s5 + $0xa24] sm:$0xf]
  %v1701 = vld [vmem:[%s5 + $0xa28] sm:$0xff]
  %v1702 = vld [vmem:[%s5 + $0xa30] sm:$0xff]
  %v1703 = vld [vmem:[%s5 + $0xa38] sm:$0xff]
  %v1704 = vld [vmem:[%s5 + $0xa40] sm:$0xff]
  %v1705 = vld [vmem:[%s5 + $0xa48] sm:$0xff]
  %v1706 = vld [vmem:[%s5 + $0xa50] sm:$0xff]
  %v1707 = vld [vmem:[%s5 + $0xa58] sm:$0xf]
  %v1708 = vld [vmem:[%s5 + $0xa5c] sm:$0xff]
  %v1709 = vld [vmem:[%s5 + $0xa64] sm:$0xff]
  %v1710 = vld [vmem:[%s5 + $0xa6c] sm:$0xff]
  %v1711 = vld [vmem:[%s5 + $0xa74] sm:$0xff]
  %v1712 = vld [vmem:[%s5 + $0xa7c] sm:$0xff]
  %v1713 = vld [vmem:[%s5 + $0xa84] sm:$0xff]
  %v1714 = vld [vmem:[%s5 + $0xa8c] sm:$0xf]
  %v1715 = vld [vmem:[%s5 + $0xa90] sm:$0xff]
  %v1716 = vld [vmem:[%s5 + $0xa98] sm:$0xff]
  %v1717 = vld [vmem:[%s5 + $0xaa0] sm:$0xff]
  %v1718 = vld [vmem:[%s5 + $0xaa8] sm:$0xff]
  %v1719 = vld [vmem:[%s5 + $0xab0] sm:$0xff]
  %v1720 = vld [vmem:[%s5 + $0xab8] sm:$0xff]
  %v1721 = vld [vmem:[%s5 + $0xac0] sm:$0xf]
  %v1722 = vld [vmem:[%s5 + $0xac4] sm:$0xff]
  %v1723 = vld [vmem:[%s5 + $0xacc] sm:$0xff]
  %v1724 = vld [vmem:[%s5 + $0xad4] sm:$0xff]
  %v1725 = vld [vmem:[%s5 + $0xadc] sm:$0xff]
  %v1726 = vld [vmem:[%s5 + $0xae4] sm:$0xff]
  %v1727 = vld [vmem:[%s5 + $0xaec] sm:$0xff]
  %v1728 = vld [vmem:[%s5 + $0xaf4] sm:$0xf]
  %v1729 = vld [vmem:[%s5 + $0xaf8] sm:$0xff]
  %v1730 = vld [vmem:[%s5 + $0xb00] sm:$0xff]
  %v1731 = vld [vmem:[%s5 + $0xb08] sm:$0xff]
  %v1732 = vld [vmem:[%s5 + $0xb10] sm:$0xff]
  %v1733 = vld [vmem:[%s5 + $0xb18] sm:$0xff]
  %v1734 = vld [vmem:[%s5 + $0xb20] sm:$0xff]
  %v1735 = vld [vmem:[%s5 + $0xb28] sm:$0xf]
  %v1736 = vld [vmem:[%s5 + $0xb2c] sm:$0xff]
  %v1737 = vld [vmem:[%s5 + $0xb34] sm:$0xff]
  %v1738 = vld [vmem:[%s5 + $0xb3c] sm:$0xff]
  %v1739 = vld [vmem:[%s5 + $0xb44] sm:$0xff]
  %v1740 = vld [vmem:[%s5 + $0xb4c] sm:$0xff]
  %v1741 = vld [vmem:[%s5 + $0xb54] sm:$0xff]
  %v1742 = vld [vmem:[%s5 + $0xb5c] sm:$0xf]
  %v1743 = vld [vmem:[%s5 + $0xb60] sm:$0xff]
  %v1744 = vld [vmem:[%s5 + $0xb68] sm:$0xff]
  %v1745 = vld [vmem:[%s5 + $0xb70] sm:$0xff]
  %v1746 = vld [vmem:[%s5 + $0xb78] sm:$0xff]
  %v1747 = vld [vmem:[%s5 + $0xb80] sm:$0xff]
  %v1748 = vld [vmem:[%s5 + $0xb88] sm:$0xff]
  %v1749 = vld [vmem:[%s5 + $0xb90] sm:$0xf]
  %v1750 = vld [vmem:[%s5 + $0xb94] sm:$0xff]
  %v1751 = vld [vmem:[%s5 + $0xb9c] sm:$0xff]
  %v1752 = vld [vmem:[%s5 + $0xba4] sm:$0xff]
  %v1753 = vld [vmem:[%s5 + $0xbac] sm:$0xff]
  %v1754 = vld [vmem:[%s5 + $0xbb4] sm:$0xff]
  %v1755 = vld [vmem:[%s5 + $0xbbc] sm:$0xff]
  %v1756 = vld [vmem:[%s5 + $0xbc4] sm:$0xf]
  %v1757 = vld [vmem:[%s5 + $0xbc8] sm:$0xff]
  %v1758 = vld [vmem:[%s5 + $0xbd0] sm:$0xff]
  %v1759 = vld [vmem:[%s5 + $0xbd8] sm:$0xff]
  %v1760 = vld [vmem:[%s5 + $0xbe0] sm:$0xff]
  %v1761 = vld [vmem:[%s5 + $0xbe8] sm:$0xff]
  %v1762 = vld [vmem:[%s5 + $0xbf0] sm:$0xff]
  %v1763 = vld [vmem:[%s5 + $0xbf8] sm:$0xf]
  %v1764 = vld [vmem:[%s5 + $0xbfc] sm:$0xff]
  %v1765 = vld [vmem:[%s5 + $0xc04] sm:$0xff]
  %v1766 = vld [vmem:[%s5 + $0xc0c] sm:$0xff]
  %v1767 = vld [vmem:[%s5 + $0xc14] sm:$0xff]
  %v1768 = vld [vmem:[%s5 + $0xc1c] sm:$0xff]
  %v1769 = vld [vmem:[%s5 + $0xc24] sm:$0xff]
  %v1770 = vld [vmem:[%s5 + $0xc2c] sm:$0xf]
  %v1771 = vld [vmem:[%s5 + $0xc30] sm:$0xff]
  %v1772 = vld [vmem:[%s5 + $0xc38] sm:$0xff]
  %v1773 = vld [vmem:[%s5 + $0xc40] sm:$0xff]
  %v1774 = vld [vmem:[%s5 + $0xc48] sm:$0xff]
  %v1775 = vld [vmem:[%s5 + $0xc50] sm:$0xff]
  %v1776 = vld [vmem:[%s5 + $0xc58] sm:$0xff]
  %v1777 = vld [vmem:[%s5 + $0xc60] sm:$0xf]
  %v1778 = vld [vmem:[%s5 + $0xc64] sm:$0xff]
  %v1779 = vld [vmem:[%s5 + $0xc6c] sm:$0xff]
  %v1780 = vld [vmem:[%s5 + $0xc74] sm:$0xff]
  %v1781 = vld [vmem:[%s5 + $0xc7c] sm:$0xff]
  %v1782 = vld [vmem:[%s5 + $0xc84] sm:$0xff]
  %v1783 = vld [vmem:[%s5 + $0xc8c] sm:$0xff]
  %v1784 = vld [vmem:[%s5 + $0xc94] sm:$0xf]
  %v1785 = vld [vmem:[%s5 + $0xc98] sm:$0xff]
  %v1786 = vld [vmem:[%s5 + $0xca0] sm:$0xff]
  %v1787 = vld [vmem:[%s5 + $0xca8] sm:$0xff]
  %v1788 = vld [vmem:[%s5 + $0xcb0] sm:$0xff]
  %v1789 = vld [vmem:[%s5 + $0xcb8] sm:$0xff]
  %v1790 = vld [vmem:[%s5 + $0xcc0] sm:$0xff]
  %v1791 = vld [vmem:[%s5 + $0xcc8] sm:$0xf]
  %v1792 = vld [vmem:[%s5 + $0xccc] sm:$0xff]
  %v1793 = vld [vmem:[%s5 + $0xcd4] sm:$0xff]
  %v1794 = vld [vmem:[%s5 + $0xcdc] sm:$0xff]
  %v1795 = vld [vmem:[%s5 + $0xce4] sm:$0xff]
  %v1796 = vld [vmem:[%s5 + $0xcec] sm:$0xff]
  %v1797 = vld [vmem:[%s5 + $0xcf4] sm:$0xff]
  %v1798 = vld [vmem:[%s5 + $0xcfc] sm:$0xf]
  %v1799 = vld [vmem:[%s5 + $0xd00] sm:$0xff]
  %v1800 = vld [vmem:[%s5 + $0xd08] sm:$0xff]
  %v1801 = vld [vmem:[%s5 + $0xd10] sm:$0xff]
  %v1802 = vld [vmem:[%s5 + $0xd18] sm:$0xff]
  %v1803 = vld [vmem:[%s5 + $0xd20] sm:$0xff]
  %v1804 = vld [vmem:[%s5 + $0xd28] sm:$0xff]
  %v1805 = vld [vmem:[%s5 + $0xd30] sm:$0xf]
  %v1806 = vld [vmem:[%s5 + $0xd34] sm:$0xff]
  %v1807 = vld [vmem:[%s5 + $0xd3c] sm:$0xff]
  %v1808 = vld [vmem:[%s5 + $0xd44] sm:$0xff]
  %v1809 = vld [vmem:[%s5 + $0xd4c] sm:$0xff]
  %v1810 = vld [vmem:[%s5 + $0xd54] sm:$0xff]
  %v1811 = vld [vmem:[%s5 + $0xd5c] sm:$0xff]
  %v1812 = vld [vmem:[%s5 + $0xd64] sm:$0xf]
  %v1813 = vld [vmem:[%s5 + $0xd68] sm:$0xff]
  %v1814 = vld [vmem:[%s5 + $0xd70] sm:$0xff]
  %v1815 = vld [vmem:[%s5 + $0xd78] sm:$0xff]
  %v1816 = vld [vmem:[%s5 + $0xd80] sm:$0xff]
  %v1817 = vld [vmem:[%s5 + $0xd88] sm:$0xff]
  %v1818 = vld [vmem:[%s5 + $0xd90] sm:$0xff]
  %v1819 = vld [vmem:[%s5 + $0xd98] sm:$0xf]
  %v1820 = vld [vmem:[%s5 + $0xd9c] sm:$0xff]
  %v1821 = vld [vmem:[%s5 + $0xda4] sm:$0xff]
  %v1822 = vld [vmem:[%s5 + $0xdac] sm:$0xff]
  %v1823 = vld [vmem:[%s5 + $0xdb4] sm:$0xff]
  %v1824 = vld [vmem:[%s5 + $0xdbc] sm:$0xff]
  %v1825 = vld [vmem:[%s5 + $0xdc4] sm:$0xff]
  %v1826 = vld [vmem:[%s5 + $0xdcc] sm:$0xf]
  %v1827 = vld [vmem:[%s5 + $0xdd0] sm:$0xff]
  %v1828 = vld [vmem:[%s5 + $0xdd8] sm:$0xff]
  %v1829 = vld [vmem:[%s5 + $0xde0] sm:$0xff]
  %v1830 = vld [vmem:[%s5 + $0xde8] sm:$0xff]
  %v1831 = vld [vmem:[%s5 + $0xdf0] sm:$0xff]
  %v1832 = vld [vmem:[%s5 + $0xdf8] sm:$0xff]
  %v1833 = vld [vmem:[%s5 + $0xe00] sm:$0xf]
  %v1834 = vld [vmem:[%s5 + $0xe04] sm:$0xff]
  %v1835 = vld [vmem:[%s5 + $0xe0c] sm:$0xff]
  %v1836 = vld [vmem:[%s5 + $0xe14] sm:$0xff]
  %v1837 = vld [vmem:[%s5 + $0xe1c] sm:$0xff]
  %v1838 = vld [vmem:[%s5 + $0xe24] sm:$0xff]
  %v1839 = vld [vmem:[%s5 + $0xe2c] sm:$0xff]
  %v1840 = vld [vmem:[%s5 + $0xe34] sm:$0xf]
  %v1841 = vld [vmem:[%s5 + $0xe38] sm:$0xff]
  %v1842 = vld [vmem:[%s5 + $0xe40] sm:$0xff]
  %v1843 = vld [vmem:[%s5 + $0xe48] sm:$0xff]
  %v1844 = vld [vmem:[%s5 + $0xe50] sm:$0xff]
  %v1845 = vld [vmem:[%s5 + $0xe58] sm:$0xff]
  %v1846 = vld [vmem:[%s5 + $0xe60] sm:$0xff]
  %v1847 = vld [vmem:[%s5 + $0xe68] sm:$0xf]
  %v1848 = vld [vmem:[%s5 + $0xe6c] sm:$0xff]
  %v1849 = vld [vmem:[%s5 + $0xe74] sm:$0xff]
  %v1850 = vld [vmem:[%s5 + $0xe7c] sm:$0xff]
  %v1851 = vld [vmem:[%s5 + $0xe84] sm:$0xff]
  %v1852 = vld [vmem:[%s5 + $0xe8c] sm:$0xff]
  %v1853 = vld [vmem:[%s5 + $0xe94] sm:$0xff]
  %v1854 = vld [vmem:[%s5 + $0xe9c] sm:$0xf]
  %v1855 = vld [vmem:[%s5 + $0xea0] sm:$0xff]
  %v1856 = vld [vmem:[%s5 + $0xea8] sm:$0xff]
  %v1857 = vld [vmem:[%s5 + $0xeb0] sm:$0xff]
  %v1858 = vld [vmem:[%s5 + $0xeb8] sm:$0xff]
  %v1859 = vld [vmem:[%s5 + $0xec0] sm:$0xff]
  %v1860 = vld [vmem:[%s5 + $0xec8] sm:$0xff]
  %v1861 = vld [vmem:[%s5 + $0xed0] sm:$0xf]
  %v1862 = vld [vmem:[%s5 + $0xed4] sm:$0xff]
  %v1863 = vld [vmem:[%s5 + $0xedc] sm:$0xff]
  %v1864 = vld [vmem:[%s5 + $0xee4] sm:$0xff]
  %v1865 = vld [vmem:[%s5 + $0xeec] sm:$0xff]
  %v1866 = vld [vmem:[%s5 + $0xef4] sm:$0xff]
  %v1867 = vld [vmem:[%s5 + $0xefc] sm:$0xff]
  %v1868 = vld [vmem:[%s5 + $0xf04] sm:$0xf]
  %v1869 = vld [vmem:[%s5 + $0xf08] sm:$0xff]
  %v1870 = vld [vmem:[%s5 + $0xf10] sm:$0xff]
  %v1871 = vld [vmem:[%s5 + $0xf18] sm:$0xff]
  %v1872 = vld [vmem:[%s5 + $0xf20] sm:$0xff]
  %v1873 = vld [vmem:[%s5 + $0xf28] sm:$0xff]
  %v1874 = vld [vmem:[%s5 + $0xf30] sm:$0xff]
  %v1875 = vld [vmem:[%s5 + $0xf38] sm:$0xf]
  %v1876 = vld [vmem:[%s5 + $0xf3c] sm:$0xff]
  %v1877 = vld [vmem:[%s5 + $0xf44] sm:$0xff]
  %v1878 = vld [vmem:[%s5 + $0xf4c] sm:$0xff]
  %v1879 = vld [vmem:[%s5 + $0xf54] sm:$0xff]
  %v1880 = vld [vmem:[%s5 + $0xf5c] sm:$0xff]
  %v1881 = vld [vmem:[%s5 + $0xf64] sm:$0xff]
  %v1882 = vld [vmem:[%s5 + $0xf6c] sm:$0xf]
  %v1883 = vld [vmem:[%s5 + $0xf70] sm:$0xff]
  %v1884 = vld [vmem:[%s5 + $0xf78] sm:$0xff]
  %v1885 = vld [vmem:[%s5 + $0xf80] sm:$0xff]
  %v1886 = vld [vmem:[%s5 + $0xf88] sm:$0xff]
  %v1887 = vld [vmem:[%s5 + $0xf90] sm:$0xff]
  %v1888 = vld [vmem:[%s5 + $0xf98] sm:$0xff]
  %v1889 = vld [vmem:[%s5 + $0xfa0] sm:$0xf]
  %v1890 = vld [vmem:[%s5 + $0xfa4] sm:$0xff]
  %v1891 = vld [vmem:[%s5 + $0xfac] sm:$0xff]
  %v1892 = vld [vmem:[%s5 + $0xfb4] sm:$0xff]
  %v1893 = vld [vmem:[%s5 + $0xfbc] sm:$0xff]
  %v1894 = vld [vmem:[%s5 + $0xfc4] sm:$0xff]
  %v1895 = vld [vmem:[%s5 + $0xfcc] sm:$0xff]
  %v1896 = vld [vmem:[%s5 + $0xfd4] sm:$0xf]
  %v1897 = vld [vmem:[%s5 + $0xfd8] sm:$0xff]
  %v1898 = vld [vmem:[%s5 + $0xfe0] sm:$0xff]
  %v1899 = vld [vmem:[%s5 + $0xfe8] sm:$0xff]
  %v1900 = vld [vmem:[%s5 + $0xff0] sm:$0xff]
  %v1901 = vld [vmem:[%s5 + $0xff8] sm:$0xff]
  %v1902 = vld [vmem:[%s5 + $0x1000] sm:$0xff]
  %v1903 = vld [vmem:[%s5 + $0x1008] sm:$0xf]
  %v1904 = vld [vmem:[%s5 + $0x100c] sm:$0xff]
  %v1905 = vld [vmem:[%s5 + $0x1014] sm:$0xff]
  %v1906 = vld [vmem:[%s5 + $0x101c] sm:$0xff]
  %v1907 = vld [vmem:[%s5 + $0x1024] sm:$0xff]
  %v1908 = vld [vmem:[%s5 + $0x102c] sm:$0xff]
  %v1909 = vld [vmem:[%s5 + $0x1034] sm:$0xff]
  %v1910 = vld [vmem:[%s5 + $0x103c] sm:$0xf]
  %v1911 = vld [vmem:[%s5 + $0x1040] sm:$0xff]
  %v1912 = vld [vmem:[%s5 + $0x1048] sm:$0xff]
  %v1913 = vld [vmem:[%s5 + $0x1050] sm:$0xff]
  %v1914 = vld [vmem:[%s5 + $0x1058] sm:$0xff]
  %v1915 = vld [vmem:[%s5 + $0x1060] sm:$0xff]
  %v1916 = vld [vmem:[%s5 + $0x1068] sm:$0xff]
  %v1917 = vld [vmem:[%s5 + $0x1070] sm:$0xf]
  %v1918 = vld [vmem:[%s5 + $0x1074] sm:$0xff]
  %v1919 = vld [vmem:[%s5 + $0x107c] sm:$0xff]
  %v1920 = vld [vmem:[%s5 + $0x1084] sm:$0xff]
  %v1921 = vld [vmem:[%s5 + $0x108c] sm:$0xff]
  %v1922 = vld [vmem:[%s5 + $0x1094] sm:$0xff]
  %v1923 = vld [vmem:[%s5 + $0x109c] sm:$0xff]
  %v1924 = vld [vmem:[%s5 + $0x10a4] sm:$0xf]
  %v1925 = vld [vmem:[%s5 + $0x10a8] sm:$0xff]
  %v1926 = vld [vmem:[%s5 + $0x10b0] sm:$0xff]
  %v1927 = vld [vmem:[%s5 + $0x10b8] sm:$0xff]
  %v1928 = vld [vmem:[%s5 + $0x10c0] sm:$0xff]
  %v1929 = vld [vmem:[%s5 + $0x10c8] sm:$0xff]
  %v1930 = vld [vmem:[%s5 + $0x10d0] sm:$0xff]
  %v1931 = vld [vmem:[%s5 + $0x10d8] sm:$0xf]
  %v1932 = vld [vmem:[%s5 + $0x10dc] sm:$0xff]
  %v1933 = vld [vmem:[%s5 + $0x10e4] sm:$0xff]
  %v1934 = vld [vmem:[%s5 + $0x10ec] sm:$0xff]
  %v1935 = vld [vmem:[%s5 + $0x10f4] sm:$0xff]
  %v1936 = vld [vmem:[%s5 + $0x10fc] sm:$0xff]
  %v1937 = vld [vmem:[%s5 + $0x1104] sm:$0xff]
  %v1938 = vld [vmem:[%s5 + $0x110c] sm:$0xf]
  %v1939 = vld [vmem:[%s5 + $0x1110] sm:$0xff]
  %v1940 = vld [vmem:[%s5 + $0x1118] sm:$0xff]
  %v1941 = vld [vmem:[%s5 + $0x1120] sm:$0xff]
  %v1942 = vld [vmem:[%s5 + $0x1128] sm:$0xff]
  %v1943 = vld [vmem:[%s5 + $0x1130] sm:$0xff]
  %v1944 = vld [vmem:[%s5 + $0x1138] sm:$0xff]
  %v1945 = vld [vmem:[%s5 + $0x1140] sm:$0xf]
  %v1946 = vld [vmem:[%s5 + $0x1144] sm:$0xff]
  %v1947 = vld [vmem:[%s5 + $0x114c] sm:$0xff]
  %v1948 = vld [vmem:[%s5 + $0x1154] sm:$0xff]
  %v1949 = vld [vmem:[%s5 + $0x115c] sm:$0xff]
  %v1950 = vld [vmem:[%s5 + $0x1164] sm:$0xff]
  %v1951 = vld [vmem:[%s5 + $0x116c] sm:$0xff]
  %v1952 = vld [vmem:[%s5 + $0x1174] sm:$0xf]
  %v1953 = vld [vmem:[%s5 + $0x1178] sm:$0xff]
  %v1954 = vld [vmem:[%s5 + $0x1180] sm:$0xff]
  %v1955 = vld [vmem:[%s5 + $0x1188] sm:$0xff]
  %v1956 = vld [vmem:[%s5 + $0x1190] sm:$0xff]
  %v1957 = vld [vmem:[%s5 + $0x1198] sm:$0xff]
  %v1958 = vld [vmem:[%s5 + $0x11a0] sm:$0xff]
  %v1959 = vld [vmem:[%s5 + $0x11a8] sm:$0xf]
  %v1960 = vld [vmem:[%s5 + $0x11ac] sm:$0xff]
  %v1961 = vld [vmem:[%s5 + $0x11b4] sm:$0xff]
  %v1962 = vld [vmem:[%s5 + $0x11bc] sm:$0xff]
  %v1963 = vld [vmem:[%s5 + $0x11c4] sm:$0xff]
  %v1964 = vld [vmem:[%s5 + $0x11cc] sm:$0xff]
  %v1965 = vld [vmem:[%s5 + $0x11d4] sm:$0xff]
  %v1966 = vld [vmem:[%s5 + $0x11dc] sm:$0xf]
  %v1967 = vld [vmem:[%s5 + $0x11e0] sm:$0xff]
  %v1968 = vld [vmem:[%s5 + $0x11e8] sm:$0xff]
  %v1969 = vld [vmem:[%s5 + $0x11f0] sm:$0xff]
  %v1970 = vld [vmem:[%s5 + $0x11f8] sm:$0xff]
  %v1971 = vld [vmem:[%s5 + $0x1200] sm:$0xff]
  %v1972 = vld [vmem:[%s5 + $0x1208] sm:$0xff]
  %v1973 = vld [vmem:[%s5 + $0x1210] sm:$0xf]
  %v1974 = vld [vmem:[%s5 + $0x1214] sm:$0xff]
  %v1975 = vld [vmem:[%s5 + $0x121c] sm:$0xff]
  %v1976 = vld [vmem:[%s5 + $0x1224] sm:$0xff]
  %v1977 = vld [vmem:[%s5 + $0x122c] sm:$0xff]
  %v1978 = vld [vmem:[%s5 + $0x1234] sm:$0xff]
  %v1979 = vld [vmem:[%s5 + $0x123c] sm:$0xff]
  %v1980 = vld [vmem:[%s5 + $0x1244] sm:$0xf]
  %v1981 = vld [vmem:[%s5 + $0x1248] sm:$0xff]
  %v1982 = vld [vmem:[%s5 + $0x1250] sm:$0xff]
  %v1983 = vld [vmem:[%s5 + $0x1258] sm:$0xff]
  %v1984 = vld [vmem:[%s5 + $0x1260] sm:$0xff]
  %v1985 = vld [vmem:[%s5 + $0x1268] sm:$0xff]
  %v1986 = vld [vmem:[%s5 + $0x1270] sm:$0xff]
  %v1987 = vld [vmem:[%s5 + $0x1278] sm:$0xf]
  %v1988 = vld [vmem:[%s5 + $0x127c] sm:$0xff]
  %v1989 = vld [vmem:[%s5 + $0x1284] sm:$0xff]
  %v1990 = vld [vmem:[%s5 + $0x128c] sm:$0xff]
  %v1991 = vld [vmem:[%s5 + $0x1294] sm:$0xff]
  %v1992 = vld [vmem:[%s5 + $0x129c] sm:$0xff]
  %v1993 = vld [vmem:[%s5 + $0x12a4] sm:$0xff]
  %v1994 = vld [vmem:[%s5 + $0x12ac] sm:$0xf]
  %v1995 = vld [vmem:[%s5 + $0x12b0] sm:$0xff]
  %v1996 = vld [vmem:[%s5 + $0x12b8] sm:$0xff]
  %v1997 = vld [vmem:[%s5 + $0x12c0] sm:$0xff]
  %v1998 = vld [vmem:[%s5 + $0x12c8] sm:$0xff]
  %v1999 = vld [vmem:[%s5 + $0x12d0] sm:$0xff]
  %v2000 = vld [vmem:[%s5 + $0x12d8] sm:$0xff]
  %v2001 = vld [vmem:[%s5 + $0x12e0] sm:$0xf]
  %v2002 = vld [vmem:[%s5 + $0x12e4] sm:$0xff]
  %v2003 = vld [vmem:[%s5 + $0x12ec] sm:$0xff]
  %v2004 = vld [vmem:[%s5 + $0x12f4] sm:$0xff]
  %v2005 = vld [vmem:[%s5 + $0x12fc] sm:$0xff]
  %v2006 = vld [vmem:[%s5 + $0x1304] sm:$0xff]
  %v2007 = vld [vmem:[%s5 + $0x130c] sm:$0xff]
  %v2008 = vld [vmem:[%s5 + $0x1314] sm:$0xf]
  %v2009 = vld [vmem:[%s5 + $0x1318] sm:$0xff]
  %v2010 = vld [vmem:[%s5 + $0x1320] sm:$0xff]
  %v2011 = vld [vmem:[%s5 + $0x1328] sm:$0xff]
  %v2012 = vld [vmem:[%s5 + $0x1330] sm:$0xff]
  %v2013 = vld [vmem:[%s5 + $0x1338] sm:$0xff]
  %v2014 = vld [vmem:[%s5 + $0x1340] sm:$0xff]
  %v2015 = vld [vmem:[%s5 + $0x1348] sm:$0xf]
  %v2016 = vld [vmem:[%s5 + $0x134c] sm:$0xff]
  %v2017 = vld [vmem:[%s5 + $0x1354] sm:$0xff]
  %v2018 = vld [vmem:[%s5 + $0x135c] sm:$0xff]
  %v2019 = vld [vmem:[%s5 + $0x1364] sm:$0xff]
  %v2020 = vld [vmem:[%s5 + $0x136c] sm:$0xff]
  %v2021 = vld [vmem:[%s5 + $0x1374] sm:$0xff]
  %v2022 = vld [vmem:[%s5 + $0x137c] sm:$0xf]
  %v2023 = vld [vmem:[%s5 + $0x1380] sm:$0xff]
  %v2024 = vld [vmem:[%s5 + $0x1388] sm:$0xff]
  %v2025 = vld [vmem:[%s5 + $0x1390] sm:$0xff]
  %v2026 = vld [vmem:[%s5 + $0x1398] sm:$0xff]
  %v2027 = vld [vmem:[%s5 + $0x13a0] sm:$0xff]
  %v2028 = vld [vmem:[%s5 + $0x13a8] sm:$0xff]
  %v2029 = vld [vmem:[%s5 + $0x13b0] sm:$0xf]
  %v2030 = vld [vmem:[%s5 + $0x13b4] sm:$0xff]
  %v2031 = vld [vmem:[%s5 + $0x13bc] sm:$0xff]
  %v2032 = vld [vmem:[%s5 + $0x13c4] sm:$0xff]
  %v2033 = vld [vmem:[%s5 + $0x13cc] sm:$0xff]
  %v2034 = vld [vmem:[%s5 + $0x13d4] sm:$0xff]
  %v2035 = vld [vmem:[%s5 + $0x13dc] sm:$0xff]
  %v2036 = vld [vmem:[%s5 + $0x13e4] sm:$0xf]
  %v2037 = vld [vmem:[%s6] sm:$0xff]
  %v2038 = vld [vmem:[%s6 + $0x8] sm:$0x1f]
  %v2041 = vlaneseq
  %v2042 = vshrl.u32 %v2041, 7
  %v2043 = vsub.s32 0, %v2042
  %v2044 = vrot.slane %v2037, %v2043
  %v2045 = vlaneseq
  %v2046 = vshrl.u32 %v2045, 7
  %v2047 = vsub.s32 1, %v2046
  %v2048 = vrot.slane %v2037, %v2047
  %v2049 = vlaneseq
  %v2050 = vshrl.u32 %v2049, 7
  %v2051 = vsub.s32 2, %v2050
  %v2052 = vrot.slane %v2037, %v2051
  %v2053 = vlaneseq
  %v2054 = vshrl.u32 %v2053, 7
  %v2055 = vsub.s32 3, %v2054
  %v2056 = vrot.slane %v2037, %v2055
  %v2057 = vlaneseq
  %v2058 = vshrl.u32 %v2057, 7
  %v2059 = vsub.s32 4, %v2058
  %v2060 = vrot.slane %v2037, %v2059
  %v2061 = vlaneseq
  %v2062 = vshrl.u32 %v2061, 7
  %v2063 = vsub.s32 5, %v2062
  %v2064 = vrot.slane %v2037, %v2063
  %v2065 = vlaneseq
  %v2066 = vshrl.u32 %v2065, 7
  %v2067 = vsub.s32 6, %v2066
  %v2068 = vrot.slane %v2037, %v2067
  %v2069 = vlaneseq
  %v2070 = vshrl.u32 %v2069, 7
  %v2071 = vsub.s32 7, %v2070
  %v2072 = vrot.slane %v2037, %v2071
  %v2073 = vlaneseq
  %v2074 = vshrl.u32 %v2073, 7
  %v2075 = vsub.s32 0, %v2074
  %v2076 = vrot.slane %v2038, %v2075
  %v2077 = vlaneseq
  %v2078 = vshrl.u32 %v2077, 7
  %v2079 = vsub.s32 1, %v2078
  %v2080 = vrot.slane %v2038, %v2079
  %v2081 = vlaneseq
  %v2082 = vshrl.u32 %v2081, 7
  %v2083 = vsub.s32 2, %v2082
  %v2084 = vrot.slane %v2038, %v2083
  %v2085 = vlaneseq
  %v2086 = vshrl.u32 %v2085, 7
  %v2087 = vsub.s32 3, %v2086
  %v2088 = vrot.slane %v2038, %v2087
  %v2089 = vlaneseq
  %v2090 = vshrl.u32 %v2089, 7
  %v2091 = vsub.s32 4, %v2090
  %v2092 = vrot.slane %v2038, %v2091
  %v2792 = vunpack.c.l.b16 %v1351
  %v2793 = vunpack.c.h.b16 %v1351
  %v2794 = vunpack.c.l.b16 %v1352
  %v2795 = vunpack.c.h.b16 %v1352
  %v2796 = vunpack.c.l.b16 %v1353
  %v2797 = vunpack.c.h.b16 %v1353
  %v2798 = vunpack.c.l.b16 %v1354
  %v2799 = vunpack.c.h.b16 %v1354
  %v2800 = vunpack.c.l.b16 %v1355
  %v2801 = vunpack.c.h.b16 %v1355
  %v2802 = vunpack.c.l.b16 %v1356
  %v2803 = vunpack.c.h.b16 %v1356
  %v2804 = vunpack.c.l.b16 %v1357
  %v2805 = vunpack.c.l.b16 %v1358
  %v2806 = vunpack.c.h.b16 %v1358
  %v2807 = vunpack.c.l.b16 %v1359
  %v2808 = vunpack.c.h.b16 %v1359
  %v2809 = vunpack.c.l.b16 %v1360
  %v2810 = vunpack.c.h.b16 %v1360
  %v2811 = vunpack.c.l.b16 %v1361
  %v2812 = vunpack.c.h.b16 %v1361
  %v2813 = vunpack.c.l.b16 %v1362
  %v2814 = vunpack.c.h.b16 %v1362
  %v2815 = vunpack.c.l.b16 %v1363
  %v2816 = vunpack.c.h.b16 %v1363
  %v2817 = vunpack.c.l.b16 %v1364
  %v2818 = vunpack.c.l.b16 %v1365
  %v2819 = vunpack.c.h.b16 %v1365
  %v2820 = vunpack.c.l.b16 %v1366
  %v2821 = vunpack.c.h.b16 %v1366
  %v2822 = vunpack.c.l.b16 %v1367
  %v2823 = vunpack.c.h.b16 %v1367
  %v2824 = vunpack.c.l.b16 %v1368
  %v2825 = vunpack.c.h.b16 %v1368
  %v2826 = vunpack.c.l.b16 %v1369
  %v2827 = vunpack.c.h.b16 %v1369
  %v2828 = vunpack.c.l.b16 %v1370
  %v2829 = vunpack.c.h.b16 %v1370
  %v2830 = vunpack.c.l.b16 %v1371
  %v2831 = vunpack.c.l.b16 %v1372
  %v2832 = vunpack.c.h.b16 %v1372
  %v2833 = vunpack.c.l.b16 %v1373
  %v2834 = vunpack.c.h.b16 %v1373
  %v2835 = vunpack.c.l.b16 %v1374
  %v2836 = vunpack.c.h.b16 %v1374
  %v2837 = vunpack.c.l.b16 %v1375
  %v2838 = vunpack.c.h.b16 %v1375
  %v2839 = vunpack.c.l.b16 %v1376
  %v2840 = vunpack.c.h.b16 %v1376
  %v2841 = vunpack.c.l.b16 %v1377
  %v2842 = vunpack.c.h.b16 %v1377
  %v2843 = vunpack.c.l.b16 %v1378
  %v2844 = vunpack.c.l.b16 %v1379
  %v2845 = vunpack.c.h.b16 %v1379
  %v2846 = vunpack.c.l.b16 %v1380
  %v2847 = vunpack.c.h.b16 %v1380
  %v2848 = vunpack.c.l.b16 %v1381
  %v2849 = vunpack.c.h.b16 %v1381
  %v2850 = vunpack.c.l.b16 %v1382
  %v2851 = vunpack.c.h.b16 %v1382
  %v2852 = vunpack.c.l.b16 %v1383
  %v2853 = vunpack.c.h.b16 %v1383
  %v2854 = vunpack.c.l.b16 %v1384
  %v2855 = vunpack.c.h.b16 %v1384
  %v2856 = vunpack.c.l.b16 %v1385
  %v2857 = vunpack.c.l.b16 %v1386
  %v2858 = vunpack.c.h.b16 %v1386
  %v2859 = vunpack.c.l.b16 %v1387
  %v2860 = vunpack.c.h.b16 %v1387
  %v2861 = vunpack.c.l.b16 %v1388
  %v2862 = vunpack.c.h.b16 %v1388
  %v2863 = vunpack.c.l.b16 %v1389
  %v2864 = vunpack.c.h.b16 %v1389
  %v2865 = vunpack.c.l.b16 %v1390
  %v2866 = vunpack.c.h.b16 %v1390
  %v2867 = vunpack.c.l.b16 %v1391
  %v2868 = vunpack.c.h.b16 %v1391
  %v2869 = vunpack.c.l.b16 %v1392
  %v2870 = vunpack.c.l.b16 %v1393
  %v2871 = vunpack.c.h.b16 %v1393
  %v2872 = vunpack.c.l.b16 %v1394
  %v2873 = vunpack.c.h.b16 %v1394
  %v2874 = vunpack.c.l.b16 %v1395
  %v2875 = vunpack.c.h.b16 %v1395
  %v2876 = vunpack.c.l.b16 %v1396
  %v2877 = vunpack.c.h.b16 %v1396
  %v2878 = vunpack.c.l.b16 %v1397
  %v2879 = vunpack.c.h.b16 %v1397
  %v2880 = vunpack.c.l.b16 %v1398
  %v2881 = vunpack.c.h.b16 %v1398
  %v2882 = vunpack.c.l.b16 %v1399
  %v2883 = vunpack.c.l.b16 %v1400
  %v2884 = vunpack.c.h.b16 %v1400
  %v2885 = vunpack.c.l.b16 %v1401
  %v2886 = vunpack.c.h.b16 %v1401
  %v2887 = vunpack.c.l.b16 %v1402
  %v2888 = vunpack.c.h.b16 %v1402
  %v2889 = vunpack.c.l.b16 %v1403
  %v2890 = vunpack.c.h.b16 %v1403
  %v2891 = vunpack.c.l.b16 %v1404
  %v2892 = vunpack.c.h.b16 %v1404
  %v2893 = vunpack.c.l.b16 %v1405
  %v2894 = vunpack.c.h.b16 %v1405
  %v2895 = vunpack.c.l.b16 %v1406
  %v2896 = vunpack.c.l.b16 %v1407
  %v2897 = vunpack.c.h.b16 %v1407
  %v2898 = vunpack.c.l.b16 %v1408
  %v2899 = vunpack.c.h.b16 %v1408
  %v2900 = vunpack.c.l.b16 %v1409
  %v2901 = vunpack.c.h.b16 %v1409
  %v2902 = vunpack.c.l.b16 %v1410
  %v2903 = vunpack.c.h.b16 %v1410
  %v2904 = vunpack.c.l.b16 %v1411
  %v2905 = vunpack.c.h.b16 %v1411
  %v2906 = vunpack.c.l.b16 %v1412
  %v2907 = vunpack.c.h.b16 %v1412
  %v2908 = vunpack.c.l.b16 %v1413
  %v2909 = vunpack.c.l.b16 %v1414
  %v2910 = vunpack.c.h.b16 %v1414
  %v2911 = vunpack.c.l.b16 %v1415
  %v2912 = vunpack.c.h.b16 %v1415
  %v2913 = vunpack.c.l.b16 %v1416
  %v2914 = vunpack.c.h.b16 %v1416
  %v2915 = vunpack.c.l.b16 %v1417
  %v2916 = vunpack.c.h.b16 %v1417
  %v2917 = vunpack.c.l.b16 %v1418
  %v2918 = vunpack.c.h.b16 %v1418
  %v2919 = vunpack.c.l.b16 %v1419
  %v2920 = vunpack.c.h.b16 %v1419
  %v2921 = vunpack.c.l.b16 %v1420
  %v2922 = vunpack.c.l.b16 %v1421
  %v2923 = vunpack.c.h.b16 %v1421
  %v2924 = vunpack.c.l.b16 %v1422
  %v2925 = vunpack.c.h.b16 %v1422
  %v2926 = vunpack.c.l.b16 %v1423
  %v2927 = vunpack.c.h.b16 %v1423
  %v2928 = vunpack.c.l.b16 %v1424
  %v2929 = vunpack.c.h.b16 %v1424
  %v2930 = vunpack.c.l.b16 %v1425
  %v2931 = vunpack.c.h.b16 %v1425
  %v2932 = vunpack.c.l.b16 %v1426
  %v2933 = vunpack.c.h.b16 %v1426
  %v2934 = vunpack.c.l.b16 %v1427
  %v2935 = vunpack.c.l.b16 %v1428
  %v2936 = vunpack.c.h.b16 %v1428
  %v2937 = vunpack.c.l.b16 %v1429
  %v2938 = vunpack.c.h.b16 %v1429
  %v2939 = vunpack.c.l.b16 %v1430
  %v2940 = vunpack.c.h.b16 %v1430
  %v2941 = vunpack.c.l.b16 %v1431
  %v2942 = vunpack.c.h.b16 %v1431
  %v2943 = vunpack.c.l.b16 %v1432
  %v2944 = vunpack.c.h.b16 %v1432
  %v2945 = vunpack.c.l.b16 %v1433
  %v2946 = vunpack.c.h.b16 %v1433
  %v2947 = vunpack.c.l.b16 %v1434
  %v2948 = vunpack.c.l.b16 %v1435
  %v2949 = vunpack.c.h.b16 %v1435
  %v2950 = vunpack.c.l.b16 %v1436
  %v2951 = vunpack.c.h.b16 %v1436
  %v2952 = vunpack.c.l.b16 %v1437
  %v2953 = vunpack.c.h.b16 %v1437
  %v2954 = vunpack.c.l.b16 %v1438
  %v2955 = vunpack.c.h.b16 %v1438
  %v2956 = vunpack.c.l.b16 %v1439
  %v2957 = vunpack.c.h.b16 %v1439
  %v2958 = vunpack.c.l.b16 %v1440
  %v2959 = vunpack.c.h.b16 %v1440
  %v2960 = vunpack.c.l.b16 %v1441
  %v2961 = vunpack.c.l.b16 %v1442
  %v2962 = vunpack.c.h.b16 %v1442
  %v2963 = vunpack.c.l.b16 %v1443
  %v2964 = vunpack.c.h.b16 %v1443
  %v2965 = vunpack.c.l.b16 %v1444
  %v2966 = vunpack.c.h.b16 %v1444
  %v2967 = vunpack.c.l.b16 %v1445
  %v2968 = vunpack.c.h.b16 %v1445
  %v2969 = vunpack.c.l.b16 %v1446
  %v2970 = vunpack.c.h.b16 %v1446
  %v2971 = vunpack.c.l.b16 %v1447
  %v2972 = vunpack.c.h.b16 %v1447
  %v2973 = vunpack.c.l.b16 %v1448
  %v2974 = vunpack.c.l.b16 %v1449
  %v2975 = vunpack.c.h.b16 %v1449
  %v2976 = vunpack.c.l.b16 %v1450
  %v2977 = vunpack.c.h.b16 %v1450
  %v2978 = vunpack.c.l.b16 %v1451
  %v2979 = vunpack.c.h.b16 %v1451
  %v2980 = vunpack.c.l.b16 %v1452
  %v2981 = vunpack.c.h.b16 %v1452
  %v2982 = vunpack.c.l.b16 %v1453
  %v2983 = vunpack.c.h.b16 %v1453
  %v2984 = vunpack.c.l.b16 %v1454
  %v2985 = vunpack.c.h.b16 %v1454
  %v2986 = vunpack.c.l.b16 %v1455
  %v2987 = vunpack.c.l.b16 %v1456
  %v2988 = vunpack.c.h.b16 %v1456
  %v2989 = vunpack.c.l.b16 %v1457
  %v2990 = vunpack.c.h.b16 %v1457
  %v2991 = vunpack.c.l.b16 %v1458
  %v2992 = vunpack.c.h.b16 %v1458
  %v2993 = vunpack.c.l.b16 %v1459
  %v2994 = vunpack.c.h.b16 %v1459
  %v2995 = vunpack.c.l.b16 %v1460
  %v2996 = vunpack.c.h.b16 %v1460
  %v2997 = vunpack.c.l.b16 %v1461
  %v2998 = vunpack.c.h.b16 %v1461
  %v2999 = vunpack.c.l.b16 %v1462
  %v3000 = vunpack.c.l.b16 %v1463
  %v3001 = vunpack.c.h.b16 %v1463
  %v3002 = vunpack.c.l.b16 %v1464
  %v3003 = vunpack.c.h.b16 %v1464
  %v3004 = vunpack.c.l.b16 %v1465
  %v3005 = vunpack.c.h.b16 %v1465
  %v3006 = vunpack.c.l.b16 %v1466
  %v3007 = vunpack.c.h.b16 %v1466
  %v3008 = vunpack.c.l.b16 %v1467
  %v3009 = vunpack.c.h.b16 %v1467
  %v3010 = vunpack.c.l.b16 %v1468
  %v3011 = vunpack.c.h.b16 %v1468
  %v3012 = vunpack.c.l.b16 %v1469
  %v3013 = vunpack.c.l.b16 %v1470
  %v3014 = vunpack.c.h.b16 %v1470
  %v3015 = vunpack.c.l.b16 %v1471
  %v3016 = vunpack.c.h.b16 %v1471
  %v3017 = vunpack.c.l.b16 %v1472
  %v3018 = vunpack.c.h.b16 %v1472
  %v3019 = vunpack.c.l.b16 %v1473
  %v3020 = vunpack.c.h.b16 %v1473
  %v3021 = vunpack.c.l.b16 %v1474
  %v3022 = vunpack.c.h.b16 %v1474
  %v3023 = vunpack.c.l.b16 %v1475
  %v3024 = vunpack.c.h.b16 %v1475
  %v3025 = vunpack.c.l.b16 %v1476
  %v3026 = vunpack.c.l.b16 %v1477
  %v3027 = vunpack.c.h.b16 %v1477
  %v3028 = vunpack.c.l.b16 %v1478
  %v3029 = vunpack.c.h.b16 %v1478
  %v3030 = vunpack.c.l.b16 %v1479
  %v3031 = vunpack.c.h.b16 %v1479
  %v3032 = vunpack.c.l.b16 %v1480
  %v3033 = vunpack.c.h.b16 %v1480
  %v3034 = vunpack.c.l.b16 %v1481
  %v3035 = vunpack.c.h.b16 %v1481
  %v3036 = vunpack.c.l.b16 %v1482
  %v3037 = vunpack.c.h.b16 %v1482
  %v3038 = vunpack.c.l.b16 %v1483
  %v3039 = vunpack.c.l.b16 %v1484
  %v3040 = vunpack.c.h.b16 %v1484
  %v3041 = vunpack.c.l.b16 %v1485
  %v3042 = vunpack.c.h.b16 %v1485
  %v3043 = vunpack.c.l.b16 %v1486
  %v3044 = vunpack.c.h.b16 %v1486
  %v3045 = vunpack.c.l.b16 %v1487
  %v3046 = vunpack.c.h.b16 %v1487
  %v3047 = vunpack.c.l.b16 %v1488
  %v3048 = vunpack.c.h.b16 %v1488
  %v3049 = vunpack.c.l.b16 %v1489
  %v3050 = vunpack.c.h.b16 %v1489
  %v3051 = vunpack.c.l.b16 %v1490
  %v3052 = vunpack.c.l.b16 %v1491
  %v3053 = vunpack.c.h.b16 %v1491
  %v3054 = vunpack.c.l.b16 %v1492
  %v3055 = vunpack.c.h.b16 %v1492
  %v3056 = vunpack.c.l.b16 %v1493
  %v3057 = vunpack.c.h.b16 %v1493
  %v3058 = vunpack.c.l.b16 %v1494
  %v3059 = vunpack.c.h.b16 %v1494
  %v3060 = vunpack.c.l.b16 %v1495
  %v3061 = vunpack.c.h.b16 %v1495
  %v3062 = vunpack.c.l.b16 %v1496
  %v3063 = vunpack.c.h.b16 %v1496
  %v3064 = vunpack.c.l.b16 %v1497
  %v3065 = vunpack.c.l.b16 %v1498
  %v3066 = vunpack.c.h.b16 %v1498
  %v3067 = vunpack.c.l.b16 %v1499
  %v3068 = vunpack.c.h.b16 %v1499
  %v3069 = vunpack.c.l.b16 %v1500
  %v3070 = vunpack.c.h.b16 %v1500
  %v3071 = vunpack.c.l.b16 %v1501
  %v3072 = vunpack.c.h.b16 %v1501
  %v3073 = vunpack.c.l.b16 %v1502
  %v3074 = vunpack.c.h.b16 %v1502
  %v3075 = vunpack.c.l.b16 %v1503
  %v3076 = vunpack.c.h.b16 %v1503
  %v3077 = vunpack.c.l.b16 %v1504
  %v3078 = vunpack.c.l.b16 %v1505
  %v3079 = vunpack.c.h.b16 %v1505
  %v3080 = vunpack.c.l.b16 %v1506
  %v3081 = vunpack.c.h.b16 %v1506
  %v3082 = vunpack.c.l.b16 %v1507
  %v3083 = vunpack.c.h.b16 %v1507
  %v3084 = vunpack.c.l.b16 %v1508
  %v3085 = vunpack.c.h.b16 %v1508
  %v3086 = vunpack.c.l.b16 %v1509
  %v3087 = vunpack.c.h.b16 %v1509
  %v3088 = vunpack.c.l.b16 %v1510
  %v3089 = vunpack.c.h.b16 %v1510
  %v3090 = vunpack.c.l.b16 %v1511
  %v3091 = vunpack.c.l.b16 %v1512
  %v3092 = vunpack.c.h.b16 %v1512
  %v3093 = vunpack.c.l.b16 %v1513
  %v3094 = vunpack.c.h.b16 %v1513
  %v3095 = vunpack.c.l.b16 %v1514
  %v3096 = vunpack.c.h.b16 %v1514
  %v3097 = vunpack.c.l.b16 %v1515
  %v3098 = vunpack.c.h.b16 %v1515
  %v3099 = vunpack.c.l.b16 %v1516
  %v3100 = vunpack.c.h.b16 %v1516
  %v3101 = vunpack.c.l.b16 %v1517
  %v3102 = vunpack.c.h.b16 %v1517
  %v3103 = vunpack.c.l.b16 %v1518
  %v3104 = vunpack.c.l.b16 %v1519
  %v3105 = vunpack.c.h.b16 %v1519
  %v3106 = vunpack.c.l.b16 %v1520
  %v3107 = vunpack.c.h.b16 %v1520
  %v3108 = vunpack.c.l.b16 %v1521
  %v3109 = vunpack.c.h.b16 %v1521
  %v3110 = vunpack.c.l.b16 %v1522
  %v3111 = vunpack.c.h.b16 %v1522
  %v3112 = vunpack.c.l.b16 %v1523
  %v3113 = vunpack.c.h.b16 %v1523
  %v3114 = vunpack.c.l.b16 %v1524
  %v3115 = vunpack.c.h.b16 %v1524
  %v3116 = vunpack.c.l.b16 %v1525
  %v3117 = vunpack.c.l.b16 %v1526
  %v3118 = vunpack.c.h.b16 %v1526
  %v3119 = vunpack.c.l.b16 %v1527
  %v3120 = vunpack.c.h.b16 %v1527
  %v3121 = vunpack.c.l.b16 %v1528
  %v3122 = vunpack.c.h.b16 %v1528
  %v3123 = vunpack.c.l.b16 %v1529
  %v3124 = vunpack.c.h.b16 %v1529
  %v3125 = vunpack.c.l.b16 %v1530
  %v3126 = vunpack.c.h.b16 %v1530
  %v3127 = vunpack.c.l.b16 %v1531
  %v3128 = vunpack.c.h.b16 %v1531
  %v3129 = vunpack.c.l.b16 %v1532
  %v3130 = vunpack.c.l.b16 %v1533
  %v3131 = vunpack.c.h.b16 %v1533
  %v3132 = vunpack.c.l.b16 %v1534
  %v3133 = vunpack.c.h.b16 %v1534
  %v3134 = vunpack.c.l.b16 %v1535
  %v3135 = vunpack.c.h.b16 %v1535
  %v3136 = vunpack.c.l.b16 %v1536
  %v3137 = vunpack.c.h.b16 %v1536
  %v3138 = vunpack.c.l.b16 %v1537
  %v3139 = vunpack.c.h.b16 %v1537
  %v3140 = vunpack.c.l.b16 %v1538
  %v3141 = vunpack.c.h.b16 %v1538
  %v3142 = vunpack.c.l.b16 %v1539
  %v3143 = vunpack.c.l.b16 %v1540
  %v3144 = vunpack.c.h.b16 %v1540
  %v3145 = vunpack.c.l.b16 %v1541
  %v3146 = vunpack.c.h.b16 %v1541
  %v3147 = vunpack.c.l.b16 %v1542
  %v3148 = vunpack.c.h.b16 %v1542
  %v3149 = vunpack.c.l.b16 %v1543
  %v3150 = vunpack.c.h.b16 %v1543
  %v3151 = vunpack.c.l.b16 %v1544
  %v3152 = vunpack.c.h.b16 %v1544
  %v3153 = vunpack.c.l.b16 %v1545
  %v3154 = vunpack.c.h.b16 %v1545
  %v3155 = vunpack.c.l.b16 %v1546
  %v3156 = vunpack.c.l.b16 %v1547
  %v3157 = vunpack.c.h.b16 %v1547
  %v3158 = vunpack.c.l.b16 %v1548
  %v3159 = vunpack.c.h.b16 %v1548
  %v3160 = vunpack.c.l.b16 %v1549
  %v3161 = vunpack.c.h.b16 %v1549
  %v3162 = vunpack.c.l.b16 %v1550
  %v3163 = vunpack.c.h.b16 %v1550
  %v3164 = vunpack.c.l.b16 %v1551
  %v3165 = vunpack.c.h.b16 %v1551
  %v3166 = vunpack.c.l.b16 %v1552
  %v3167 = vunpack.c.h.b16 %v1552
  %v3168 = vunpack.c.l.b16 %v1553
  %v3169 = vunpack.c.l.b16 %v1554
  %v3170 = vunpack.c.h.b16 %v1554
  %v3171 = vunpack.c.l.b16 %v1555
  %v3172 = vunpack.c.h.b16 %v1555
  %v3173 = vunpack.c.l.b16 %v1556
  %v3174 = vunpack.c.h.b16 %v1556
  %v3175 = vunpack.c.l.b16 %v1557
  %v3176 = vunpack.c.h.b16 %v1557
  %v3177 = vunpack.c.l.b16 %v1558
  %v3178 = vunpack.c.h.b16 %v1558
  %v3179 = vunpack.c.l.b16 %v1559
  %v3180 = vunpack.c.h.b16 %v1559
  %v3181 = vunpack.c.l.b16 %v1560
  %v3182 = vunpack.c.l.b16 %v1561
  %v3183 = vunpack.c.h.b16 %v1561
  %v3184 = vunpack.c.l.b16 %v1562
  %v3185 = vunpack.c.h.b16 %v1562
  %v3186 = vunpack.c.l.b16 %v1563
  %v3187 = vunpack.c.h.b16 %v1563
  %v3188 = vunpack.c.l.b16 %v1564
  %v3189 = vunpack.c.h.b16 %v1564
  %v3190 = vunpack.c.l.b16 %v1565
  %v3191 = vunpack.c.h.b16 %v1565
  %v3192 = vunpack.c.l.b16 %v1566
  %v3193 = vunpack.c.h.b16 %v1566
  %v3194 = vunpack.c.l.b16 %v1567
  %v3195 = vunpack.c.l.b16 %v1568
  %v3196 = vunpack.c.h.b16 %v1568
  %v3197 = vunpack.c.l.b16 %v1569
  %v3198 = vunpack.c.h.b16 %v1569
  %v3199 = vunpack.c.l.b16 %v1570
  %v3200 = vunpack.c.h.b16 %v1570
  %v3201 = vunpack.c.l.b16 %v1571
  %v3202 = vunpack.c.h.b16 %v1571
  %v3203 = vunpack.c.l.b16 %v1572
  %v3204 = vunpack.c.h.b16 %v1572
  %v3205 = vunpack.c.l.b16 %v1573
  %v3206 = vunpack.c.h.b16 %v1573
  %v3207 = vunpack.c.l.b16 %v1574
  %v3208 = vunpack.c.l.b16 %v1575
  %v3209 = vunpack.c.h.b16 %v1575
  %v3210 = vunpack.c.l.b16 %v1576
  %v3211 = vunpack.c.h.b16 %v1576
  %v3212 = vunpack.c.l.b16 %v1577
  %v3213 = vunpack.c.h.b16 %v1577
  %v3214 = vunpack.c.l.b16 %v1578
  %v3215 = vunpack.c.h.b16 %v1578
  %v3216 = vunpack.c.l.b16 %v1579
  %v3217 = vunpack.c.h.b16 %v1579
  %v3218 = vunpack.c.l.b16 %v1580
  %v3219 = vunpack.c.h.b16 %v1580
  %v3220 = vunpack.c.l.b16 %v1581
  %v3221 = vunpack.c.l.b16 %v1582
  %v3222 = vunpack.c.h.b16 %v1582
  %v3223 = vunpack.c.l.b16 %v1583
  %v3224 = vunpack.c.h.b16 %v1583
  %v3225 = vunpack.c.l.b16 %v1584
  %v3226 = vunpack.c.h.b16 %v1584
  %v3227 = vunpack.c.l.b16 %v1585
  %v3228 = vunpack.c.h.b16 %v1585
  %v3229 = vunpack.c.l.b16 %v1586
  %v3230 = vunpack.c.h.b16 %v1586
  %v3231 = vunpack.c.l.b16 %v1587
  %v3232 = vunpack.c.h.b16 %v1587
  %v3233 = vunpack.c.l.b16 %v1588
  %v3234 = vunpack.c.l.b16 %v1589
  %v3235 = vunpack.c.h.b16 %v1589
  %v3236 = vunpack.c.l.b16 %v1590
  %v3237 = vunpack.c.h.b16 %v1590
  %v3238 = vunpack.c.l.b16 %v1591
  %v3239 = vunpack.c.h.b16 %v1591
  %v3240 = vunpack.c.l.b16 %v1592
  %v3241 = vunpack.c.h.b16 %v1592
  %v3242 = vunpack.c.l.b16 %v1593
  %v3243 = vunpack.c.h.b16 %v1593
  %v3244 = vunpack.c.l.b16 %v1594
  %v3245 = vunpack.c.h.b16 %v1594
  %v3246 = vunpack.c.l.b16 %v1595
  %v3247 = vunpack.c.l.b16 %v1596
  %v3248 = vunpack.c.h.b16 %v1596
  %v3249 = vunpack.c.l.b16 %v1597
  %v3250 = vunpack.c.h.b16 %v1597
  %v3251 = vunpack.c.l.b16 %v1598
  %v3252 = vunpack.c.h.b16 %v1598
  %v3253 = vunpack.c.l.b16 %v1599
  %v3254 = vunpack.c.h.b16 %v1599
  %v3255 = vunpack.c.l.b16 %v1600
  %v3256 = vunpack.c.h.b16 %v1600
  %v3257 = vunpack.c.l.b16 %v1601
  %v3258 = vunpack.c.h.b16 %v1601
  %v3259 = vunpack.c.l.b16 %v1602
  %v3260 = vunpack.c.l.b16 %v1603
  %v3261 = vunpack.c.h.b16 %v1603
  %v3262 = vunpack.c.l.b16 %v1604
  %v3263 = vunpack.c.h.b16 %v1604
  %v3264 = vunpack.c.l.b16 %v1605
  %v3265 = vunpack.c.h.b16 %v1605
  %v3266 = vunpack.c.l.b16 %v1606
  %v3267 = vunpack.c.h.b16 %v1606
  %v3268 = vunpack.c.l.b16 %v1607
  %v3269 = vunpack.c.h.b16 %v1607
  %v3270 = vunpack.c.l.b16 %v1608
  %v3271 = vunpack.c.h.b16 %v1608
  %v3272 = vunpack.c.l.b16 %v1609
  %v3273 = vunpack.c.l.b16 %v1610
  %v3274 = vunpack.c.h.b16 %v1610
  %v3275 = vunpack.c.l.b16 %v1611
  %v3276 = vunpack.c.h.b16 %v1611
  %v3277 = vunpack.c.l.b16 %v1612
  %v3278 = vunpack.c.h.b16 %v1612
  %v3279 = vunpack.c.l.b16 %v1613
  %v3280 = vunpack.c.h.b16 %v1613
  %v3281 = vunpack.c.l.b16 %v1614
  %v3282 = vunpack.c.h.b16 %v1614
  %v3283 = vunpack.c.l.b16 %v1615
  %v3284 = vunpack.c.h.b16 %v1615
  %v3285 = vunpack.c.l.b16 %v1616
  %v3286 = vunpack.c.l.b16 %v1617
  %v3287 = vunpack.c.h.b16 %v1617
  %v3288 = vunpack.c.l.b16 %v1618
  %v3289 = vunpack.c.h.b16 %v1618
  %v3290 = vunpack.c.l.b16 %v1619
  %v3291 = vunpack.c.h.b16 %v1619
  %v3292 = vunpack.c.l.b16 %v1620
  %v3293 = vunpack.c.h.b16 %v1620
  %v3294 = vunpack.c.l.b16 %v1621
  %v3295 = vunpack.c.h.b16 %v1621
  %v3296 = vunpack.c.l.b16 %v1622
  %v3297 = vunpack.c.h.b16 %v1622
  %v3298 = vunpack.c.l.b16 %v1623
  %v3299 = vunpack.c.l.b16 %v1624
  %v3300 = vunpack.c.h.b16 %v1624
  %v3301 = vunpack.c.l.b16 %v1625
  %v3302 = vunpack.c.h.b16 %v1625
  %v3303 = vunpack.c.l.b16 %v1626
  %v3304 = vunpack.c.h.b16 %v1626
  %v3305 = vunpack.c.l.b16 %v1627
  %v3306 = vunpack.c.h.b16 %v1627
  %v3307 = vunpack.c.l.b16 %v1628
  %v3308 = vunpack.c.h.b16 %v1628
  %v3309 = vunpack.c.l.b16 %v1629
  %v3310 = vunpack.c.h.b16 %v1629
  %v3311 = vunpack.c.l.b16 %v1630
  %v3312 = vunpack.c.l.b16 %v1631
  %v3313 = vunpack.c.h.b16 %v1631
  %v3314 = vunpack.c.l.b16 %v1632
  %v3315 = vunpack.c.h.b16 %v1632
  %v3316 = vunpack.c.l.b16 %v1633
  %v3317 = vunpack.c.h.b16 %v1633
  %v3318 = vunpack.c.l.b16 %v1634
  %v3319 = vunpack.c.h.b16 %v1634
  %v3320 = vunpack.c.l.b16 %v1635
  %v3321 = vunpack.c.h.b16 %v1635
  %v3322 = vunpack.c.l.b16 %v1636
  %v3323 = vunpack.c.h.b16 %v1636
  %v3324 = vunpack.c.l.b16 %v1637
  %v3325 = vunpack.c.l.b16 %v1638
  %v3326 = vunpack.c.h.b16 %v1638
  %v3327 = vunpack.c.l.b16 %v1639
  %v3328 = vunpack.c.h.b16 %v1639
  %v3329 = vunpack.c.l.b16 %v1640
  %v3330 = vunpack.c.h.b16 %v1640
  %v3331 = vunpack.c.l.b16 %v1641
  %v3332 = vunpack.c.h.b16 %v1641
  %v3333 = vunpack.c.l.b16 %v1642
  %v3334 = vunpack.c.h.b16 %v1642
  %v3335 = vunpack.c.l.b16 %v1643
  %v3336 = vunpack.c.h.b16 %v1643
  %v3337 = vunpack.c.l.b16 %v1644
  %v3338 = vunpack.c.l.b16 %v1645
  %v3339 = vunpack.c.h.b16 %v1645
  %v3340 = vunpack.c.l.b16 %v1646
  %v3341 = vunpack.c.h.b16 %v1646
  %v3342 = vunpack.c.l.b16 %v1647
  %v3343 = vunpack.c.h.b16 %v1647
  %v3344 = vunpack.c.l.b16 %v1648
  %v3345 = vunpack.c.h.b16 %v1648
  %v3346 = vunpack.c.l.b16 %v1649
  %v3347 = vunpack.c.h.b16 %v1649
  %v3348 = vunpack.c.l.b16 %v1650
  %v3349 = vunpack.c.h.b16 %v1650
  %v3350 = vunpack.c.l.b16 %v1651
  %v3351 = vunpack.c.l.b16 %v1652
  %v3352 = vunpack.c.h.b16 %v1652
  %v3353 = vunpack.c.l.b16 %v1653
  %v3354 = vunpack.c.h.b16 %v1653
  %v3355 = vunpack.c.l.b16 %v1654
  %v3356 = vunpack.c.h.b16 %v1654
  %v3357 = vunpack.c.l.b16 %v1655
  %v3358 = vunpack.c.h.b16 %v1655
  %v3359 = vunpack.c.l.b16 %v1656
  %v3360 = vunpack.c.h.b16 %v1656
  %v3361 = vunpack.c.l.b16 %v1657
  %v3362 = vunpack.c.h.b16 %v1657
  %v3363 = vunpack.c.l.b16 %v1658
  %v3364 = vunpack.c.l.b16 %v1659
  %v3365 = vunpack.c.h.b16 %v1659
  %v3366 = vunpack.c.l.b16 %v1660
  %v3367 = vunpack.c.h.b16 %v1660
  %v3368 = vunpack.c.l.b16 %v1661
  %v3369 = vunpack.c.h.b16 %v1661
  %v3370 = vunpack.c.l.b16 %v1662
  %v3371 = vunpack.c.h.b16 %v1662
  %v3372 = vunpack.c.l.b16 %v1663
  %v3373 = vunpack.c.h.b16 %v1663
  %v3374 = vunpack.c.l.b16 %v1664
  %v3375 = vunpack.c.h.b16 %v1664
  %v3376 = vunpack.c.l.b16 %v1665
  %v3377 = vunpack.c.l.b16 %v1666
  %v3378 = vunpack.c.h.b16 %v1666
  %v3379 = vunpack.c.l.b16 %v1667
  %v3380 = vunpack.c.h.b16 %v1667
  %v3381 = vunpack.c.l.b16 %v1668
  %v3382 = vunpack.c.h.b16 %v1668
  %v3383 = vunpack.c.l.b16 %v1669
  %v3384 = vunpack.c.h.b16 %v1669
  %v3385 = vunpack.c.l.b16 %v1670
  %v3386 = vunpack.c.h.b16 %v1670
  %v3387 = vunpack.c.l.b16 %v1671
  %v3388 = vunpack.c.h.b16 %v1671
  %v3389 = vunpack.c.l.b16 %v1672
  %v3390 = vunpack.c.l.b16 %v1673
  %v3391 = vunpack.c.h.b16 %v1673
  %v3392 = vunpack.c.l.b16 %v1674
  %v3393 = vunpack.c.h.b16 %v1674
  %v3394 = vunpack.c.l.b16 %v1675
  %v3395 = vunpack.c.h.b16 %v1675
  %v3396 = vunpack.c.l.b16 %v1676
  %v3397 = vunpack.c.h.b16 %v1676
  %v3398 = vunpack.c.l.b16 %v1677
  %v3399 = vunpack.c.h.b16 %v1677
  %v3400 = vunpack.c.l.b16 %v1678
  %v3401 = vunpack.c.h.b16 %v1678
  %v3402 = vunpack.c.l.b16 %v1679
  %v3403 = vunpack.c.l.b16 %v1680
  %v3404 = vunpack.c.h.b16 %v1680
  %v3405 = vunpack.c.l.b16 %v1681
  %v3406 = vunpack.c.h.b16 %v1681
  %v3407 = vunpack.c.l.b16 %v1682
  %v3408 = vunpack.c.h.b16 %v1682
  %v3409 = vunpack.c.l.b16 %v1683
  %v3410 = vunpack.c.h.b16 %v1683
  %v3411 = vunpack.c.l.b16 %v1684
  %v3412 = vunpack.c.h.b16 %v1684
  %v3413 = vunpack.c.l.b16 %v1685
  %v3414 = vunpack.c.h.b16 %v1685
  %v3415 = vunpack.c.l.b16 %v1686
  %v3416 = vunpack.c.l.b16 %v1687
  %v3417 = vunpack.c.h.b16 %v1687
  %v3418 = vunpack.c.l.b16 %v1688
  %v3419 = vunpack.c.h.b16 %v1688
  %v3420 = vunpack.c.l.b16 %v1689
  %v3421 = vunpack.c.h.b16 %v1689
  %v3422 = vunpack.c.l.b16 %v1690
  %v3423 = vunpack.c.h.b16 %v1690
  %v3424 = vunpack.c.l.b16 %v1691
  %v3425 = vunpack.c.h.b16 %v1691
  %v3426 = vunpack.c.l.b16 %v1692
  %v3427 = vunpack.c.h.b16 %v1692
  %v3428 = vunpack.c.l.b16 %v1693
  %v3429 = vunpack.c.l.b16 %v1694
  %v3430 = vunpack.c.h.b16 %v1694
  %v3431 = vunpack.c.l.b16 %v1695
  %v3432 = vunpack.c.h.b16 %v1695
  %v3433 = vunpack.c.l.b16 %v1696
  %v3434 = vunpack.c.h.b16 %v1696
  %v3435 = vunpack.c.l.b16 %v1697
  %v3436 = vunpack.c.h.b16 %v1697
  %v3437 = vunpack.c.l.b16 %v1698
  %v3438 = vunpack.c.h.b16 %v1698
  %v3439 = vunpack.c.l.b16 %v1699
  %v3440 = vunpack.c.h.b16 %v1699
  %v3441 = vunpack.c.l.b16 %v1700
  %v3442 = vunpack.c.l.b16 %v1701
  %v3443 = vunpack.c.h.b16 %v1701
  %v3444 = vunpack.c.l.b16 %v1702
  %v3445 = vunpack.c.h.b16 %v1702
  %v3446 = vunpack.c.l.b16 %v1703
  %v3447 = vunpack.c.h.b16 %v1703
  %v3448 = vunpack.c.l.b16 %v1704
  %v3449 = vunpack.c.h.b16 %v1704
  %v3450 = vunpack.c.l.b16 %v1705
  %v3451 = vunpack.c.h.b16 %v1705
  %v3452 = vunpack.c.l.b16 %v1706
  %v3453 = vunpack.c.h.b16 %v1706
  %v3454 = vunpack.c.l.b16 %v1707
  %v3455 = vunpack.c.l.b16 %v1708
  %v3456 = vunpack.c.h.b16 %v1708
  %v3457 = vunpack.c.l.b16 %v1709
  %v3458 = vunpack.c.h.b16 %v1709
  %v3459 = vunpack.c.l.b16 %v1710
  %v3460 = vunpack.c.h.b16 %v1710
  %v3461 = vunpack.c.l.b16 %v1711
  %v3462 = vunpack.c.h.b16 %v1711
  %v3463 = vunpack.c.l.b16 %v1712
  %v3464 = vunpack.c.h.b16 %v1712
  %v3465 = vunpack.c.l.b16 %v1713
  %v3466 = vunpack.c.h.b16 %v1713
  %v3467 = vunpack.c.l.b16 %v1714
  %v3468 = vunpack.c.l.b16 %v1715
  %v3469 = vunpack.c.h.b16 %v1715
  %v3470 = vunpack.c.l.b16 %v1716
  %v3471 = vunpack.c.h.b16 %v1716
  %v3472 = vunpack.c.l.b16 %v1717
  %v3473 = vunpack.c.h.b16 %v1717
  %v3474 = vunpack.c.l.b16 %v1718
  %v3475 = vunpack.c.h.b16 %v1718
  %v3476 = vunpack.c.l.b16 %v1719
  %v3477 = vunpack.c.h.b16 %v1719
  %v3478 = vunpack.c.l.b16 %v1720
  %v3479 = vunpack.c.h.b16 %v1720
  %v3480 = vunpack.c.l.b16 %v1721
  %v3481 = vunpack.c.l.b16 %v1722
  %v3482 = vunpack.c.h.b16 %v1722
  %v3483 = vunpack.c.l.b16 %v1723
  %v3484 = vunpack.c.h.b16 %v1723
  %v3485 = vunpack.c.l.b16 %v1724
  %v3486 = vunpack.c.h.b16 %v1724
  %v3487 = vunpack.c.l.b16 %v1725
  %v3488 = vunpack.c.h.b16 %v1725
  %v3489 = vunpack.c.l.b16 %v1726
  %v3490 = vunpack.c.h.b16 %v1726
  %v3491 = vunpack.c.l.b16 %v1727
  %v3492 = vunpack.c.h.b16 %v1727
  %v3493 = vunpack.c.l.b16 %v1728
  %v3494 = vunpack.c.l.b16 %v1729
  %v3495 = vunpack.c.h.b16 %v1729
  %v3496 = vunpack.c.l.b16 %v1730
  %v3497 = vunpack.c.h.b16 %v1730
  %v3498 = vunpack.c.l.b16 %v1731
  %v3499 = vunpack.c.h.b16 %v1731
  %v3500 = vunpack.c.l.b16 %v1732
  %v3501 = vunpack.c.h.b16 %v1732
  %v3502 = vunpack.c.l.b16 %v1733
  %v3503 = vunpack.c.h.b16 %v1733
  %v3504 = vunpack.c.l.b16 %v1734
  %v3505 = vunpack.c.h.b16 %v1734
  %v3506 = vunpack.c.l.b16 %v1735
  %v3507 = vunpack.c.l.b16 %v1736
  %v3508 = vunpack.c.h.b16 %v1736
  %v3509 = vunpack.c.l.b16 %v1737
  %v3510 = vunpack.c.h.b16 %v1737
  %v3511 = vunpack.c.l.b16 %v1738
  %v3512 = vunpack.c.h.b16 %v1738
  %v3513 = vunpack.c.l.b16 %v1739
  %v3514 = vunpack.c.h.b16 %v1739
  %v3515 = vunpack.c.l.b16 %v1740
  %v3516 = vunpack.c.h.b16 %v1740
  %v3517 = vunpack.c.l.b16 %v1741
  %v3518 = vunpack.c.h.b16 %v1741
  %v3519 = vunpack.c.l.b16 %v1742
  %v3520 = vunpack.c.l.b16 %v1743
  %v3521 = vunpack.c.h.b16 %v1743
  %v3522 = vunpack.c.l.b16 %v1744
  %v3523 = vunpack.c.h.b16 %v1744
  %v3524 = vunpack.c.l.b16 %v1745
  %v3525 = vunpack.c.h.b16 %v1745
  %v3526 = vunpack.c.l.b16 %v1746
  %v3527 = vunpack.c.h.b16 %v1746
  %v3528 = vunpack.c.l.b16 %v1747
  %v3529 = vunpack.c.h.b16 %v1747
  %v3530 = vunpack.c.l.b16 %v1748
  %v3531 = vunpack.c.h.b16 %v1748
  %v3532 = vunpack.c.l.b16 %v1749
  %v3533 = vunpack.c.l.b16 %v1750
  %v3534 = vunpack.c.h.b16 %v1750
  %v3535 = vunpack.c.l.b16 %v1751
  %v3536 = vunpack.c.h.b16 %v1751
  %v3537 = vunpack.c.l.b16 %v1752
  %v3538 = vunpack.c.h.b16 %v1752
  %v3539 = vunpack.c.l.b16 %v1753
  %v3540 = vunpack.c.h.b16 %v1753
  %v3541 = vunpack.c.l.b16 %v1754
  %v3542 = vunpack.c.h.b16 %v1754
  %v3543 = vunpack.c.l.b16 %v1755
  %v3544 = vunpack.c.h.b16 %v1755
  %v3545 = vunpack.c.l.b16 %v1756
  %v3546 = vunpack.c.l.b16 %v1757
  %v3547 = vunpack.c.h.b16 %v1757
  %v3548 = vunpack.c.l.b16 %v1758
  %v3549 = vunpack.c.h.b16 %v1758
  %v3550 = vunpack.c.l.b16 %v1759
  %v3551 = vunpack.c.h.b16 %v1759
  %v3552 = vunpack.c.l.b16 %v1760
  %v3553 = vunpack.c.h.b16 %v1760
  %v3554 = vunpack.c.l.b16 %v1761
  %v3555 = vunpack.c.h.b16 %v1761
  %v3556 = vunpack.c.l.b16 %v1762
  %v3557 = vunpack.c.h.b16 %v1762
  %v3558 = vunpack.c.l.b16 %v1763
  %v3559 = vunpack.c.l.b16 %v1764
  %v3560 = vunpack.c.h.b16 %v1764
  %v3561 = vunpack.c.l.b16 %v1765
  %v3562 = vunpack.c.h.b16 %v1765
  %v3563 = vunpack.c.l.b16 %v1766
  %v3564 = vunpack.c.h.b16 %v1766
  %v3565 = vunpack.c.l.b16 %v1767
  %v3566 = vunpack.c.h.b16 %v1767
  %v3567 = vunpack.c.l.b16 %v1768
  %v3568 = vunpack.c.h.b16 %v1768
  %v3569 = vunpack.c.l.b16 %v1769
  %v3570 = vunpack.c.h.b16 %v1769
  %v3571 = vunpack.c.l.b16 %v1770
  %v3572 = vunpack.c.l.b16 %v1771
  %v3573 = vunpack.c.h.b16 %v1771
  %v3574 = vunpack.c.l.b16 %v1772
  %v3575 = vunpack.c.h.b16 %v1772
  %v3576 = vunpack.c.l.b16 %v1773
  %v3577 = vunpack.c.h.b16 %v1773
  %v3578 = vunpack.c.l.b16 %v1774
  %v3579 = vunpack.c.h.b16 %v1774
  %v3580 = vunpack.c.l.b16 %v1775
  %v3581 = vunpack.c.h.b16 %v1775
  %v3582 = vunpack.c.l.b16 %v1776
  %v3583 = vunpack.c.h.b16 %v1776
  %v3584 = vunpack.c.l.b16 %v1777
  %v3585 = vunpack.c.l.b16 %v1778
  %v3586 = vunpack.c.h.b16 %v1778
  %v3587 = vunpack.c.l.b16 %v1779
  %v3588 = vunpack.c.h.b16 %v1779
  %v3589 = vunpack.c.l.b16 %v1780
  %v3590 = vunpack.c.h.b16 %v1780
  %v3591 = vunpack.c.l.b16 %v1781
  %v3592 = vunpack.c.h.b16 %v1781
  %v3593 = vunpack.c.l.b16 %v1782
  %v3594 = vunpack.c.h.b16 %v1782
  %v3595 = vunpack.c.l.b16 %v1783
  %v3596 = vunpack.c.h.b16 %v1783
  %v3597 = vunpack.c.l.b16 %v1784
  %v3598 = vunpack.c.l.b16 %v1785
  %v3599 = vunpack.c.h.b16 %v1785
  %v3600 = vunpack.c.l.b16 %v1786
  %v3601 = vunpack.c.h.b16 %v1786
  %v3602 = vunpack.c.l.b16 %v1787
  %v3603 = vunpack.c.h.b16 %v1787
  %v3604 = vunpack.c.l.b16 %v1788
  %v3605 = vunpack.c.h.b16 %v1788
  %v3606 = vunpack.c.l.b16 %v1789
  %v3607 = vunpack.c.h.b16 %v1789
  %v3608 = vunpack.c.l.b16 %v1790
  %v3609 = vunpack.c.h.b16 %v1790
  %v3610 = vunpack.c.l.b16 %v1791
  %v3611 = vunpack.c.l.b16 %v1792
  %v3612 = vunpack.c.h.b16 %v1792
  %v3613 = vunpack.c.l.b16 %v1793
  %v3614 = vunpack.c.h.b16 %v1793
  %v3615 = vunpack.c.l.b16 %v1794
  %v3616 = vunpack.c.h.b16 %v1794
  %v3617 = vunpack.c.l.b16 %v1795
  %v3618 = vunpack.c.h.b16 %v1795
  %v3619 = vunpack.c.l.b16 %v1796
  %v3620 = vunpack.c.h.b16 %v1796
  %v3621 = vunpack.c.l.b16 %v1797
  %v3622 = vunpack.c.h.b16 %v1797
  %v3623 = vunpack.c.l.b16 %v1798
  %v3624 = vunpack.c.l.b16 %v1799
  %v3625 = vunpack.c.h.b16 %v1799
  %v3626 = vunpack.c.l.b16 %v1800
  %v3627 = vunpack.c.h.b16 %v1800
  %v3628 = vunpack.c.l.b16 %v1801
  %v3629 = vunpack.c.h.b16 %v1801
  %v3630 = vunpack.c.l.b16 %v1802
  %v3631 = vunpack.c.h.b16 %v1802
  %v3632 = vunpack.c.l.b16 %v1803
  %v3633 = vunpack.c.h.b16 %v1803
  %v3634 = vunpack.c.l.b16 %v1804
  %v3635 = vunpack.c.h.b16 %v1804
  %v3636 = vunpack.c.l.b16 %v1805
  %v3637 = vunpack.c.l.b16 %v1806
  %v3638 = vunpack.c.h.b16 %v1806
  %v3639 = vunpack.c.l.b16 %v1807
  %v3640 = vunpack.c.h.b16 %v1807
  %v3641 = vunpack.c.l.b16 %v1808
  %v3642 = vunpack.c.h.b16 %v1808
  %v3643 = vunpack.c.l.b16 %v1809
  %v3644 = vunpack.c.h.b16 %v1809
  %v3645 = vunpack.c.l.b16 %v1810
  %v3646 = vunpack.c.h.b16 %v1810
  %v3647 = vunpack.c.l.b16 %v1811
  %v3648 = vunpack.c.h.b16 %v1811
  %v3649 = vunpack.c.l.b16 %v1812
  %v3650 = vunpack.c.l.b16 %v1813
  %v3651 = vunpack.c.h.b16 %v1813
  %v3652 = vunpack.c.l.b16 %v1814
  %v3653 = vunpack.c.h.b16 %v1814
  %v3654 = vunpack.c.l.b16 %v1815
  %v3655 = vunpack.c.h.b16 %v1815
  %v3656 = vunpack.c.l.b16 %v1816
  %v3657 = vunpack.c.h.b16 %v1816
  %v3658 = vunpack.c.l.b16 %v1817
  %v3659 = vunpack.c.h.b16 %v1817
  %v3660 = vunpack.c.l.b16 %v1818
  %v3661 = vunpack.c.h.b16 %v1818
  %v3662 = vunpack.c.l.b16 %v1819
  %v3663 = vunpack.c.l.b16 %v1820
  %v3664 = vunpack.c.h.b16 %v1820
  %v3665 = vunpack.c.l.b16 %v1821
  %v3666 = vunpack.c.h.b16 %v1821
  %v3667 = vunpack.c.l.b16 %v1822
  %v3668 = vunpack.c.h.b16 %v1822
  %v3669 = vunpack.c.l.b16 %v1823
  %v3670 = vunpack.c.h.b16 %v1823
  %v3671 = vunpack.c.l.b16 %v1824
  %v3672 = vunpack.c.h.b16 %v1824
  %v3673 = vunpack.c.l.b16 %v1825
  %v3674 = vunpack.c.h.b16 %v1825
  %v3675 = vunpack.c.l.b16 %v1826
  %v3676 = vunpack.c.l.b16 %v1827
  %v3677 = vunpack.c.h.b16 %v1827
  %v3678 = vunpack.c.l.b16 %v1828
  %v3679 = vunpack.c.h.b16 %v1828
  %v3680 = vunpack.c.l.b16 %v1829
  %v3681 = vunpack.c.h.b16 %v1829
  %v3682 = vunpack.c.l.b16 %v1830
  %v3683 = vunpack.c.h.b16 %v1830
  %v3684 = vunpack.c.l.b16 %v1831
  %v3685 = vunpack.c.h.b16 %v1831
  %v3686 = vunpack.c.l.b16 %v1832
  %v3687 = vunpack.c.h.b16 %v1832
  %v3688 = vunpack.c.l.b16 %v1833
  %v3689 = vunpack.c.l.b16 %v1834
  %v3690 = vunpack.c.h.b16 %v1834
  %v3691 = vunpack.c.l.b16 %v1835
  %v3692 = vunpack.c.h.b16 %v1835
  %v3693 = vunpack.c.l.b16 %v1836
  %v3694 = vunpack.c.h.b16 %v1836
  %v3695 = vunpack.c.l.b16 %v1837
  %v3696 = vunpack.c.h.b16 %v1837
  %v3697 = vunpack.c.l.b16 %v1838
  %v3698 = vunpack.c.h.b16 %v1838
  %v3699 = vunpack.c.l.b16 %v1839
  %v3700 = vunpack.c.h.b16 %v1839
  %v3701 = vunpack.c.l.b16 %v1840
  %v3702 = vunpack.c.l.b16 %v1841
  %v3703 = vunpack.c.h.b16 %v1841
  %v3704 = vunpack.c.l.b16 %v1842
  %v3705 = vunpack.c.h.b16 %v1842
  %v3706 = vunpack.c.l.b16 %v1843
  %v3707 = vunpack.c.h.b16 %v1843
  %v3708 = vunpack.c.l.b16 %v1844
  %v3709 = vunpack.c.h.b16 %v1844
  %v3710 = vunpack.c.l.b16 %v1845
  %v3711 = vunpack.c.h.b16 %v1845
  %v3712 = vunpack.c.l.b16 %v1846
  %v3713 = vunpack.c.h.b16 %v1846
  %v3714 = vunpack.c.l.b16 %v1847
  %v3715 = vunpack.c.l.b16 %v1848
  %v3716 = vunpack.c.h.b16 %v1848
  %v3717 = vunpack.c.l.b16 %v1849
  %v3718 = vunpack.c.h.b16 %v1849
  %v3719 = vunpack.c.l.b16 %v1850
  %v3720 = vunpack.c.h.b16 %v1850
  %v3721 = vunpack.c.l.b16 %v1851
  %v3722 = vunpack.c.h.b16 %v1851
  %v3723 = vunpack.c.l.b16 %v1852
  %v3724 = vunpack.c.h.b16 %v1852
  %v3725 = vunpack.c.l.b16 %v1853
  %v3726 = vunpack.c.h.b16 %v1853
  %v3727 = vunpack.c.l.b16 %v1854
  %v3728 = vunpack.c.l.b16 %v1855
  %v3729 = vunpack.c.h.b16 %v1855
  %v3730 = vunpack.c.l.b16 %v1856
  %v3731 = vunpack.c.h.b16 %v1856
  %v3732 = vunpack.c.l.b16 %v1857
  %v3733 = vunpack.c.h.b16 %v1857
  %v3734 = vunpack.c.l.b16 %v1858
  %v3735 = vunpack.c.h.b16 %v1858
  %v3736 = vunpack.c.l.b16 %v1859
  %v3737 = vunpack.c.h.b16 %v1859
  %v3738 = vunpack.c.l.b16 %v1860
  %v3739 = vunpack.c.h.b16 %v1860
  %v3740 = vunpack.c.l.b16 %v1861
  %v3741 = vunpack.c.l.b16 %v1862
  %v3742 = vunpack.c.h.b16 %v1862
  %v3743 = vunpack.c.l.b16 %v1863
  %v3744 = vunpack.c.h.b16 %v1863
  %v3745 = vunpack.c.l.b16 %v1864
  %v3746 = vunpack.c.h.b16 %v1864
  %v3747 = vunpack.c.l.b16 %v1865
  %v3748 = vunpack.c.h.b16 %v1865
  %v3749 = vunpack.c.l.b16 %v1866
  %v3750 = vunpack.c.h.b16 %v1866
  %v3751 = vunpack.c.l.b16 %v1867
  %v3752 = vunpack.c.h.b16 %v1867
  %v3753 = vunpack.c.l.b16 %v1868
  %v3754 = vunpack.c.l.b16 %v1869
  %v3755 = vunpack.c.h.b16 %v1869
  %v3756 = vunpack.c.l.b16 %v1870
  %v3757 = vunpack.c.h.b16 %v1870
  %v3758 = vunpack.c.l.b16 %v1871
  %v3759 = vunpack.c.h.b16 %v1871
  %v3760 = vunpack.c.l.b16 %v1872
  %v3761 = vunpack.c.h.b16 %v1872
  %v3762 = vunpack.c.l.b16 %v1873
  %v3763 = vunpack.c.h.b16 %v1873
  %v3764 = vunpack.c.l.b16 %v1874
  %v3765 = vunpack.c.h.b16 %v1874
  %v3766 = vunpack.c.l.b16 %v1875
  %v3767 = vunpack.c.l.b16 %v1876
  %v3768 = vunpack.c.h.b16 %v1876
  %v3769 = vunpack.c.l.b16 %v1877
  %v3770 = vunpack.c.h.b16 %v1877
  %v3771 = vunpack.c.l.b16 %v1878
  %v3772 = vunpack.c.h.b16 %v1878
  %v3773 = vunpack.c.l.b16 %v1879
  %v3774 = vunpack.c.h.b16 %v1879
  %v3775 = vunpack.c.l.b16 %v1880
  %v3776 = vunpack.c.h.b16 %v1880
  %v3777 = vunpack.c.l.b16 %v1881
  %v3778 = vunpack.c.h.b16 %v1881
  %v3779 = vunpack.c.l.b16 %v1882
  %v3780 = vunpack.c.l.b16 %v1883
  %v3781 = vunpack.c.h.b16 %v1883
  %v3782 = vunpack.c.l.b16 %v1884
  %v3783 = vunpack.c.h.b16 %v1884
  %v3784 = vunpack.c.l.b16 %v1885
  %v3785 = vunpack.c.h.b16 %v1885
  %v3786 = vunpack.c.l.b16 %v1886
  %v3787 = vunpack.c.h.b16 %v1886
  %v3788 = vunpack.c.l.b16 %v1887
  %v3789 = vunpack.c.h.b16 %v1887
  %v3790 = vunpack.c.l.b16 %v1888
  %v3791 = vunpack.c.h.b16 %v1888
  %v3792 = vunpack.c.l.b16 %v1889
  %v3793 = vunpack.c.l.b16 %v1890
  %v3794 = vunpack.c.h.b16 %v1890
  %v3795 = vunpack.c.l.b16 %v1891
  %v3796 = vunpack.c.h.b16 %v1891
  %v3797 = vunpack.c.l.b16 %v1892
  %v3798 = vunpack.c.h.b16 %v1892
  %v3799 = vunpack.c.l.b16 %v1893
  %v3800 = vunpack.c.h.b16 %v1893
  %v3801 = vunpack.c.l.b16 %v1894
  %v3802 = vunpack.c.h.b16 %v1894
  %v3803 = vunpack.c.l.b16 %v1895
  %v3804 = vunpack.c.h.b16 %v1895
  %v3805 = vunpack.c.l.b16 %v1896
  %v3806 = vunpack.c.l.b16 %v1897
  %v3807 = vunpack.c.h.b16 %v1897
  %v3808 = vunpack.c.l.b16 %v1898
  %v3809 = vunpack.c.h.b16 %v1898
  %v3810 = vunpack.c.l.b16 %v1899
  %v3811 = vunpack.c.h.b16 %v1899
  %v3812 = vunpack.c.l.b16 %v1900
  %v3813 = vunpack.c.h.b16 %v1900
  %v3814 = vunpack.c.l.b16 %v1901
  %v3815 = vunpack.c.h.b16 %v1901
  %v3816 = vunpack.c.l.b16 %v1902
  %v3817 = vunpack.c.h.b16 %v1902
  %v3818 = vunpack.c.l.b16 %v1903
  %v3819 = vunpack.c.l.b16 %v1904
  %v3820 = vunpack.c.h.b16 %v1904
  %v3821 = vunpack.c.l.b16 %v1905
  %v3822 = vunpack.c.h.b16 %v1905
  %v3823 = vunpack.c.l.b16 %v1906
  %v3824 = vunpack.c.h.b16 %v1906
  %v3825 = vunpack.c.l.b16 %v1907
  %v3826 = vunpack.c.h.b16 %v1907
  %v3827 = vunpack.c.l.b16 %v1908
  %v3828 = vunpack.c.h.b16 %v1908
  %v3829 = vunpack.c.l.b16 %v1909
  %v3830 = vunpack.c.h.b16 %v1909
  %v3831 = vunpack.c.l.b16 %v1910
  %v3832 = vunpack.c.l.b16 %v1911
  %v3833 = vunpack.c.h.b16 %v1911
  %v3834 = vunpack.c.l.b16 %v1912
  %v3835 = vunpack.c.h.b16 %v1912
  %v3836 = vunpack.c.l.b16 %v1913
  %v3837 = vunpack.c.h.b16 %v1913
  %v3838 = vunpack.c.l.b16 %v1914
  %v3839 = vunpack.c.h.b16 %v1914
  %v3840 = vunpack.c.l.b16 %v1915
  %v3841 = vunpack.c.h.b16 %v1915
  %v3842 = vunpack.c.l.b16 %v1916
  %v3843 = vunpack.c.h.b16 %v1916
  %v3844 = vunpack.c.l.b16 %v1917
  %v3845 = vunpack.c.l.b16 %v1918
  %v3846 = vunpack.c.h.b16 %v1918
  %v3847 = vunpack.c.l.b16 %v1919
  %v3848 = vunpack.c.h.b16 %v1919
  %v3849 = vunpack.c.l.b16 %v1920
  %v3850 = vunpack.c.h.b16 %v1920
  %v3851 = vunpack.c.l.b16 %v1921
  %v3852 = vunpack.c.h.b16 %v1921
  %v3853 = vunpack.c.l.b16 %v1922
  %v3854 = vunpack.c.h.b16 %v1922
  %v3855 = vunpack.c.l.b16 %v1923
  %v3856 = vunpack.c.h.b16 %v1923
  %v3857 = vunpack.c.l.b16 %v1924
  %v3858 = vunpack.c.l.b16 %v1925
  %v3859 = vunpack.c.h.b16 %v1925
  %v3860 = vunpack.c.l.b16 %v1926
  %v3861 = vunpack.c.h.b16 %v1926
  %v3862 = vunpack.c.l.b16 %v1927
  %v3863 = vunpack.c.h.b16 %v1927
  %v3864 = vunpack.c.l.b16 %v1928
  %v3865 = vunpack.c.h.b16 %v1928
  %v3866 = vunpack.c.l.b16 %v1929
  %v3867 = vunpack.c.h.b16 %v1929
  %v3868 = vunpack.c.l.b16 %v1930
  %v3869 = vunpack.c.h.b16 %v1930
  %v3870 = vunpack.c.l.b16 %v1931
  %v3871 = vunpack.c.l.b16 %v1932
  %v3872 = vunpack.c.h.b16 %v1932
  %v3873 = vunpack.c.l.b16 %v1933
  %v3874 = vunpack.c.h.b16 %v1933
  %v3875 = vunpack.c.l.b16 %v1934
  %v3876 = vunpack.c.h.b16 %v1934
  %v3877 = vunpack.c.l.b16 %v1935
  %v3878 = vunpack.c.h.b16 %v1935
  %v3879 = vunpack.c.l.b16 %v1936
  %v3880 = vunpack.c.h.b16 %v1936
  %v3881 = vunpack.c.l.b16 %v1937
  %v3882 = vunpack.c.h.b16 %v1937
  %v3883 = vunpack.c.l.b16 %v1938
  %v3884 = vunpack.c.l.b16 %v1939
  %v3885 = vunpack.c.h.b16 %v1939
  %v3886 = vunpack.c.l.b16 %v1940
  %v3887 = vunpack.c.h.b16 %v1940
  %v3888 = vunpack.c.l.b16 %v1941
  %v3889 = vunpack.c.h.b16 %v1941
  %v3890 = vunpack.c.l.b16 %v1942
  %v3891 = vunpack.c.h.b16 %v1942
  %v3892 = vunpack.c.l.b16 %v1943
  %v3893 = vunpack.c.h.b16 %v1943
  %v3894 = vunpack.c.l.b16 %v1944
  %v3895 = vunpack.c.h.b16 %v1944
  %v3896 = vunpack.c.l.b16 %v1945
  %v3897 = vunpack.c.l.b16 %v1946
  %v3898 = vunpack.c.h.b16 %v1946
  %v3899 = vunpack.c.l.b16 %v1947
  %v3900 = vunpack.c.h.b16 %v1947
  %v3901 = vunpack.c.l.b16 %v1948
  %v3902 = vunpack.c.h.b16 %v1948
  %v3903 = vunpack.c.l.b16 %v1949
  %v3904 = vunpack.c.h.b16 %v1949
  %v3905 = vunpack.c.l.b16 %v1950
  %v3906 = vunpack.c.h.b16 %v1950
  %v3907 = vunpack.c.l.b16 %v1951
  %v3908 = vunpack.c.h.b16 %v1951
  %v3909 = vunpack.c.l.b16 %v1952
  %v3910 = vunpack.c.l.b16 %v1953
  %v3911 = vunpack.c.h.b16 %v1953
  %v3912 = vunpack.c.l.b16 %v1954
  %v3913 = vunpack.c.h.b16 %v1954
  %v3914 = vunpack.c.l.b16 %v1955
  %v3915 = vunpack.c.h.b16 %v1955
  %v3916 = vunpack.c.l.b16 %v1956
  %v3917 = vunpack.c.h.b16 %v1956
  %v3918 = vunpack.c.l.b16 %v1957
  %v3919 = vunpack.c.h.b16 %v1957
  %v3920 = vunpack.c.l.b16 %v1958
  %v3921 = vunpack.c.h.b16 %v1958
  %v3922 = vunpack.c.l.b16 %v1959
  %v3923 = vunpack.c.l.b16 %v1960
  %v3924 = vunpack.c.h.b16 %v1960
  %v3925 = vunpack.c.l.b16 %v1961
  %v3926 = vunpack.c.h.b16 %v1961
  %v3927 = vunpack.c.l.b16 %v1962
  %v3928 = vunpack.c.h.b16 %v1962
  %v3929 = vunpack.c.l.b16 %v1963
  %v3930 = vunpack.c.h.b16 %v1963
  %v3931 = vunpack.c.l.b16 %v1964
  %v3932 = vunpack.c.h.b16 %v1964
  %v3933 = vunpack.c.l.b16 %v1965
  %v3934 = vunpack.c.h.b16 %v1965
  %v3935 = vunpack.c.l.b16 %v1966
  %v3936 = vunpack.c.l.b16 %v1967
  %v3937 = vunpack.c.h.b16 %v1967
  %v3938 = vunpack.c.l.b16 %v1968
  %v3939 = vunpack.c.h.b16 %v1968
  %v3940 = vunpack.c.l.b16 %v1969
  %v3941 = vunpack.c.h.b16 %v1969
  %v3942 = vunpack.c.l.b16 %v1970
  %v3943 = vunpack.c.h.b16 %v1970
  %v3944 = vunpack.c.l.b16 %v1971
  %v3945 = vunpack.c.h.b16 %v1971
  %v3946 = vunpack.c.l.b16 %v1972
  %v3947 = vunpack.c.h.b16 %v1972
  %v3948 = vunpack.c.l.b16 %v1973
  %v3949 = vunpack.c.l.b16 %v1974
  %v3950 = vunpack.c.h.b16 %v1974
  %v3951 = vunpack.c.l.b16 %v1975
  %v3952 = vunpack.c.h.b16 %v1975
  %v3953 = vunpack.c.l.b16 %v1976
  %v3954 = vunpack.c.h.b16 %v1976
  %v3955 = vunpack.c.l.b16 %v1977
  %v3956 = vunpack.c.h.b16 %v1977
  %v3957 = vunpack.c.l.b16 %v1978
  %v3958 = vunpack.c.h.b16 %v1978
  %v3959 = vunpack.c.l.b16 %v1979
  %v3960 = vunpack.c.h.b16 %v1979
  %v3961 = vunpack.c.l.b16 %v1980
  %v3962 = vunpack.c.l.b16 %v1981
  %v3963 = vunpack.c.h.b16 %v1981
  %v3964 = vunpack.c.l.b16 %v1982
  %v3965 = vunpack.c.h.b16 %v1982
  %v3966 = vunpack.c.l.b16 %v1983
  %v3967 = vunpack.c.h.b16 %v1983
  %v3968 = vunpack.c.l.b16 %v1984
  %v3969 = vunpack.c.h.b16 %v1984
  %v3970 = vunpack.c.l.b16 %v1985
  %v3971 = vunpack.c.h.b16 %v1985
  %v3972 = vunpack.c.l.b16 %v1986
  %v3973 = vunpack.c.h.b16 %v1986
  %v3974 = vunpack.c.l.b16 %v1987
  %v3975 = vunpack.c.l.b16 %v1988
  %v3976 = vunpack.c.h.b16 %v1988
  %v3977 = vunpack.c.l.b16 %v1989
  %v3978 = vunpack.c.h.b16 %v1989
  %v3979 = vunpack.c.l.b16 %v1990
  %v3980 = vunpack.c.h.b16 %v1990
  %v3981 = vunpack.c.l.b16 %v1991
  %v3982 = vunpack.c.h.b16 %v1991
  %v3983 = vunpack.c.l.b16 %v1992
  %v3984 = vunpack.c.h.b16 %v1992
  %v3985 = vunpack.c.l.b16 %v1993
  %v3986 = vunpack.c.h.b16 %v1993
  %v3987 = vunpack.c.l.b16 %v1994
  %v3988 = vunpack.c.l.b16 %v1995
  %v3989 = vunpack.c.h.b16 %v1995
  %v3990 = vunpack.c.l.b16 %v1996
  %v3991 = vunpack.c.h.b16 %v1996
  %v3992 = vunpack.c.l.b16 %v1997
  %v3993 = vunpack.c.h.b16 %v1997
  %v3994 = vunpack.c.l.b16 %v1998
  %v3995 = vunpack.c.h.b16 %v1998
  %v3996 = vunpack.c.l.b16 %v1999
  %v3997 = vunpack.c.h.b16 %v1999
  %v3998 = vunpack.c.l.b16 %v2000
  %v3999 = vunpack.c.h.b16 %v2000
  %v4000 = vunpack.c.l.b16 %v2001
  %v4001 = vunpack.c.l.b16 %v2002
  %v4002 = vunpack.c.h.b16 %v2002
  %v4003 = vunpack.c.l.b16 %v2003
  %v4004 = vunpack.c.h.b16 %v2003
  %v4005 = vunpack.c.l.b16 %v2004
  %v4006 = vunpack.c.h.b16 %v2004
  %v4007 = vunpack.c.l.b16 %v2005
  %v4008 = vunpack.c.h.b16 %v2005
  %v4009 = vunpack.c.l.b16 %v2006
  %v4010 = vunpack.c.h.b16 %v2006
  %v4011 = vunpack.c.l.b16 %v2007
  %v4012 = vunpack.c.h.b16 %v2007
  %v4013 = vunpack.c.l.b16 %v2008
  %v4014 = vunpack.c.l.b16 %v2009
  %v4015 = vunpack.c.h.b16 %v2009
  %v4016 = vunpack.c.l.b16 %v2010
  %v4017 = vunpack.c.h.b16 %v2010
  %v4018 = vunpack.c.l.b16 %v2011
  %v4019 = vunpack.c.h.b16 %v2011
  %v4020 = vunpack.c.l.b16 %v2012
  %v4021 = vunpack.c.h.b16 %v2012
  %v4022 = vunpack.c.l.b16 %v2013
  %v4023 = vunpack.c.h.b16 %v2013
  %v4024 = vunpack.c.l.b16 %v2014
  %v4025 = vunpack.c.h.b16 %v2014
  %v4026 = vunpack.c.l.b16 %v2015
  %v4027 = vunpack.c.l.b16 %v2016
  %v4028 = vunpack.c.h.b16 %v2016
  %v4029 = vunpack.c.l.b16 %v2017
  %v4030 = vunpack.c.h.b16 %v2017
  %v4031 = vunpack.c.l.b16 %v2018
  %v4032 = vunpack.c.h.b16 %v2018
  %v4033 = vunpack.c.l.b16 %v2019
  %v4034 = vunpack.c.h.b16 %v2019
  %v4035 = vunpack.c.l.b16 %v2020
  %v4036 = vunpack.c.h.b16 %v2020
  %v4037 = vunpack.c.l.b16 %v2021
  %v4038 = vunpack.c.h.b16 %v2021
  %v4039 = vunpack.c.l.b16 %v2022
  %v4040 = vunpack.c.l.b16 %v2023
  %v4041 = vunpack.c.h.b16 %v2023
  %v4042 = vunpack.c.l.b16 %v2024
  %v4043 = vunpack.c.h.b16 %v2024
  %v4044 = vunpack.c.l.b16 %v2025
  %v4045 = vunpack.c.h.b16 %v2025
  %v4046 = vunpack.c.l.b16 %v2026
  %v4047 = vunpack.c.h.b16 %v2026
  %v4048 = vunpack.c.l.b16 %v2027
  %v4049 = vunpack.c.h.b16 %v2027
  %v4050 = vunpack.c.l.b16 %v2028
  %v4051 = vunpack.c.h.b16 %v2028
  %v4052 = vunpack.c.l.b16 %v2029
  %v4053 = vunpack.c.l.b16 %v2030
  %v4054 = vunpack.c.h.b16 %v2030
  %v4055 = vunpack.c.l.b16 %v2031
  %v4056 = vunpack.c.h.b16 %v2031
  %v4057 = vunpack.c.l.b16 %v2032
  %v4058 = vunpack.c.h.b16 %v2032
  %v4059 = vunpack.c.l.b16 %v2033
  %v4060 = vunpack.c.h.b16 %v2033
  %v4061 = vunpack.c.l.b16 %v2034
  %v4062 = vunpack.c.h.b16 %v2034
  %v4063 = vunpack.c.l.b16 %v2035
  %v4064 = vunpack.c.h.b16 %v2035
  %v4065 = vunpack.c.l.b16 %v2036
  %v4066 = vpack.c.b16 %v2805, %v2792
  %v4067 = vpack.c.b16 %v2806, %v2793
  %v4068 = vpack.c.b16 %v2807, %v2794
  %v4069 = vpack.c.b16 %v2808, %v2795
  %v4070 = vpack.c.b16 %v2809, %v2796
  %v4071 = vpack.c.b16 %v2810, %v2797
  %v4072 = vpack.c.b16 %v2811, %v2798
  %v4073 = vpack.c.b16 %v2812, %v2799
  %v4074 = vpack.c.b16 %v2813, %v2800
  %v4075 = vpack.c.b16 %v2814, %v2801
  %v4076 = vpack.c.b16 %v2815, %v2802
  %v4077 = vpack.c.b16 %v2816, %v2803
  %v4078 = vpack.c.b16 %v2817, %v2804
  %v4079 = vpack.c.b16 %v2831, %v2818
  %v4080 = vpack.c.b16 %v2832, %v2819
  %v4081 = vpack.c.b16 %v2833, %v2820
  %v4082 = vpack.c.b16 %v2834, %v2821
  %v4083 = vpack.c.b16 %v2835, %v2822
  %v4084 = vpack.c.b16 %v2836, %v2823
  %v4085 = vpack.c.b16 %v2837, %v2824
  %v4086 = vpack.c.b16 %v2838, %v2825
  %v4087 = vpack.c.b16 %v2839, %v2826
  %v4088 = vpack.c.b16 %v2840, %v2827
  %v4089 = vpack.c.b16 %v2841, %v2828
  %v4090 = vpack.c.b16 %v2842, %v2829
  %v4091 = vpack.c.b16 %v2843, %v2830
  %v4092 = vpack.c.b16 %v2857, %v2844
  %v4093 = vpack.c.b16 %v2858, %v2845
  %v4094 = vpack.c.b16 %v2859, %v2846
  %v4095 = vpack.c.b16 %v2860, %v2847
  %v4096 = vpack.c.b16 %v2861, %v2848
  %v4097 = vpack.c.b16 %v2862, %v2849
  %v4098 = vpack.c.b16 %v2863, %v2850
  %v4099 = vpack.c.b16 %v2864, %v2851
  %v4100 = vpack.c.b16 %v2865, %v2852
  %v4101 = vpack.c.b16 %v2866, %v2853
  %v4102 = vpack.c.b16 %v2867, %v2854
  %v4103 = vpack.c.b16 %v2868, %v2855
  %v4104 = vpack.c.b16 %v2869, %v2856
  %v4105 = vpack.c.b16 %v2883, %v2870
  %v4106 = vpack.c.b16 %v2884, %v2871
  %v4107 = vpack.c.b16 %v2885, %v2872
  %v4108 = vpack.c.b16 %v2886, %v2873
  %v4109 = vpack.c.b16 %v2887, %v2874
  %v4110 = vpack.c.b16 %v2888, %v2875
  %v4111 = vpack.c.b16 %v2889, %v2876
  %v4112 = vpack.c.b16 %v2890, %v2877
  %v4113 = vpack.c.b16 %v2891, %v2878
  %v4114 = vpack.c.b16 %v2892, %v2879
  %v4115 = vpack.c.b16 %v2893, %v2880
  %v4116 = vpack.c.b16 %v2894, %v2881
  %v4117 = vpack.c.b16 %v2895, %v2882
  %v4118 = vpack.c.b16 %v2909, %v2896
  %v4119 = vpack.c.b16 %v2910, %v2897
  %v4120 = vpack.c.b16 %v2911, %v2898
  %v4121 = vpack.c.b16 %v2912, %v2899
  %v4122 = vpack.c.b16 %v2913, %v2900
  %v4123 = vpack.c.b16 %v2914, %v2901
  %v4124 = vpack.c.b16 %v2915, %v2902
  %v4125 = vpack.c.b16 %v2916, %v2903
  %v4126 = vpack.c.b16 %v2917, %v2904
  %v4127 = vpack.c.b16 %v2918, %v2905
  %v4128 = vpack.c.b16 %v2919, %v2906
  %v4129 = vpack.c.b16 %v2920, %v2907
  %v4130 = vpack.c.b16 %v2921, %v2908
  %v4131 = vpack.c.b16 %v2935, %v2922
  %v4132 = vpack.c.b16 %v2936, %v2923
  %v4133 = vpack.c.b16 %v2937, %v2924
  %v4134 = vpack.c.b16 %v2938, %v2925
  %v4135 = vpack.c.b16 %v2939, %v2926
  %v4136 = vpack.c.b16 %v2940, %v2927
  %v4137 = vpack.c.b16 %v2941, %v2928
  %v4138 = vpack.c.b16 %v2942, %v2929
  %v4139 = vpack.c.b16 %v2943, %v2930
  %v4140 = vpack.c.b16 %v2944, %v2931
  %v4141 = vpack.c.b16 %v2945, %v2932
  %v4142 = vpack.c.b16 %v2946, %v2933
  %v4143 = vpack.c.b16 %v2947, %v2934
  %v4144 = vpack.c.b16 %v2961, %v2948
  %v4145 = vpack.c.b16 %v2962, %v2949
  %v4146 = vpack.c.b16 %v2963, %v2950
  %v4147 = vpack.c.b16 %v2964, %v2951
  %v4148 = vpack.c.b16 %v2965, %v2952
  %v4149 = vpack.c.b16 %v2966, %v2953
  %v4150 = vpack.c.b16 %v2967, %v2954
  %v4151 = vpack.c.b16 %v2968, %v2955
  %v4152 = vpack.c.b16 %v2969, %v2956
  %v4153 = vpack.c.b16 %v2970, %v2957
  %v4154 = vpack.c.b16 %v2971, %v2958
  %v4155 = vpack.c.b16 %v2972, %v2959
  %v4156 = vpack.c.b16 %v2973, %v2960
  %v4157 = vpack.c.b16 %v2987, %v2974
  %v4158 = vpack.c.b16 %v2988, %v2975
  %v4159 = vpack.c.b16 %v2989, %v2976
  %v4160 = vpack.c.b16 %v2990, %v2977
  %v4161 = vpack.c.b16 %v2991, %v2978
  %v4162 = vpack.c.b16 %v2992, %v2979
  %v4163 = vpack.c.b16 %v2993, %v2980
  %v4164 = vpack.c.b16 %v2994, %v2981
  %v4165 = vpack.c.b16 %v2995, %v2982
  %v4166 = vpack.c.b16 %v2996, %v2983
  %v4167 = vpack.c.b16 %v2997, %v2984
  %v4168 = vpack.c.b16 %v2998, %v2985
  %v4169 = vpack.c.b16 %v2999, %v2986
  %v4170 = vpack.c.b16 %v3013, %v3000
  %v4171 = vpack.c.b16 %v3014, %v3001
  %v4172 = vpack.c.b16 %v3015, %v3002
  %v4173 = vpack.c.b16 %v3016, %v3003
  %v4174 = vpack.c.b16 %v3017, %v3004
  %v4175 = vpack.c.b16 %v3018, %v3005
  %v4176 = vpack.c.b16 %v3019, %v3006
  %v4177 = vpack.c.b16 %v3020, %v3007
  %v4178 = vpack.c.b16 %v3021, %v3008
  %v4179 = vpack.c.b16 %v3022, %v3009
  %v4180 = vpack.c.b16 %v3023, %v3010
  %v4181 = vpack.c.b16 %v3024, %v3011
  %v4182 = vpack.c.b16 %v3025, %v3012
  %v4183 = vpack.c.b16 %v3039, %v3026
  %v4184 = vpack.c.b16 %v3040, %v3027
  %v4185 = vpack.c.b16 %v3041, %v3028
  %v4186 = vpack.c.b16 %v3042, %v3029
  %v4187 = vpack.c.b16 %v3043, %v3030
  %v4188 = vpack.c.b16 %v3044, %v3031
  %v4189 = vpack.c.b16 %v3045, %v3032
  %v4190 = vpack.c.b16 %v3046, %v3033
  %v4191 = vpack.c.b16 %v3047, %v3034
  %v4192 = vpack.c.b16 %v3048, %v3035
  %v4193 = vpack.c.b16 %v3049, %v3036
  %v4194 = vpack.c.b16 %v3050, %v3037
  %v4195 = vpack.c.b16 %v3051, %v3038
  %v4196 = vpack.c.b16 %v3065, %v3052
  %v4197 = vpack.c.b16 %v3066, %v3053
  %v4198 = vpack.c.b16 %v3067, %v3054
  %v4199 = vpack.c.b16 %v3068, %v3055
  %v4200 = vpack.c.b16 %v3069, %v3056
  %v4201 = vpack.c.b16 %v3070, %v3057
  %v4202 = vpack.c.b16 %v3071, %v3058
  %v4203 = vpack.c.b16 %v3072, %v3059
  %v4204 = vpack.c.b16 %v3073, %v3060
  %v4205 = vpack.c.b16 %v3074, %v3061
  %v4206 = vpack.c.b16 %v3075, %v3062
  %v4207 = vpack.c.b16 %v3076, %v3063
  %v4208 = vpack.c.b16 %v3077, %v3064
  %v4209 = vpack.c.b16 %v3091, %v3078
  %v4210 = vpack.c.b16 %v3092, %v3079
  %v4211 = vpack.c.b16 %v3093, %v3080
  %v4212 = vpack.c.b16 %v3094, %v3081
  %v4213 = vpack.c.b16 %v3095, %v3082
  %v4214 = vpack.c.b16 %v3096, %v3083
  %v4215 = vpack.c.b16 %v3097, %v3084
  %v4216 = vpack.c.b16 %v3098, %v3085
  %v4217 = vpack.c.b16 %v3099, %v3086
  %v4218 = vpack.c.b16 %v3100, %v3087
  %v4219 = vpack.c.b16 %v3101, %v3088
  %v4220 = vpack.c.b16 %v3102, %v3089
  %v4221 = vpack.c.b16 %v3103, %v3090
  %v4222 = vpack.c.b16 %v3117, %v3104
  %v4223 = vpack.c.b16 %v3118, %v3105
  %v4224 = vpack.c.b16 %v3119, %v3106
  %v4225 = vpack.c.b16 %v3120, %v3107
  %v4226 = vpack.c.b16 %v3121, %v3108
  %v4227 = vpack.c.b16 %v3122, %v3109
  %v4228 = vpack.c.b16 %v3123, %v3110
  %v4229 = vpack.c.b16 %v3124, %v3111
  %v4230 = vpack.c.b16 %v3125, %v3112
  %v4231 = vpack.c.b16 %v3126, %v3113
  %v4232 = vpack.c.b16 %v3127, %v3114
  %v4233 = vpack.c.b16 %v3128, %v3115
  %v4234 = vpack.c.b16 %v3129, %v3116
  %v4235 = vpack.c.b16 %v3143, %v3130
  %v4236 = vpack.c.b16 %v3144, %v3131
  %v4237 = vpack.c.b16 %v3145, %v3132
  %v4238 = vpack.c.b16 %v3146, %v3133
  %v4239 = vpack.c.b16 %v3147, %v3134
  %v4240 = vpack.c.b16 %v3148, %v3135
  %v4241 = vpack.c.b16 %v3149, %v3136
  %v4242 = vpack.c.b16 %v3150, %v3137
  %v4243 = vpack.c.b16 %v3151, %v3138
  %v4244 = vpack.c.b16 %v3152, %v3139
  %v4245 = vpack.c.b16 %v3153, %v3140
  %v4246 = vpack.c.b16 %v3154, %v3141
  %v4247 = vpack.c.b16 %v3155, %v3142
  %v4248 = vpack.c.b16 %v3169, %v3156
  %v4249 = vpack.c.b16 %v3170, %v3157
  %v4250 = vpack.c.b16 %v3171, %v3158
  %v4251 = vpack.c.b16 %v3172, %v3159
  %v4252 = vpack.c.b16 %v3173, %v3160
  %v4253 = vpack.c.b16 %v3174, %v3161
  %v4254 = vpack.c.b16 %v3175, %v3162
  %v4255 = vpack.c.b16 %v3176, %v3163
  %v4256 = vpack.c.b16 %v3177, %v3164
  %v4257 = vpack.c.b16 %v3178, %v3165
  %v4258 = vpack.c.b16 %v3179, %v3166
  %v4259 = vpack.c.b16 %v3180, %v3167
  %v4260 = vpack.c.b16 %v3181, %v3168
  %v4261 = vpack.c.b16 %v3195, %v3182
  %v4262 = vpack.c.b16 %v3196, %v3183
  %v4263 = vpack.c.b16 %v3197, %v3184
  %v4264 = vpack.c.b16 %v3198, %v3185
  %v4265 = vpack.c.b16 %v3199, %v3186
  %v4266 = vpack.c.b16 %v3200, %v3187
  %v4267 = vpack.c.b16 %v3201, %v3188
  %v4268 = vpack.c.b16 %v3202, %v3189
  %v4269 = vpack.c.b16 %v3203, %v3190
  %v4270 = vpack.c.b16 %v3204, %v3191
  %v4271 = vpack.c.b16 %v3205, %v3192
  %v4272 = vpack.c.b16 %v3206, %v3193
  %v4273 = vpack.c.b16 %v3207, %v3194
  %v4274 = vpack.c.b16 %v3221, %v3208
  %v4275 = vpack.c.b16 %v3222, %v3209
  %v4276 = vpack.c.b16 %v3223, %v3210
  %v4277 = vpack.c.b16 %v3224, %v3211
  %v4278 = vpack.c.b16 %v3225, %v3212
  %v4279 = vpack.c.b16 %v3226, %v3213
  %v4280 = vpack.c.b16 %v3227, %v3214
  %v4281 = vpack.c.b16 %v3228, %v3215
  %v4282 = vpack.c.b16 %v3229, %v3216
  %v4283 = vpack.c.b16 %v3230, %v3217
  %v4284 = vpack.c.b16 %v3231, %v3218
  %v4285 = vpack.c.b16 %v3232, %v3219
  %v4286 = vpack.c.b16 %v3233, %v3220
  %v4287 = vpack.c.b16 %v3247, %v3234
  %v4288 = vpack.c.b16 %v3248, %v3235
  %v4289 = vpack.c.b16 %v3249, %v3236
  %v4290 = vpack.c.b16 %v3250, %v3237
  %v4291 = vpack.c.b16 %v3251, %v3238
  %v4292 = vpack.c.b16 %v3252, %v3239
  %v4293 = vpack.c.b16 %v3253, %v3240
  %v4294 = vpack.c.b16 %v3254, %v3241
  %v4295 = vpack.c.b16 %v3255, %v3242
  %v4296 = vpack.c.b16 %v3256, %v3243
  %v4297 = vpack.c.b16 %v3257, %v3244
  %v4298 = vpack.c.b16 %v3258, %v3245
  %v4299 = vpack.c.b16 %v3259, %v3246
  %v4300 = vpack.c.b16 %v3273, %v3260
  %v4301 = vpack.c.b16 %v3274, %v3261
  %v4302 = vpack.c.b16 %v3275, %v3262
  %v4303 = vpack.c.b16 %v3276, %v3263
  %v4304 = vpack.c.b16 %v3277, %v3264
  %v4305 = vpack.c.b16 %v3278, %v3265
  %v4306 = vpack.c.b16 %v3279, %v3266
  %v4307 = vpack.c.b16 %v3280, %v3267
  %v4308 = vpack.c.b16 %v3281, %v3268
  %v4309 = vpack.c.b16 %v3282, %v3269
  %v4310 = vpack.c.b16 %v3283, %v3270
  %v4311 = vpack.c.b16 %v3284, %v3271
  %v4312 = vpack.c.b16 %v3285, %v3272
  %v4313 = vpack.c.b16 %v3299, %v3286
  %v4314 = vpack.c.b16 %v3300, %v3287
  %v4315 = vpack.c.b16 %v3301, %v3288
  %v4316 = vpack.c.b16 %v3302, %v3289
  %v4317 = vpack.c.b16 %v3303, %v3290
  %v4318 = vpack.c.b16 %v3304, %v3291
  %v4319 = vpack.c.b16 %v3305, %v3292
  %v4320 = vpack.c.b16 %v3306, %v3293
  %v4321 = vpack.c.b16 %v3307, %v3294
  %v4322 = vpack.c.b16 %v3308, %v3295
  %v4323 = vpack.c.b16 %v3309, %v3296
  %v4324 = vpack.c.b16 %v3310, %v3297
  %v4325 = vpack.c.b16 %v3311, %v3298
  %v4326 = vpack.c.b16 %v3325, %v3312
  %v4327 = vpack.c.b16 %v3326, %v3313
  %v4328 = vpack.c.b16 %v3327, %v3314
  %v4329 = vpack.c.b16 %v3328, %v3315
  %v4330 = vpack.c.b16 %v3329, %v3316
  %v4331 = vpack.c.b16 %v3330, %v3317
  %v4332 = vpack.c.b16 %v3331, %v3318
  %v4333 = vpack.c.b16 %v3332, %v3319
  %v4334 = vpack.c.b16 %v3333, %v3320
  %v4335 = vpack.c.b16 %v3334, %v3321
  %v4336 = vpack.c.b16 %v3335, %v3322
  %v4337 = vpack.c.b16 %v3336, %v3323
  %v4338 = vpack.c.b16 %v3337, %v3324
  %v4339 = vpack.c.b16 %v3351, %v3338
  %v4340 = vpack.c.b16 %v3352, %v3339
  %v4341 = vpack.c.b16 %v3353, %v3340
  %v4342 = vpack.c.b16 %v3354, %v3341
  %v4343 = vpack.c.b16 %v3355, %v3342
  %v4344 = vpack.c.b16 %v3356, %v3343
  %v4345 = vpack.c.b16 %v3357, %v3344
  %v4346 = vpack.c.b16 %v3358, %v3345
  %v4347 = vpack.c.b16 %v3359, %v3346
  %v4348 = vpack.c.b16 %v3360, %v3347
  %v4349 = vpack.c.b16 %v3361, %v3348
  %v4350 = vpack.c.b16 %v3362, %v3349
  %v4351 = vpack.c.b16 %v3363, %v3350
  %v4352 = vpack.c.b16 %v3377, %v3364
  %v4353 = vpack.c.b16 %v3378, %v3365
  %v4354 = vpack.c.b16 %v3379, %v3366
  %v4355 = vpack.c.b16 %v3380, %v3367
  %v4356 = vpack.c.b16 %v3381, %v3368
  %v4357 = vpack.c.b16 %v3382, %v3369
  %v4358 = vpack.c.b16 %v3383, %v3370
  %v4359 = vpack.c.b16 %v3384, %v3371
  %v4360 = vpack.c.b16 %v3385, %v3372
  %v4361 = vpack.c.b16 %v3386, %v3373
  %v4362 = vpack.c.b16 %v3387, %v3374
  %v4363 = vpack.c.b16 %v3388, %v3375
  %v4364 = vpack.c.b16 %v3389, %v3376
  %v4365 = vpack.c.b16 %v3403, %v3390
  %v4366 = vpack.c.b16 %v3404, %v3391
  %v4367 = vpack.c.b16 %v3405, %v3392
  %v4368 = vpack.c.b16 %v3406, %v3393
  %v4369 = vpack.c.b16 %v3407, %v3394
  %v4370 = vpack.c.b16 %v3408, %v3395
  %v4371 = vpack.c.b16 %v3409, %v3396
  %v4372 = vpack.c.b16 %v3410, %v3397
  %v4373 = vpack.c.b16 %v3411, %v3398
  %v4374 = vpack.c.b16 %v3412, %v3399
  %v4375 = vpack.c.b16 %v3413, %v3400
  %v4376 = vpack.c.b16 %v3414, %v3401
  %v4377 = vpack.c.b16 %v3415, %v3402
  %v4378 = vpack.c.b16 %v3429, %v3416
  %v4379 = vpack.c.b16 %v3430, %v3417
  %v4380 = vpack.c.b16 %v3431, %v3418
  %v4381 = vpack.c.b16 %v3432, %v3419
  %v4382 = vpack.c.b16 %v3433, %v3420
  %v4383 = vpack.c.b16 %v3434, %v3421
  %v4384 = vpack.c.b16 %v3435, %v3422
  %v4385 = vpack.c.b16 %v3436, %v3423
  %v4386 = vpack.c.b16 %v3437, %v3424
  %v4387 = vpack.c.b16 %v3438, %v3425
  %v4388 = vpack.c.b16 %v3439, %v3426
  %v4389 = vpack.c.b16 %v3440, %v3427
  %v4390 = vpack.c.b16 %v3441, %v3428
  %v4391 = vpack.c.b16 %v3455, %v3442
  %v4392 = vpack.c.b16 %v3456, %v3443
  %v4393 = vpack.c.b16 %v3457, %v3444
  %v4394 = vpack.c.b16 %v3458, %v3445
  %v4395 = vpack.c.b16 %v3459, %v3446
  %v4396 = vpack.c.b16 %v3460, %v3447
  %v4397 = vpack.c.b16 %v3461, %v3448
  %v4398 = vpack.c.b16 %v3462, %v3449
  %v4399 = vpack.c.b16 %v3463, %v3450
  %v4400 = vpack.c.b16 %v3464, %v3451
  %v4401 = vpack.c.b16 %v3465, %v3452
  %v4402 = vpack.c.b16 %v3466, %v3453
  %v4403 = vpack.c.b16 %v3467, %v3454
  %v4404 = vpack.c.b16 %v3481, %v3468
  %v4405 = vpack.c.b16 %v3482, %v3469
  %v4406 = vpack.c.b16 %v3483, %v3470
  %v4407 = vpack.c.b16 %v3484, %v3471
  %v4408 = vpack.c.b16 %v3485, %v3472
  %v4409 = vpack.c.b16 %v3486, %v3473
  %v4410 = vpack.c.b16 %v3487, %v3474
  %v4411 = vpack.c.b16 %v3488, %v3475
  %v4412 = vpack.c.b16 %v3489, %v3476
  %v4413 = vpack.c.b16 %v3490, %v3477
  %v4414 = vpack.c.b16 %v3491, %v3478
  %v4415 = vpack.c.b16 %v3492, %v3479
  %v4416 = vpack.c.b16 %v3493, %v3480
  %v4417 = vpack.c.b16 %v3507, %v3494
  %v4418 = vpack.c.b16 %v3508, %v3495
  %v4419 = vpack.c.b16 %v3509, %v3496
  %v4420 = vpack.c.b16 %v3510, %v3497
  %v4421 = vpack.c.b16 %v3511, %v3498
  %v4422 = vpack.c.b16 %v3512, %v3499
  %v4423 = vpack.c.b16 %v3513, %v3500
  %v4424 = vpack.c.b16 %v3514, %v3501
  %v4425 = vpack.c.b16 %v3515, %v3502
  %v4426 = vpack.c.b16 %v3516, %v3503
  %v4427 = vpack.c.b16 %v3517, %v3504
  %v4428 = vpack.c.b16 %v3518, %v3505
  %v4429 = vpack.c.b16 %v3519, %v3506
  %v4430 = vpack.c.b16 %v3533, %v3520
  %v4431 = vpack.c.b16 %v3534, %v3521
  %v4432 = vpack.c.b16 %v3535, %v3522
  %v4433 = vpack.c.b16 %v3536, %v3523
  %v4434 = vpack.c.b16 %v3537, %v3524
  %v4435 = vpack.c.b16 %v3538, %v3525
  %v4436 = vpack.c.b16 %v3539, %v3526
  %v4437 = vpack.c.b16 %v3540, %v3527
  %v4438 = vpack.c.b16 %v3541, %v3528
  %v4439 = vpack.c.b16 %v3542, %v3529
  %v4440 = vpack.c.b16 %v3543, %v3530
  %v4441 = vpack.c.b16 %v3544, %v3531
  %v4442 = vpack.c.b16 %v3545, %v3532
  %v4443 = vpack.c.b16 %v3559, %v3546
  %v4444 = vpack.c.b16 %v3560, %v3547
  %v4445 = vpack.c.b16 %v3561, %v3548
  %v4446 = vpack.c.b16 %v3562, %v3549
  %v4447 = vpack.c.b16 %v3563, %v3550
  %v4448 = vpack.c.b16 %v3564, %v3551
  %v4449 = vpack.c.b16 %v3565, %v3552
  %v4450 = vpack.c.b16 %v3566, %v3553
  %v4451 = vpack.c.b16 %v3567, %v3554
  %v4452 = vpack.c.b16 %v3568, %v3555
  %v4453 = vpack.c.b16 %v3569, %v3556
  %v4454 = vpack.c.b16 %v3570, %v3557
  %v4455 = vpack.c.b16 %v3571, %v3558
  %v4456 = vpack.c.b16 %v3585, %v3572
  %v4457 = vpack.c.b16 %v3586, %v3573
  %v4458 = vpack.c.b16 %v3587, %v3574
  %v4459 = vpack.c.b16 %v3588, %v3575
  %v4460 = vpack.c.b16 %v3589, %v3576
  %v4461 = vpack.c.b16 %v3590, %v3577
  %v4462 = vpack.c.b16 %v3591, %v3578
  %v4463 = vpack.c.b16 %v3592, %v3579
  %v4464 = vpack.c.b16 %v3593, %v3580
  %v4465 = vpack.c.b16 %v3594, %v3581
  %v4466 = vpack.c.b16 %v3595, %v3582
  %v4467 = vpack.c.b16 %v3596, %v3583
  %v4468 = vpack.c.b16 %v3597, %v3584
  %v4469 = vpack.c.b16 %v3611, %v3598
  %v4470 = vpack.c.b16 %v3612, %v3599
  %v4471 = vpack.c.b16 %v3613, %v3600
  %v4472 = vpack.c.b16 %v3614, %v3601
  %v4473 = vpack.c.b16 %v3615, %v3602
  %v4474 = vpack.c.b16 %v3616, %v3603
  %v4475 = vpack.c.b16 %v3617, %v3604
  %v4476 = vpack.c.b16 %v3618, %v3605
  %v4477 = vpack.c.b16 %v3619, %v3606
  %v4478 = vpack.c.b16 %v3620, %v3607
  %v4479 = vpack.c.b16 %v3621, %v3608
  %v4480 = vpack.c.b16 %v3622, %v3609
  %v4481 = vpack.c.b16 %v3623, %v3610
  %v4482 = vpack.c.b16 %v3637, %v3624
  %v4483 = vpack.c.b16 %v3638, %v3625
  %v4484 = vpack.c.b16 %v3639, %v3626
  %v4485 = vpack.c.b16 %v3640, %v3627
  %v4486 = vpack.c.b16 %v3641, %v3628
  %v4487 = vpack.c.b16 %v3642, %v3629
  %v4488 = vpack.c.b16 %v3643, %v3630
  %v4489 = vpack.c.b16 %v3644, %v3631
  %v4490 = vpack.c.b16 %v3645, %v3632
  %v4491 = vpack.c.b16 %v3646, %v3633
  %v4492 = vpack.c.b16 %v3647, %v3634
  %v4493 = vpack.c.b16 %v3648, %v3635
  %v4494 = vpack.c.b16 %v3649, %v3636
  %v4495 = vpack.c.b16 %v3663, %v3650
  %v4496 = vpack.c.b16 %v3664, %v3651
  %v4497 = vpack.c.b16 %v3665, %v3652
  %v4498 = vpack.c.b16 %v3666, %v3653
  %v4499 = vpack.c.b16 %v3667, %v3654
  %v4500 = vpack.c.b16 %v3668, %v3655
  %v4501 = vpack.c.b16 %v3669, %v3656
  %v4502 = vpack.c.b16 %v3670, %v3657
  %v4503 = vpack.c.b16 %v3671, %v3658
  %v4504 = vpack.c.b16 %v3672, %v3659
  %v4505 = vpack.c.b16 %v3673, %v3660
  %v4506 = vpack.c.b16 %v3674, %v3661
  %v4507 = vpack.c.b16 %v3675, %v3662
  %v4508 = vpack.c.b16 %v3689, %v3676
  %v4509 = vpack.c.b16 %v3690, %v3677
  %v4510 = vpack.c.b16 %v3691, %v3678
  %v4511 = vpack.c.b16 %v3692, %v3679
  %v4512 = vpack.c.b16 %v3693, %v3680
  %v4513 = vpack.c.b16 %v3694, %v3681
  %v4514 = vpack.c.b16 %v3695, %v3682
  %v4515 = vpack.c.b16 %v3696, %v3683
  %v4516 = vpack.c.b16 %v3697, %v3684
  %v4517 = vpack.c.b16 %v3698, %v3685
  %v4518 = vpack.c.b16 %v3699, %v3686
  %v4519 = vpack.c.b16 %v3700, %v3687
  %v4520 = vpack.c.b16 %v3701, %v3688
  %v4521 = vpack.c.b16 %v3715, %v3702
  %v4522 = vpack.c.b16 %v3716, %v3703
  %v4523 = vpack.c.b16 %v3717, %v3704
  %v4524 = vpack.c.b16 %v3718, %v3705
  %v4525 = vpack.c.b16 %v3719, %v3706
  %v4526 = vpack.c.b16 %v3720, %v3707
  %v4527 = vpack.c.b16 %v3721, %v3708
  %v4528 = vpack.c.b16 %v3722, %v3709
  %v4529 = vpack.c.b16 %v3723, %v3710
  %v4530 = vpack.c.b16 %v3724, %v3711
  %v4531 = vpack.c.b16 %v3725, %v3712
  %v4532 = vpack.c.b16 %v3726, %v3713
  %v4533 = vpack.c.b16 %v3727, %v3714
  %v4534 = vpack.c.b16 %v3741, %v3728
  %v4535 = vpack.c.b16 %v3742, %v3729
  %v4536 = vpack.c.b16 %v3743, %v3730
  %v4537 = vpack.c.b16 %v3744, %v3731
  %v4538 = vpack.c.b16 %v3745, %v3732
  %v4539 = vpack.c.b16 %v3746, %v3733
  %v4540 = vpack.c.b16 %v3747, %v3734
  %v4541 = vpack.c.b16 %v3748, %v3735
  %v4542 = vpack.c.b16 %v3749, %v3736
  %v4543 = vpack.c.b16 %v3750, %v3737
  %v4544 = vpack.c.b16 %v3751, %v3738
  %v4545 = vpack.c.b16 %v3752, %v3739
  %v4546 = vpack.c.b16 %v3753, %v3740
  %v4547 = vpack.c.b16 %v3767, %v3754
  %v4548 = vpack.c.b16 %v3768, %v3755
  %v4549 = vpack.c.b16 %v3769, %v3756
  %v4550 = vpack.c.b16 %v3770, %v3757
  %v4551 = vpack.c.b16 %v3771, %v3758
  %v4552 = vpack.c.b16 %v3772, %v3759
  %v4553 = vpack.c.b16 %v3773, %v3760
  %v4554 = vpack.c.b16 %v3774, %v3761
  %v4555 = vpack.c.b16 %v3775, %v3762
  %v4556 = vpack.c.b16 %v3776, %v3763
  %v4557 = vpack.c.b16 %v3777, %v3764
  %v4558 = vpack.c.b16 %v3778, %v3765
  %v4559 = vpack.c.b16 %v3779, %v3766
  %v4560 = vpack.c.b16 %v3793, %v3780
  %v4561 = vpack.c.b16 %v3794, %v3781
  %v4562 = vpack.c.b16 %v3795, %v3782
  %v4563 = vpack.c.b16 %v3796, %v3783
  %v4564 = vpack.c.b16 %v3797, %v3784
  %v4565 = vpack.c.b16 %v3798, %v3785
  %v4566 = vpack.c.b16 %v3799, %v3786
  %v4567 = vpack.c.b16 %v3800, %v3787
  %v4568 = vpack.c.b16 %v3801, %v3788
  %v4569 = vpack.c.b16 %v3802, %v3789
  %v4570 = vpack.c.b16 %v3803, %v3790
  %v4571 = vpack.c.b16 %v3804, %v3791
  %v4572 = vpack.c.b16 %v3805, %v3792
  %v4573 = vpack.c.b16 %v3819, %v3806
  %v4574 = vpack.c.b16 %v3820, %v3807
  %v4575 = vpack.c.b16 %v3821, %v3808
  %v4576 = vpack.c.b16 %v3822, %v3809
  %v4577 = vpack.c.b16 %v3823, %v3810
  %v4578 = vpack.c.b16 %v3824, %v3811
  %v4579 = vpack.c.b16 %v3825, %v3812
  %v4580 = vpack.c.b16 %v3826, %v3813
  %v4581 = vpack.c.b16 %v3827, %v3814
  %v4582 = vpack.c.b16 %v3828, %v3815
  %v4583 = vpack.c.b16 %v3829, %v3816
  %v4584 = vpack.c.b16 %v3830, %v3817
  %v4585 = vpack.c.b16 %v3831, %v3818
  %v4586 = vpack.c.b16 %v3845, %v3832
  %v4587 = vpack.c.b16 %v3846, %v3833
  %v4588 = vpack.c.b16 %v3847, %v3834
  %v4589 = vpack.c.b16 %v3848, %v3835
  %v4590 = vpack.c.b16 %v3849, %v3836
  %v4591 = vpack.c.b16 %v3850, %v3837
  %v4592 = vpack.c.b16 %v3851, %v3838
  %v4593 = vpack.c.b16 %v3852, %v3839
  %v4594 = vpack.c.b16 %v3853, %v3840
  %v4595 = vpack.c.b16 %v3854, %v3841
  %v4596 = vpack.c.b16 %v3855, %v3842
  %v4597 = vpack.c.b16 %v3856, %v3843
  %v4598 = vpack.c.b16 %v3857, %v3844
  %v4599 = vpack.c.b16 %v3871, %v3858
  %v4600 = vpack.c.b16 %v3872, %v3859
  %v4601 = vpack.c.b16 %v3873, %v3860
  %v4602 = vpack.c.b16 %v3874, %v3861
  %v4603 = vpack.c.b16 %v3875, %v3862
  %v4604 = vpack.c.b16 %v3876, %v3863
  %v4605 = vpack.c.b16 %v3877, %v3864
  %v4606 = vpack.c.b16 %v3878, %v3865
  %v4607 = vpack.c.b16 %v3879, %v3866
  %v4608 = vpack.c.b16 %v3880, %v3867
  %v4609 = vpack.c.b16 %v3881, %v3868
  %v4610 = vpack.c.b16 %v3882, %v3869
  %v4611 = vpack.c.b16 %v3883, %v3870
  %v4612 = vpack.c.b16 %v3897, %v3884
  %v4613 = vpack.c.b16 %v3898, %v3885
  %v4614 = vpack.c.b16 %v3899, %v3886
  %v4615 = vpack.c.b16 %v3900, %v3887
  %v4616 = vpack.c.b16 %v3901, %v3888
  %v4617 = vpack.c.b16 %v3902, %v3889
  %v4618 = vpack.c.b16 %v3903, %v3890
  %v4619 = vpack.c.b16 %v3904, %v3891
  %v4620 = vpack.c.b16 %v3905, %v3892
  %v4621 = vpack.c.b16 %v3906, %v3893
  %v4622 = vpack.c.b16 %v3907, %v3894
  %v4623 = vpack.c.b16 %v3908, %v3895
  %v4624 = vpack.c.b16 %v3909, %v3896
  %v4625 = vpack.c.b16 %v3923, %v3910
  %v4626 = vpack.c.b16 %v3924, %v3911
  %v4627 = vpack.c.b16 %v3925, %v3912
  %v4628 = vpack.c.b16 %v3926, %v3913
  %v4629 = vpack.c.b16 %v3927, %v3914
  %v4630 = vpack.c.b16 %v3928, %v3915
  %v4631 = vpack.c.b16 %v3929, %v3916
  %v4632 = vpack.c.b16 %v3930, %v3917
  %v4633 = vpack.c.b16 %v3931, %v3918
  %v4634 = vpack.c.b16 %v3932, %v3919
  %v4635 = vpack.c.b16 %v3933, %v3920
  %v4636 = vpack.c.b16 %v3934, %v3921
  %v4637 = vpack.c.b16 %v3935, %v3922
  %v4638 = vpack.c.b16 %v3949, %v3936
  %v4639 = vpack.c.b16 %v3950, %v3937
  %v4640 = vpack.c.b16 %v3951, %v3938
  %v4641 = vpack.c.b16 %v3952, %v3939
  %v4642 = vpack.c.b16 %v3953, %v3940
  %v4643 = vpack.c.b16 %v3954, %v3941
  %v4644 = vpack.c.b16 %v3955, %v3942
  %v4645 = vpack.c.b16 %v3956, %v3943
  %v4646 = vpack.c.b16 %v3957, %v3944
  %v4647 = vpack.c.b16 %v3958, %v3945
  %v4648 = vpack.c.b16 %v3959, %v3946
  %v4649 = vpack.c.b16 %v3960, %v3947
  %v4650 = vpack.c.b16 %v3961, %v3948
  %v4651 = vpack.c.b16 %v3975, %v3962
  %v4652 = vpack.c.b16 %v3976, %v3963
  %v4653 = vpack.c.b16 %v3977, %v3964
  %v4654 = vpack.c.b16 %v3978, %v3965
  %v4655 = vpack.c.b16 %v3979, %v3966
  %v4656 = vpack.c.b16 %v3980, %v3967
  %v4657 = vpack.c.b16 %v3981, %v3968
  %v4658 = vpack.c.b16 %v3982, %v3969
  %v4659 = vpack.c.b16 %v3983, %v3970
  %v4660 = vpack.c.b16 %v3984, %v3971
  %v4661 = vpack.c.b16 %v3985, %v3972
  %v4662 = vpack.c.b16 %v3986, %v3973
  %v4663 = vpack.c.b16 %v3987, %v3974
  %v4664 = vpack.c.b16 %v4001, %v3988
  %v4665 = vpack.c.b16 %v4002, %v3989
  %v4666 = vpack.c.b16 %v4003, %v3990
  %v4667 = vpack.c.b16 %v4004, %v3991
  %v4668 = vpack.c.b16 %v4005, %v3992
  %v4669 = vpack.c.b16 %v4006, %v3993
  %v4670 = vpack.c.b16 %v4007, %v3994
  %v4671 = vpack.c.b16 %v4008, %v3995
  %v4672 = vpack.c.b16 %v4009, %v3996
  %v4673 = vpack.c.b16 %v4010, %v3997
  %v4674 = vpack.c.b16 %v4011, %v3998
  %v4675 = vpack.c.b16 %v4012, %v3999
  %v4676 = vpack.c.b16 %v4013, %v4000
  %v4677 = vpack.c.b16 %v4027, %v4014
  %v4678 = vpack.c.b16 %v4028, %v4015
  %v4679 = vpack.c.b16 %v4029, %v4016
  %v4680 = vpack.c.b16 %v4030, %v4017
  %v4681 = vpack.c.b16 %v4031, %v4018
  %v4682 = vpack.c.b16 %v4032, %v4019
  %v4683 = vpack.c.b16 %v4033, %v4020
  %v4684 = vpack.c.b16 %v4034, %v4021
  %v4685 = vpack.c.b16 %v4035, %v4022
  %v4686 = vpack.c.b16 %v4036, %v4023
  %v4687 = vpack.c.b16 %v4037, %v4024
  %v4688 = vpack.c.b16 %v4038, %v4025
  %v4689 = vpack.c.b16 %v4039, %v4026
  %v4690 = vpack.c.b16 %v4053, %v4040
  %v4691 = vpack.c.b16 %v4054, %v4041
  %v4692 = vpack.c.b16 %v4055, %v4042
  %v4693 = vpack.c.b16 %v4056, %v4043
  %v4694 = vpack.c.b16 %v4057, %v4044
  %v4695 = vpack.c.b16 %v4058, %v4045
  %v4696 = vpack.c.b16 %v4059, %v4046
  %v4697 = vpack.c.b16 %v4060, %v4047
  %v4698 = vpack.c.b16 %v4061, %v4048
  %v4699 = vpack.c.b16 %v4062, %v4049
  %v4700 = vpack.c.b16 %v4063, %v4050
  %v4701 = vpack.c.b16 %v4064, %v4051
  %v4702 = vpack.c.b16 %v4065, %v4052
  %vm5340 = vcmask 130048
  %v5342 = vsel %vm5340, %v1350, 0
  %5344 = vmatprep.subr.bf16.mxu0 %v4158
  %5345 = vmatpush1.bf16.msra.mxu0 %v4157
  %5346 = vmatprep.subr.bf16.mxu0 %v4145
  %5347 = vmatpush1.bf16.msra.mxu0 %v4144
  %5348 = vmatprep.subr.bf16.mxu0 %v4132
  %5349 = vmatpush1.bf16.msra.mxu0 %v4131
  %5350 = vmatprep.subr.bf16.mxu0 %v4119
  %5351 = vmatpush1.bf16.msra.mxu0 %v4118
  %5352 = vmatprep.subr.bf16.mxu0 %v4106
  %5353 = vmatpush1.bf16.msra.mxu0 %v4105
  %5354 = vmatprep.subr.bf16.mxu0 %v4093
  %5355 = vmatpush1.bf16.msra.mxu0 %v4092
  %5356 = vmatprep.subr.bf16.mxu0 %v4080
  %5357 = vmatpush1.bf16.msra.mxu0 %v4079
  %5358 = vmatprep.subr.bf16.mxu0 %v4067
  %5359 = vmatpush1.bf16.msra.mxu0 %v4066
  %5360 = vmatprep.subr.bf16.mxu0 %v4262
  %5361 = vmatpush2.bf16.msra.mxu0 %v4261
  %5362 = vmatprep.subr.bf16.mxu0 %v4249
  %5363 = vmatpush2.bf16.msra.mxu0 %v4248
  %5364 = vmatprep.subr.bf16.mxu0 %v4236
  %5365 = vmatpush2.bf16.msra.mxu0 %v4235
  %5366 = vmatprep.subr.bf16.mxu0 %v4223
  %5367 = vmatpush2.bf16.msra.mxu0 %v4222
  %5368 = vmatprep.subr.bf16.mxu0 %v4210
  %5369 = vmatpush2.bf16.msra.mxu0 %v4209
  %5370 = vmatprep.subr.bf16.mxu0 %v4197
  %5371 = vmatpush2.bf16.msra.mxu0 %v4196
  %5372 = vmatprep.subr.bf16.mxu0 %v4184
  %5373 = vmatpush2.bf16.msra.mxu0 %v4183
  %5374 = vmatprep.subr.bf16.mxu0 %v4171
  %5375 = vmatpush2.bf16.msra.mxu0 %v4170
  %5376 = vmatprep.mubr.bf16.mxu0 %v1345
  %5377 = vmatmul.mubr.bf16.gmra.mxu0 %v1344
  %v5378 = vpop.f32.mrf.mxu0
  %v5379 = vadd.f32 %v2044, %v5378
  %v5380 = vpop.f32.mrf.mxu0
  %v5381 = vadd.f32 %v2048, %v5380
  %v5382 = vpop.f32.mrf.mxu0
  %v5383 = vpop.f32.mrf.mxu0
  %5384 = vdwg.mxu0
  %5385 = vmatprep.subr.bf16.mxu0 %v4366
  %5386 = vmatpush1.bf16.msra.mxu0 %v4365
  %5387 = vmatprep.subr.bf16.mxu0 %v4353
  %5388 = vmatpush1.bf16.msra.mxu0 %v4352
  %5389 = vmatprep.subr.bf16.mxu0 %v4340
  %5390 = vmatpush1.bf16.msra.mxu0 %v4339
  %5391 = vmatprep.subr.bf16.mxu0 %v4327
  %5392 = vmatpush1.bf16.msra.mxu0 %v4326
  %5393 = vmatprep.subr.bf16.mxu0 %v4314
  %5394 = vmatpush1.bf16.msra.mxu0 %v4313
  %5395 = vmatprep.subr.bf16.mxu0 %v4301
  %5396 = vmatpush1.bf16.msra.mxu0 %v4300
  %5397 = vmatprep.subr.bf16.mxu0 %v4288
  %5398 = vmatpush1.bf16.msra.mxu0 %v4287
  %5399 = vmatprep.subr.bf16.mxu0 %v4275
  %5400 = vmatpush1.bf16.msra.mxu0 %v4274
  %5401 = vmatprep.subr.bf16.mxu0 %v4470
  %5402 = vmatpush2.bf16.msra.mxu0 %v4469
  %5403 = vmatprep.subr.bf16.mxu0 %v4457
  %5404 = vmatpush2.bf16.msra.mxu0 %v4456
  %5405 = vmatprep.subr.bf16.mxu0 %v4444
  %5406 = vmatpush2.bf16.msra.mxu0 %v4443
  %5407 = vmatprep.subr.bf16.mxu0 %v4431
  %5408 = vmatpush2.bf16.msra.mxu0 %v4430
  %5409 = vmatprep.subr.bf16.mxu0 %v4418
  %5410 = vmatpush2.bf16.msra.mxu0 %v4417
  %5411 = vmatprep.subr.bf16.mxu0 %v4405
  %5412 = vmatpush2.bf16.msra.mxu0 %v4404
  %5413 = vmatprep.subr.bf16.mxu0 %v4392
  %5414 = vmatpush2.bf16.msra.mxu0 %v4391
  %5415 = vmatprep.subr.bf16.mxu0 %v4379
  %5416 = vmatpush2.bf16.msra.mxu0 %v4378
  %5417 = vmatprep.mubr.bf16.mxu0 %v1347
  %5418 = vmatmul.mubr.bf16.gmra.mxu0 %v1346
  %v5419 = vpop.f32.mrf.mxu0
  %v5420 = vadd.f32 %v5379, %v5419
  %v5421 = vpop.f32.mrf.mxu0
  %v5422 = vadd.f32 %v5381, %v5421
  %v5423 = vpop.f32.mrf.mxu0
  %v5424 = vpop.f32.mrf.mxu0
  %5425 = vdwg.mxu0
  %5426 = vmatprep.subr.bf16.mxu0 %v4574
  %5427 = vmatpush1.bf16.msra.mxu0 %v4573
  %5428 = vmatprep.subr.bf16.mxu0 %v4561
  %5429 = vmatpush1.bf16.msra.mxu0 %v4560
  %5430 = vmatprep.subr.bf16.mxu0 %v4548
  %5431 = vmatpush1.bf16.msra.mxu0 %v4547
  %5432 = vmatprep.subr.bf16.mxu0 %v4535
  %5433 = vmatpush1.bf16.msra.mxu0 %v4534
  %5434 = vmatprep.subr.bf16.mxu0 %v4522
  %5435 = vmatpush1.bf16.msra.mxu0 %v4521
  %5436 = vmatprep.subr.bf16.mxu0 %v4509
  %5437 = vmatpush1.bf16.msra.mxu0 %v4508
  %5438 = vmatprep.subr.bf16.mxu0 %v4496
  %5439 = vmatpush1.bf16.msra.mxu0 %v4495
  %5440 = vmatprep.subr.bf16.mxu0 %v4483
  %5441 = vmatpush1.bf16.msra.mxu0 %v4482
  %5442 = vmatprep.subr.bf16.mxu0 %v4678
  %5443 = vmatpush2.bf16.msra.mxu0 %v4677
  %5444 = vmatprep.subr.bf16.mxu0 %v4665
  %5445 = vmatpush2.bf16.msra.mxu0 %v4664
  %5446 = vmatprep.subr.bf16.mxu0 %v4652
  %5447 = vmatpush2.bf16.msra.mxu0 %v4651
  %5448 = vmatprep.subr.bf16.mxu0 %v4639
  %5449 = vmatpush2.bf16.msra.mxu0 %v4638
  %5450 = vmatprep.subr.bf16.mxu0 %v4626
  %5451 = vmatpush2.bf16.msra.mxu0 %v4625
  %5452 = vmatprep.subr.bf16.mxu0 %v4613
  %5453 = vmatpush2.bf16.msra.mxu0 %v4612
  %5454 = vmatprep.subr.bf16.mxu0 %v4600
  %5455 = vmatpush2.bf16.msra.mxu0 %v4599
  %5456 = vmatprep.subr.bf16.mxu0 %v4587
  %5457 = vmatpush2.bf16.msra.mxu0 %v4586
  %5458 = vmatprep.mubr.bf16.mxu0 %v1349
  %5459 = vmatmul.mubr.bf16.gmra.mxu0 %v1348
  %v5460 = vpop.f32.mrf.mxu0
  %v5461 = vadd.f32 %v5420, %v5460
  %v5462 = vpop.f32.mrf.mxu0
  %v5463 = vadd.f32 %v5422, %v5462
  %v5464 = vpop.f32.mrf.mxu0
  %v5465 = vpop.f32.mrf.mxu0
  %5466 = vdwg.mxu0
  %5467 = vmatprep.subr.bf16.mxu0 0
  %5468 = vmatpush1.bf16.msra.mxu0 0
  %5469 = vmatprep.subr.bf16.mxu0 0
  %5470 = vmatpush1.bf16.msra.mxu0 0
  %5471 = vmatprep.subr.bf16.mxu0 0
  %5472 = vmatpush1.bf16.msra.mxu0 0
  %5473 = vmatprep.subr.bf16.mxu0 0
  %5474 = vmatpush1.bf16.msra.mxu0 0
  %5475 = vmatprep.subr.bf16.mxu0 0
  %5476 = vmatpush1.bf16.msra.mxu0 0
  %5477 = vmatprep.subr.bf16.mxu0 0
  %5478 = vmatpush1.bf16.msra.mxu0 0
  %5479 = vmatprep.subr.bf16.mxu0 0
  %5480 = vmatpush1.bf16.msra.mxu0 0
  %5481 = vmatprep.subr.bf16.mxu0 %v4691
  %5482 = vmatpush1.bf16.msra.mxu0 %v4690
  %5483 = vmatprep.subr.bf16.mxu0 0
  %5484 = vmatpush2.bf16.msra.mxu0 0
  %5485 = vmatprep.subr.bf16.mxu0 0
  %5486 = vmatpush2.bf16.msra.mxu0 0
  %5487 = vmatprep.subr.bf16.mxu0 0
  %5488 = vmatpush2.bf16.msra.mxu0 0
  %5489 = vmatprep.subr.bf16.mxu0 0
  %5490 = vmatpush2.bf16.msra.mxu0 0
  %5491 = vmatprep.subr.bf16.mxu0 0
  %5492 = vmatpush2.bf16.msra.mxu0 0
  %5493 = vmatprep.subr.bf16.mxu0 0
  %5494 = vmatpush2.bf16.msra.mxu0 0
  %5495 = vmatprep.subr.bf16.mxu0 0
  %5496 = vmatpush2.bf16.msra.mxu0 0
  %5497 = vmatprep.subr.bf16.mxu0 0
  %5498 = vmatpush2.bf16.msra.mxu0 0
  %5499 = vmatprep.mubr.bf16.mxu0 0
  %5500 = vmatmul.mubr.bf16.gmra.mxu0 %v5342
  %v5501 = vpop.f32.mrf.mxu0
  %v5502 = vadd.f32 %v5461, %v5501
  %v5503 = vpop.f32.mrf.mxu0
  %v5504 = vadd.f32 %v5463, %v5503
  %v5505 = vpop.f32.mrf.mxu0
  %v5506 = vpop.f32.mrf.mxu0
  %5507 = vdwg.mxu0
  %5508 = vmatprep.subr.bf16.mxu0 %v4160
  %5509 = vmatpush1.bf16.msra.mxu0 %v4159
  %5510 = vmatprep.subr.bf16.mxu0 %v4147
  %5511 = vmatpush1.bf16.msra.mxu0 %v4146
  %5512 = vmatprep.subr.bf16.mxu0 %v4134
  %5513 = vmatpush1.bf16.msra.mxu0 %v4133
  %5514 = vmatprep.subr.bf16.mxu0 %v4121
  %5515 = vmatpush1.bf16.msra.mxu0 %v4120
  %5516 = vmatprep.subr.bf16.mxu0 %v4108
  %5517 = vmatpush1.bf16.msra.mxu0 %v4107
  %5518 = vmatprep.subr.bf16.mxu0 %v4095
  %5519 = vmatpush1.bf16.msra.mxu0 %v4094
  %5520 = vmatprep.subr.bf16.mxu0 %v4082
  %5521 = vmatpush1.bf16.msra.mxu0 %v4081
  %5522 = vmatprep.subr.bf16.mxu0 %v4069
  %5523 = vmatpush1.bf16.msra.mxu0 %v4068
  %5524 = vmatprep.subr.bf16.mxu0 %v4264
  %5525 = vmatpush2.bf16.msra.mxu0 %v4263
  %5526 = vmatprep.subr.bf16.mxu0 %v4251
  %5527 = vmatpush2.bf16.msra.mxu0 %v4250
  %5528 = vmatprep.subr.bf16.mxu0 %v4238
  %5529 = vmatpush2.bf16.msra.mxu0 %v4237
  %5530 = vmatprep.subr.bf16.mxu0 %v4225
  %5531 = vmatpush2.bf16.msra.mxu0 %v4224
  %5532 = vmatprep.subr.bf16.mxu0 %v4212
  %5533 = vmatpush2.bf16.msra.mxu0 %v4211
  %5534 = vmatprep.subr.bf16.mxu0 %v4199
  %5535 = vmatpush2.bf16.msra.mxu0 %v4198
  %5536 = vmatprep.subr.bf16.mxu0 %v4186
  %5537 = vmatpush2.bf16.msra.mxu0 %v4185
  %5538 = vmatprep.subr.bf16.mxu0 %v4173
  %5539 = vmatpush2.bf16.msra.mxu0 %v4172
  %5540 = vmatprep.mubr.bf16.mxu0 %v1345
  %5541 = vmatmul.mubr.bf16.gmra.mxu0 %v1344
  %v5542 = vpop.f32.mrf.mxu0
  %v5543 = vadd.f32 %v2052, %v5542
  %v5544 = vpop.f32.mrf.mxu0
  %v5545 = vadd.f32 %v2056, %v5544
  %v5546 = vpop.f32.mrf.mxu0
  %v5547 = vpop.f32.mrf.mxu0
  %5548 = vdwg.mxu0
  %5549 = vmatprep.subr.bf16.mxu0 %v4368
  %5550 = vmatpush1.bf16.msra.mxu0 %v4367
  %5551 = vmatprep.subr.bf16.mxu0 %v4355
  %5552 = vmatpush1.bf16.msra.mxu0 %v4354
  %5553 = vmatprep.subr.bf16.mxu0 %v4342
  %5554 = vmatpush1.bf16.msra.mxu0 %v4341
  %5555 = vmatprep.subr.bf16.mxu0 %v4329
  %5556 = vmatpush1.bf16.msra.mxu0 %v4328
  %5557 = vmatprep.subr.bf16.mxu0 %v4316
  %5558 = vmatpush1.bf16.msra.mxu0 %v4315
  %5559 = vmatprep.subr.bf16.mxu0 %v4303
  %5560 = vmatpush1.bf16.msra.mxu0 %v4302
  %5561 = vmatprep.subr.bf16.mxu0 %v4290
  %5562 = vmatpush1.bf16.msra.mxu0 %v4289
  %5563 = vmatprep.subr.bf16.mxu0 %v4277
  %5564 = vmatpush1.bf16.msra.mxu0 %v4276
  %5565 = vmatprep.subr.bf16.mxu0 %v4472
  %5566 = vmatpush2.bf16.msra.mxu0 %v4471
  %5567 = vmatprep.subr.bf16.mxu0 %v4459
  %5568 = vmatpush2.bf16.msra.mxu0 %v4458
  %5569 = vmatprep.subr.bf16.mxu0 %v4446
  %5570 = vmatpush2.bf16.msra.mxu0 %v4445
  %5571 = vmatprep.subr.bf16.mxu0 %v4433
  %5572 = vmatpush2.bf16.msra.mxu0 %v4432
  %5573 = vmatprep.subr.bf16.mxu0 %v4420
  %5574 = vmatpush2.bf16.msra.mxu0 %v4419
  %5575 = vmatprep.subr.bf16.mxu0 %v4407
  %5576 = vmatpush2.bf16.msra.mxu0 %v4406
  %5577 = vmatprep.subr.bf16.mxu0 %v4394
  %5578 = vmatpush2.bf16.msra.mxu0 %v4393
  %5579 = vmatprep.subr.bf16.mxu0 %v4381
  %5580 = vmatpush2.bf16.msra.mxu0 %v4380
  %5581 = vmatprep.mubr.bf16.mxu0 %v1347
  %5582 = vmatmul.mubr.bf16.gmra.mxu0 %v1346
  %v5583 = vpop.f32.mrf.mxu0
  %v5584 = vadd.f32 %v5543, %v5583
  %v5585 = vpop.f32.mrf.mxu0
  %v5586 = vadd.f32 %v5545, %v5585
  %v5587 = vpop.f32.mrf.mxu0
  %v5588 = vpop.f32.mrf.mxu0
  %5589 = vdwg.mxu0
  %5590 = vmatprep.subr.bf16.mxu0 %v4576
  %5591 = vmatpush1.bf16.msra.mxu0 %v4575
  %5592 = vmatprep.subr.bf16.mxu0 %v4563
  %5593 = vmatpush1.bf16.msra.mxu0 %v4562
  %5594 = vmatprep.subr.bf16.mxu0 %v4550
  %5595 = vmatpush1.bf16.msra.mxu0 %v4549
  %5596 = vmatprep.subr.bf16.mxu0 %v4537
  %5597 = vmatpush1.bf16.msra.mxu0 %v4536
  %5598 = vmatprep.subr.bf16.mxu0 %v4524
  %5599 = vmatpush1.bf16.msra.mxu0 %v4523
  %5600 = vmatprep.subr.bf16.mxu0 %v4511
  %5601 = vmatpush1.bf16.msra.mxu0 %v4510
  %5602 = vmatprep.subr.bf16.mxu0 %v4498
  %5603 = vmatpush1.bf16.msra.mxu0 %v4497
  %5604 = vmatprep.subr.bf16.mxu0 %v4485
  %5605 = vmatpush1.bf16.msra.mxu0 %v4484
  %5606 = vmatprep.subr.bf16.mxu0 %v4680
  %5607 = vmatpush2.bf16.msra.mxu0 %v4679
  %5608 = vmatprep.subr.bf16.mxu0 %v4667
  %5609 = vmatpush2.bf16.msra.mxu0 %v4666
  %5610 = vmatprep.subr.bf16.mxu0 %v4654
  %5611 = vmatpush2.bf16.msra.mxu0 %v4653
  %5612 = vmatprep.subr.bf16.mxu0 %v4641
  %5613 = vmatpush2.bf16.msra.mxu0 %v4640
  %5614 = vmatprep.subr.bf16.mxu0 %v4628
  %5615 = vmatpush2.bf16.msra.mxu0 %v4627
  %5616 = vmatprep.subr.bf16.mxu0 %v4615
  %5617 = vmatpush2.bf16.msra.mxu0 %v4614
  %5618 = vmatprep.subr.bf16.mxu0 %v4602
  %5619 = vmatpush2.bf16.msra.mxu0 %v4601
  %5620 = vmatprep.subr.bf16.mxu0 %v4589
  %5621 = vmatpush2.bf16.msra.mxu0 %v4588
  %5622 = vmatprep.mubr.bf16.mxu0 %v1349
  %5623 = vmatmul.mubr.bf16.gmra.mxu0 %v1348
  %v5624 = vpop.f32.mrf.mxu0
  %v5625 = vadd.f32 %v5584, %v5624
  %v5626 = vpop.f32.mrf.mxu0
  %v5627 = vadd.f32 %v5586, %v5626
  %v5628 = vpop.f32.mrf.mxu0
  %v5629 = vpop.f32.mrf.mxu0
  %5630 = vdwg.mxu0
  %5631 = vmatprep.subr.bf16.mxu0 0
  %5632 = vmatpush1.bf16.msra.mxu0 0
  %5633 = vmatprep.subr.bf16.mxu0 0
  %5634 = vmatpush1.bf16.msra.mxu0 0
  %5635 = vmatprep.subr.bf16.mxu0 0
  %5636 = vmatpush1.bf16.msra.mxu0 0
  %5637 = vmatprep.subr.bf16.mxu0 0
  %5638 = vmatpush1.bf16.msra.mxu0 0
  %5639 = vmatprep.subr.bf16.mxu0 0
  %5640 = vmatpush1.bf16.msra.mxu0 0
  %5641 = vmatprep.subr.bf16.mxu0 0
  %5642 = vmatpush1.bf16.msra.mxu0 0
  %5643 = vmatprep.subr.bf16.mxu0 0
  %5644 = vmatpush1.bf16.msra.mxu0 0
  %5645 = vmatprep.subr.bf16.mxu0 %v4693
  %5646 = vmatpush1.bf16.msra.mxu0 %v4692
  %5647 = vmatprep.subr.bf16.mxu0 0
  %5648 = vmatpush2.bf16.msra.mxu0 0
  %5649 = vmatprep.subr.bf16.mxu0 0
  %5650 = vmatpush2.bf16.msra.mxu0 0
  %5651 = vmatprep.subr.bf16.mxu0 0
  %5652 = vmatpush2.bf16.msra.mxu0 0
  %5653 = vmatprep.subr.bf16.mxu0 0
  %5654 = vmatpush2.bf16.msra.mxu0 0
  %5655 = vmatprep.subr.bf16.mxu0 0
  %5656 = vmatpush2.bf16.msra.mxu0 0
  %5657 = vmatprep.subr.bf16.mxu0 0
  %5658 = vmatpush2.bf16.msra.mxu0 0
  %5659 = vmatprep.subr.bf16.mxu0 0
  %5660 = vmatpush2.bf16.msra.mxu0 0
  %5661 = vmatprep.subr.bf16.mxu0 0
  %5662 = vmatpush2.bf16.msra.mxu0 0
  %5663 = vmatprep.mubr.bf16.mxu0 0
  %5664 = vmatmul.mubr.bf16.gmra.mxu0 %v5342
  %v5665 = vpop.f32.mrf.mxu0
  %v5666 = vadd.f32 %v5625, %v5665
  %v5667 = vpop.f32.mrf.mxu0
  %v5668 = vadd.f32 %v5627, %v5667
  %v5669 = vpop.f32.mrf.mxu0
  %v5670 = vpop.f32.mrf.mxu0
  %5671 = vdwg.mxu0
  %5672 = vmatprep.subr.bf16.mxu0 %v4162
  %5673 = vmatpush1.bf16.msra.mxu0 %v4161
  %5674 = vmatprep.subr.bf16.mxu0 %v4149
  %5675 = vmatpush1.bf16.msra.mxu0 %v4148
  %5676 = vmatprep.subr.bf16.mxu0 %v4136
  %5677 = vmatpush1.bf16.msra.mxu0 %v4135
  %5678 = vmatprep.subr.bf16.mxu0 %v4123
  %5679 = vmatpush1.bf16.msra.mxu0 %v4122
  %5680 = vmatprep.subr.bf16.mxu0 %v4110
  %5681 = vmatpush1.bf16.msra.mxu0 %v4109
  %5682 = vmatprep.subr.bf16.mxu0 %v4097
  %5683 = vmatpush1.bf16.msra.mxu0 %v4096
  %5684 = vmatprep.subr.bf16.mxu0 %v4084
  %5685 = vmatpush1.bf16.msra.mxu0 %v4083
  %5686 = vmatprep.subr.bf16.mxu0 %v4071
  %5687 = vmatpush1.bf16.msra.mxu0 %v4070
  %5688 = vmatprep.subr.bf16.mxu0 %v4266
  %5689 = vmatpush2.bf16.msra.mxu0 %v4265
  %5690 = vmatprep.subr.bf16.mxu0 %v4253
  %5691 = vmatpush2.bf16.msra.mxu0 %v4252
  %5692 = vmatprep.subr.bf16.mxu0 %v4240
  %5693 = vmatpush2.bf16.msra.mxu0 %v4239
  %5694 = vmatprep.subr.bf16.mxu0 %v4227
  %5695 = vmatpush2.bf16.msra.mxu0 %v4226
  %5696 = vmatprep.subr.bf16.mxu0 %v4214
  %5697 = vmatpush2.bf16.msra.mxu0 %v4213
  %5698 = vmatprep.subr.bf16.mxu0 %v4201
  %5699 = vmatpush2.bf16.msra.mxu0 %v4200
  %5700 = vmatprep.subr.bf16.mxu0 %v4188
  %5701 = vmatpush2.bf16.msra.mxu0 %v4187
  %5702 = vmatprep.subr.bf16.mxu0 %v4175
  %5703 = vmatpush2.bf16.msra.mxu0 %v4174
  %5704 = vmatprep.mubr.bf16.mxu0 %v1345
  %5705 = vmatmul.mubr.bf16.gmra.mxu0 %v1344
  %v5706 = vpop.f32.mrf.mxu0
  %v5707 = vadd.f32 %v2060, %v5706
  %v5708 = vpop.f32.mrf.mxu0
  %v5709 = vadd.f32 %v2064, %v5708
  %v5710 = vpop.f32.mrf.mxu0
  %v5711 = vpop.f32.mrf.mxu0
  %5712 = vdwg.mxu0
  %5713 = vmatprep.subr.bf16.mxu0 %v4370
  %5714 = vmatpush1.bf16.msra.mxu0 %v4369
  %5715 = vmatprep.subr.bf16.mxu0 %v4357
  %5716 = vmatpush1.bf16.msra.mxu0 %v4356
  %5717 = vmatprep.subr.bf16.mxu0 %v4344
  %5718 = vmatpush1.bf16.msra.mxu0 %v4343
  %5719 = vmatprep.subr.bf16.mxu0 %v4331
  %5720 = vmatpush1.bf16.msra.mxu0 %v4330
  %5721 = vmatprep.subr.bf16.mxu0 %v4318
  %5722 = vmatpush1.bf16.msra.mxu0 %v4317
  %5723 = vmatprep.subr.bf16.mxu0 %v4305
  %5724 = vmatpush1.bf16.msra.mxu0 %v4304
  %5725 = vmatprep.subr.bf16.mxu0 %v4292
  %5726 = vmatpush1.bf16.msra.mxu0 %v4291
  %5727 = vmatprep.subr.bf16.mxu0 %v4279
  %5728 = vmatpush1.bf16.msra.mxu0 %v4278
  %5729 = vmatprep.subr.bf16.mxu0 %v4474
  %5730 = vmatpush2.bf16.msra.mxu0 %v4473
  %5731 = vmatprep.subr.bf16.mxu0 %v4461
  %5732 = vmatpush2.bf16.msra.mxu0 %v4460
  %5733 = vmatprep.subr.bf16.mxu0 %v4448
  %5734 = vmatpush2.bf16.msra.mxu0 %v4447
  %5735 = vmatprep.subr.bf16.mxu0 %v4435
  %5736 = vmatpush2.bf16.msra.mxu0 %v4434
  %5737 = vmatprep.subr.bf16.mxu0 %v4422
  %5738 = vmatpush2.bf16.msra.mxu0 %v4421
  %5739 = vmatprep.subr.bf16.mxu0 %v4409
  %5740 = vmatpush2.bf16.msra.mxu0 %v4408
  %5741 = vmatprep.subr.bf16.mxu0 %v4396
  %5742 = vmatpush2.bf16.msra.mxu0 %v4395
  %5743 = vmatprep.subr.bf16.mxu0 %v4383
  %5744 = vmatpush2.bf16.msra.mxu0 %v4382
  %5745 = vmatprep.mubr.bf16.mxu0 %v1347
  %5746 = vmatmul.mubr.bf16.gmra.mxu0 %v1346
  %v5747 = vpop.f32.mrf.mxu0
  %v5748 = vadd.f32 %v5707, %v5747
  %v5749 = vpop.f32.mrf.mxu0
  %v5750 = vadd.f32 %v5709, %v5749
  %v5751 = vpop.f32.mrf.mxu0
  %v5752 = vpop.f32.mrf.mxu0
  %5753 = vdwg.mxu0
  %5754 = vmatprep.subr.bf16.mxu0 %v4578
  %5755 = vmatpush1.bf16.msra.mxu0 %v4577
  %5756 = vmatprep.subr.bf16.mxu0 %v4565
  %5757 = vmatpush1.bf16.msra.mxu0 %v4564
  %5758 = vmatprep.subr.bf16.mxu0 %v4552
  %5759 = vmatpush1.bf16.msra.mxu0 %v4551
  %5760 = vmatprep.subr.bf16.mxu0 %v4539
  %5761 = vmatpush1.bf16.msra.mxu0 %v4538
  %5762 = vmatprep.subr.bf16.mxu0 %v4526
  %5763 = vmatpush1.bf16.msra.mxu0 %v4525
  %5764 = vmatprep.subr.bf16.mxu0 %v4513
  %5765 = vmatpush1.bf16.msra.mxu0 %v4512
  %5766 = vmatprep.subr.bf16.mxu0 %v4500
  %5767 = vmatpush1.bf16.msra.mxu0 %v4499
  %5768 = vmatprep.subr.bf16.mxu0 %v4487
  %5769 = vmatpush1.bf16.msra.mxu0 %v4486
  %5770 = vmatprep.subr.bf16.mxu0 %v4682
  %5771 = vmatpush2.bf16.msra.mxu0 %v4681
  %5772 = vmatprep.subr.bf16.mxu0 %v4669
  %5773 = vmatpush2.bf16.msra.mxu0 %v4668
  %5774 = vmatprep.subr.bf16.mxu0 %v4656
  %5775 = vmatpush2.bf16.msra.mxu0 %v4655
  %5776 = vmatprep.subr.bf16.mxu0 %v4643
  %5777 = vmatpush2.bf16.msra.mxu0 %v4642
  %5778 = vmatprep.subr.bf16.mxu0 %v4630
  %5779 = vmatpush2.bf16.msra.mxu0 %v4629
  %5780 = vmatprep.subr.bf16.mxu0 %v4617
  %5781 = vmatpush2.bf16.msra.mxu0 %v4616
  %5782 = vmatprep.subr.bf16.mxu0 %v4604
  %5783 = vmatpush2.bf16.msra.mxu0 %v4603
  %5784 = vmatprep.subr.bf16.mxu0 %v4591
  %5785 = vmatpush2.bf16.msra.mxu0 %v4590
  %5786 = vmatprep.mubr.bf16.mxu0 %v1349
  %5787 = vmatmul.mubr.bf16.gmra.mxu0 %v1348
  %v5788 = vpop.f32.mrf.mxu0
  %v5789 = vadd.f32 %v5748, %v5788
  %v5790 = vpop.f32.mrf.mxu0
  %v5791 = vadd.f32 %v5750, %v5790
  %v5792 = vpop.f32.mrf.mxu0
  %v5793 = vpop.f32.mrf.mxu0
  %5794 = vdwg.mxu0
  %5795 = vmatprep.subr.bf16.mxu0 0
  %5796 = vmatpush1.bf16.msra.mxu0 0
  %5797 = vmatprep.subr.bf16.mxu0 0
  %5798 = vmatpush1.bf16.msra.mxu0 0
  %5799 = vmatprep.subr.bf16.mxu0 0
  %5800 = vmatpush1.bf16.msra.mxu0 0
  %5801 = vmatprep.subr.bf16.mxu0 0
  %5802 = vmatpush1.bf16.msra.mxu0 0
  %5803 = vmatprep.subr.bf16.mxu0 0
  %5804 = vmatpush1.bf16.msra.mxu0 0
  %5805 = vmatprep.subr.bf16.mxu0 0
  %5806 = vmatpush1.bf16.msra.mxu0 0
  %5807 = vmatprep.subr.bf16.mxu0 0
  %5808 = vmatpush1.bf16.msra.mxu0 0
  %5809 = vmatprep.subr.bf16.mxu0 %v4695
  %5810 = vmatpush1.bf16.msra.mxu0 %v4694
  %5811 = vmatprep.subr.bf16.mxu0 0
  %5812 = vmatpush2.bf16.msra.mxu0 0
  %5813 = vmatprep.subr.bf16.mxu0 0
  %5814 = vmatpush2.bf16.msra.mxu0 0
  %5815 = vmatprep.subr.bf16.mxu0 0
  %5816 = vmatpush2.bf16.msra.mxu0 0
  %5817 = vmatprep.subr.bf16.mxu0 0
  %5818 = vmatpush2.bf16.msra.mxu0 0
  %5819 = vmatprep.subr.bf16.mxu0 0
  %5820 = vmatpush2.bf16.msra.mxu0 0
  %5821 = vmatprep.subr.bf16.mxu0 0
  %5822 = vmatpush2.bf16.msra.mxu0 0
  %5823 = vmatprep.subr.bf16.mxu0 0
  %5824 = vmatpush2.bf16.msra.mxu0 0
  %5825 = vmatprep.subr.bf16.mxu0 0
  %5826 = vmatpush2.bf16.msra.mxu0 0
  %5827 = vmatprep.mubr.bf16.mxu0 0
  %5828 = vmatmul.mubr.bf16.gmra.mxu0 %v5342
  %v5829 = vpop.f32.mrf.mxu0
  %v5830 = vadd.f32 %v5789, %v5829
  %v5831 = vpop.f32.mrf.mxu0
  %v5832 = vadd.f32 %v5791, %v5831
  %v5833 = vpop.f32.mrf.mxu0
  %v5834 = vpop.f32.mrf.mxu0
  %5835 = vdwg.mxu0
  %5836 = vmatprep.subr.bf16.mxu0 %v4164
  %5837 = vmatpush1.bf16.msra.mxu0 %v4163
  %5838 = vmatprep.subr.bf16.mxu0 %v4151
  %5839 = vmatpush1.bf16.msra.mxu0 %v4150
  %5840 = vmatprep.subr.bf16.mxu0 %v4138
  %5841 = vmatpush1.bf16.msra.mxu0 %v4137
  %5842 = vmatprep.subr.bf16.mxu0 %v4125
  %5843 = vmatpush1.bf16.msra.mxu0 %v4124
  %5844 = vmatprep.subr.bf16.mxu0 %v4112
  %5845 = vmatpush1.bf16.msra.mxu0 %v4111
  %5846 = vmatprep.subr.bf16.mxu0 %v4099
  %5847 = vmatpush1.bf16.msra.mxu0 %v4098
  %5848 = vmatprep.subr.bf16.mxu0 %v4086
  %5849 = vmatpush1.bf16.msra.mxu0 %v4085
  %5850 = vmatprep.subr.bf16.mxu0 %v4073
  %5851 = vmatpush1.bf16.msra.mxu0 %v4072
  %5852 = vmatprep.subr.bf16.mxu0 %v4268
  %5853 = vmatpush2.bf16.msra.mxu0 %v4267
  %5854 = vmatprep.subr.bf16.mxu0 %v4255
  %5855 = vmatpush2.bf16.msra.mxu0 %v4254
  %5856 = vmatprep.subr.bf16.mxu0 %v4242
  %5857 = vmatpush2.bf16.msra.mxu0 %v4241
  %5858 = vmatprep.subr.bf16.mxu0 %v4229
  %5859 = vmatpush2.bf16.msra.mxu0 %v4228
  %5860 = vmatprep.subr.bf16.mxu0 %v4216
  %5861 = vmatpush2.bf16.msra.mxu0 %v4215
  %5862 = vmatprep.subr.bf16.mxu0 %v4203
  %5863 = vmatpush2.bf16.msra.mxu0 %v4202
  %5864 = vmatprep.subr.bf16.mxu0 %v4190
  %5865 = vmatpush2.bf16.msra.mxu0 %v4189
  %5866 = vmatprep.subr.bf16.mxu0 %v4177
  %5867 = vmatpush2.bf16.msra.mxu0 %v4176
  %5868 = vmatprep.mubr.bf16.mxu0 %v1345
  %5869 = vmatmul.mubr.bf16.gmra.mxu0 %v1344
  %v5870 = vpop.f32.mrf.mxu0
  %v5871 = vadd.f32 %v2068, %v5870
  %v5872 = vpop.f32.mrf.mxu0
  %v5873 = vadd.f32 %v2072, %v5872
  %v5874 = vpop.f32.mrf.mxu0
  %v5875 = vpop.f32.mrf.mxu0
  %5876 = vdwg.mxu0
  %5877 = vmatprep.subr.bf16.mxu0 %v4372
  %5878 = vmatpush1.bf16.msra.mxu0 %v4371
  %5879 = vmatprep.subr.bf16.mxu0 %v4359
  %5880 = vmatpush1.bf16.msra.mxu0 %v4358
  %5881 = vmatprep.subr.bf16.mxu0 %v4346
  %5882 = vmatpush1.bf16.msra.mxu0 %v4345
  %5883 = vmatprep.subr.bf16.mxu0 %v4333
  %5884 = vmatpush1.bf16.msra.mxu0 %v4332
  %5885 = vmatprep.subr.bf16.mxu0 %v4320
  %5886 = vmatpush1.bf16.msra.mxu0 %v4319
  %5887 = vmatprep.subr.bf16.mxu0 %v4307
  %5888 = vmatpush1.bf16.msra.mxu0 %v4306
  %5889 = vmatprep.subr.bf16.mxu0 %v4294
  %5890 = vmatpush1.bf16.msra.mxu0 %v4293
  %5891 = vmatprep.subr.bf16.mxu0 %v4281
  %5892 = vmatpush1.bf16.msra.mxu0 %v4280
  %5893 = vmatprep.subr.bf16.mxu0 %v4476
  %5894 = vmatpush2.bf16.msra.mxu0 %v4475
  %5895 = vmatprep.subr.bf16.mxu0 %v4463
  %5896 = vmatpush2.bf16.msra.mxu0 %v4462
  %5897 = vmatprep.subr.bf16.mxu0 %v4450
  %5898 = vmatpush2.bf16.msra.mxu0 %v4449
  %5899 = vmatprep.subr.bf16.mxu0 %v4437
  %5900 = vmatpush2.bf16.msra.mxu0 %v4436
  %5901 = vmatprep.subr.bf16.mxu0 %v4424
  %5902 = vmatpush2.bf16.msra.mxu0 %v4423
  %5903 = vmatprep.subr.bf16.mxu0 %v4411
  %5904 = vmatpush2.bf16.msra.mxu0 %v4410
  %5905 = vmatprep.subr.bf16.mxu0 %v4398
  %5906 = vmatpush2.bf16.msra.mxu0 %v4397
  %5907 = vmatprep.subr.bf16.mxu0 %v4385
  %5908 = vmatpush2.bf16.msra.mxu0 %v4384
  %5909 = vmatprep.mubr.bf16.mxu0 %v1347
  %5910 = vmatmul.mubr.bf16.gmra.mxu0 %v1346
  %v5911 = vpop.f32.mrf.mxu0
  %v5912 = vadd.f32 %v5871, %v5911
  %v5913 = vpop.f32.mrf.mxu0
  %v5914 = vadd.f32 %v5873, %v5913
  %v5915 = vpop.f32.mrf.mxu0
  %v5916 = vpop.f32.mrf.mxu0
  %5917 = vdwg.mxu0
  %5918 = vmatprep.subr.bf16.mxu0 %v4580
  %5919 = vmatpush1.bf16.msra.mxu0 %v4579
  %5920 = vmatprep.subr.bf16.mxu0 %v4567
  %5921 = vmatpush1.bf16.msra.mxu0 %v4566
  %5922 = vmatprep.subr.bf16.mxu0 %v4554
  %5923 = vmatpush1.bf16.msra.mxu0 %v4553
  %5924 = vmatprep.subr.bf16.mxu0 %v4541
  %5925 = vmatpush1.bf16.msra.mxu0 %v4540
  %5926 = vmatprep.subr.bf16.mxu0 %v4528
  %5927 = vmatpush1.bf16.msra.mxu0 %v4527
  %5928 = vmatprep.subr.bf16.mxu0 %v4515
  %5929 = vmatpush1.bf16.msra.mxu0 %v4514
  %5930 = vmatprep.subr.bf16.mxu0 %v4502
  %5931 = vmatpush1.bf16.msra.mxu0 %v4501
  %5932 = vmatprep.subr.bf16.mxu0 %v4489
  %5933 = vmatpush1.bf16.msra.mxu0 %v4488
  %5934 = vmatprep.subr.bf16.mxu0 %v4684
  %5935 = vmatpush2.bf16.msra.mxu0 %v4683
  %5936 = vmatprep.subr.bf16.mxu0 %v4671
  %5937 = vmatpush2.bf16.msra.mxu0 %v4670
  %5938 = vmatprep.subr.bf16.mxu0 %v4658
  %5939 = vmatpush2.bf16.msra.mxu0 %v4657
  %5940 = vmatprep.subr.bf16.mxu0 %v4645
  %5941 = vmatpush2.bf16.msra.mxu0 %v4644
  %5942 = vmatprep.subr.bf16.mxu0 %v4632
  %5943 = vmatpush2.bf16.msra.mxu0 %v4631
  %5944 = vmatprep.subr.bf16.mxu0 %v4619
  %5945 = vmatpush2.bf16.msra.mxu0 %v4618
  %5946 = vmatprep.subr.bf16.mxu0 %v4606
  %5947 = vmatpush2.bf16.msra.mxu0 %v4605
  %5948 = vmatprep.subr.bf16.mxu0 %v4593
  %5949 = vmatpush2.bf16.msra.mxu0 %v4592
  %5950 = vmatprep.mubr.bf16.mxu0 %v1349
  %5951 = vmatmul.mubr.bf16.gmra.mxu0 %v1348
  %v5952 = vpop.f32.mrf.mxu0
  %v5953 = vadd.f32 %v5912, %v5952
  %v5954 = vpop.f32.mrf.mxu0
  %v5955 = vadd.f32 %v5914, %v5954
  %v5956 = vpop.f32.mrf.mxu0
  %v5957 = vpop.f32.mrf.mxu0
  %5958 = vdwg.mxu0
  %5959 = vmatprep.subr.bf16.mxu0 0
  %5960 = vmatpush1.bf16.msra.mxu0 0
  %5961 = vmatprep.subr.bf16.mxu0 0
  %5962 = vmatpush1.bf16.msra.mxu0 0
  %5963 = vmatprep.subr.bf16.mxu0 0
  %5964 = vmatpush1.bf16.msra.mxu0 0
  %5965 = vmatprep.subr.bf16.mxu0 0
  %5966 = vmatpush1.bf16.msra.mxu0 0
  %5967 = vmatprep.subr.bf16.mxu0 0
  %5968 = vmatpush1.bf16.msra.mxu0 0
  %5969 = vmatprep.subr.bf16.mxu0 0
  %5970 = vmatpush1.bf16.msra.mxu0 0
  %5971 = vmatprep.subr.bf16.mxu0 0
  %5972 = vmatpush1.bf16.msra.mxu0 0
  %5973 = vmatprep.subr.bf16.mxu0 %v4697
  %5974 = vmatpush1.bf16.msra.mxu0 %v4696
  %5975 = vmatprep.subr.bf16.mxu0 0
  %5976 = vmatpush2.bf16.msra.mxu0 0
  %5977 = vmatprep.subr.bf16.mxu0 0
  %5978 = vmatpush2.bf16.msra.mxu0 0
  %5979 = vmatprep.subr.bf16.mxu0 0
  %5980 = vmatpush2.bf16.msra.mxu0 0
  %5981 = vmatprep.subr.bf16.mxu0 0
  %5982 = vmatpush2.bf16.msra.mxu0 0
  %5983 = vmatprep.subr.bf16.mxu0 0
  %5984 = vmatpush2.bf16.msra.mxu0 0
  %5985 = vmatprep.subr.bf16.mxu0 0
  %5986 = vmatpush2.bf16.msra.mxu0 0
  %5987 = vmatprep.subr.bf16.mxu0 0
  %5988 = vmatpush2.bf16.msra.mxu0 0
  %5989 = vmatprep.subr.bf16.mxu0 0
  %5990 = vmatpush2.bf16.msra.mxu0 0
  %5991 = vmatprep.mubr.bf16.mxu0 0
  %5992 = vmatmul.mubr.bf16.gmra.mxu0 %v5342
  %v5993 = vpop.f32.mrf.mxu0
  %v5994 = vadd.f32 %v5953, %v5993
  %v5995 = vpop.f32.mrf.mxu0
  %v5996 = vadd.f32 %v5955, %v5995
  %v5997 = vpop.f32.mrf.mxu0
  %v5998 = vpop.f32.mrf.mxu0
  %5999 = vdwg.mxu0
  %6000 = vmatprep.subr.bf16.mxu0 %v4166
  %6001 = vmatpush1.bf16.msra.mxu0 %v4165
  %6002 = vmatprep.subr.bf16.mxu0 %v4153
  %6003 = vmatpush1.bf16.msra.mxu0 %v4152
  %6004 = vmatprep.subr.bf16.mxu0 %v4140
  %6005 = vmatpush1.bf16.msra.mxu0 %v4139
  %6006 = vmatprep.subr.bf16.mxu0 %v4127
  %6007 = vmatpush1.bf16.msra.mxu0 %v4126
  %6008 = vmatprep.subr.bf16.mxu0 %v4114
  %6009 = vmatpush1.bf16.msra.mxu0 %v4113
  %6010 = vmatprep.subr.bf16.mxu0 %v4101
  %6011 = vmatpush1.bf16.msra.mxu0 %v4100
  %6012 = vmatprep.subr.bf16.mxu0 %v4088
  %6013 = vmatpush1.bf16.msra.mxu0 %v4087
  %6014 = vmatprep.subr.bf16.mxu0 %v4075
  %6015 = vmatpush1.bf16.msra.mxu0 %v4074
  %6016 = vmatprep.subr.bf16.mxu0 %v4270
  %6017 = vmatpush2.bf16.msra.mxu0 %v4269
  %6018 = vmatprep.subr.bf16.mxu0 %v4257
  %6019 = vmatpush2.bf16.msra.mxu0 %v4256
  %6020 = vmatprep.subr.bf16.mxu0 %v4244
  %6021 = vmatpush2.bf16.msra.mxu0 %v4243
  %6022 = vmatprep.subr.bf16.mxu0 %v4231
  %6023 = vmatpush2.bf16.msra.mxu0 %v4230
  %6024 = vmatprep.subr.bf16.mxu0 %v4218
  %6025 = vmatpush2.bf16.msra.mxu0 %v4217
  %6026 = vmatprep.subr.bf16.mxu0 %v4205
  %6027 = vmatpush2.bf16.msra.mxu0 %v4204
  %6028 = vmatprep.subr.bf16.mxu0 %v4192
  %6029 = vmatpush2.bf16.msra.mxu0 %v4191
  %6030 = vmatprep.subr.bf16.mxu0 %v4179
  %6031 = vmatpush2.bf16.msra.mxu0 %v4178
  %6032 = vmatprep.mubr.bf16.mxu0 %v1345
  %6033 = vmatmul.mubr.bf16.gmra.mxu0 %v1344
  %v6034 = vpop.f32.mrf.mxu0
  %v6035 = vadd.f32 %v2076, %v6034
  %v6036 = vpop.f32.mrf.mxu0
  %v6037 = vadd.f32 %v2080, %v6036
  %v6038 = vpop.f32.mrf.mxu0
  %v6039 = vpop.f32.mrf.mxu0
  %6040 = vdwg.mxu0
  %6041 = vmatprep.subr.bf16.mxu0 %v4374
  %6042 = vmatpush1.bf16.msra.mxu0 %v4373
  %6043 = vmatprep.subr.bf16.mxu0 %v4361
  %6044 = vmatpush1.bf16.msra.mxu0 %v4360
  %6045 = vmatprep.subr.bf16.mxu0 %v4348
  %6046 = vmatpush1.bf16.msra.mxu0 %v4347
  %6047 = vmatprep.subr.bf16.mxu0 %v4335
  %6048 = vmatpush1.bf16.msra.mxu0 %v4334
  %6049 = vmatprep.subr.bf16.mxu0 %v4322
  %6050 = vmatpush1.bf16.msra.mxu0 %v4321
  %6051 = vmatprep.subr.bf16.mxu0 %v4309
  %6052 = vmatpush1.bf16.msra.mxu0 %v4308
  %6053 = vmatprep.subr.bf16.mxu0 %v4296
  %6054 = vmatpush1.bf16.msra.mxu0 %v4295
  %6055 = vmatprep.subr.bf16.mxu0 %v4283
  %6056 = vmatpush1.bf16.msra.mxu0 %v4282
  %6057 = vmatprep.subr.bf16.mxu0 %v4478
  %6058 = vmatpush2.bf16.msra.mxu0 %v4477
  %6059 = vmatprep.subr.bf16.mxu0 %v4465
  %6060 = vmatpush2.bf16.msra.mxu0 %v4464
  %6061 = vmatprep.subr.bf16.mxu0 %v4452
  %6062 = vmatpush2.bf16.msra.mxu0 %v4451
  %6063 = vmatprep.subr.bf16.mxu0 %v4439
  %6064 = vmatpush2.bf16.msra.mxu0 %v4438
  %6065 = vmatprep.subr.bf16.mxu0 %v4426
  %6066 = vmatpush2.bf16.msra.mxu0 %v4425
  %6067 = vmatprep.subr.bf16.mxu0 %v4413
  %6068 = vmatpush2.bf16.msra.mxu0 %v4412
  %6069 = vmatprep.subr.bf16.mxu0 %v4400
  %6070 = vmatpush2.bf16.msra.mxu0 %v4399
  %6071 = vmatprep.subr.bf16.mxu0 %v4387
  %6072 = vmatpush2.bf16.msra.mxu0 %v4386
  %6073 = vmatprep.mubr.bf16.mxu0 %v1347
  %6074 = vmatmul.mubr.bf16.gmra.mxu0 %v1346
  %v6075 = vpop.f32.mrf.mxu0
  %v6076 = vadd.f32 %v6035, %v6075
  %v6077 = vpop.f32.mrf.mxu0
  %v6078 = vadd.f32 %v6037, %v6077
  %v6079 = vpop.f32.mrf.mxu0
  %v6080 = vpop.f32.mrf.mxu0
  %6081 = vdwg.mxu0
  %6082 = vmatprep.subr.bf16.mxu0 %v4582
  %6083 = vmatpush1.bf16.msra.mxu0 %v4581
  %6084 = vmatprep.subr.bf16.mxu0 %v4569
  %6085 = vmatpush1.bf16.msra.mxu0 %v4568
  %6086 = vmatprep.subr.bf16.mxu0 %v4556
  %6087 = vmatpush1.bf16.msra.mxu0 %v4555
  %6088 = vmatprep.subr.bf16.mxu0 %v4543
  %6089 = vmatpush1.bf16.msra.mxu0 %v4542
  %6090 = vmatprep.subr.bf16.mxu0 %v4530
  %6091 = vmatpush1.bf16.msra.mxu0 %v4529
  %6092 = vmatprep.subr.bf16.mxu0 %v4517
  %6093 = vmatpush1.bf16.msra.mxu0 %v4516
  %6094 = vmatprep.subr.bf16.mxu0 %v4504
  %6095 = vmatpush1.bf16.msra.mxu0 %v4503
  %6096 = vmatprep.subr.bf16.mxu0 %v4491
  %6097 = vmatpush1.bf16.msra.mxu0 %v4490
  %6098 = vmatprep.subr.bf16.mxu0 %v4686
  %6099 = vmatpush2.bf16.msra.mxu0 %v4685
  %6100 = vmatprep.subr.bf16.mxu0 %v4673
  %6101 = vmatpush2.bf16.msra.mxu0 %v4672
  %6102 = vmatprep.subr.bf16.mxu0 %v4660
  %6103 = vmatpush2.bf16.msra.mxu0 %v4659
  %6104 = vmatprep.subr.bf16.mxu0 %v4647
  %6105 = vmatpush2.bf16.msra.mxu0 %v4646
  %6106 = vmatprep.subr.bf16.mxu0 %v4634
  %6107 = vmatpush2.bf16.msra.mxu0 %v4633
  %6108 = vmatprep.subr.bf16.mxu0 %v4621
  %6109 = vmatpush2.bf16.msra.mxu0 %v4620
  %6110 = vmatprep.subr.bf16.mxu0 %v4608
  %6111 = vmatpush2.bf16.msra.mxu0 %v4607
  %6112 = vmatprep.subr.bf16.mxu0 %v4595
  %6113 = vmatpush2.bf16.msra.mxu0 %v4594
  %6114 = vmatprep.mubr.bf16.mxu0 %v1349
  %6115 = vmatmul.mubr.bf16.gmra.mxu0 %v1348
  %v6116 = vpop.f32.mrf.mxu0
  %v6117 = vadd.f32 %v6076, %v6116
  %v6118 = vpop.f32.mrf.mxu0
  %v6119 = vadd.f32 %v6078, %v6118
  %v6120 = vpop.f32.mrf.mxu0
  %v6121 = vpop.f32.mrf.mxu0
  %6122 = vdwg.mxu0
  %6123 = vmatprep.subr.bf16.mxu0 0
  %6124 = vmatpush1.bf16.msra.mxu0 0
  %6125 = vmatprep.subr.bf16.mxu0 0
  %6126 = vmatpush1.bf16.msra.mxu0 0
  %6127 = vmatprep.subr.bf16.mxu0 0
  %6128 = vmatpush1.bf16.msra.mxu0 0
  %6129 = vmatprep.subr.bf16.mxu0 0
  %6130 = vmatpush1.bf16.msra.mxu0 0
  %6131 = vmatprep.subr.bf16.mxu0 0
  %6132 = vmatpush1.bf16.msra.mxu0 0
  %6133 = vmatprep.subr.bf16.mxu0 0
  %6134 = vmatpush1.bf16.msra.mxu0 0
  %6135 = vmatprep.subr.bf16.mxu0 0
  %6136 = vmatpush1.bf16.msra.mxu0 0
  %6137 = vmatprep.subr.bf16.mxu0 %v4699
  %6138 = vmatpush1.bf16.msra.mxu0 %v4698
  %6139 = vmatprep.subr.bf16.mxu0 0
  %6140 = vmatpush2.bf16.msra.mxu0 0
  %6141 = vmatprep.subr.bf16.mxu0 0
  %6142 = vmatpush2.bf16.msra.mxu0 0
  %6143 = vmatprep.subr.bf16.mxu0 0
  %6144 = vmatpush2.bf16.msra.mxu0 0
  %6145 = vmatprep.subr.bf16.mxu0 0
  %6146 = vmatpush2.bf16.msra.mxu0 0
  %6147 = vmatprep.subr.bf16.mxu0 0
  %6148 = vmatpush2.bf16.msra.mxu0 0
  %6149 = vmatprep.subr.bf16.mxu0 0
  %6150 = vmatpush2.bf16.msra.mxu0 0
  %6151 = vmatprep.subr.bf16.mxu0 0
  %6152 = vmatpush2.bf16.msra.mxu0 0
  %6153 = vmatprep.subr.bf16.mxu0 0
  %6154 = vmatpush2.bf16.msra.mxu0 0
  %6155 = vmatprep.mubr.bf16.mxu0 0
  %6156 = vmatmul.mubr.bf16.gmra.mxu0 %v5342
  %v6157 = vpop.f32.mrf.mxu0
  %v6158 = vadd.f32 %v6117, %v6157
  %v6159 = vpop.f32.mrf.mxu0
  %v6160 = vadd.f32 %v6119, %v6159
  %v6161 = vpop.f32.mrf.mxu0
  %v6162 = vpop.f32.mrf.mxu0
  %6163 = vdwg.mxu0
  %6164 = vmatprep.subr.bf16.mxu0 %v4168
  %6165 = vmatpush1.bf16.msra.mxu0 %v4167
  %6166 = vmatprep.subr.bf16.mxu0 %v4155
  %6167 = vmatpush1.bf16.msra.mxu0 %v4154
  %6168 = vmatprep.subr.bf16.mxu0 %v4142
  %6169 = vmatpush1.bf16.msra.mxu0 %v4141
  %6170 = vmatprep.subr.bf16.mxu0 %v4129
  %6171 = vmatpush1.bf16.msra.mxu0 %v4128
  %6172 = vmatprep.subr.bf16.mxu0 %v4116
  %6173 = vmatpush1.bf16.msra.mxu0 %v4115
  %6174 = vmatprep.subr.bf16.mxu0 %v4103
  %6175 = vmatpush1.bf16.msra.mxu0 %v4102
  %6176 = vmatprep.subr.bf16.mxu0 %v4090
  %6177 = vmatpush1.bf16.msra.mxu0 %v4089
  %6178 = vmatprep.subr.bf16.mxu0 %v4077
  %6179 = vmatpush1.bf16.msra.mxu0 %v4076
  %6180 = vmatprep.subr.bf16.mxu0 %v4272
  %6181 = vmatpush2.bf16.msra.mxu0 %v4271
  %6182 = vmatprep.subr.bf16.mxu0 %v4259
  %6183 = vmatpush2.bf16.msra.mxu0 %v4258
  %6184 = vmatprep.subr.bf16.mxu0 %v4246
  %6185 = vmatpush2.bf16.msra.mxu0 %v4245
  %6186 = vmatprep.subr.bf16.mxu0 %v4233
  %6187 = vmatpush2.bf16.msra.mxu0 %v4232
  %6188 = vmatprep.subr.bf16.mxu0 %v4220
  %6189 = vmatpush2.bf16.msra.mxu0 %v4219
  %6190 = vmatprep.subr.bf16.mxu0 %v4207
  %6191 = vmatpush2.bf16.msra.mxu0 %v4206
  %6192 = vmatprep.subr.bf16.mxu0 %v4194
  %6193 = vmatpush2.bf16.msra.mxu0 %v4193
  %6194 = vmatprep.subr.bf16.mxu0 %v4181
  %6195 = vmatpush2.bf16.msra.mxu0 %v4180
  %6196 = vmatprep.mubr.bf16.mxu0 %v1345
  %6197 = vmatmul.mubr.bf16.gmra.mxu0 %v1344
  %v6198 = vpop.f32.mrf.mxu0
  %v6199 = vadd.f32 %v2084, %v6198
  %v6200 = vpop.f32.mrf.mxu0
  %v6201 = vadd.f32 %v2088, %v6200
  %v6202 = vpop.f32.mrf.mxu0
  %v6203 = vpop.f32.mrf.mxu0
  %6204 = vdwg.mxu0
  %6205 = vmatprep.subr.bf16.mxu0 %v4376
  %6206 = vmatpush1.bf16.msra.mxu0 %v4375
  %6207 = vmatprep.subr.bf16.mxu0 %v4363
  %6208 = vmatpush1.bf16.msra.mxu0 %v4362
  %6209 = vmatprep.subr.bf16.mxu0 %v4350
  %6210 = vmatpush1.bf16.msra.mxu0 %v4349
  %6211 = vmatprep.subr.bf16.mxu0 %v4337
  %6212 = vmatpush1.bf16.msra.mxu0 %v4336
  %6213 = vmatprep.subr.bf16.mxu0 %v4324
  %6214 = vmatpush1.bf16.msra.mxu0 %v4323
  %6215 = vmatprep.subr.bf16.mxu0 %v4311
  %6216 = vmatpush1.bf16.msra.mxu0 %v4310
  %6217 = vmatprep.subr.bf16.mxu0 %v4298
  %6218 = vmatpush1.bf16.msra.mxu0 %v4297
  %6219 = vmatprep.subr.bf16.mxu0 %v4285
  %6220 = vmatpush1.bf16.msra.mxu0 %v4284
  %6221 = vmatprep.subr.bf16.mxu0 %v4480
  %6222 = vmatpush2.bf16.msra.mxu0 %v4479
  %6223 = vmatprep.subr.bf16.mxu0 %v4467
  %6224 = vmatpush2.bf16.msra.mxu0 %v4466
  %6225 = vmatprep.subr.bf16.mxu0 %v4454
  %6226 = vmatpush2.bf16.msra.mxu0 %v4453
  %6227 = vmatprep.subr.bf16.mxu0 %v4441
  %6228 = vmatpush2.bf16.msra.mxu0 %v4440
  %6229 = vmatprep.subr.bf16.mxu0 %v4428
  %6230 = vmatpush2.bf16.msra.mxu0 %v4427
  %6231 = vmatprep.subr.bf16.mxu0 %v4415
  %6232 = vmatpush2.bf16.msra.mxu0 %v4414
  %6233 = vmatprep.subr.bf16.mxu0 %v4402
  %6234 = vmatpush2.bf16.msra.mxu0 %v4401
  %6235 = vmatprep.subr.bf16.mxu0 %v4389
  %6236 = vmatpush2.bf16.msra.mxu0 %v4388
  %6237 = vmatprep.mubr.bf16.mxu0 %v1347
  %6238 = vmatmul.mubr.bf16.gmra.mxu0 %v1346
  %v6239 = vpop.f32.mrf.mxu0
  %v6240 = vadd.f32 %v6199, %v6239
  %v6241 = vpop.f32.mrf.mxu0
  %v6242 = vadd.f32 %v6201, %v6241
  %v6243 = vpop.f32.mrf.mxu0
  %v6244 = vpop.f32.mrf.mxu0
  %6245 = vdwg.mxu0
  %6246 = vmatprep.subr.bf16.mxu0 %v4584
  %6247 = vmatpush1.bf16.msra.mxu0 %v4583
  %6248 = vmatprep.subr.bf16.mxu0 %v4571
  %6249 = vmatpush1.bf16.msra.mxu0 %v4570
  %6250 = vmatprep.subr.bf16.mxu0 %v4558
  %6251 = vmatpush1.bf16.msra.mxu0 %v4557
  %6252 = vmatprep.subr.bf16.mxu0 %v4545
  %6253 = vmatpush1.bf16.msra.mxu0 %v4544
  %6254 = vmatprep.subr.bf16.mxu0 %v4532
  %6255 = vmatpush1.bf16.msra.mxu0 %v4531
  %6256 = vmatprep.subr.bf16.mxu0 %v4519
  %6257 = vmatpush1.bf16.msra.mxu0 %v4518
  %6258 = vmatprep.subr.bf16.mxu0 %v4506
  %6259 = vmatpush1.bf16.msra.mxu0 %v4505
  %6260 = vmatprep.subr.bf16.mxu0 %v4493
  %6261 = vmatpush1.bf16.msra.mxu0 %v4492
  %6262 = vmatprep.subr.bf16.mxu0 %v4688
  %6263 = vmatpush2.bf16.msra.mxu0 %v4687
  %6264 = vmatprep.subr.bf16.mxu0 %v4675
  %6265 = vmatpush2.bf16.msra.mxu0 %v4674
  %6266 = vmatprep.subr.bf16.mxu0 %v4662
  %6267 = vmatpush2.bf16.msra.mxu0 %v4661
  %6268 = vmatprep.subr.bf16.mxu0 %v4649
  %6269 = vmatpush2.bf16.msra.mxu0 %v4648
  %6270 = vmatprep.subr.bf16.mxu0 %v4636
  %6271 = vmatpush2.bf16.msra.mxu0 %v4635
  %6272 = vmatprep.subr.bf16.mxu0 %v4623
  %6273 = vmatpush2.bf16.msra.mxu0 %v4622
  %6274 = vmatprep.subr.bf16.mxu0 %v4610
  %6275 = vmatpush2.bf16.msra.mxu0 %v4609
  %6276 = vmatprep.subr.bf16.mxu0 %v4597
  %6277 = vmatpush2.bf16.msra.mxu0 %v4596
  %6278 = vmatprep.mubr.bf16.mxu0 %v1349
  %6279 = vmatmul.mubr.bf16.gmra.mxu0 %v1348
  %v6280 = vpop.f32.mrf.mxu0
  %v6281 = vadd.f32 %v6240, %v6280
  %v6282 = vpop.f32.mrf.mxu0
  %v6283 = vadd.f32 %v6242, %v6282
  %v6284 = vpop.f32.mrf.mxu0
  %v6285 = vpop.f32.mrf.mxu0
  %6286 = vdwg.mxu0
  %6287 = vmatprep.subr.bf16.mxu0 0
  %6288 = vmatpush1.bf16.msra.mxu0 0
  %6289 = vmatprep.subr.bf16.mxu0 0
  %6290 = vmatpush1.bf16.msra.mxu0 0
  %6291 = vmatprep.subr.bf16.mxu0 0
  %6292 = vmatpush1.bf16.msra.mxu0 0
  %6293 = vmatprep.subr.bf16.mxu0 0
  %6294 = vmatpush1.bf16.msra.mxu0 0
  %6295 = vmatprep.subr.bf16.mxu0 0
  %6296 = vmatpush1.bf16.msra.mxu0 0
  %6297 = vmatprep.subr.bf16.mxu0 0
  %6298 = vmatpush1.bf16.msra.mxu0 0
  %6299 = vmatprep.subr.bf16.mxu0 0
  %6300 = vmatpush1.bf16.msra.mxu0 0
  %6301 = vmatprep.subr.bf16.mxu0 %v4701
  %6302 = vmatpush1.bf16.msra.mxu0 %v4700
  %6303 = vmatprep.subr.bf16.mxu0 0
  %6304 = vmatpush2.bf16.msra.mxu0 0
  %6305 = vmatprep.subr.bf16.mxu0 0
  %6306 = vmatpush2.bf16.msra.mxu0 0
  %6307 = vmatprep.subr.bf16.mxu0 0
  %6308 = vmatpush2.bf16.msra.mxu0 0
  %6309 = vmatprep.subr.bf16.mxu0 0
  %6310 = vmatpush2.bf16.msra.mxu0 0
  %6311 = vmatprep.subr.bf16.mxu0 0
  %6312 = vmatpush2.bf16.msra.mxu0 0
  %6313 = vmatprep.subr.bf16.mxu0 0
  %6314 = vmatpush2.bf16.msra.mxu0 0
  %6315 = vmatprep.subr.bf16.mxu0 0
  %6316 = vmatpush2.bf16.msra.mxu0 0
  %6317 = vmatprep.subr.bf16.mxu0 0
  %6318 = vmatpush2.bf16.msra.mxu0 0
  %6319 = vmatprep.mubr.bf16.mxu0 0
  %6320 = vmatmul.mubr.bf16.gmra.mxu0 %v5342
  %v6321 = vpop.f32.mrf.mxu0
  %v6322 = vadd.f32 %v6281, %v6321
  %v6323 = vpop.f32.mrf.mxu0
  %v6324 = vadd.f32 %v6283, %v6323
  %v6325 = vpop.f32.mrf.mxu0
  %v6326 = vpop.f32.mrf.mxu0
  %6327 = vdwg.mxu0
  %6328 = vmatprep.subr.bf16.mxu0 0
  %6329 = vmatpush1.bf16.msra.mxu0 %v4169
  %6330 = vmatprep.subr.bf16.mxu0 0
  %6331 = vmatpush1.bf16.msra.mxu0 %v4156
  %6332 = vmatprep.subr.bf16.mxu0 0
  %6333 = vmatpush1.bf16.msra.mxu0 %v4143
  %6334 = vmatprep.subr.bf16.mxu0 0
  %6335 = vmatpush1.bf16.msra.mxu0 %v4130
  %6336 = vmatprep.subr.bf16.mxu0 0
  %6337 = vmatpush1.bf16.msra.mxu0 %v4117
  %6338 = vmatprep.subr.bf16.mxu0 0
  %6339 = vmatpush1.bf16.msra.mxu0 %v4104
  %6340 = vmatprep.subr.bf16.mxu0 0
  %6341 = vmatpush1.bf16.msra.mxu0 %v4091
  %6342 = vmatprep.subr.bf16.mxu0 0
  %6343 = vmatpush1.bf16.msra.mxu0 %v4078
  %6344 = vmatprep.subr.bf16.mxu0 0
  %6345 = vmatpush2.bf16.msra.mxu0 %v4273
  %6346 = vmatprep.subr.bf16.mxu0 0
  %6347 = vmatpush2.bf16.msra.mxu0 %v4260
  %6348 = vmatprep.subr.bf16.mxu0 0
  %6349 = vmatpush2.bf16.msra.mxu0 %v4247
  %6350 = vmatprep.subr.bf16.mxu0 0
  %6351 = vmatpush2.bf16.msra.mxu0 %v4234
  %6352 = vmatprep.subr.bf16.mxu0 0
  %6353 = vmatpush2.bf16.msra.mxu0 %v4221
  %6354 = vmatprep.subr.bf16.mxu0 0
  %6355 = vmatpush2.bf16.msra.mxu0 %v4208
  %6356 = vmatprep.subr.bf16.mxu0 0
  %6357 = vmatpush2.bf16.msra.mxu0 %v4195
  %6358 = vmatprep.subr.bf16.mxu0 0
  %6359 = vmatpush2.bf16.msra.mxu0 %v4182
  %6360 = vmatprep.mubr.bf16.mxu0 %v1345
  %6361 = vmatmul.mubr.bf16.gmra.mxu0 %v1344
  %v6362 = vpop.f32.mrf.mxu0
  %v6363 = vadd.f32 %v2092, %v6362
  %v6364 = vpop.f32.mrf.mxu0
  %v6365 = vpop.f32.mrf.mxu0
  %v6366 = vpop.f32.mrf.mxu0
  %6367 = vdwg.mxu0
  %6368 = vmatprep.subr.bf16.mxu0 0
  %6369 = vmatpush1.bf16.msra.mxu0 %v4377
  %6370 = vmatprep.subr.bf16.mxu0 0
  %6371 = vmatpush1.bf16.msra.mxu0 %v4364
  %6372 = vmatprep.subr.bf16.mxu0 0
  %6373 = vmatpush1.bf16.msra.mxu0 %v4351
  %6374 = vmatprep.subr.bf16.mxu0 0
  %6375 = vmatpush1.bf16.msra.mxu0 %v4338
  %6376 = vmatprep.subr.bf16.mxu0 0
  %6377 = vmatpush1.bf16.msra.mxu0 %v4325
  %6378 = vmatprep.subr.bf16.mxu0 0
  %6379 = vmatpush1.bf16.msra.mxu0 %v4312
  %6380 = vmatprep.subr.bf16.mxu0 0
  %6381 = vmatpush1.bf16.msra.mxu0 %v4299
  %6382 = vmatprep.subr.bf16.mxu0 0
  %6383 = vmatpush1.bf16.msra.mxu0 %v4286
  %6384 = vmatprep.subr.bf16.mxu0 0
  %6385 = vmatpush2.bf16.msra.mxu0 %v4481
  %6386 = vmatprep.subr.bf16.mxu0 0
  %6387 = vmatpush2.bf16.msra.mxu0 %v4468
  %6388 = vmatprep.subr.bf16.mxu0 0
  %6389 = vmatpush2.bf16.msra.mxu0 %v4455
  %6390 = vmatprep.subr.bf16.mxu0 0
  %6391 = vmatpush2.bf16.msra.mxu0 %v4442
  %6392 = vmatprep.subr.bf16.mxu0 0
  %6393 = vmatpush2.bf16.msra.mxu0 %v4429
  %6394 = vmatprep.subr.bf16.mxu0 0
  %6395 = vmatpush2.bf16.msra.mxu0 %v4416
  %6396 = vmatprep.subr.bf16.mxu0 0
  %6397 = vmatpush2.bf16.msra.mxu0 %v4403
  %6398 = vmatprep.subr.bf16.mxu0 0
  %6399 = vmatpush2.bf16.msra.mxu0 %v4390
  %6400 = vmatprep.mubr.bf16.mxu0 %v1347
  %6401 = vmatmul.mubr.bf16.gmra.mxu0 %v1346
  %v6402 = vpop.f32.mrf.mxu0
  %v6403 = vadd.f32 %v6363, %v6402
  %v6404 = vpop.f32.mrf.mxu0
  %v6405 = vpop.f32.mrf.mxu0
  %v6406 = vpop.f32.mrf.mxu0
  %6407 = vdwg.mxu0
  %6408 = vmatprep.subr.bf16.mxu0 0
  %6409 = vmatpush1.bf16.msra.mxu0 %v4585
  %6410 = vmatprep.subr.bf16.mxu0 0
  %6411 = vmatpush1.bf16.msra.mxu0 %v4572
  %6412 = vmatprep.subr.bf16.mxu0 0
  %6413 = vmatpush1.bf16.msra.mxu0 %v4559
  %6414 = vmatprep.subr.bf16.mxu0 0
  %6415 = vmatpush1.bf16.msra.mxu0 %v4546
  %6416 = vmatprep.subr.bf16.mxu0 0
  %6417 = vmatpush1.bf16.msra.mxu0 %v4533
  %6418 = vmatprep.subr.bf16.mxu0 0
  %6419 = vmatpush1.bf16.msra.mxu0 %v4520
  %6420 = vmatprep.subr.bf16.mxu0 0
  %6421 = vmatpush1.bf16.msra.mxu0 %v4507
  %6422 = vmatprep.subr.bf16.mxu0 0
  %6423 = vmatpush1.bf16.msra.mxu0 %v4494
  %6424 = vmatprep.subr.bf16.mxu0 0
  %6425 = vmatpush2.bf16.msra.mxu0 %v4689
  %6426 = vmatprep.subr.bf16.mxu0 0
  %6427 = vmatpush2.bf16.msra.mxu0 %v4676
  %6428 = vmatprep.subr.bf16.mxu0 0
  %6429 = vmatpush2.bf16.msra.mxu0 %v4663
  %6430 = vmatprep.subr.bf16.mxu0 0
  %6431 = vmatpush2.bf16.msra.mxu0 %v4650
  %6432 = vmatprep.subr.bf16.mxu0 0
  %6433 = vmatpush2.bf16.msra.mxu0 %v4637
  %6434 = vmatprep.subr.bf16.mxu0 0
  %6435 = vmatpush2.bf16.msra.mxu0 %v4624
  %6436 = vmatprep.subr.bf16.mxu0 0
  %6437 = vmatpush2.bf16.msra.mxu0 %v4611
  %6438 = vmatprep.subr.bf16.mxu0 0
  %6439 = vmatpush2.bf16.msra.mxu0 %v4598
  %6440 = vmatprep.mubr.bf16.mxu0 %v1349
  %6441 = vmatmul.mubr.bf16.gmra.mxu0 %v1348
  %v6442 = vpop.f32.mrf.mxu0
  %v6443 = vadd.f32 %v6403, %v6442
  %v6444 = vpop.f32.mrf.mxu0
  %v6445 = vpop.f32.mrf.mxu0
  %v6446 = vpop.f32.mrf.mxu0
  %6447 = vdwg.mxu0
  %6448 = vmatprep.subr.bf16.mxu0 0
  %6449 = vmatpush1.bf16.msra.mxu0 0
  %6450 = vmatprep.subr.bf16.mxu0 0
  %6451 = vmatpush1.bf16.msra.mxu0 0
  %6452 = vmatprep.subr.bf16.mxu0 0
  %6453 = vmatpush1.bf16.msra.mxu0 0
  %6454 = vmatprep.subr.bf16.mxu0 0
  %6455 = vmatpush1.bf16.msra.mxu0 0
  %6456 = vmatprep.subr.bf16.mxu0 0
  %6457 = vmatpush1.bf16.msra.mxu0 0
  %6458 = vmatprep.subr.bf16.mxu0 0
  %6459 = vmatpush1.bf16.msra.mxu0 0
  %6460 = vmatprep.subr.bf16.mxu0 0
  %6461 = vmatpush1.bf16.msra.mxu0 0
  %6462 = vmatprep.subr.bf16.mxu0 0
  %6463 = vmatpush1.bf16.msra.mxu0 %v4702
  %6464 = vmatprep.subr.bf16.mxu0 0
  %6465 = vmatpush2.bf16.msra.mxu0 0
  %6466 = vmatprep.subr.bf16.mxu0 0
  %6467 = vmatpush2.bf16.msra.mxu0 0
  %6468 = vmatprep.subr.bf16.mxu0 0
  %6469 = vmatpush2.bf16.msra.mxu0 0
  %6470 = vmatprep.subr.bf16.mxu0 0
  %6471 = vmatpush2.bf16.msra.mxu0 0
  %6472 = vmatprep.subr.bf16.mxu0 0
  %6473 = vmatpush2.bf16.msra.mxu0 0
  %6474 = vmatprep.subr.bf16.mxu0 0
  %6475 = vmatpush2.bf16.msra.mxu0 0
  %6476 = vmatprep.subr.bf16.mxu0 0
  %6477 = vmatpush2.bf16.msra.mxu0 0
  %6478 = vmatprep.subr.bf16.mxu0 0
  %6479 = vmatpush2.bf16.msra.mxu0 0
  %6480 = vmatprep.mubr.bf16.mxu0 0
  %6481 = vmatmul.mubr.bf16.gmra.mxu0 %v5342
  %v6482 = vpop.f32.mrf.mxu0
  %v6483 = vadd.f32 %v6443, %v6482
  %v6484 = vpop.f32.mrf.mxu0
  %v6485 = vpop.f32.mrf.mxu0
  %v6486 = vpop.f32.mrf.mxu0
  %6487 = vdwg.mxu0
  %v6488 = vmax.f32 %v5502, 0.0
  %v6489 = vmax.f32 %v5504, 0.0
  %v6490 = vmax.f32 %v5666, 0.0
  %v6491 = vmax.f32 %v5668, 0.0
  %v6492 = vmax.f32 %v5830, 0.0
  %v6493 = vmax.f32 %v5832, 0.0
  %v6494 = vmax.f32 %v5994, 0.0
  %v6495 = vmax.f32 %v5996, 0.0
  %v6496 = vmax.f32 %v6158, 0.0
  %v6497 = vmax.f32 %v6160, 0.0
  %v6498 = vmax.f32 %v6322, 0.0
  %v6499 = vmax.f32 %v6324, 0.0
  %v6500 = vmax.f32 %v6483, 0.0
  %v6501 = vpack.c.bf16 %v6488, %v6488
  %v6502 = vpack.c.bf16 %v6489, %v6489
  %v6503 = vpack.c.bf16 %v6490, %v6490
  %v6504 = vpack.c.bf16 %v6491, %v6491
  %v6505 = vpack.c.bf16 %v6492, %v6492
  %v6506 = vpack.c.bf16 %v6493, %v6493
  %v6507 = vpack.c.bf16 %v6494, %v6494
  %v6508 = vpack.c.bf16 %v6495, %v6495
  %v6509 = vpack.c.bf16 %v6496, %v6496
  %v6510 = vpack.c.bf16 %v6497, %v6497
  %v6511 = vpack.c.bf16 %v6498, %v6498
  %v6512 = vpack.c.bf16 %v6499, %v6499
  %v6513 = vpack.c.bf16 %v6500, %v6500
  %v6514 = vld [vmem:[%s7] sm:$0xff]
  %v6515 = vld [vmem:[%s7 + $0x8] sm:$0xff]
  %v6516 = vld [vmem:[%s7 + $0x10] sm:$0xff]
  %v6517 = vld [vmem:[%s7 + $0x18] sm:$0xf]
  %v6518 = vld [vmem:[%s7 + $0x1c] sm:$0xff]
  %v6519 = vld [vmem:[%s7 + $0x24] sm:$0xff]
  %v6520 = vld [vmem:[%s7 + $0x2c] sm:$0xff]
  %v6521 = vld [vmem:[%s7 + $0x34] sm:$0xf]
  %v6522 = vld [vmem:[%s7 + $0x38] sm:$0xff]
  %v6523 = vld [vmem:[%s7 + $0x40] sm:$0xff]
  %v6524 = vld [vmem:[%s7 + $0x48] sm:$0xff]
  %v6525 = vld [vmem:[%s7 + $0x50] sm:$0xf]
  %v6526 = vld [vmem:[%s7 + $0x54] sm:$0xff]
  %v6527 = vld [vmem:[%s7 + $0x5c] sm:$0xff]
  %v6528 = vld [vmem:[%s7 + $0x64] sm:$0xff]
  %v6529 = vld [vmem:[%s7 + $0x6c] sm:$0xf]
  %v6530 = vld [vmem:[%s7 + $0x70] sm:$0xff]
  %v6531 = vld [vmem:[%s7 + $0x78] sm:$0xff]
  %v6532 = vld [vmem:[%s7 + $0x80] sm:$0xff]
  %v6533 = vld [vmem:[%s7 + $0x88] sm:$0xf]
  %v6534 = vld [vmem:[%s7 + $0x8c] sm:$0xff]
  %v6535 = vld [vmem:[%s7 + $0x94] sm:$0xff]
  %v6536 = vld [vmem:[%s7 + $0x9c] sm:$0xff]
  %v6537 = vld [vmem:[%s7 + $0xa4] sm:$0xf]
  %v6538 = vld [vmem:[%s7 + $0xa8] sm:$0xff]
  %v6539 = vld [vmem:[%s7 + $0xb0] sm:$0xff]
  %v6540 = vld [vmem:[%s7 + $0xb8] sm:$0xff]
  %v6541 = vld [vmem:[%s7 + $0xc0] sm:$0xf]
  %v6542 = vld [vmem:[%s7 + $0xc4] sm:$0xff]
  %v6543 = vld [vmem:[%s7 + $0xcc] sm:$0xff]
  %v6544 = vld [vmem:[%s7 + $0xd4] sm:$0xff]
  %v6545 = vld [vmem:[%s7 + $0xdc] sm:$0xf]
  %v6546 = vld [vmem:[%s7 + $0xe0] sm:$0xff]
  %v6547 = vld [vmem:[%s7 + $0xe8] sm:$0xff]
  %v6548 = vld [vmem:[%s7 + $0xf0] sm:$0xff]
  %v6549 = vld [vmem:[%s7 + $0xf8] sm:$0xf]
  %v6550 = vld [vmem:[%s7 + $0xfc] sm:$0xff]
  %v6551 = vld [vmem:[%s7 + $0x104] sm:$0xff]
  %v6552 = vld [vmem:[%s7 + $0x10c] sm:$0xff]
  %v6553 = vld [vmem:[%s7 + $0x114] sm:$0xf]
  %v6554 = vld [vmem:[%s7 + $0x118] sm:$0xff]
  %v6555 = vld [vmem:[%s7 + $0x120] sm:$0xff]
  %v6556 = vld [vmem:[%s7 + $0x128] sm:$0xff]
  %v6557 = vld [vmem:[%s7 + $0x130] sm:$0xf]
  %v6558 = vld [vmem:[%s7 + $0x134] sm:$0xff]
  %v6559 = vld [vmem:[%s7 + $0x13c] sm:$0xff]
  %v6560 = vld [vmem:[%s7 + $0x144] sm:$0xff]
  %v6561 = vld [vmem:[%s7 + $0x14c] sm:$0xf]
  %v6562 = vld [vmem:[%s7 + $0x150] sm:$0xff]
  %v6563 = vld [vmem:[%s7 + $0x158] sm:$0xff]
  %v6564 = vld [vmem:[%s7 + $0x160] sm:$0xff]
  %v6565 = vld [vmem:[%s7 + $0x168] sm:$0xf]
  %v6566 = vld [vmem:[%s7 + $0x16c] sm:$0xff]
  %v6567 = vld [vmem:[%s7 + $0x174] sm:$0xff]
  %v6568 = vld [vmem:[%s7 + $0x17c] sm:$0xff]
  %v6569 = vld [vmem:[%s7 + $0x184] sm:$0xf]
  %v6570 = vld [vmem:[%s7 + $0x188] sm:$0xff]
  %v6571 = vld [vmem:[%s7 + $0x190] sm:$0xff]
  %v6572 = vld [vmem:[%s7 + $0x198] sm:$0xff]
  %v6573 = vld [vmem:[%s7 + $0x1a0] sm:$0xf]
  %v6574 = vld [vmem:[%s7 + $0x1a4] sm:$0xff]
  %v6575 = vld [vmem:[%s7 + $0x1ac] sm:$0xff]
  %v6576 = vld [vmem:[%s7 + $0x1b4] sm:$0xff]
  %v6577 = vld [vmem:[%s7 + $0x1bc] sm:$0xf]
  %v6578 = vld [vmem:[%s7 + $0x1c0] sm:$0xff]
  %v6579 = vld [vmem:[%s7 + $0x1c8] sm:$0xff]
  %v6580 = vld [vmem:[%s7 + $0x1d0] sm:$0xff]
  %v6581 = vld [vmem:[%s7 + $0x1d8] sm:$0xf]
  %v6582 = vld [vmem:[%s7 + $0x1dc] sm:$0xff]
  %v6583 = vld [vmem:[%s7 + $0x1e4] sm:$0xff]
  %v6584 = vld [vmem:[%s7 + $0x1ec] sm:$0xff]
  %v6585 = vld [vmem:[%s7 + $0x1f4] sm:$0xf]
  %v6586 = vld [vmem:[%s7 + $0x1f8] sm:$0xff]
  %v6587 = vld [vmem:[%s7 + $0x200] sm:$0xff]
  %v6588 = vld [vmem:[%s7 + $0x208] sm:$0xff]
  %v6589 = vld [vmem:[%s7 + $0x210] sm:$0xf]
  %v6590 = vld [vmem:[%s7 + $0x214] sm:$0xff]
  %v6591 = vld [vmem:[%s7 + $0x21c] sm:$0xff]
  %v6592 = vld [vmem:[%s7 + $0x224] sm:$0xff]
  %v6593 = vld [vmem:[%s7 + $0x22c] sm:$0xf]
  %v6594 = vld [vmem:[%s7 + $0x230] sm:$0xff]
  %v6595 = vld [vmem:[%s7 + $0x238] sm:$0xff]
  %v6596 = vld [vmem:[%s7 + $0x240] sm:$0xff]
  %v6597 = vld [vmem:[%s7 + $0x248] sm:$0xf]
  %v6598 = vld [vmem:[%s7 + $0x24c] sm:$0xff]
  %v6599 = vld [vmem:[%s7 + $0x254] sm:$0xff]
  %v6600 = vld [vmem:[%s7 + $0x25c] sm:$0xff]
  %v6601 = vld [vmem:[%s7 + $0x264] sm:$0xf]
  %v6602 = vld [vmem:[%s7 + $0x268] sm:$0xff]
  %v6603 = vld [vmem:[%s7 + $0x270] sm:$0xff]
  %v6604 = vld [vmem:[%s7 + $0x278] sm:$0xff]
  %v6605 = vld [vmem:[%s7 + $0x280] sm:$0xf]
  %v6606 = vld [vmem:[%s7 + $0x284] sm:$0xff]
  %v6607 = vld [vmem:[%s7 + $0x28c] sm:$0xff]
  %v6608 = vld [vmem:[%s7 + $0x294] sm:$0xff]
  %v6609 = vld [vmem:[%s7 + $0x29c] sm:$0xf]
  %v6610 = vld [vmem:[%s7 + $0x2a0] sm:$0xff]
  %v6611 = vld [vmem:[%s7 + $0x2a8] sm:$0xff]
  %v6612 = vld [vmem:[%s7 + $0x2b0] sm:$0xff]
  %v6613 = vld [vmem:[%s7 + $0x2b8] sm:$0xf]
  %v6614 = vld [vmem:[%s7 + $0x2bc] sm:$0xff]
  %v6615 = vld [vmem:[%s7 + $0x2c4] sm:$0xff]
  %v6616 = vld [vmem:[%s7 + $0x2cc] sm:$0xff]
  %v6617 = vld [vmem:[%s7 + $0x2d4] sm:$0xf]
  %v6618 = vld [vmem:[%s7 + $0x2d8] sm:$0xff]
  %v6619 = vld [vmem:[%s7 + $0x2e0] sm:$0xff]
  %v6620 = vld [vmem:[%s7 + $0x2e8] sm:$0xff]
  %v6621 = vld [vmem:[%s7 + $0x2f0] sm:$0xf]
  %v6622 = vld [vmem:[%s7 + $0x2f4] sm:$0xff]
  %v6623 = vld [vmem:[%s7 + $0x2fc] sm:$0xff]
  %v6624 = vld [vmem:[%s7 + $0x304] sm:$0xff]
  %v6625 = vld [vmem:[%s7 + $0x30c] sm:$0xf]
  %v6626 = vld [vmem:[%s7 + $0x310] sm:$0xff]
  %v6627 = vld [vmem:[%s7 + $0x318] sm:$0xff]
  %v6628 = vld [vmem:[%s7 + $0x320] sm:$0xff]
  %v6629 = vld [vmem:[%s7 + $0x328] sm:$0xf]
  %v6630 = vld [vmem:[%s7 + $0x32c] sm:$0xff]
  %v6631 = vld [vmem:[%s7 + $0x334] sm:$0xff]
  %v6632 = vld [vmem:[%s7 + $0x33c] sm:$0xff]
  %v6633 = vld [vmem:[%s7 + $0x344] sm:$0xf]
  %v6634 = vld [vmem:[%s7 + $0x348] sm:$0xff]
  %v6635 = vld [vmem:[%s7 + $0x350] sm:$0xff]
  %v6636 = vld [vmem:[%s7 + $0x358] sm:$0xff]
  %v6637 = vld [vmem:[%s7 + $0x360] sm:$0xf]
  %v6638 = vld [vmem:[%s7 + $0x364] sm:$0xff]
  %v6639 = vld [vmem:[%s7 + $0x36c] sm:$0xff]
  %v6640 = vld [vmem:[%s7 + $0x374] sm:$0xff]
  %v6641 = vld [vmem:[%s7 + $0x37c] sm:$0xf]
  %v6642 = vld [vmem:[%s7 + $0x380] sm:$0xff]
  %v6643 = vld [vmem:[%s7 + $0x388] sm:$0xff]
  %v6644 = vld [vmem:[%s7 + $0x390] sm:$0xff]
  %v6645 = vld [vmem:[%s7 + $0x398] sm:$0xf]
  %v6646 = vld [vmem:[%s7 + $0x39c] sm:$0xff]
  %v6647 = vld [vmem:[%s7 + $0x3a4] sm:$0xff]
  %v6648 = vld [vmem:[%s7 + $0x3ac] sm:$0xff]
  %v6649 = vld [vmem:[%s7 + $0x3b4] sm:$0xf]
  %v6650 = vld [vmem:[%s7 + $0x3b8] sm:$0xff]
  %v6651 = vld [vmem:[%s7 + $0x3c0] sm:$0xff]
  %v6652 = vld [vmem:[%s7 + $0x3c8] sm:$0xff]
  %v6653 = vld [vmem:[%s7 + $0x3d0] sm:$0xf]
  %v6654 = vld [vmem:[%s7 + $0x3d4] sm:$0xff]
  %v6655 = vld [vmem:[%s7 + $0x3dc] sm:$0xff]
  %v6656 = vld [vmem:[%s7 + $0x3e4] sm:$0xff]
  %v6657 = vld [vmem:[%s7 + $0x3ec] sm:$0xf]
  %v6658 = vld [vmem:[%s7 + $0x3f0] sm:$0xff]
  %v6659 = vld [vmem:[%s7 + $0x3f8] sm:$0xff]
  %v6660 = vld [vmem:[%s7 + $0x400] sm:$0xff]
  %v6661 = vld [vmem:[%s7 + $0x408] sm:$0xf]
  %v6662 = vld [vmem:[%s7 + $0x40c] sm:$0xff]
  %v6663 = vld [vmem:[%s7 + $0x414] sm:$0xff]
  %v6664 = vld [vmem:[%s7 + $0x41c] sm:$0xff]
  %v6665 = vld [vmem:[%s7 + $0x424] sm:$0xf]
  %v6666 = vld [vmem:[%s7 + $0x428] sm:$0xff]
  %v6667 = vld [vmem:[%s7 + $0x430] sm:$0xff]
  %v6668 = vld [vmem:[%s7 + $0x438] sm:$0xff]
  %v6669 = vld [vmem:[%s7 + $0x440] sm:$0xf]
  %v6670 = vld [vmem:[%s7 + $0x444] sm:$0xff]
  %v6671 = vld [vmem:[%s7 + $0x44c] sm:$0xff]
  %v6672 = vld [vmem:[%s7 + $0x454] sm:$0xff]
  %v6673 = vld [vmem:[%s7 + $0x45c] sm:$0xf]
  %v6674 = vld [vmem:[%s7 + $0x460] sm:$0xff]
  %v6675 = vld [vmem:[%s7 + $0x468] sm:$0xff]
  %v6676 = vld [vmem:[%s7 + $0x470] sm:$0xff]
  %v6677 = vld [vmem:[%s7 + $0x478] sm:$0xf]
  %v6678 = vld [vmem:[%s7 + $0x47c] sm:$0xff]
  %v6679 = vld [vmem:[%s7 + $0x484] sm:$0xff]
  %v6680 = vld [vmem:[%s7 + $0x48c] sm:$0xff]
  %v6681 = vld [vmem:[%s7 + $0x494] sm:$0xf]
  %v6682 = vld [vmem:[%s7 + $0x498] sm:$0xff]
  %v6683 = vld [vmem:[%s7 + $0x4a0] sm:$0xff]
  %v6684 = vld [vmem:[%s7 + $0x4a8] sm:$0xff]
  %v6685 = vld [vmem:[%s7 + $0x4b0] sm:$0xf]
  %v6686 = vld [vmem:[%s7 + $0x4b4] sm:$0xff]
  %v6687 = vld [vmem:[%s7 + $0x4bc] sm:$0xff]
  %v6688 = vld [vmem:[%s7 + $0x4c4] sm:$0xff]
  %v6689 = vld [vmem:[%s7 + $0x4cc] sm:$0xf]
  %v6690 = vld [vmem:[%s7 + $0x4d0] sm:$0xff]
  %v6691 = vld [vmem:[%s7 + $0x4d8] sm:$0xff]
  %v6692 = vld [vmem:[%s7 + $0x4e0] sm:$0xff]
  %v6693 = vld [vmem:[%s7 + $0x4e8] sm:$0xf]
  %v6694 = vld [vmem:[%s7 + $0x4ec] sm:$0xff]
  %v6695 = vld [vmem:[%s7 + $0x4f4] sm:$0xff]
  %v6696 = vld [vmem:[%s7 + $0x4fc] sm:$0xff]
  %v6697 = vld [vmem:[%s7 + $0x504] sm:$0xf]
  %v6698 = vld [vmem:[%s7 + $0x508] sm:$0xff]
  %v6699 = vld [vmem:[%s7 + $0x510] sm:$0xff]
  %v6700 = vld [vmem:[%s7 + $0x518] sm:$0xff]
  %v6701 = vld [vmem:[%s7 + $0x520] sm:$0xf]
  %v6702 = vld [vmem:[%s7 + $0x524] sm:$0xff]
  %v6703 = vld [vmem:[%s7 + $0x52c] sm:$0xff]
  %v6704 = vld [vmem:[%s7 + $0x534] sm:$0xff]
  %v6705 = vld [vmem:[%s7 + $0x53c] sm:$0xf]
  %v6706 = vld [vmem:[%s7 + $0x540] sm:$0xff]
  %v6707 = vld [vmem:[%s7 + $0x548] sm:$0xff]
  %v6708 = vld [vmem:[%s7 + $0x550] sm:$0xff]
  %v6709 = vld [vmem:[%s7 + $0x558] sm:$0xf]
  %v6710 = vld [vmem:[%s7 + $0x55c] sm:$0xff]
  %v6711 = vld [vmem:[%s7 + $0x564] sm:$0xff]
  %v6712 = vld [vmem:[%s7 + $0x56c] sm:$0xff]
  %v6713 = vld [vmem:[%s7 + $0x574] sm:$0xf]
  %v6714 = vld [vmem:[%s7 + $0x578] sm:$0xff]
  %v6715 = vld [vmem:[%s7 + $0x580] sm:$0xff]
  %v6716 = vld [vmem:[%s7 + $0x588] sm:$0xff]
  %v6717 = vld [vmem:[%s7 + $0x590] sm:$0xf]
  %v6718 = vld [vmem:[%s7 + $0x594] sm:$0xff]
  %v6719 = vld [vmem:[%s7 + $0x59c] sm:$0xff]
  %v6720 = vld [vmem:[%s7 + $0x5a4] sm:$0xff]
  %v6721 = vld [vmem:[%s7 + $0x5ac] sm:$0xf]
  %v6722 = vld [vmem:[%s7 + $0x5b0] sm:$0xff]
  %v6723 = vld [vmem:[%s7 + $0x5b8] sm:$0xff]
  %v6724 = vld [vmem:[%s7 + $0x5c0] sm:$0xff]
  %v6725 = vld [vmem:[%s7 + $0x5c8] sm:$0xf]
  %v6726 = vld [vmem:[%s7 + $0x5cc] sm:$0xff]
  %v6727 = vld [vmem:[%s7 + $0x5d4] sm:$0xff]
  %v6728 = vld [vmem:[%s7 + $0x5dc] sm:$0xff]
  %v6729 = vld [vmem:[%s7 + $0x5e4] sm:$0xf]
  %v6730 = vld [vmem:[%s7 + $0x5e8] sm:$0xff]
  %v6731 = vld [vmem:[%s7 + $0x5f0] sm:$0xff]
  %v6732 = vld [vmem:[%s7 + $0x5f8] sm:$0xff]
  %v6733 = vld [vmem:[%s7 + $0x600] sm:$0xf]
  %v6734 = vld [vmem:[%s7 + $0x604] sm:$0xff]
  %v6735 = vld [vmem:[%s7 + $0x60c] sm:$0xff]
  %v6736 = vld [vmem:[%s7 + $0x614] sm:$0xff]
  %v6737 = vld [vmem:[%s7 + $0x61c] sm:$0xf]
  %v6738 = vld [vmem:[%s7 + $0x620] sm:$0xff]
  %v6739 = vld [vmem:[%s7 + $0x628] sm:$0xff]
  %v6740 = vld [vmem:[%s7 + $0x630] sm:$0xff]
  %v6741 = vld [vmem:[%s7 + $0x638] sm:$0xf]
  %v6742 = vld [vmem:[%s7 + $0x63c] sm:$0xff]
  %v6743 = vld [vmem:[%s7 + $0x644] sm:$0xff]
  %v6744 = vld [vmem:[%s7 + $0x64c] sm:$0xff]
  %v6745 = vld [vmem:[%s7 + $0x654] sm:$0xf]
  %v6746 = vld [vmem:[%s7 + $0x658] sm:$0xff]
  %v6747 = vld [vmem:[%s7 + $0x660] sm:$0xff]
  %v6748 = vld [vmem:[%s7 + $0x668] sm:$0xff]
  %v6749 = vld [vmem:[%s7 + $0x670] sm:$0xf]
  %v6750 = vld [vmem:[%s7 + $0x674] sm:$0xff]
  %v6751 = vld [vmem:[%s7 + $0x67c] sm:$0xff]
  %v6752 = vld [vmem:[%s7 + $0x684] sm:$0xff]
  %v6753 = vld [vmem:[%s7 + $0x68c] sm:$0xf]
  %v6754 = vld [vmem:[%s7 + $0x690] sm:$0xff]
  %v6755 = vld [vmem:[%s7 + $0x698] sm:$0xff]
  %v6756 = vld [vmem:[%s7 + $0x6a0] sm:$0xff]
  %v6757 = vld [vmem:[%s7 + $0x6a8] sm:$0xf]
  %v6758 = vld [vmem:[%s7 + $0x6ac] sm:$0xff]
  %v6759 = vld [vmem:[%s7 + $0x6b4] sm:$0xff]
  %v6760 = vld [vmem:[%s7 + $0x6bc] sm:$0xff]
  %v6761 = vld [vmem:[%s7 + $0x6c4] sm:$0xf]
  %v6762 = vld [vmem:[%s7 + $0x6c8] sm:$0xff]
  %v6763 = vld [vmem:[%s7 + $0x6d0] sm:$0xff]
  %v6764 = vld [vmem:[%s7 + $0x6d8] sm:$0xff]
  %v6765 = vld [vmem:[%s7 + $0x6e0] sm:$0xf]
  %v6766 = vld [vmem:[%s7 + $0x6e4] sm:$0xff]
  %v6767 = vld [vmem:[%s7 + $0x6ec] sm:$0xff]
  %v6768 = vld [vmem:[%s7 + $0x6f4] sm:$0xff]
  %v6769 = vld [vmem:[%s7 + $0x6fc] sm:$0xf]
  %v6770 = vld [vmem:[%s7 + $0x700] sm:$0xff]
  %v6771 = vld [vmem:[%s7 + $0x708] sm:$0xff]
  %v6772 = vld [vmem:[%s7 + $0x710] sm:$0xff]
  %v6773 = vld [vmem:[%s7 + $0x718] sm:$0xf]
  %v6774 = vld [vmem:[%s7 + $0x71c] sm:$0xff]
  %v6775 = vld [vmem:[%s7 + $0x724] sm:$0xff]
  %v6776 = vld [vmem:[%s7 + $0x72c] sm:$0xff]
  %v6777 = vld [vmem:[%s7 + $0x734] sm:$0xf]
  %v6778 = vld [vmem:[%s7 + $0x738] sm:$0xff]
  %v6779 = vld [vmem:[%s7 + $0x740] sm:$0xff]
  %v6780 = vld [vmem:[%s7 + $0x748] sm:$0xff]
  %v6781 = vld [vmem:[%s7 + $0x750] sm:$0xf]
  %v6782 = vld [vmem:[%s7 + $0x754] sm:$0xff]
  %v6783 = vld [vmem:[%s7 + $0x75c] sm:$0xff]
  %v6784 = vld [vmem:[%s7 + $0x764] sm:$0xff]
  %v6785 = vld [vmem:[%s7 + $0x76c] sm:$0xf]
  %v6786 = vld [vmem:[%s7 + $0x770] sm:$0xff]
  %v6787 = vld [vmem:[%s7 + $0x778] sm:$0xff]
  %v6788 = vld [vmem:[%s7 + $0x780] sm:$0xff]
  %v6789 = vld [vmem:[%s7 + $0x788] sm:$0xf]
  %v6790 = vld [vmem:[%s7 + $0x78c] sm:$0xff]
  %v6791 = vld [vmem:[%s7 + $0x794] sm:$0xff]
  %v6792 = vld [vmem:[%s7 + $0x79c] sm:$0xff]
  %v6793 = vld [vmem:[%s7 + $0x7a4] sm:$0xf]
  %v6794 = vld [vmem:[%s7 + $0x7a8] sm:$0xff]
  %v6795 = vld [vmem:[%s7 + $0x7b0] sm:$0xff]
  %v6796 = vld [vmem:[%s7 + $0x7b8] sm:$0xff]
  %v6797 = vld [vmem:[%s7 + $0x7c0] sm:$0xf]
  %v6798 = vld [vmem:[%s7 + $0x7c4] sm:$0xff]
  %v6799 = vld [vmem:[%s7 + $0x7cc] sm:$0xff]
  %v6800 = vld [vmem:[%s7 + $0x7d4] sm:$0xff]
  %v6801 = vld [vmem:[%s7 + $0x7dc] sm:$0xf]
  %v6802 = vld [vmem:[%s7 + $0x7e0] sm:$0xff]
  %v6803 = vld [vmem:[%s7 + $0x7e8] sm:$0xff]
  %v6804 = vld [vmem:[%s7 + $0x7f0] sm:$0xff]
  %v6805 = vld [vmem:[%s7 + $0x7f8] sm:$0xf]
  %v6806 = vld [vmem:[%s7 + $0x7fc] sm:$0xff]
  %v6807 = vld [vmem:[%s7 + $0x804] sm:$0xff]
  %v6808 = vld [vmem:[%s7 + $0x80c] sm:$0xff]
  %v6809 = vld [vmem:[%s7 + $0x814] sm:$0xf]
  %v6810 = vld [vmem:[%s7 + $0x818] sm:$0xff]
  %v6811 = vld [vmem:[%s7 + $0x820] sm:$0xff]
  %v6812 = vld [vmem:[%s7 + $0x828] sm:$0xff]
  %v6813 = vld [vmem:[%s7 + $0x830] sm:$0xf]
  %v6814 = vld [vmem:[%s7 + $0x834] sm:$0xff]
  %v6815 = vld [vmem:[%s7 + $0x83c] sm:$0xff]
  %v6816 = vld [vmem:[%s7 + $0x844] sm:$0xff]
  %v6817 = vld [vmem:[%s7 + $0x84c] sm:$0xf]
  %v6818 = vld [vmem:[%s7 + $0x850] sm:$0xff]
  %v6819 = vld [vmem:[%s7 + $0x858] sm:$0xff]
  %v6820 = vld [vmem:[%s7 + $0x860] sm:$0xff]
  %v6821 = vld [vmem:[%s7 + $0x868] sm:$0xf]
  %v6822 = vld [vmem:[%s7 + $0x86c] sm:$0xff]
  %v6823 = vld [vmem:[%s7 + $0x874] sm:$0xff]
  %v6824 = vld [vmem:[%s7 + $0x87c] sm:$0xff]
  %v6825 = vld [vmem:[%s7 + $0x884] sm:$0xf]
  %v6826 = vld [vmem:[%s7 + $0x888] sm:$0xff]
  %v6827 = vld [vmem:[%s7 + $0x890] sm:$0xff]
  %v6828 = vld [vmem:[%s7 + $0x898] sm:$0xff]
  %v6829 = vld [vmem:[%s7 + $0x8a0] sm:$0xf]
  %v6830 = vld [vmem:[%s7 + $0x8a4] sm:$0xff]
  %v6831 = vld [vmem:[%s7 + $0x8ac] sm:$0xff]
  %v6832 = vld [vmem:[%s7 + $0x8b4] sm:$0xff]
  %v6833 = vld [vmem:[%s7 + $0x8bc] sm:$0xf]
  %v6834 = vld [vmem:[%s7 + $0x8c0] sm:$0xff]
  %v6835 = vld [vmem:[%s7 + $0x8c8] sm:$0xff]
  %v6836 = vld [vmem:[%s7 + $0x8d0] sm:$0xff]
  %v6837 = vld [vmem:[%s7 + $0x8d8] sm:$0xf]
  %v6838 = vld [vmem:[%s7 + $0x8dc] sm:$0xff]
  %v6839 = vld [vmem:[%s7 + $0x8e4] sm:$0xff]
  %v6840 = vld [vmem:[%s7 + $0x8ec] sm:$0xff]
  %v6841 = vld [vmem:[%s7 + $0x8f4] sm:$0xf]
  %v6842 = vld [vmem:[%s7 + $0x8f8] sm:$0xff]
  %v6843 = vld [vmem:[%s7 + $0x900] sm:$0xff]
  %v6844 = vld [vmem:[%s7 + $0x908] sm:$0xff]
  %v6845 = vld [vmem:[%s7 + $0x910] sm:$0xf]
  %v6846 = vld [vmem:[%s7 + $0x914] sm:$0xff]
  %v6847 = vld [vmem:[%s7 + $0x91c] sm:$0xff]
  %v6848 = vld [vmem:[%s7 + $0x924] sm:$0xff]
  %v6849 = vld [vmem:[%s7 + $0x92c] sm:$0xf]
  %v6850 = vld [vmem:[%s7 + $0x930] sm:$0xff]
  %v6851 = vld [vmem:[%s7 + $0x938] sm:$0xff]
  %v6852 = vld [vmem:[%s7 + $0x940] sm:$0xff]
  %v6853 = vld [vmem:[%s7 + $0x948] sm:$0xf]
  %v6854 = vld [vmem:[%s7 + $0x94c] sm:$0xff]
  %v6855 = vld [vmem:[%s7 + $0x954] sm:$0xff]
  %v6856 = vld [vmem:[%s7 + $0x95c] sm:$0xff]
  %v6857 = vld [vmem:[%s7 + $0x964] sm:$0xf]
  %v6858 = vld [vmem:[%s7 + $0x968] sm:$0xff]
  %v6859 = vld [vmem:[%s7 + $0x970] sm:$0xff]
  %v6860 = vld [vmem:[%s7 + $0x978] sm:$0xff]
  %v6861 = vld [vmem:[%s7 + $0x980] sm:$0xf]
  %v6862 = vld [vmem:[%s7 + $0x984] sm:$0xff]
  %v6863 = vld [vmem:[%s7 + $0x98c] sm:$0xff]
  %v6864 = vld [vmem:[%s7 + $0x994] sm:$0xff]
  %v6865 = vld [vmem:[%s7 + $0x99c] sm:$0xf]
  %v6866 = vld [vmem:[%s7 + $0x9a0] sm:$0xff]
  %v6867 = vld [vmem:[%s7 + $0x9a8] sm:$0xff]
  %v6868 = vld [vmem:[%s7 + $0x9b0] sm:$0xff]
  %v6869 = vld [vmem:[%s7 + $0x9b8] sm:$0xf]
  %v6870 = vld [vmem:[%s7 + $0x9bc] sm:$0xff]
  %v6871 = vld [vmem:[%s7 + $0x9c4] sm:$0xff]
  %v6872 = vld [vmem:[%s7 + $0x9cc] sm:$0xff]
  %v6873 = vld [vmem:[%s7 + $0x9d4] sm:$0xf]
  %v6874 = vld [vmem:[%s7 + $0x9d8] sm:$0xff]
  %v6875 = vld [vmem:[%s7 + $0x9e0] sm:$0xff]
  %v6876 = vld [vmem:[%s7 + $0x9e8] sm:$0xff]
  %v6877 = vld [vmem:[%s7 + $0x9f0] sm:$0xf]
  %v6878 = vld [vmem:[%s7 + $0x9f4] sm:$0xff]
  %v6879 = vld [vmem:[%s7 + $0x9fc] sm:$0xff]
  %v6880 = vld [vmem:[%s7 + $0xa04] sm:$0xff]
  %v6881 = vld [vmem:[%s7 + $0xa0c] sm:$0xf]
  %v6882 = vld [vmem:[%s7 + $0xa10] sm:$0xff]
  %v6883 = vld [vmem:[%s7 + $0xa18] sm:$0xff]
  %v6884 = vld [vmem:[%s7 + $0xa20] sm:$0xff]
  %v6885 = vld [vmem:[%s7 + $0xa28] sm:$0xf]
  %v6886 = vld [vmem:[%s7 + $0xa2c] sm:$0xff]
  %v6887 = vld [vmem:[%s7 + $0xa34] sm:$0xff]
  %v6888 = vld [vmem:[%s7 + $0xa3c] sm:$0xff]
  %v6889 = vld [vmem:[%s7 + $0xa44] sm:$0xf]
  %v6890 = vld [vmem:[%s7 + $0xa48] sm:$0xff]
  %v6891 = vld [vmem:[%s7 + $0xa50] sm:$0xff]
  %v6892 = vld [vmem:[%s7 + $0xa58] sm:$0xff]
  %v6893 = vld [vmem:[%s7 + $0xa60] sm:$0xf]
  %v6894 = vld [vmem:[%s7 + $0xa64] sm:$0xff]
  %v6895 = vld [vmem:[%s7 + $0xa6c] sm:$0xff]
  %v6896 = vld [vmem:[%s7 + $0xa74] sm:$0xff]
  %v6897 = vld [vmem:[%s7 + $0xa7c] sm:$0xf]
  %v6898 = vld [vmem:[%s7 + $0xa80] sm:$0xff]
  %v6899 = vld [vmem:[%s7 + $0xa88] sm:$0xff]
  %v6900 = vld [vmem:[%s7 + $0xa90] sm:$0xff]
  %v6901 = vld [vmem:[%s7 + $0xa98] sm:$0xf]
  %v6902 = vld [vmem:[%s7 + $0xa9c] sm:$0xff]
  %v6903 = vld [vmem:[%s7 + $0xaa4] sm:$0xff]
  %v6904 = vld [vmem:[%s7 + $0xaac] sm:$0xff]
  %v6905 = vld [vmem:[%s7 + $0xab4] sm:$0xf]
  %v6906 = vld [vmem:[%s7 + $0xab8] sm:$0xff]
  %v6907 = vld [vmem:[%s7 + $0xac0] sm:$0xff]
  %v6908 = vld [vmem:[%s7 + $0xac8] sm:$0xff]
  %v6909 = vld [vmem:[%s7 + $0xad0] sm:$0xf]
  %v6910 = vld [vmem:[%s7 + $0xad4] sm:$0xff]
  %v6911 = vld [vmem:[%s7 + $0xadc] sm:$0xff]
  %v6912 = vld [vmem:[%s7 + $0xae4] sm:$0xff]
  %v6913 = vld [vmem:[%s7 + $0xaec] sm:$0xf]
  %v6914 = vld [vmem:[%s7 + $0xaf0] sm:$0xff]
  %v6915 = vld [vmem:[%s7 + $0xaf8] sm:$0xff]
  %v6916 = vld [vmem:[%s7 + $0xb00] sm:$0xff]
  %v6917 = vld [vmem:[%s7 + $0xb08] sm:$0xf]
  %v6918 = vld [vmem:[%s7 + $0xb0c] sm:$0xff]
  %v6919 = vld [vmem:[%s7 + $0xb14] sm:$0xff]
  %v6920 = vld [vmem:[%s7 + $0xb1c] sm:$0xff]
  %v6921 = vld [vmem:[%s7 + $0xb24] sm:$0xf]
  %v6922 = vld [vmem:[%s7 + $0xb28] sm:$0xff]
  %v6923 = vld [vmem:[%s7 + $0xb30] sm:$0xff]
  %v6924 = vld [vmem:[%s7 + $0xb38] sm:$0xff]
  %v6925 = vld [vmem:[%s7 + $0xb40] sm:$0xf]
  %v6926 = vld [vmem:[%s7 + $0xb44] sm:$0xff]
  %v6927 = vld [vmem:[%s7 + $0xb4c] sm:$0xff]
  %v6928 = vld [vmem:[%s7 + $0xb54] sm:$0xff]
  %v6929 = vld [vmem:[%s7 + $0xb5c] sm:$0xf]
  %v6930 = vld [vmem:[%s7 + $0xb60] sm:$0xff]
  %v6931 = vld [vmem:[%s7 + $0xb68] sm:$0xff]
  %v6932 = vld [vmem:[%s7 + $0xb70] sm:$0xff]
  %v6933 = vld [vmem:[%s7 + $0xb78] sm:$0xf]
  %v6934 = vld [vmem:[%s7 + $0xb7c] sm:$0xff]
  %v6935 = vld [vmem:[%s7 + $0xb84] sm:$0xff]
  %v6936 = vld [vmem:[%s7 + $0xb8c] sm:$0xff]
  %v6937 = vld [vmem:[%s7 + $0xb94] sm:$0xf]
  %v6938 = vld [vmem:[%s7 + $0xb98] sm:$0xff]
  %v6939 = vld [vmem:[%s7 + $0xba0] sm:$0xff]
  %v6940 = vld [vmem:[%s7 + $0xba8] sm:$0xff]
  %v6941 = vld [vmem:[%s7 + $0xbb0] sm:$0xf]
  %v6942 = vld [vmem:[%s7 + $0xbb4] sm:$0xff]
  %v6943 = vld [vmem:[%s7 + $0xbbc] sm:$0xff]
  %v6944 = vld [vmem:[%s7 + $0xbc4] sm:$0xff]
  %v6945 = vld [vmem:[%s7 + $0xbcc] sm:$0xf]
  %v6946 = vld [vmem:[%s7 + $0xbd0] sm:$0xff]
  %v6947 = vld [vmem:[%s7 + $0xbd8] sm:$0xff]
  %v6948 = vld [vmem:[%s7 + $0xbe0] sm:$0xff]
  %v6949 = vld [vmem:[%s7 + $0xbe8] sm:$0xf]
  %v6950 = vld [vmem:[%s7 + $0xbec] sm:$0xff]
  %v6951 = vld [vmem:[%s7 + $0xbf4] sm:$0xff]
  %v6952 = vld [vmem:[%s7 + $0xbfc] sm:$0xff]
  %v6953 = vld [vmem:[%s7 + $0xc04] sm:$0xf]
  %v6954 = vld [vmem:[%s7 + $0xc08] sm:$0xff]
  %v6955 = vld [vmem:[%s7 + $0xc10] sm:$0xff]
  %v6956 = vld [vmem:[%s7 + $0xc18] sm:$0xff]
  %v6957 = vld [vmem:[%s7 + $0xc20] sm:$0xf]
  %v6958 = vld [vmem:[%s7 + $0xc24] sm:$0xff]
  %v6959 = vld [vmem:[%s7 + $0xc2c] sm:$0xff]
  %v6960 = vld [vmem:[%s7 + $0xc34] sm:$0xff]
  %v6961 = vld [vmem:[%s7 + $0xc3c] sm:$0xf]
  %v6962 = vld [vmem:[%s7 + $0xc40] sm:$0xff]
  %v6963 = vld [vmem:[%s7 + $0xc48] sm:$0xff]
  %v6964 = vld [vmem:[%s7 + $0xc50] sm:$0xff]
  %v6965 = vld [vmem:[%s7 + $0xc58] sm:$0xf]
  %v6966 = vld [vmem:[%s7 + $0xc5c] sm:$0xff]
  %v6967 = vld [vmem:[%s7 + $0xc64] sm:$0xff]
  %v6968 = vld [vmem:[%s7 + $0xc6c] sm:$0xff]
  %v6969 = vld [vmem:[%s7 + $0xc74] sm:$0xf]
  %v6970 = vld [vmem:[%s7 + $0xc78] sm:$0xff]
  %v6971 = vld [vmem:[%s7 + $0xc80] sm:$0xff]
  %v6972 = vld [vmem:[%s7 + $0xc88] sm:$0xff]
  %v6973 = vld [vmem:[%s7 + $0xc90] sm:$0xf]
  %v6974 = vld [vmem:[%s7 + $0xc94] sm:$0xff]
  %v6975 = vld [vmem:[%s7 + $0xc9c] sm:$0xff]
  %v6976 = vld [vmem:[%s7 + $0xca4] sm:$0xff]
  %v6977 = vld [vmem:[%s7 + $0xcac] sm:$0xf]
  %v6978 = vld [vmem:[%s7 + $0xcb0] sm:$0xff]
  %v6979 = vld [vmem:[%s7 + $0xcb8] sm:$0xff]
  %v6980 = vld [vmem:[%s7 + $0xcc0] sm:$0xff]
  %v6981 = vld [vmem:[%s7 + $0xcc8] sm:$0xf]
  %v6982 = vld [vmem:[%s7 + $0xccc] sm:$0xff]
  %v6983 = vld [vmem:[%s7 + $0xcd4] sm:$0xff]
  %v6984 = vld [vmem:[%s7 + $0xcdc] sm:$0xff]
  %v6985 = vld [vmem:[%s7 + $0xce4] sm:$0xf]
  %v6986 = vld [vmem:[%s7 + $0xce8] sm:$0xff]
  %v6987 = vld [vmem:[%s7 + $0xcf0] sm:$0xff]
  %v6988 = vld [vmem:[%s7 + $0xcf8] sm:$0xff]
  %v6989 = vld [vmem:[%s7 + $0xd00] sm:$0xf]
  %v6990 = vld [vmem:[%s7 + $0xd04] sm:$0xff]
  %v6991 = vld [vmem:[%s7 + $0xd0c] sm:$0xff]
  %v6992 = vld [vmem:[%s7 + $0xd14] sm:$0xff]
  %v6993 = vld [vmem:[%s7 + $0xd1c] sm:$0xf]
  %v6994 = vld [vmem:[%s7 + $0xd20] sm:$0xff]
  %v6995 = vld [vmem:[%s7 + $0xd28] sm:$0xff]
  %v6996 = vld [vmem:[%s7 + $0xd30] sm:$0xff]
  %v6997 = vld [vmem:[%s7 + $0xd38] sm:$0xf]
  %v6998 = vld [vmem:[%s7 + $0xd3c] sm:$0xff]
  %v6999 = vld [vmem:[%s7 + $0xd44] sm:$0xff]
  %v7000 = vld [vmem:[%s7 + $0xd4c] sm:$0xff]
  %v7001 = vld [vmem:[%s7 + $0xd54] sm:$0xf]
  %v7002 = vld [vmem:[%s7 + $0xd58] sm:$0xff]
  %v7003 = vld [vmem:[%s7 + $0xd60] sm:$0xff]
  %v7004 = vld [vmem:[%s7 + $0xd68] sm:$0xff]
  %v7005 = vld [vmem:[%s7 + $0xd70] sm:$0xf]
  %v7006 = vld [vmem:[%s7 + $0xd74] sm:$0xff]
  %v7007 = vld [vmem:[%s7 + $0xd7c] sm:$0xff]
  %v7008 = vld [vmem:[%s7 + $0xd84] sm:$0xff]
  %v7009 = vld [vmem:[%s7 + $0xd8c] sm:$0xf]
  %v7010 = vld [vmem:[%s7 + $0xd90] sm:$0xff]
  %v7011 = vld [vmem:[%s7 + $0xd98] sm:$0xff]
  %v7012 = vld [vmem:[%s7 + $0xda0] sm:$0xff]
  %v7013 = vld [vmem:[%s7 + $0xda8] sm:$0xf]
  %v7014 = vld [vmem:[%s7 + $0xdac] sm:$0xff]
  %v7015 = vld [vmem:[%s7 + $0xdb4] sm:$0xff]
  %v7016 = vld [vmem:[%s7 + $0xdbc] sm:$0xff]
  %v7017 = vld [vmem:[%s7 + $0xdc4] sm:$0xf]
  %v7018 = vld [vmem:[%s7 + $0xdc8] sm:$0xff]
  %v7019 = vld [vmem:[%s7 + $0xdd0] sm:$0xff]
  %v7020 = vld [vmem:[%s7 + $0xdd8] sm:$0xff]
  %v7021 = vld [vmem:[%s7 + $0xde0] sm:$0xf]
  %v7022 = vld [vmem:[%s7 + $0xde4] sm:$0xff]
  %v7023 = vld [vmem:[%s7 + $0xdec] sm:$0xff]
  %v7024 = vld [vmem:[%s7 + $0xdf4] sm:$0xff]
  %v7025 = vld [vmem:[%s7 + $0xdfc] sm:$0xf]
  %v7026 = vld [vmem:[%s7 + $0xe00] sm:$0xff]
  %v7027 = vld [vmem:[%s7 + $0xe08] sm:$0xff]
  %v7028 = vld [vmem:[%s7 + $0xe10] sm:$0xff]
  %v7029 = vld [vmem:[%s7 + $0xe18] sm:$0xf]
  %v7030 = vld [vmem:[%s7 + $0xe1c] sm:$0xff]
  %v7031 = vld [vmem:[%s7 + $0xe24] sm:$0xff]
  %v7032 = vld [vmem:[%s7 + $0xe2c] sm:$0xff]
  %v7033 = vld [vmem:[%s7 + $0xe34] sm:$0xf]
  %v7034 = vld [vmem:[%s7 + $0xe38] sm:$0xff]
  %v7035 = vld [vmem:[%s7 + $0xe40] sm:$0xff]
  %v7036 = vld [vmem:[%s7 + $0xe48] sm:$0xff]
  %v7037 = vld [vmem:[%s7 + $0xe50] sm:$0xf]
  %v7038 = vld [vmem:[%s7 + $0xe54] sm:$0xff]
  %v7039 = vld [vmem:[%s7 + $0xe5c] sm:$0xff]
  %v7040 = vld [vmem:[%s7 + $0xe64] sm:$0xff]
  %v7041 = vld [vmem:[%s7 + $0xe6c] sm:$0xf]
  %v7042 = vld [vmem:[%s7 + $0xe70] sm:$0xff]
  %v7043 = vld [vmem:[%s7 + $0xe78] sm:$0xff]
  %v7044 = vld [vmem:[%s7 + $0xe80] sm:$0xff]
  %v7045 = vld [vmem:[%s7 + $0xe88] sm:$0xf]
  %v7046 = vld [vmem:[%s7 + $0xe8c] sm:$0xff]
  %v7047 = vld [vmem:[%s7 + $0xe94] sm:$0xff]
  %v7048 = vld [vmem:[%s7 + $0xe9c] sm:$0xff]
  %v7049 = vld [vmem:[%s7 + $0xea4] sm:$0xf]
  %v7050 = vld [vmem:[%s7 + $0xea8] sm:$0xff]
  %v7051 = vld [vmem:[%s7 + $0xeb0] sm:$0xff]
  %v7052 = vld [vmem:[%s7 + $0xeb8] sm:$0xff]
  %v7053 = vld [vmem:[%s7 + $0xec0] sm:$0xf]
  %v7054 = vld [vmem:[%s7 + $0xec4] sm:$0xff]
  %v7055 = vld [vmem:[%s7 + $0xecc] sm:$0xff]
  %v7056 = vld [vmem:[%s7 + $0xed4] sm:$0xff]
  %v7057 = vld [vmem:[%s7 + $0xedc] sm:$0xf]
  %v7058 = vld [vmem:[%s7 + $0xee0] sm:$0xff]
  %v7059 = vld [vmem:[%s7 + $0xee8] sm:$0xff]
  %v7060 = vld [vmem:[%s7 + $0xef0] sm:$0xff]
  %v7061 = vld [vmem:[%s7 + $0xef8] sm:$0xf]
  %v7062 = vld [vmem:[%s7 + $0xefc] sm:$0xff]
  %v7063 = vld [vmem:[%s7 + $0xf04] sm:$0xff]
  %v7064 = vld [vmem:[%s7 + $0xf0c] sm:$0xff]
  %v7065 = vld [vmem:[%s7 + $0xf14] sm:$0xf]
  %v7066 = vld [vmem:[%s7 + $0xf18] sm:$0xff]
  %v7067 = vld [vmem:[%s7 + $0xf20] sm:$0xff]
  %v7068 = vld [vmem:[%s7 + $0xf28] sm:$0xff]
  %v7069 = vld [vmem:[%s7 + $0xf30] sm:$0xf]
  %v7070 = vld [vmem:[%s7 + $0xf34] sm:$0xff]
  %v7071 = vld [vmem:[%s7 + $0xf3c] sm:$0xff]
  %v7072 = vld [vmem:[%s7 + $0xf44] sm:$0xff]
  %v7073 = vld [vmem:[%s7 + $0xf4c] sm:$0xf]
  %v7074 = vld [vmem:[%s7 + $0xf50] sm:$0xff]
  %v7075 = vld [vmem:[%s7 + $0xf58] sm:$0xff]
  %v7076 = vld [vmem:[%s7 + $0xf60] sm:$0xff]
  %v7077 = vld [vmem:[%s7 + $0xf68] sm:$0xf]
  %v7078 = vld [vmem:[%s7 + $0xf6c] sm:$0xff]
  %v7079 = vld [vmem:[%s7 + $0xf74] sm:$0xff]
  %v7080 = vld [vmem:[%s7 + $0xf7c] sm:$0xff]
  %v7081 = vld [vmem:[%s7 + $0xf84] sm:$0xf]
  %v7082 = vld [vmem:[%s7 + $0xf88] sm:$0xff]
  %v7083 = vld [vmem:[%s7 + $0xf90] sm:$0xff]
  %v7084 = vld [vmem:[%s7 + $0xf98] sm:$0xff]
  %v7085 = vld [vmem:[%s7 + $0xfa0] sm:$0xf]
  %v7086 = vld [vmem:[%s7 + $0xfa4] sm:$0xff]
  %v7087 = vld [vmem:[%s7 + $0xfac] sm:$0xff]
  %v7088 = vld [vmem:[%s7 + $0xfb4] sm:$0xff]
  %v7089 = vld [vmem:[%s7 + $0xfbc] sm:$0xf]
  %v7090 = vld [vmem:[%s7 + $0xfc0] sm:$0xff]
  %v7091 = vld [vmem:[%s7 + $0xfc8] sm:$0xff]
  %v7092 = vld [vmem:[%s7 + $0xfd0] sm:$0xff]
  %v7093 = vld [vmem:[%s7 + $0xfd8] sm:$0xf]
  %v7094 = vld [vmem:[%s7 + $0xfdc] sm:$0xff]
  %v7095 = vld [vmem:[%s7 + $0xfe4] sm:$0xff]
  %v7096 = vld [vmem:[%s7 + $0xfec] sm:$0xff]
  %v7097 = vld [vmem:[%s7 + $0xff4] sm:$0xf]
  %v7098 = vld [vmem:[%s7 + $0xff8] sm:$0xff]
  %v7099 = vld [vmem:[%s7 + $0x1000] sm:$0xff]
  %v7100 = vld [vmem:[%s7 + $0x1008] sm:$0xff]
  %v7101 = vld [vmem:[%s7 + $0x1010] sm:$0xf]
  %v7102 = vld [vmem:[%s7 + $0x1014] sm:$0xff]
  %v7103 = vld [vmem:[%s7 + $0x101c] sm:$0xff]
  %v7104 = vld [vmem:[%s7 + $0x1024] sm:$0xff]
  %v7105 = vld [vmem:[%s7 + $0x102c] sm:$0xf]
  %v7106 = vld [vmem:[%s7 + $0x1030] sm:$0xff]
  %v7107 = vld [vmem:[%s7 + $0x1038] sm:$0xff]
  %v7108 = vld [vmem:[%s7 + $0x1040] sm:$0xff]
  %v7109 = vld [vmem:[%s7 + $0x1048] sm:$0xf]
  %v7110 = vld [vmem:[%s7 + $0x104c] sm:$0xff]
  %v7111 = vld [vmem:[%s7 + $0x1054] sm:$0xff]
  %v7112 = vld [vmem:[%s7 + $0x105c] sm:$0xff]
  %v7113 = vld [vmem:[%s7 + $0x1064] sm:$0xf]
  %v7114 = vld [vmem:[%s7 + $0x1068] sm:$0xff]
  %v7115 = vld [vmem:[%s7 + $0x1070] sm:$0xff]
  %v7116 = vld [vmem:[%s7 + $0x1078] sm:$0xff]
  %v7117 = vld [vmem:[%s7 + $0x1080] sm:$0xf]
  %v7118 = vld [vmem:[%s7 + $0x1084] sm:$0xff]
  %v7119 = vld [vmem:[%s7 + $0x108c] sm:$0xff]
  %v7120 = vld [vmem:[%s7 + $0x1094] sm:$0xff]
  %v7121 = vld [vmem:[%s7 + $0x109c] sm:$0xf]
  %v7122 = vld [vmem:[%s7 + $0x10a0] sm:$0xff]
  %v7123 = vld [vmem:[%s7 + $0x10a8] sm:$0xff]
  %v7124 = vld [vmem:[%s7 + $0x10b0] sm:$0xff]
  %v7125 = vld [vmem:[%s7 + $0x10b8] sm:$0xf]
  %v7126 = vld [vmem:[%s7 + $0x10bc] sm:$0xff]
  %v7127 = vld [vmem:[%s7 + $0x10c4] sm:$0xff]
  %v7128 = vld [vmem:[%s7 + $0x10cc] sm:$0xff]
  %v7129 = vld [vmem:[%s7 + $0x10d4] sm:$0xf]
  %v7130 = vld [vmem:[%s7 + $0x10d8] sm:$0xff]
  %v7131 = vld [vmem:[%s7 + $0x10e0] sm:$0xff]
  %v7132 = vld [vmem:[%s7 + $0x10e8] sm:$0xff]
  %v7133 = vld [vmem:[%s7 + $0x10f0] sm:$0xf]
  %v7134 = vld [vmem:[%s7 + $0x10f4] sm:$0xff]
  %v7135 = vld [vmem:[%s7 + $0x10fc] sm:$0xff]
  %v7136 = vld [vmem:[%s7 + $0x1104] sm:$0xff]
  %v7137 = vld [vmem:[%s7 + $0x110c] sm:$0xf]
  %v7138 = vld [vmem:[%s7 + $0x1110] sm:$0xff]
  %v7139 = vld [vmem:[%s7 + $0x1118] sm:$0xff]
  %v7140 = vld [vmem:[%s7 + $0x1120] sm:$0xff]
  %v7141 = vld [vmem:[%s7 + $0x1128] sm:$0xf]
  %v7142 = vld [vmem:[%s7 + $0x112c] sm:$0xff]
  %v7143 = vld [vmem:[%s7 + $0x1134] sm:$0xff]
  %v7144 = vld [vmem:[%s7 + $0x113c] sm:$0xff]
  %v7145 = vld [vmem:[%s7 + $0x1144] sm:$0xf]
  %v7146 = vld [vmem:[%s7 + $0x1148] sm:$0xff]
  %v7147 = vld [vmem:[%s7 + $0x1150] sm:$0xff]
  %v7148 = vld [vmem:[%s7 + $0x1158] sm:$0xff]
  %v7149 = vld [vmem:[%s7 + $0x1160] sm:$0xf]
  %v7150 = vld [vmem:[%s7 + $0x1164] sm:$0xff]
  %v7151 = vld [vmem:[%s7 + $0x116c] sm:$0xff]
  %v7152 = vld [vmem:[%s7 + $0x1174] sm:$0xff]
  %v7153 = vld [vmem:[%s7 + $0x117c] sm:$0xf]
  %v7154 = vld [vmem:[%s7 + $0x1180] sm:$0xff]
  %v7155 = vld [vmem:[%s7 + $0x1188] sm:$0xff]
  %v7156 = vld [vmem:[%s7 + $0x1190] sm:$0xff]
  %v7157 = vld [vmem:[%s7 + $0x1198] sm:$0xf]
  %v7158 = vld [vmem:[%s7 + $0x119c] sm:$0xff]
  %v7159 = vld [vmem:[%s7 + $0x11a4] sm:$0xff]
  %v7160 = vld [vmem:[%s7 + $0x11ac] sm:$0xff]
  %v7161 = vld [vmem:[%s7 + $0x11b4] sm:$0xf]
  %v7162 = vld [vmem:[%s7 + $0x11b8] sm:$0xff]
  %v7163 = vld [vmem:[%s7 + $0x11c0] sm:$0xff]
  %v7164 = vld [vmem:[%s7 + $0x11c8] sm:$0xff]
  %v7165 = vld [vmem:[%s7 + $0x11d0] sm:$0xf]
  %v7166 = vld [vmem:[%s7 + $0x11d4] sm:$0xff]
  %v7167 = vld [vmem:[%s7 + $0x11dc] sm:$0xff]
  %v7168 = vld [vmem:[%s7 + $0x11e4] sm:$0xff]
  %v7169 = vld [vmem:[%s7 + $0x11ec] sm:$0xf]
  %v7170 = vld [vmem:[%s7 + $0x11f0] sm:$0xff]
  %v7171 = vld [vmem:[%s7 + $0x11f8] sm:$0xff]
  %v7172 = vld [vmem:[%s7 + $0x1200] sm:$0xff]
  %v7173 = vld [vmem:[%s7 + $0x1208] sm:$0xf]
  %v7174 = vld [vmem:[%s7 + $0x120c] sm:$0xff]
  %v7175 = vld [vmem:[%s7 + $0x1214] sm:$0xff]
  %v7176 = vld [vmem:[%s7 + $0x121c] sm:$0xff]
  %v7177 = vld [vmem:[%s7 + $0x1224] sm:$0xf]
  %v7178 = vld [vmem:[%s7 + $0x1228] sm:$0xff]
  %v7179 = vld [vmem:[%s7 + $0x1230] sm:$0xff]
  %v7180 = vld [vmem:[%s7 + $0x1238] sm:$0xff]
  %v7181 = vld [vmem:[%s7 + $0x1240] sm:$0xf]
  %v7182 = vld [vmem:[%s7 + $0x1244] sm:$0xff]
  %v7183 = vld [vmem:[%s7 + $0x124c] sm:$0xff]
  %v7184 = vld [vmem:[%s7 + $0x1254] sm:$0xff]
  %v7185 = vld [vmem:[%s7 + $0x125c] sm:$0xf]
  %v7186 = vld [vmem:[%s7 + $0x1260] sm:$0xff]
  %v7187 = vld [vmem:[%s7 + $0x1268] sm:$0xff]
  %v7188 = vld [vmem:[%s7 + $0x1270] sm:$0xff]
  %v7189 = vld [vmem:[%s7 + $0x1278] sm:$0xf]
  %v7190 = vld [vmem:[%s7 + $0x127c] sm:$0xff]
  %v7191 = vld [vmem:[%s7 + $0x1284] sm:$0xff]
  %v7192 = vld [vmem:[%s7 + $0x128c] sm:$0xff]
  %v7193 = vld [vmem:[%s7 + $0x1294] sm:$0xf]
  %v7194 = vld [vmem:[%s7 + $0x1298] sm:$0xff]
  %v7195 = vld [vmem:[%s7 + $0x12a0] sm:$0xff]
  %v7196 = vld [vmem:[%s7 + $0x12a8] sm:$0xff]
  %v7197 = vld [vmem:[%s7 + $0x12b0] sm:$0xf]
  %v7198 = vld [vmem:[%s7 + $0x12b4] sm:$0xff]
  %v7199 = vld [vmem:[%s7 + $0x12bc] sm:$0xff]
  %v7200 = vld [vmem:[%s7 + $0x12c4] sm:$0xff]
  %v7201 = vld [vmem:[%s7 + $0x12cc] sm:$0xf]
  %v7202 = vld [vmem:[%s7 + $0x12d0] sm:$0xff]
  %v7203 = vld [vmem:[%s7 + $0x12d8] sm:$0xff]
  %v7204 = vld [vmem:[%s7 + $0x12e0] sm:$0xff]
  %v7205 = vld [vmem:[%s7 + $0x12e8] sm:$0xf]
  %v7206 = vld [vmem:[%s7 + $0x12ec] sm:$0xff]
  %v7207 = vld [vmem:[%s7 + $0x12f4] sm:$0xff]
  %v7208 = vld [vmem:[%s7 + $0x12fc] sm:$0xff]
  %v7209 = vld [vmem:[%s7 + $0x1304] sm:$0xf]
  %v7210 = vld [vmem:[%s7 + $0x1308] sm:$0xff]
  %v7211 = vld [vmem:[%s7 + $0x1310] sm:$0xff]
  %v7212 = vld [vmem:[%s7 + $0x1318] sm:$0xff]
  %v7213 = vld [vmem:[%s7 + $0x1320] sm:$0xf]
  %v7214 = vld [vmem:[%s7 + $0x1324] sm:$0xff]
  %v7215 = vld [vmem:[%s7 + $0x132c] sm:$0xff]
  %v7216 = vld [vmem:[%s7 + $0x1334] sm:$0xff]
  %v7217 = vld [vmem:[%s7 + $0x133c] sm:$0xf]
  %v7218 = vld [vmem:[%s7 + $0x1340] sm:$0xff]
  %v7219 = vld [vmem:[%s7 + $0x1348] sm:$0xff]
  %v7220 = vld [vmem:[%s7 + $0x1350] sm:$0xff]
  %v7221 = vld [vmem:[%s7 + $0x1358] sm:$0xf]
  %v7222 = vld [vmem:[%s7 + $0x135c] sm:$0xff]
  %v7223 = vld [vmem:[%s7 + $0x1364] sm:$0xff]
  %v7224 = vld [vmem:[%s7 + $0x136c] sm:$0xff]
  %v7225 = vld [vmem:[%s7 + $0x1374] sm:$0xf]
  %v7226 = vld [vmem:[%s7 + $0x1378] sm:$0xff]
  %v7227 = vld [vmem:[%s7 + $0x1380] sm:$0xff]
  %v7228 = vld [vmem:[%s7 + $0x1388] sm:$0xff]
  %v7229 = vld [vmem:[%s7 + $0x1390] sm:$0xf]
  %v7230 = vld [vmem:[%s7 + $0x1394] sm:$0xff]
  %v7231 = vld [vmem:[%s7 + $0x139c] sm:$0xff]
  %v7232 = vld [vmem:[%s7 + $0x13a4] sm:$0xff]
  %v7233 = vld [vmem:[%s7 + $0x13ac] sm:$0xf]
  %v7234 = vld [vmem:[%s7 + $0x13b0] sm:$0xff]
  %v7235 = vld [vmem:[%s7 + $0x13b8] sm:$0xff]
  %v7236 = vld [vmem:[%s7 + $0x13c0] sm:$0xff]
  %v7237 = vld [vmem:[%s7 + $0x13c8] sm:$0xf]
  %v7238 = vld [vmem:[%s7 + $0x13cc] sm:$0xff]
  %v7239 = vld [vmem:[%s7 + $0x13d4] sm:$0xff]
  %v7240 = vld [vmem:[%s7 + $0x13dc] sm:$0xff]
  %v7241 = vld [vmem:[%s7 + $0x13e4] sm:$0xf]
  %v7242 = vld [vmem:[%s7 + $0x13e8] sm:$0xff]
  %v7243 = vld [vmem:[%s7 + $0x13f0] sm:$0xff]
  %v7244 = vld [vmem:[%s7 + $0x13f8] sm:$0xff]
  %v7245 = vld [vmem:[%s7 + $0x1400] sm:$0xf]
  %v7246 = vld [vmem:[%s7 + $0x1404] sm:$0xff]
  %v7247 = vld [vmem:[%s7 + $0x140c] sm:$0xff]
  %v7248 = vld [vmem:[%s7 + $0x1414] sm:$0xff]
  %v7249 = vld [vmem:[%s7 + $0x141c] sm:$0xf]
  %v7250 = vld [vmem:[%s7 + $0x1420] sm:$0xff]
  %v7251 = vld [vmem:[%s7 + $0x1428] sm:$0xff]
  %v7252 = vld [vmem:[%s7 + $0x1430] sm:$0xff]
  %v7253 = vld [vmem:[%s7 + $0x1438] sm:$0xf]
  %v7254 = vld [vmem:[%s7 + $0x143c] sm:$0xff]
  %v7255 = vld [vmem:[%s7 + $0x1444] sm:$0xff]
  %v7256 = vld [vmem:[%s7 + $0x144c] sm:$0xff]
  %v7257 = vld [vmem:[%s7 + $0x1454] sm:$0xf]
  %v7258 = vld [vmem:[%s7 + $0x1458] sm:$0xff]
  %v7259 = vld [vmem:[%s7 + $0x1460] sm:$0xff]
  %v7260 = vld [vmem:[%s7 + $0x1468] sm:$0xff]
  %v7261 = vld [vmem:[%s7 + $0x1470] sm:$0xf]
  %v7262 = vld [vmem:[%s7 + $0x1474] sm:$0xff]
  %v7263 = vld [vmem:[%s7 + $0x147c] sm:$0xff]
  %v7264 = vld [vmem:[%s7 + $0x1484] sm:$0xff]
  %v7265 = vld [vmem:[%s7 + $0x148c] sm:$0xf]
  %v7266 = vld [vmem:[%s7 + $0x1490] sm:$0xff]
  %v7267 = vld [vmem:[%s7 + $0x1498] sm:$0xff]
  %v7268 = vld [vmem:[%s7 + $0x14a0] sm:$0xff]
  %v7269 = vld [vmem:[%s7 + $0x14a8] sm:$0xf]
  %v7270 = vld [vmem:[%s7 + $0x14ac] sm:$0xff]
  %v7271 = vld [vmem:[%s7 + $0x14b4] sm:$0xff]
  %v7272 = vld [vmem:[%s7 + $0x14bc] sm:$0xff]
  %v7273 = vld [vmem:[%s7 + $0x14c4] sm:$0xf]
  %v7274 = vld [vmem:[%s7 + $0x14c8] sm:$0xff]
  %v7275 = vld [vmem:[%s7 + $0x14d0] sm:$0xff]
  %v7276 = vld [vmem:[%s7 + $0x14d8] sm:$0xff]
  %v7277 = vld [vmem:[%s7 + $0x14e0] sm:$0xf]
  %v7278 = vld [vmem:[%s7 + $0x14e4] sm:$0xff]
  %v7279 = vld [vmem:[%s7 + $0x14ec] sm:$0xff]
  %v7280 = vld [vmem:[%s7 + $0x14f4] sm:$0xff]
  %v7281 = vld [vmem:[%s7 + $0x14fc] sm:$0xf]
  %v7282 = vld [vmem:[%s7 + $0x1500] sm:$0xff]
  %v7283 = vld [vmem:[%s7 + $0x1508] sm:$0xff]
  %v7284 = vld [vmem:[%s7 + $0x1510] sm:$0xff]
  %v7285 = vld [vmem:[%s7 + $0x1518] sm:$0xf]
  %v7286 = vld [vmem:[%s7 + $0x151c] sm:$0xff]
  %v7287 = vld [vmem:[%s7 + $0x1524] sm:$0xff]
  %v7288 = vld [vmem:[%s7 + $0x152c] sm:$0xff]
  %v7289 = vld [vmem:[%s7 + $0x1534] sm:$0xf]
  %v7290 = vld [vmem:[%s7 + $0x1538] sm:$0xff]
  %v7291 = vld [vmem:[%s7 + $0x1540] sm:$0xff]
  %v7292 = vld [vmem:[%s7 + $0x1548] sm:$0xff]
  %v7293 = vld [vmem:[%s7 + $0x1550] sm:$0xf]
  %v7294 = vld [vmem:[%s7 + $0x1554] sm:$0xff]
  %v7295 = vld [vmem:[%s7 + $0x155c] sm:$0xff]
  %v7296 = vld [vmem:[%s7 + $0x1564] sm:$0xff]
  %v7297 = vld [vmem:[%s7 + $0x156c] sm:$0xf]
  %v7298 = vld [vmem:[%s8] sm:$0x7f]
  %v7300 = vlaneseq
  %v7301 = vshrl.u32 %v7300, 7
  %v7302 = vsub.s32 0, %v7301
  %v7303 = vrot.slane %v7298, %v7302
  %v7304 = vlaneseq
  %v7305 = vshrl.u32 %v7304, 7
  %v7306 = vsub.s32 1, %v7305
  %v7307 = vrot.slane %v7298, %v7306
  %v7308 = vlaneseq
  %v7309 = vshrl.u32 %v7308, 7
  %v7310 = vsub.s32 2, %v7309
  %v7311 = vrot.slane %v7298, %v7310
  %v7312 = vlaneseq
  %v7313 = vshrl.u32 %v7312, 7
  %v7314 = vsub.s32 3, %v7313
  %v7315 = vrot.slane %v7298, %v7314
  %v7316 = vlaneseq
  %v7317 = vshrl.u32 %v7316, 7
  %v7318 = vsub.s32 4, %v7317
  %v7319 = vrot.slane %v7298, %v7318
  %v7320 = vlaneseq
  %v7321 = vshrl.u32 %v7320, 7
  %v7322 = vsub.s32 5, %v7321
  %v7323 = vrot.slane %v7298, %v7322
  %v7324 = vlaneseq
  %v7325 = vshrl.u32 %v7324, 7
  %v7326 = vsub.s32 6, %v7325
  %v7327 = vrot.slane %v7298, %v7326
  %v8119 = vunpack.c.l.b16 %v6514
  %v8120 = vunpack.c.h.b16 %v6514
  %v8121 = vunpack.c.l.b16 %v6515
  %v8122 = vunpack.c.h.b16 %v6515
  %v8123 = vunpack.c.l.b16 %v6516
  %v8124 = vunpack.c.h.b16 %v6516
  %v8125 = vunpack.c.l.b16 %v6517
  %v8126 = vunpack.c.l.b16 %v6518
  %v8127 = vunpack.c.h.b16 %v6518
  %v8128 = vunpack.c.l.b16 %v6519
  %v8129 = vunpack.c.h.b16 %v6519
  %v8130 = vunpack.c.l.b16 %v6520
  %v8131 = vunpack.c.h.b16 %v6520
  %v8132 = vunpack.c.l.b16 %v6521
  %v8133 = vunpack.c.l.b16 %v6522
  %v8134 = vunpack.c.h.b16 %v6522
  %v8135 = vunpack.c.l.b16 %v6523
  %v8136 = vunpack.c.h.b16 %v6523
  %v8137 = vunpack.c.l.b16 %v6524
  %v8138 = vunpack.c.h.b16 %v6524
  %v8139 = vunpack.c.l.b16 %v6525
  %v8140 = vunpack.c.l.b16 %v6526
  %v8141 = vunpack.c.h.b16 %v6526
  %v8142 = vunpack.c.l.b16 %v6527
  %v8143 = vunpack.c.h.b16 %v6527
  %v8144 = vunpack.c.l.b16 %v6528
  %v8145 = vunpack.c.h.b16 %v6528
  %v8146 = vunpack.c.l.b16 %v6529
  %v8147 = vunpack.c.l.b16 %v6530
  %v8148 = vunpack.c.h.b16 %v6530
  %v8149 = vunpack.c.l.b16 %v6531
  %v8150 = vunpack.c.h.b16 %v6531
  %v8151 = vunpack.c.l.b16 %v6532
  %v8152 = vunpack.c.h.b16 %v6532
  %v8153 = vunpack.c.l.b16 %v6533
  %v8154 = vunpack.c.l.b16 %v6534
  %v8155 = vunpack.c.h.b16 %v6534
  %v8156 = vunpack.c.l.b16 %v6535
  %v8157 = vunpack.c.h.b16 %v6535
  %v8158 = vunpack.c.l.b16 %v6536
  %v8159 = vunpack.c.h.b16 %v6536
  %v8160 = vunpack.c.l.b16 %v6537
  %v8161 = vunpack.c.l.b16 %v6538
  %v8162 = vunpack.c.h.b16 %v6538
  %v8163 = vunpack.c.l.b16 %v6539
  %v8164 = vunpack.c.h.b16 %v6539
  %v8165 = vunpack.c.l.b16 %v6540
  %v8166 = vunpack.c.h.b16 %v6540
  %v8167 = vunpack.c.l.b16 %v6541
  %v8168 = vunpack.c.l.b16 %v6542
  %v8169 = vunpack.c.h.b16 %v6542
  %v8170 = vunpack.c.l.b16 %v6543
  %v8171 = vunpack.c.h.b16 %v6543
  %v8172 = vunpack.c.l.b16 %v6544
  %v8173 = vunpack.c.h.b16 %v6544
  %v8174 = vunpack.c.l.b16 %v6545
  %v8175 = vunpack.c.l.b16 %v6546
  %v8176 = vunpack.c.h.b16 %v6546
  %v8177 = vunpack.c.l.b16 %v6547
  %v8178 = vunpack.c.h.b16 %v6547
  %v8179 = vunpack.c.l.b16 %v6548
  %v8180 = vunpack.c.h.b16 %v6548
  %v8181 = vunpack.c.l.b16 %v6549
  %v8182 = vunpack.c.l.b16 %v6550
  %v8183 = vunpack.c.h.b16 %v6550
  %v8184 = vunpack.c.l.b16 %v6551
  %v8185 = vunpack.c.h.b16 %v6551
  %v8186 = vunpack.c.l.b16 %v6552
  %v8187 = vunpack.c.h.b16 %v6552
  %v8188 = vunpack.c.l.b16 %v6553
  %v8189 = vunpack.c.l.b16 %v6554
  %v8190 = vunpack.c.h.b16 %v6554
  %v8191 = vunpack.c.l.b16 %v6555
  %v8192 = vunpack.c.h.b16 %v6555
  %v8193 = vunpack.c.l.b16 %v6556
  %v8194 = vunpack.c.h.b16 %v6556
  %v8195 = vunpack.c.l.b16 %v6557
  %v8196 = vunpack.c.l.b16 %v6558
  %v8197 = vunpack.c.h.b16 %v6558
  %v8198 = vunpack.c.l.b16 %v6559
  %v8199 = vunpack.c.h.b16 %v6559
  %v8200 = vunpack.c.l.b16 %v6560
  %v8201 = vunpack.c.h.b16 %v6560
  %v8202 = vunpack.c.l.b16 %v6561
  %v8203 = vunpack.c.l.b16 %v6562
  %v8204 = vunpack.c.h.b16 %v6562
  %v8205 = vunpack.c.l.b16 %v6563
  %v8206 = vunpack.c.h.b16 %v6563
  %v8207 = vunpack.c.l.b16 %v6564
  %v8208 = vunpack.c.h.b16 %v6564
  %v8209 = vunpack.c.l.b16 %v6565
  %v8210 = vunpack.c.l.b16 %v6566
  %v8211 = vunpack.c.h.b16 %v6566
  %v8212 = vunpack.c.l.b16 %v6567
  %v8213 = vunpack.c.h.b16 %v6567
  %v8214 = vunpack.c.l.b16 %v6568
  %v8215 = vunpack.c.h.b16 %v6568
  %v8216 = vunpack.c.l.b16 %v6569
  %v8217 = vunpack.c.l.b16 %v6570
  %v8218 = vunpack.c.h.b16 %v6570
  %v8219 = vunpack.c.l.b16 %v6571
  %v8220 = vunpack.c.h.b16 %v6571
  %v8221 = vunpack.c.l.b16 %v6572
  %v8222 = vunpack.c.h.b16 %v6572
  %v8223 = vunpack.c.l.b16 %v6573
  %v8224 = vunpack.c.l.b16 %v6574
  %v8225 = vunpack.c.h.b16 %v6574
  %v8226 = vunpack.c.l.b16 %v6575
  %v8227 = vunpack.c.h.b16 %v6575
  %v8228 = vunpack.c.l.b16 %v6576
  %v8229 = vunpack.c.h.b16 %v6576
  %v8230 = vunpack.c.l.b16 %v6577
  %v8231 = vunpack.c.l.b16 %v6578
  %v8232 = vunpack.c.h.b16 %v6578
  %v8233 = vunpack.c.l.b16 %v6579
  %v8234 = vunpack.c.h.b16 %v6579
  %v8235 = vunpack.c.l.b16 %v6580
  %v8236 = vunpack.c.h.b16 %v6580
  %v8237 = vunpack.c.l.b16 %v6581
  %v8238 = vunpack.c.l.b16 %v6582
  %v8239 = vunpack.c.h.b16 %v6582
  %v8240 = vunpack.c.l.b16 %v6583
  %v8241 = vunpack.c.h.b16 %v6583
  %v8242 = vunpack.c.l.b16 %v6584
  %v8243 = vunpack.c.h.b16 %v6584
  %v8244 = vunpack.c.l.b16 %v6585
  %v8245 = vunpack.c.l.b16 %v6586
  %v8246 = vunpack.c.h.b16 %v6586
  %v8247 = vunpack.c.l.b16 %v6587
  %v8248 = vunpack.c.h.b16 %v6587
  %v8249 = vunpack.c.l.b16 %v6588
  %v8250 = vunpack.c.h.b16 %v6588
  %v8251 = vunpack.c.l.b16 %v6589
  %v8252 = vunpack.c.l.b16 %v6590
  %v8253 = vunpack.c.h.b16 %v6590
  %v8254 = vunpack.c.l.b16 %v6591
  %v8255 = vunpack.c.h.b16 %v6591
  %v8256 = vunpack.c.l.b16 %v6592
  %v8257 = vunpack.c.h.b16 %v6592
  %v8258 = vunpack.c.l.b16 %v6593
  %v8259 = vunpack.c.l.b16 %v6594
  %v8260 = vunpack.c.h.b16 %v6594
  %v8261 = vunpack.c.l.b16 %v6595
  %v8262 = vunpack.c.h.b16 %v6595
  %v8263 = vunpack.c.l.b16 %v6596
  %v8264 = vunpack.c.h.b16 %v6596
  %v8265 = vunpack.c.l.b16 %v6597
  %v8266 = vunpack.c.l.b16 %v6598
  %v8267 = vunpack.c.h.b16 %v6598
  %v8268 = vunpack.c.l.b16 %v6599
  %v8269 = vunpack.c.h.b16 %v6599
  %v8270 = vunpack.c.l.b16 %v6600
  %v8271 = vunpack.c.h.b16 %v6600
  %v8272 = vunpack.c.l.b16 %v6601
  %v8273 = vunpack.c.l.b16 %v6602
  %v8274 = vunpack.c.h.b16 %v6602
  %v8275 = vunpack.c.l.b16 %v6603
  %v8276 = vunpack.c.h.b16 %v6603
  %v8277 = vunpack.c.l.b16 %v6604
  %v8278 = vunpack.c.h.b16 %v6604
  %v8279 = vunpack.c.l.b16 %v6605
  %v8280 = vunpack.c.l.b16 %v6606
  %v8281 = vunpack.c.h.b16 %v6606
  %v8282 = vunpack.c.l.b16 %v6607
  %v8283 = vunpack.c.h.b16 %v6607
  %v8284 = vunpack.c.l.b16 %v6608
  %v8285 = vunpack.c.h.b16 %v6608
  %v8286 = vunpack.c.l.b16 %v6609
  %v8287 = vunpack.c.l.b16 %v6610
  %v8288 = vunpack.c.h.b16 %v6610
  %v8289 = vunpack.c.l.b16 %v6611
  %v8290 = vunpack.c.h.b16 %v6611
  %v8291 = vunpack.c.l.b16 %v6612
  %v8292 = vunpack.c.h.b16 %v6612
  %v8293 = vunpack.c.l.b16 %v6613
  %v8294 = vunpack.c.l.b16 %v6614
  %v8295 = vunpack.c.h.b16 %v6614
  %v8296 = vunpack.c.l.b16 %v6615
  %v8297 = vunpack.c.h.b16 %v6615
  %v8298 = vunpack.c.l.b16 %v6616
  %v8299 = vunpack.c.h.b16 %v6616
  %v8300 = vunpack.c.l.b16 %v6617
  %v8301 = vunpack.c.l.b16 %v6618
  %v8302 = vunpack.c.h.b16 %v6618
  %v8303 = vunpack.c.l.b16 %v6619
  %v8304 = vunpack.c.h.b16 %v6619
  %v8305 = vunpack.c.l.b16 %v6620
  %v8306 = vunpack.c.h.b16 %v6620
  %v8307 = vunpack.c.l.b16 %v6621
  %v8308 = vunpack.c.l.b16 %v6622
  %v8309 = vunpack.c.h.b16 %v6622
  %v8310 = vunpack.c.l.b16 %v6623
  %v8311 = vunpack.c.h.b16 %v6623
  %v8312 = vunpack.c.l.b16 %v6624
  %v8313 = vunpack.c.h.b16 %v6624
  %v8314 = vunpack.c.l.b16 %v6625
  %v8315 = vunpack.c.l.b16 %v6626
  %v8316 = vunpack.c.h.b16 %v6626
  %v8317 = vunpack.c.l.b16 %v6627
  %v8318 = vunpack.c.h.b16 %v6627
  %v8319 = vunpack.c.l.b16 %v6628
  %v8320 = vunpack.c.h.b16 %v6628
  %v8321 = vunpack.c.l.b16 %v6629
  %v8322 = vunpack.c.l.b16 %v6630
  %v8323 = vunpack.c.h.b16 %v6630
  %v8324 = vunpack.c.l.b16 %v6631
  %v8325 = vunpack.c.h.b16 %v6631
  %v8326 = vunpack.c.l.b16 %v6632
  %v8327 = vunpack.c.h.b16 %v6632
  %v8328 = vunpack.c.l.b16 %v6633
  %v8329 = vunpack.c.l.b16 %v6634
  %v8330 = vunpack.c.h.b16 %v6634
  %v8331 = vunpack.c.l.b16 %v6635
  %v8332 = vunpack.c.h.b16 %v6635
  %v8333 = vunpack.c.l.b16 %v6636
  %v8334 = vunpack.c.h.b16 %v6636
  %v8335 = vunpack.c.l.b16 %v6637
  %v8336 = vunpack.c.l.b16 %v6638
  %v8337 = vunpack.c.h.b16 %v6638
  %v8338 = vunpack.c.l.b16 %v6639
  %v8339 = vunpack.c.h.b16 %v6639
  %v8340 = vunpack.c.l.b16 %v6640
  %v8341 = vunpack.c.h.b16 %v6640
  %v8342 = vunpack.c.l.b16 %v6641
  %v8343 = vunpack.c.l.b16 %v6642
  %v8344 = vunpack.c.h.b16 %v6642
  %v8345 = vunpack.c.l.b16 %v6643
  %v8346 = vunpack.c.h.b16 %v6643
  %v8347 = vunpack.c.l.b16 %v6644
  %v8348 = vunpack.c.h.b16 %v6644
  %v8349 = vunpack.c.l.b16 %v6645
  %v8350 = vunpack.c.l.b16 %v6646
  %v8351 = vunpack.c.h.b16 %v6646
  %v8352 = vunpack.c.l.b16 %v6647
  %v8353 = vunpack.c.h.b16 %v6647
  %v8354 = vunpack.c.l.b16 %v6648
  %v8355 = vunpack.c.h.b16 %v6648
  %v8356 = vunpack.c.l.b16 %v6649
  %v8357 = vunpack.c.l.b16 %v6650
  %v8358 = vunpack.c.h.b16 %v6650
  %v8359 = vunpack.c.l.b16 %v6651
  %v8360 = vunpack.c.h.b16 %v6651
  %v8361 = vunpack.c.l.b16 %v6652
  %v8362 = vunpack.c.h.b16 %v6652
  %v8363 = vunpack.c.l.b16 %v6653
  %v8364 = vunpack.c.l.b16 %v6654
  %v8365 = vunpack.c.h.b16 %v6654
  %v8366 = vunpack.c.l.b16 %v6655
  %v8367 = vunpack.c.h.b16 %v6655
  %v8368 = vunpack.c.l.b16 %v6656
  %v8369 = vunpack.c.h.b16 %v6656
  %v8370 = vunpack.c.l.b16 %v6657
  %v8371 = vunpack.c.l.b16 %v6658
  %v8372 = vunpack.c.h.b16 %v6658
  %v8373 = vunpack.c.l.b16 %v6659
  %v8374 = vunpack.c.h.b16 %v6659
  %v8375 = vunpack.c.l.b16 %v6660
  %v8376 = vunpack.c.h.b16 %v6660
  %v8377 = vunpack.c.l.b16 %v6661
  %v8378 = vunpack.c.l.b16 %v6662
  %v8379 = vunpack.c.h.b16 %v6662
  %v8380 = vunpack.c.l.b16 %v6663
  %v8381 = vunpack.c.h.b16 %v6663
  %v8382 = vunpack.c.l.b16 %v6664
  %v8383 = vunpack.c.h.b16 %v6664
  %v8384 = vunpack.c.l.b16 %v6665
  %v8385 = vunpack.c.l.b16 %v6666
  %v8386 = vunpack.c.h.b16 %v6666
  %v8387 = vunpack.c.l.b16 %v6667
  %v8388 = vunpack.c.h.b16 %v6667
  %v8389 = vunpack.c.l.b16 %v6668
  %v8390 = vunpack.c.h.b16 %v6668
  %v8391 = vunpack.c.l.b16 %v6669
  %v8392 = vunpack.c.l.b16 %v6670
  %v8393 = vunpack.c.h.b16 %v6670
  %v8394 = vunpack.c.l.b16 %v6671
  %v8395 = vunpack.c.h.b16 %v6671
  %v8396 = vunpack.c.l.b16 %v6672
  %v8397 = vunpack.c.h.b16 %v6672
  %v8398 = vunpack.c.l.b16 %v6673
  %v8399 = vunpack.c.l.b16 %v6674
  %v8400 = vunpack.c.h.b16 %v6674
  %v8401 = vunpack.c.l.b16 %v6675
  %v8402 = vunpack.c.h.b16 %v6675
  %v8403 = vunpack.c.l.b16 %v6676
  %v8404 = vunpack.c.h.b16 %v6676
  %v8405 = vunpack.c.l.b16 %v6677
  %v8406 = vunpack.c.l.b16 %v6678
  %v8407 = vunpack.c.h.b16 %v6678
  %v8408 = vunpack.c.l.b16 %v6679
  %v8409 = vunpack.c.h.b16 %v6679
  %v8410 = vunpack.c.l.b16 %v6680
  %v8411 = vunpack.c.h.b16 %v6680
  %v8412 = vunpack.c.l.b16 %v6681
  %v8413 = vunpack.c.l.b16 %v6682
  %v8414 = vunpack.c.h.b16 %v6682
  %v8415 = vunpack.c.l.b16 %v6683
  %v8416 = vunpack.c.h.b16 %v6683
  %v8417 = vunpack.c.l.b16 %v6684
  %v8418 = vunpack.c.h.b16 %v6684
  %v8419 = vunpack.c.l.b16 %v6685
  %v8420 = vunpack.c.l.b16 %v6686
  %v8421 = vunpack.c.h.b16 %v6686
  %v8422 = vunpack.c.l.b16 %v6687
  %v8423 = vunpack.c.h.b16 %v6687
  %v8424 = vunpack.c.l.b16 %v6688
  %v8425 = vunpack.c.h.b16 %v6688
  %v8426 = vunpack.c.l.b16 %v6689
  %v8427 = vunpack.c.l.b16 %v6690
  %v8428 = vunpack.c.h.b16 %v6690
  %v8429 = vunpack.c.l.b16 %v6691
  %v8430 = vunpack.c.h.b16 %v6691
  %v8431 = vunpack.c.l.b16 %v6692
  %v8432 = vunpack.c.h.b16 %v6692
  %v8433 = vunpack.c.l.b16 %v6693
  %v8434 = vunpack.c.l.b16 %v6694
  %v8435 = vunpack.c.h.b16 %v6694
  %v8436 = vunpack.c.l.b16 %v6695
  %v8437 = vunpack.c.h.b16 %v6695
  %v8438 = vunpack.c.l.b16 %v6696
  %v8439 = vunpack.c.h.b16 %v6696
  %v8440 = vunpack.c.l.b16 %v6697
  %v8441 = vunpack.c.l.b16 %v6698
  %v8442 = vunpack.c.h.b16 %v6698
  %v8443 = vunpack.c.l.b16 %v6699
  %v8444 = vunpack.c.h.b16 %v6699
  %v8445 = vunpack.c.l.b16 %v6700
  %v8446 = vunpack.c.h.b16 %v6700
  %v8447 = vunpack.c.l.b16 %v6701
  %v8448 = vunpack.c.l.b16 %v6702
  %v8449 = vunpack.c.h.b16 %v6702
  %v8450 = vunpack.c.l.b16 %v6703
  %v8451 = vunpack.c.h.b16 %v6703
  %v8452 = vunpack.c.l.b16 %v6704
  %v8453 = vunpack.c.h.b16 %v6704
  %v8454 = vunpack.c.l.b16 %v6705
  %v8455 = vunpack.c.l.b16 %v6706
  %v8456 = vunpack.c.h.b16 %v6706
  %v8457 = vunpack.c.l.b16 %v6707
  %v8458 = vunpack.c.h.b16 %v6707
  %v8459 = vunpack.c.l.b16 %v6708
  %v8460 = vunpack.c.h.b16 %v6708
  %v8461 = vunpack.c.l.b16 %v6709
  %v8462 = vunpack.c.l.b16 %v6710
  %v8463 = vunpack.c.h.b16 %v6710
  %v8464 = vunpack.c.l.b16 %v6711
  %v8465 = vunpack.c.h.b16 %v6711
  %v8466 = vunpack.c.l.b16 %v6712
  %v8467 = vunpack.c.h.b16 %v6712
  %v8468 = vunpack.c.l.b16 %v6713
  %v8469 = vunpack.c.l.b16 %v6714
  %v8470 = vunpack.c.h.b16 %v6714
  %v8471 = vunpack.c.l.b16 %v6715
  %v8472 = vunpack.c.h.b16 %v6715
  %v8473 = vunpack.c.l.b16 %v6716
  %v8474 = vunpack.c.h.b16 %v6716
  %v8475 = vunpack.c.l.b16 %v6717
  %v8476 = vunpack.c.l.b16 %v6718
  %v8477 = vunpack.c.h.b16 %v6718
  %v8478 = vunpack.c.l.b16 %v6719
  %v8479 = vunpack.c.h.b16 %v6719
  %v8480 = vunpack.c.l.b16 %v6720
  %v8481 = vunpack.c.h.b16 %v6720
  %v8482 = vunpack.c.l.b16 %v6721
  %v8483 = vunpack.c.l.b16 %v6722
  %v8484 = vunpack.c.h.b16 %v6722
  %v8485 = vunpack.c.l.b16 %v6723
  %v8486 = vunpack.c.h.b16 %v6723
  %v8487 = vunpack.c.l.b16 %v6724
  %v8488 = vunpack.c.h.b16 %v6724
  %v8489 = vunpack.c.l.b16 %v6725
  %v8490 = vunpack.c.l.b16 %v6726
  %v8491 = vunpack.c.h.b16 %v6726
  %v8492 = vunpack.c.l.b16 %v6727
  %v8493 = vunpack.c.h.b16 %v6727
  %v8494 = vunpack.c.l.b16 %v6728
  %v8495 = vunpack.c.h.b16 %v6728
  %v8496 = vunpack.c.l.b16 %v6729
  %v8497 = vunpack.c.l.b16 %v6730
  %v8498 = vunpack.c.h.b16 %v6730
  %v8499 = vunpack.c.l.b16 %v6731
  %v8500 = vunpack.c.h.b16 %v6731
  %v8501 = vunpack.c.l.b16 %v6732
  %v8502 = vunpack.c.h.b16 %v6732
  %v8503 = vunpack.c.l.b16 %v6733
  %v8504 = vunpack.c.l.b16 %v6734
  %v8505 = vunpack.c.h.b16 %v6734
  %v8506 = vunpack.c.l.b16 %v6735
  %v8507 = vunpack.c.h.b16 %v6735
  %v8508 = vunpack.c.l.b16 %v6736
  %v8509 = vunpack.c.h.b16 %v6736
  %v8510 = vunpack.c.l.b16 %v6737
  %v8511 = vunpack.c.l.b16 %v6738
  %v8512 = vunpack.c.h.b16 %v6738
  %v8513 = vunpack.c.l.b16 %v6739
  %v8514 = vunpack.c.h.b16 %v6739
  %v8515 = vunpack.c.l.b16 %v6740
  %v8516 = vunpack.c.h.b16 %v6740
  %v8517 = vunpack.c.l.b16 %v6741
  %v8518 = vunpack.c.l.b16 %v6742
  %v8519 = vunpack.c.h.b16 %v6742
  %v8520 = vunpack.c.l.b16 %v6743
  %v8521 = vunpack.c.h.b16 %v6743
  %v8522 = vunpack.c.l.b16 %v6744
  %v8523 = vunpack.c.h.b16 %v6744
  %v8524 = vunpack.c.l.b16 %v6745
  %v8525 = vunpack.c.l.b16 %v6746
  %v8526 = vunpack.c.h.b16 %v6746
  %v8527 = vunpack.c.l.b16 %v6747
  %v8528 = vunpack.c.h.b16 %v6747
  %v8529 = vunpack.c.l.b16 %v6748
  %v8530 = vunpack.c.h.b16 %v6748
  %v8531 = vunpack.c.l.b16 %v6749
  %v8532 = vunpack.c.l.b16 %v6750
  %v8533 = vunpack.c.h.b16 %v6750
  %v8534 = vunpack.c.l.b16 %v6751
  %v8535 = vunpack.c.h.b16 %v6751
  %v8536 = vunpack.c.l.b16 %v6752
  %v8537 = vunpack.c.h.b16 %v6752
  %v8538 = vunpack.c.l.b16 %v6753
  %v8539 = vunpack.c.l.b16 %v6754
  %v8540 = vunpack.c.h.b16 %v6754
  %v8541 = vunpack.c.l.b16 %v6755
  %v8542 = vunpack.c.h.b16 %v6755
  %v8543 = vunpack.c.l.b16 %v6756
  %v8544 = vunpack.c.h.b16 %v6756
  %v8545 = vunpack.c.l.b16 %v6757
  %v8546 = vunpack.c.l.b16 %v6758
  %v8547 = vunpack.c.h.b16 %v6758
  %v8548 = vunpack.c.l.b16 %v6759
  %v8549 = vunpack.c.h.b16 %v6759
  %v8550 = vunpack.c.l.b16 %v6760
  %v8551 = vunpack.c.h.b16 %v6760
  %v8552 = vunpack.c.l.b16 %v6761
  %v8553 = vunpack.c.l.b16 %v6762
  %v8554 = vunpack.c.h.b16 %v6762
  %v8555 = vunpack.c.l.b16 %v6763
  %v8556 = vunpack.c.h.b16 %v6763
  %v8557 = vunpack.c.l.b16 %v6764
  %v8558 = vunpack.c.h.b16 %v6764
  %v8559 = vunpack.c.l.b16 %v6765
  %v8560 = vunpack.c.l.b16 %v6766
  %v8561 = vunpack.c.h.b16 %v6766
  %v8562 = vunpack.c.l.b16 %v6767
  %v8563 = vunpack.c.h.b16 %v6767
  %v8564 = vunpack.c.l.b16 %v6768
  %v8565 = vunpack.c.h.b16 %v6768
  %v8566 = vunpack.c.l.b16 %v6769
  %v8567 = vunpack.c.l.b16 %v6770
  %v8568 = vunpack.c.h.b16 %v6770
  %v8569 = vunpack.c.l.b16 %v6771
  %v8570 = vunpack.c.h.b16 %v6771
  %v8571 = vunpack.c.l.b16 %v6772
  %v8572 = vunpack.c.h.b16 %v6772
  %v8573 = vunpack.c.l.b16 %v6773
  %v8574 = vunpack.c.l.b16 %v6774
  %v8575 = vunpack.c.h.b16 %v6774
  %v8576 = vunpack.c.l.b16 %v6775
  %v8577 = vunpack.c.h.b16 %v6775
  %v8578 = vunpack.c.l.b16 %v6776
  %v8579 = vunpack.c.h.b16 %v6776
  %v8580 = vunpack.c.l.b16 %v6777
  %v8581 = vunpack.c.l.b16 %v6778
  %v8582 = vunpack.c.h.b16 %v6778
  %v8583 = vunpack.c.l.b16 %v6779
  %v8584 = vunpack.c.h.b16 %v6779
  %v8585 = vunpack.c.l.b16 %v6780
  %v8586 = vunpack.c.h.b16 %v6780
  %v8587 = vunpack.c.l.b16 %v6781
  %v8588 = vunpack.c.l.b16 %v6782
  %v8589 = vunpack.c.h.b16 %v6782
  %v8590 = vunpack.c.l.b16 %v6783
  %v8591 = vunpack.c.h.b16 %v6783
  %v8592 = vunpack.c.l.b16 %v6784
  %v8593 = vunpack.c.h.b16 %v6784
  %v8594 = vunpack.c.l.b16 %v6785
  %v8595 = vunpack.c.l.b16 %v6786
  %v8596 = vunpack.c.h.b16 %v6786
  %v8597 = vunpack.c.l.b16 %v6787
  %v8598 = vunpack.c.h.b16 %v6787
  %v8599 = vunpack.c.l.b16 %v6788
  %v8600 = vunpack.c.h.b16 %v6788
  %v8601 = vunpack.c.l.b16 %v6789
  %v8602 = vunpack.c.l.b16 %v6790
  %v8603 = vunpack.c.h.b16 %v6790
  %v8604 = vunpack.c.l.b16 %v6791
  %v8605 = vunpack.c.h.b16 %v6791
  %v8606 = vunpack.c.l.b16 %v6792
  %v8607 = vunpack.c.h.b16 %v6792
  %v8608 = vunpack.c.l.b16 %v6793
  %v8609 = vunpack.c.l.b16 %v6794
  %v8610 = vunpack.c.h.b16 %v6794
  %v8611 = vunpack.c.l.b16 %v6795
  %v8612 = vunpack.c.h.b16 %v6795
  %v8613 = vunpack.c.l.b16 %v6796
  %v8614 = vunpack.c.h.b16 %v6796
  %v8615 = vunpack.c.l.b16 %v6797
  %v8616 = vunpack.c.l.b16 %v6798
  %v8617 = vunpack.c.h.b16 %v6798
  %v8618 = vunpack.c.l.b16 %v6799
  %v8619 = vunpack.c.h.b16 %v6799
  %v8620 = vunpack.c.l.b16 %v6800
  %v8621 = vunpack.c.h.b16 %v6800
  %v8622 = vunpack.c.l.b16 %v6801
  %v8623 = vunpack.c.l.b16 %v6802
  %v8624 = vunpack.c.h.b16 %v6802
  %v8625 = vunpack.c.l.b16 %v6803
  %v8626 = vunpack.c.h.b16 %v6803
  %v8627 = vunpack.c.l.b16 %v6804
  %v8628 = vunpack.c.h.b16 %v6804
  %v8629 = vunpack.c.l.b16 %v6805
  %v8630 = vunpack.c.l.b16 %v6806
  %v8631 = vunpack.c.h.b16 %v6806
  %v8632 = vunpack.c.l.b16 %v6807
  %v8633 = vunpack.c.h.b16 %v6807
  %v8634 = vunpack.c.l.b16 %v6808
  %v8635 = vunpack.c.h.b16 %v6808
  %v8636 = vunpack.c.l.b16 %v6809
  %v8637 = vunpack.c.l.b16 %v6810
  %v8638 = vunpack.c.h.b16 %v6810
  %v8639 = vunpack.c.l.b16 %v6811
  %v8640 = vunpack.c.h.b16 %v6811
  %v8641 = vunpack.c.l.b16 %v6812
  %v8642 = vunpack.c.h.b16 %v6812
  %v8643 = vunpack.c.l.b16 %v6813
  %v8644 = vunpack.c.l.b16 %v6814
  %v8645 = vunpack.c.h.b16 %v6814
  %v8646 = vunpack.c.l.b16 %v6815
  %v8647 = vunpack.c.h.b16 %v6815
  %v8648 = vunpack.c.l.b16 %v6816
  %v8649 = vunpack.c.h.b16 %v6816
  %v8650 = vunpack.c.l.b16 %v6817
  %v8651 = vunpack.c.l.b16 %v6818
  %v8652 = vunpack.c.h.b16 %v6818
  %v8653 = vunpack.c.l.b16 %v6819
  %v8654 = vunpack.c.h.b16 %v6819
  %v8655 = vunpack.c.l.b16 %v6820
  %v8656 = vunpack.c.h.b16 %v6820
  %v8657 = vunpack.c.l.b16 %v6821
  %v8658 = vunpack.c.l.b16 %v6822
  %v8659 = vunpack.c.h.b16 %v6822
  %v8660 = vunpack.c.l.b16 %v6823
  %v8661 = vunpack.c.h.b16 %v6823
  %v8662 = vunpack.c.l.b16 %v6824
  %v8663 = vunpack.c.h.b16 %v6824
  %v8664 = vunpack.c.l.b16 %v6825
  %v8665 = vunpack.c.l.b16 %v6826
  %v8666 = vunpack.c.h.b16 %v6826
  %v8667 = vunpack.c.l.b16 %v6827
  %v8668 = vunpack.c.h.b16 %v6827
  %v8669 = vunpack.c.l.b16 %v6828
  %v8670 = vunpack.c.h.b16 %v6828
  %v8671 = vunpack.c.l.b16 %v6829
  %v8672 = vunpack.c.l.b16 %v6830
  %v8673 = vunpack.c.h.b16 %v6830
  %v8674 = vunpack.c.l.b16 %v6831
  %v8675 = vunpack.c.h.b16 %v6831
  %v8676 = vunpack.c.l.b16 %v6832
  %v8677 = vunpack.c.h.b16 %v6832
  %v8678 = vunpack.c.l.b16 %v6833
  %v8679 = vunpack.c.l.b16 %v6834
  %v8680 = vunpack.c.h.b16 %v6834
  %v8681 = vunpack.c.l.b16 %v6835
  %v8682 = vunpack.c.h.b16 %v6835
  %v8683 = vunpack.c.l.b16 %v6836
  %v8684 = vunpack.c.h.b16 %v6836
  %v8685 = vunpack.c.l.b16 %v6837
  %v8686 = vunpack.c.l.b16 %v6838
  %v8687 = vunpack.c.h.b16 %v6838
  %v8688 = vunpack.c.l.b16 %v6839
  %v8689 = vunpack.c.h.b16 %v6839
  %v8690 = vunpack.c.l.b16 %v6840
  %v8691 = vunpack.c.h.b16 %v6840
  %v8692 = vunpack.c.l.b16 %v6841
  %v8693 = vunpack.c.l.b16 %v6842
  %v8694 = vunpack.c.h.b16 %v6842
  %v8695 = vunpack.c.l.b16 %v6843
  %v8696 = vunpack.c.h.b16 %v6843
  %v8697 = vunpack.c.l.b16 %v6844
  %v8698 = vunpack.c.h.b16 %v6844
  %v8699 = vunpack.c.l.b16 %v6845
  %v8700 = vunpack.c.l.b16 %v6846
  %v8701 = vunpack.c.h.b16 %v6846
  %v8702 = vunpack.c.l.b16 %v6847
  %v8703 = vunpack.c.h.b16 %v6847
  %v8704 = vunpack.c.l.b16 %v6848
  %v8705 = vunpack.c.h.b16 %v6848
  %v8706 = vunpack.c.l.b16 %v6849
  %v8707 = vunpack.c.l.b16 %v6850
  %v8708 = vunpack.c.h.b16 %v6850
  %v8709 = vunpack.c.l.b16 %v6851
  %v8710 = vunpack.c.h.b16 %v6851
  %v8711 = vunpack.c.l.b16 %v6852
  %v8712 = vunpack.c.h.b16 %v6852
  %v8713 = vunpack.c.l.b16 %v6853
  %v8714 = vunpack.c.l.b16 %v6854
  %v8715 = vunpack.c.h.b16 %v6854
  %v8716 = vunpack.c.l.b16 %v6855
  %v8717 = vunpack.c.h.b16 %v6855
  %v8718 = vunpack.c.l.b16 %v6856
  %v8719 = vunpack.c.h.b16 %v6856
  %v8720 = vunpack.c.l.b16 %v6857
  %v8721 = vunpack.c.l.b16 %v6858
  %v8722 = vunpack.c.h.b16 %v6858
  %v8723 = vunpack.c.l.b16 %v6859
  %v8724 = vunpack.c.h.b16 %v6859
  %v8725 = vunpack.c.l.b16 %v6860
  %v8726 = vunpack.c.h.b16 %v6860
  %v8727 = vunpack.c.l.b16 %v6861
  %v8728 = vunpack.c.l.b16 %v6862
  %v8729 = vunpack.c.h.b16 %v6862
  %v8730 = vunpack.c.l.b16 %v6863
  %v8731 = vunpack.c.h.b16 %v6863
  %v8732 = vunpack.c.l.b16 %v6864
  %v8733 = vunpack.c.h.b16 %v6864
  %v8734 = vunpack.c.l.b16 %v6865
  %v8735 = vunpack.c.l.b16 %v6866
  %v8736 = vunpack.c.h.b16 %v6866
  %v8737 = vunpack.c.l.b16 %v6867
  %v8738 = vunpack.c.h.b16 %v6867
  %v8739 = vunpack.c.l.b16 %v6868
  %v8740 = vunpack.c.h.b16 %v6868
  %v8741 = vunpack.c.l.b16 %v6869
  %v8742 = vunpack.c.l.b16 %v6870
  %v8743 = vunpack.c.h.b16 %v6870
  %v8744 = vunpack.c.l.b16 %v6871
  %v8745 = vunpack.c.h.b16 %v6871
  %v8746 = vunpack.c.l.b16 %v6872
  %v8747 = vunpack.c.h.b16 %v6872
  %v8748 = vunpack.c.l.b16 %v6873
  %v8749 = vunpack.c.l.b16 %v6874
  %v8750 = vunpack.c.h.b16 %v6874
  %v8751 = vunpack.c.l.b16 %v6875
  %v8752 = vunpack.c.h.b16 %v6875
  %v8753 = vunpack.c.l.b16 %v6876
  %v8754 = vunpack.c.h.b16 %v6876
  %v8755 = vunpack.c.l.b16 %v6877
  %v8756 = vunpack.c.l.b16 %v6878
  %v8757 = vunpack.c.h.b16 %v6878
  %v8758 = vunpack.c.l.b16 %v6879
  %v8759 = vunpack.c.h.b16 %v6879
  %v8760 = vunpack.c.l.b16 %v6880
  %v8761 = vunpack.c.h.b16 %v6880
  %v8762 = vunpack.c.l.b16 %v6881
  %v8763 = vunpack.c.l.b16 %v6882
  %v8764 = vunpack.c.h.b16 %v6882
  %v8765 = vunpack.c.l.b16 %v6883
  %v8766 = vunpack.c.h.b16 %v6883
  %v8767 = vunpack.c.l.b16 %v6884
  %v8768 = vunpack.c.h.b16 %v6884
  %v8769 = vunpack.c.l.b16 %v6885
  %v8770 = vunpack.c.l.b16 %v6886
  %v8771 = vunpack.c.h.b16 %v6886
  %v8772 = vunpack.c.l.b16 %v6887
  %v8773 = vunpack.c.h.b16 %v6887
  %v8774 = vunpack.c.l.b16 %v6888
  %v8775 = vunpack.c.h.b16 %v6888
  %v8776 = vunpack.c.l.b16 %v6889
  %v8777 = vunpack.c.l.b16 %v6890
  %v8778 = vunpack.c.h.b16 %v6890
  %v8779 = vunpack.c.l.b16 %v6891
  %v8780 = vunpack.c.h.b16 %v6891
  %v8781 = vunpack.c.l.b16 %v6892
  %v8782 = vunpack.c.h.b16 %v6892
  %v8783 = vunpack.c.l.b16 %v6893
  %v8784 = vunpack.c.l.b16 %v6894
  %v8785 = vunpack.c.h.b16 %v6894
  %v8786 = vunpack.c.l.b16 %v6895
  %v8787 = vunpack.c.h.b16 %v6895
  %v8788 = vunpack.c.l.b16 %v6896
  %v8789 = vunpack.c.h.b16 %v6896
  %v8790 = vunpack.c.l.b16 %v6897
  %v8791 = vunpack.c.l.b16 %v6898
  %v8792 = vunpack.c.h.b16 %v6898
  %v8793 = vunpack.c.l.b16 %v6899
  %v8794 = vunpack.c.h.b16 %v6899
  %v8795 = vunpack.c.l.b16 %v6900
  %v8796 = vunpack.c.h.b16 %v6900
  %v8797 = vunpack.c.l.b16 %v6901
  %v8798 = vunpack.c.l.b16 %v6902
  %v8799 = vunpack.c.h.b16 %v6902
  %v8800 = vunpack.c.l.b16 %v6903
  %v8801 = vunpack.c.h.b16 %v6903
  %v8802 = vunpack.c.l.b16 %v6904
  %v8803 = vunpack.c.h.b16 %v6904
  %v8804 = vunpack.c.l.b16 %v6905
  %v8805 = vunpack.c.l.b16 %v6906
  %v8806 = vunpack.c.h.b16 %v6906
  %v8807 = vunpack.c.l.b16 %v6907
  %v8808 = vunpack.c.h.b16 %v6907
  %v8809 = vunpack.c.l.b16 %v6908
  %v8810 = vunpack.c.h.b16 %v6908
  %v8811 = vunpack.c.l.b16 %v6909
  %v8812 = vunpack.c.l.b16 %v6910
  %v8813 = vunpack.c.h.b16 %v6910
  %v8814 = vunpack.c.l.b16 %v6911
  %v8815 = vunpack.c.h.b16 %v6911
  %v8816 = vunpack.c.l.b16 %v6912
  %v8817 = vunpack.c.h.b16 %v6912
  %v8818 = vunpack.c.l.b16 %v6913
  %v8819 = vunpack.c.l.b16 %v6914
  %v8820 = vunpack.c.h.b16 %v6914
  %v8821 = vunpack.c.l.b16 %v6915
  %v8822 = vunpack.c.h.b16 %v6915
  %v8823 = vunpack.c.l.b16 %v6916
  %v8824 = vunpack.c.h.b16 %v6916
  %v8825 = vunpack.c.l.b16 %v6917
  %v8826 = vunpack.c.l.b16 %v6918
  %v8827 = vunpack.c.h.b16 %v6918
  %v8828 = vunpack.c.l.b16 %v6919
  %v8829 = vunpack.c.h.b16 %v6919
  %v8830 = vunpack.c.l.b16 %v6920
  %v8831 = vunpack.c.h.b16 %v6920
  %v8832 = vunpack.c.l.b16 %v6921
  %v8833 = vunpack.c.l.b16 %v6922
  %v8834 = vunpack.c.h.b16 %v6922
  %v8835 = vunpack.c.l.b16 %v6923
  %v8836 = vunpack.c.h.b16 %v6923
  %v8837 = vunpack.c.l.b16 %v6924
  %v8838 = vunpack.c.h.b16 %v6924
  %v8839 = vunpack.c.l.b16 %v6925
  %v8840 = vunpack.c.l.b16 %v6926
  %v8841 = vunpack.c.h.b16 %v6926
  %v8842 = vunpack.c.l.b16 %v6927
  %v8843 = vunpack.c.h.b16 %v6927
  %v8844 = vunpack.c.l.b16 %v6928
  %v8845 = vunpack.c.h.b16 %v6928
  %v8846 = vunpack.c.l.b16 %v6929
  %v8847 = vunpack.c.l.b16 %v6930
  %v8848 = vunpack.c.h.b16 %v6930
  %v8849 = vunpack.c.l.b16 %v6931
  %v8850 = vunpack.c.h.b16 %v6931
  %v8851 = vunpack.c.l.b16 %v6932
  %v8852 = vunpack.c.h.b16 %v6932
  %v8853 = vunpack.c.l.b16 %v6933
  %v8854 = vunpack.c.l.b16 %v6934
  %v8855 = vunpack.c.h.b16 %v6934
  %v8856 = vunpack.c.l.b16 %v6935
  %v8857 = vunpack.c.h.b16 %v6935
  %v8858 = vunpack.c.l.b16 %v6936
  %v8859 = vunpack.c.h.b16 %v6936
  %v8860 = vunpack.c.l.b16 %v6937
  %v8861 = vunpack.c.l.b16 %v6938
  %v8862 = vunpack.c.h.b16 %v6938
  %v8863 = vunpack.c.l.b16 %v6939
  %v8864 = vunpack.c.h.b16 %v6939
  %v8865 = vunpack.c.l.b16 %v6940
  %v8866 = vunpack.c.h.b16 %v6940
  %v8867 = vunpack.c.l.b16 %v6941
  %v8868 = vunpack.c.l.b16 %v6942
  %v8869 = vunpack.c.h.b16 %v6942
  %v8870 = vunpack.c.l.b16 %v6943
  %v8871 = vunpack.c.h.b16 %v6943
  %v8872 = vunpack.c.l.b16 %v6944
  %v8873 = vunpack.c.h.b16 %v6944
  %v8874 = vunpack.c.l.b16 %v6945
  %v8875 = vunpack.c.l.b16 %v6946
  %v8876 = vunpack.c.h.b16 %v6946
  %v8877 = vunpack.c.l.b16 %v6947
  %v8878 = vunpack.c.h.b16 %v6947
  %v8879 = vunpack.c.l.b16 %v6948
  %v8880 = vunpack.c.h.b16 %v6948
  %v8881 = vunpack.c.l.b16 %v6949
  %v8882 = vunpack.c.l.b16 %v6950
  %v8883 = vunpack.c.h.b16 %v6950
  %v8884 = vunpack.c.l.b16 %v6951
  %v8885 = vunpack.c.h.b16 %v6951
  %v8886 = vunpack.c.l.b16 %v6952
  %v8887 = vunpack.c.h.b16 %v6952
  %v8888 = vunpack.c.l.b16 %v6953
  %v8889 = vunpack.c.l.b16 %v6954
  %v8890 = vunpack.c.h.b16 %v6954
  %v8891 = vunpack.c.l.b16 %v6955
  %v8892 = vunpack.c.h.b16 %v6955
  %v8893 = vunpack.c.l.b16 %v6956
  %v8894 = vunpack.c.h.b16 %v6956
  %v8895 = vunpack.c.l.b16 %v6957
  %v8896 = vunpack.c.l.b16 %v6958
  %v8897 = vunpack.c.h.b16 %v6958
  %v8898 = vunpack.c.l.b16 %v6959
  %v8899 = vunpack.c.h.b16 %v6959
  %v8900 = vunpack.c.l.b16 %v6960
  %v8901 = vunpack.c.h.b16 %v6960
  %v8902 = vunpack.c.l.b16 %v6961
  %v8903 = vunpack.c.l.b16 %v6962
  %v8904 = vunpack.c.h.b16 %v6962
  %v8905 = vunpack.c.l.b16 %v6963
  %v8906 = vunpack.c.h.b16 %v6963
  %v8907 = vunpack.c.l.b16 %v6964
  %v8908 = vunpack.c.h.b16 %v6964
  %v8909 = vunpack.c.l.b16 %v6965
  %v8910 = vunpack.c.l.b16 %v6966
  %v8911 = vunpack.c.h.b16 %v6966
  %v8912 = vunpack.c.l.b16 %v6967
  %v8913 = vunpack.c.h.b16 %v6967
  %v8914 = vunpack.c.l.b16 %v6968
  %v8915 = vunpack.c.h.b16 %v6968
  %v8916 = vunpack.c.l.b16 %v6969
  %v8917 = vunpack.c.l.b16 %v6970
  %v8918 = vunpack.c.h.b16 %v6970
  %v8919 = vunpack.c.l.b16 %v6971
  %v8920 = vunpack.c.h.b16 %v6971
  %v8921 = vunpack.c.l.b16 %v6972
  %v8922 = vunpack.c.h.b16 %v6972
  %v8923 = vunpack.c.l.b16 %v6973
  %v8924 = vunpack.c.l.b16 %v6974
  %v8925 = vunpack.c.h.b16 %v6974
  %v8926 = vunpack.c.l.b16 %v6975
  %v8927 = vunpack.c.h.b16 %v6975
  %v8928 = vunpack.c.l.b16 %v6976
  %v8929 = vunpack.c.h.b16 %v6976
  %v8930 = vunpack.c.l.b16 %v6977
  %v8931 = vunpack.c.l.b16 %v6978
  %v8932 = vunpack.c.h.b16 %v6978
  %v8933 = vunpack.c.l.b16 %v6979
  %v8934 = vunpack.c.h.b16 %v6979
  %v8935 = vunpack.c.l.b16 %v6980
  %v8936 = vunpack.c.h.b16 %v6980
  %v8937 = vunpack.c.l.b16 %v6981
  %v8938 = vunpack.c.l.b16 %v6982
  %v8939 = vunpack.c.h.b16 %v6982
  %v8940 = vunpack.c.l.b16 %v6983
  %v8941 = vunpack.c.h.b16 %v6983
  %v8942 = vunpack.c.l.b16 %v6984
  %v8943 = vunpack.c.h.b16 %v6984
  %v8944 = vunpack.c.l.b16 %v6985
  %v8945 = vunpack.c.l.b16 %v6986
  %v8946 = vunpack.c.h.b16 %v6986
  %v8947 = vunpack.c.l.b16 %v6987
  %v8948 = vunpack.c.h.b16 %v6987
  %v8949 = vunpack.c.l.b16 %v6988
  %v8950 = vunpack.c.h.b16 %v6988
  %v8951 = vunpack.c.l.b16 %v6989
  %v8952 = vunpack.c.l.b16 %v6990
  %v8953 = vunpack.c.h.b16 %v6990
  %v8954 = vunpack.c.l.b16 %v6991
  %v8955 = vunpack.c.h.b16 %v6991
  %v8956 = vunpack.c.l.b16 %v6992
  %v8957 = vunpack.c.h.b16 %v6992
  %v8958 = vunpack.c.l.b16 %v6993
  %v8959 = vunpack.c.l.b16 %v6994
  %v8960 = vunpack.c.h.b16 %v6994
  %v8961 = vunpack.c.l.b16 %v6995
  %v8962 = vunpack.c.h.b16 %v6995
  %v8963 = vunpack.c.l.b16 %v6996
  %v8964 = vunpack.c.h.b16 %v6996
  %v8965 = vunpack.c.l.b16 %v6997
  %v8966 = vunpack.c.l.b16 %v6998
  %v8967 = vunpack.c.h.b16 %v6998
  %v8968 = vunpack.c.l.b16 %v6999
  %v8969 = vunpack.c.h.b16 %v6999
  %v8970 = vunpack.c.l.b16 %v7000
  %v8971 = vunpack.c.h.b16 %v7000
  %v8972 = vunpack.c.l.b16 %v7001
  %v8973 = vunpack.c.l.b16 %v7002
  %v8974 = vunpack.c.h.b16 %v7002
  %v8975 = vunpack.c.l.b16 %v7003
  %v8976 = vunpack.c.h.b16 %v7003
  %v8977 = vunpack.c.l.b16 %v7004
  %v8978 = vunpack.c.h.b16 %v7004
  %v8979 = vunpack.c.l.b16 %v7005
  %v8980 = vunpack.c.l.b16 %v7006
  %v8981 = vunpack.c.h.b16 %v7006
  %v8982 = vunpack.c.l.b16 %v7007
  %v8983 = vunpack.c.h.b16 %v7007
  %v8984 = vunpack.c.l.b16 %v7008
  %v8985 = vunpack.c.h.b16 %v7008
  %v8986 = vunpack.c.l.b16 %v7009
  %v8987 = vunpack.c.l.b16 %v7010
  %v8988 = vunpack.c.h.b16 %v7010
  %v8989 = vunpack.c.l.b16 %v7011
  %v8990 = vunpack.c.h.b16 %v7011
  %v8991 = vunpack.c.l.b16 %v7012
  %v8992 = vunpack.c.h.b16 %v7012
  %v8993 = vunpack.c.l.b16 %v7013
  %v8994 = vunpack.c.l.b16 %v7014
  %v8995 = vunpack.c.h.b16 %v7014
  %v8996 = vunpack.c.l.b16 %v7015
  %v8997 = vunpack.c.h.b16 %v7015
  %v8998 = vunpack.c.l.b16 %v7016
  %v8999 = vunpack.c.h.b16 %v7016
  %v9000 = vunpack.c.l.b16 %v7017
  %v9001 = vunpack.c.l.b16 %v7018
  %v9002 = vunpack.c.h.b16 %v7018
  %v9003 = vunpack.c.l.b16 %v7019
  %v9004 = vunpack.c.h.b16 %v7019
  %v9005 = vunpack.c.l.b16 %v7020
  %v9006 = vunpack.c.h.b16 %v7020
  %v9007 = vunpack.c.l.b16 %v7021
  %v9008 = vunpack.c.l.b16 %v7022
  %v9009 = vunpack.c.h.b16 %v7022
  %v9010 = vunpack.c.l.b16 %v7023
  %v9011 = vunpack.c.h.b16 %v7023
  %v9012 = vunpack.c.l.b16 %v7024
  %v9013 = vunpack.c.h.b16 %v7024
  %v9014 = vunpack.c.l.b16 %v7025
  %v9015 = vunpack.c.l.b16 %v7026
  %v9016 = vunpack.c.h.b16 %v7026
  %v9017 = vunpack.c.l.b16 %v7027
  %v9018 = vunpack.c.h.b16 %v7027
  %v9019 = vunpack.c.l.b16 %v7028
  %v9020 = vunpack.c.h.b16 %v7028
  %v9021 = vunpack.c.l.b16 %v7029
  %v9022 = vunpack.c.l.b16 %v7030
  %v9023 = vunpack.c.h.b16 %v7030
  %v9024 = vunpack.c.l.b16 %v7031
  %v9025 = vunpack.c.h.b16 %v7031
  %v9026 = vunpack.c.l.b16 %v7032
  %v9027 = vunpack.c.h.b16 %v7032
  %v9028 = vunpack.c.l.b16 %v7033
  %v9029 = vunpack.c.l.b16 %v7034
  %v9030 = vunpack.c.h.b16 %v7034
  %v9031 = vunpack.c.l.b16 %v7035
  %v9032 = vunpack.c.h.b16 %v7035
  %v9033 = vunpack.c.l.b16 %v7036
  %v9034 = vunpack.c.h.b16 %v7036
  %v9035 = vunpack.c.l.b16 %v7037
  %v9036 = vunpack.c.l.b16 %v7038
  %v9037 = vunpack.c.h.b16 %v7038
  %v9038 = vunpack.c.l.b16 %v7039
  %v9039 = vunpack.c.h.b16 %v7039
  %v9040 = vunpack.c.l.b16 %v7040
  %v9041 = vunpack.c.h.b16 %v7040
  %v9042 = vunpack.c.l.b16 %v7041
  %v9043 = vunpack.c.l.b16 %v7042
  %v9044 = vunpack.c.h.b16 %v7042
  %v9045 = vunpack.c.l.b16 %v7043
  %v9046 = vunpack.c.h.b16 %v7043
  %v9047 = vunpack.c.l.b16 %v7044
  %v9048 = vunpack.c.h.b16 %v7044
  %v9049 = vunpack.c.l.b16 %v7045
  %v9050 = vunpack.c.l.b16 %v7046
  %v9051 = vunpack.c.h.b16 %v7046
  %v9052 = vunpack.c.l.b16 %v7047
  %v9053 = vunpack.c.h.b16 %v7047
  %v9054 = vunpack.c.l.b16 %v7048
  %v9055 = vunpack.c.h.b16 %v7048
  %v9056 = vunpack.c.l.b16 %v7049
  %v9057 = vunpack.c.l.b16 %v7050
  %v9058 = vunpack.c.h.b16 %v7050
  %v9059 = vunpack.c.l.b16 %v7051
  %v9060 = vunpack.c.h.b16 %v7051
  %v9061 = vunpack.c.l.b16 %v7052
  %v9062 = vunpack.c.h.b16 %v7052
  %v9063 = vunpack.c.l.b16 %v7053
  %v9064 = vunpack.c.l.b16 %v7054
  %v9065 = vunpack.c.h.b16 %v7054
  %v9066 = vunpack.c.l.b16 %v7055
  %v9067 = vunpack.c.h.b16 %v7055
  %v9068 = vunpack.c.l.b16 %v7056
  %v9069 = vunpack.c.h.b16 %v7056
  %v9070 = vunpack.c.l.b16 %v7057
  %v9071 = vunpack.c.l.b16 %v7058
  %v9072 = vunpack.c.h.b16 %v7058
  %v9073 = vunpack.c.l.b16 %v7059
  %v9074 = vunpack.c.h.b16 %v7059
  %v9075 = vunpack.c.l.b16 %v7060
  %v9076 = vunpack.c.h.b16 %v7060
  %v9077 = vunpack.c.l.b16 %v7061
  %v9078 = vunpack.c.l.b16 %v7062
  %v9079 = vunpack.c.h.b16 %v7062
  %v9080 = vunpack.c.l.b16 %v7063
  %v9081 = vunpack.c.h.b16 %v7063
  %v9082 = vunpack.c.l.b16 %v7064
  %v9083 = vunpack.c.h.b16 %v7064
  %v9084 = vunpack.c.l.b16 %v7065
  %v9085 = vunpack.c.l.b16 %v7066
  %v9086 = vunpack.c.h.b16 %v7066
  %v9087 = vunpack.c.l.b16 %v7067
  %v9088 = vunpack.c.h.b16 %v7067
  %v9089 = vunpack.c.l.b16 %v7068
  %v9090 = vunpack.c.h.b16 %v7068
  %v9091 = vunpack.c.l.b16 %v7069
  %v9092 = vunpack.c.l.b16 %v7070
  %v9093 = vunpack.c.h.b16 %v7070
  %v9094 = vunpack.c.l.b16 %v7071
  %v9095 = vunpack.c.h.b16 %v7071
  %v9096 = vunpack.c.l.b16 %v7072
  %v9097 = vunpack.c.h.b16 %v7072
  %v9098 = vunpack.c.l.b16 %v7073
  %v9099 = vunpack.c.l.b16 %v7074
  %v9100 = vunpack.c.h.b16 %v7074
  %v9101 = vunpack.c.l.b16 %v7075
  %v9102 = vunpack.c.h.b16 %v7075
  %v9103 = vunpack.c.l.b16 %v7076
  %v9104 = vunpack.c.h.b16 %v7076
  %v9105 = vunpack.c.l.b16 %v7077
  %v9106 = vunpack.c.l.b16 %v7078
  %v9107 = vunpack.c.h.b16 %v7078
  %v9108 = vunpack.c.l.b16 %v7079
  %v9109 = vunpack.c.h.b16 %v7079
  %v9110 = vunpack.c.l.b16 %v7080
  %v9111 = vunpack.c.h.b16 %v7080
  %v9112 = vunpack.c.l.b16 %v7081
  %v9113 = vunpack.c.l.b16 %v7082
  %v9114 = vunpack.c.h.b16 %v7082
  %v9115 = vunpack.c.l.b16 %v7083
  %v9116 = vunpack.c.h.b16 %v7083
  %v9117 = vunpack.c.l.b16 %v7084
  %v9118 = vunpack.c.h.b16 %v7084
  %v9119 = vunpack.c.l.b16 %v7085
  %v9120 = vunpack.c.l.b16 %v7086
  %v9121 = vunpack.c.h.b16 %v7086
  %v9122 = vunpack.c.l.b16 %v7087
  %v9123 = vunpack.c.h.b16 %v7087
  %v9124 = vunpack.c.l.b16 %v7088
  %v9125 = vunpack.c.h.b16 %v7088
  %v9126 = vunpack.c.l.b16 %v7089
  %v9127 = vunpack.c.l.b16 %v7090
  %v9128 = vunpack.c.h.b16 %v7090
  %v9129 = vunpack.c.l.b16 %v7091
  %v9130 = vunpack.c.h.b16 %v7091
  %v9131 = vunpack.c.l.b16 %v7092
  %v9132 = vunpack.c.h.b16 %v7092
  %v9133 = vunpack.c.l.b16 %v7093
  %v9134 = vunpack.c.l.b16 %v7094
  %v9135 = vunpack.c.h.b16 %v7094
  %v9136 = vunpack.c.l.b16 %v7095
  %v9137 = vunpack.c.h.b16 %v7095
  %v9138 = vunpack.c.l.b16 %v7096
  %v9139 = vunpack.c.h.b16 %v7096
  %v9140 = vunpack.c.l.b16 %v7097
  %v9141 = vunpack.c.l.b16 %v7098
  %v9142 = vunpack.c.h.b16 %v7098
  %v9143 = vunpack.c.l.b16 %v7099
  %v9144 = vunpack.c.h.b16 %v7099
  %v9145 = vunpack.c.l.b16 %v7100
  %v9146 = vunpack.c.h.b16 %v7100
  %v9147 = vunpack.c.l.b16 %v7101
  %v9148 = vunpack.c.l.b16 %v7102
  %v9149 = vunpack.c.h.b16 %v7102
  %v9150 = vunpack.c.l.b16 %v7103
  %v9151 = vunpack.c.h.b16 %v7103
  %v9152 = vunpack.c.l.b16 %v7104
  %v9153 = vunpack.c.h.b16 %v7104
  %v9154 = vunpack.c.l.b16 %v7105
  %v9155 = vunpack.c.l.b16 %v7106
  %v9156 = vunpack.c.h.b16 %v7106
  %v9157 = vunpack.c.l.b16 %v7107
  %v9158 = vunpack.c.h.b16 %v7107
  %v9159 = vunpack.c.l.b16 %v7108
  %v9160 = vunpack.c.h.b16 %v7108
  %v9161 = vunpack.c.l.b16 %v7109
  %v9162 = vunpack.c.l.b16 %v7110
  %v9163 = vunpack.c.h.b16 %v7110
  %v9164 = vunpack.c.l.b16 %v7111
  %v9165 = vunpack.c.h.b16 %v7111
  %v9166 = vunpack.c.l.b16 %v7112
  %v9167 = vunpack.c.h.b16 %v7112
  %v9168 = vunpack.c.l.b16 %v7113
  %v9169 = vunpack.c.l.b16 %v7114
  %v9170 = vunpack.c.h.b16 %v7114
  %v9171 = vunpack.c.l.b16 %v7115
  %v9172 = vunpack.c.h.b16 %v7115
  %v9173 = vunpack.c.l.b16 %v7116
  %v9174 = vunpack.c.h.b16 %v7116
  %v9175 = vunpack.c.l.b16 %v7117
  %v9176 = vunpack.c.l.b16 %v7118
  %v9177 = vunpack.c.h.b16 %v7118
  %v9178 = vunpack.c.l.b16 %v7119
  %v9179 = vunpack.c.h.b16 %v7119
  %v9180 = vunpack.c.l.b16 %v7120
  %v9181 = vunpack.c.h.b16 %v7120
  %v9182 = vunpack.c.l.b16 %v7121
  %v9183 = vunpack.c.l.b16 %v7122
  %v9184 = vunpack.c.h.b16 %v7122
  %v9185 = vunpack.c.l.b16 %v7123
  %v9186 = vunpack.c.h.b16 %v7123
  %v9187 = vunpack.c.l.b16 %v7124
  %v9188 = vunpack.c.h.b16 %v7124
  %v9189 = vunpack.c.l.b16 %v7125
  %v9190 = vunpack.c.l.b16 %v7126
  %v9191 = vunpack.c.h.b16 %v7126
  %v9192 = vunpack.c.l.b16 %v7127
  %v9193 = vunpack.c.h.b16 %v7127
  %v9194 = vunpack.c.l.b16 %v7128
  %v9195 = vunpack.c.h.b16 %v7128
  %v9196 = vunpack.c.l.b16 %v7129
  %v9197 = vunpack.c.l.b16 %v7130
  %v9198 = vunpack.c.h.b16 %v7130
  %v9199 = vunpack.c.l.b16 %v7131
  %v9200 = vunpack.c.h.b16 %v7131
  %v9201 = vunpack.c.l.b16 %v7132
  %v9202 = vunpack.c.h.b16 %v7132
  %v9203 = vunpack.c.l.b16 %v7133
  %v9204 = vunpack.c.l.b16 %v7134
  %v9205 = vunpack.c.h.b16 %v7134
  %v9206 = vunpack.c.l.b16 %v7135
  %v9207 = vunpack.c.h.b16 %v7135
  %v9208 = vunpack.c.l.b16 %v7136
  %v9209 = vunpack.c.h.b16 %v7136
  %v9210 = vunpack.c.l.b16 %v7137
  %v9211 = vunpack.c.l.b16 %v7138
  %v9212 = vunpack.c.h.b16 %v7138
  %v9213 = vunpack.c.l.b16 %v7139
  %v9214 = vunpack.c.h.b16 %v7139
  %v9215 = vunpack.c.l.b16 %v7140
  %v9216 = vunpack.c.h.b16 %v7140
  %v9217 = vunpack.c.l.b16 %v7141
  %v9218 = vunpack.c.l.b16 %v7142
  %v9219 = vunpack.c.h.b16 %v7142
  %v9220 = vunpack.c.l.b16 %v7143
  %v9221 = vunpack.c.h.b16 %v7143
  %v9222 = vunpack.c.l.b16 %v7144
  %v9223 = vunpack.c.h.b16 %v7144
  %v9224 = vunpack.c.l.b16 %v7145
  %v9225 = vunpack.c.l.b16 %v7146
  %v9226 = vunpack.c.h.b16 %v7146
  %v9227 = vunpack.c.l.b16 %v7147
  %v9228 = vunpack.c.h.b16 %v7147
  %v9229 = vunpack.c.l.b16 %v7148
  %v9230 = vunpack.c.h.b16 %v7148
  %v9231 = vunpack.c.l.b16 %v7149
  %v9232 = vunpack.c.l.b16 %v7150
  %v9233 = vunpack.c.h.b16 %v7150
  %v9234 = vunpack.c.l.b16 %v7151
  %v9235 = vunpack.c.h.b16 %v7151
  %v9236 = vunpack.c.l.b16 %v7152
  %v9237 = vunpack.c.h.b16 %v7152
  %v9238 = vunpack.c.l.b16 %v7153
  %v9239 = vunpack.c.l.b16 %v7154
  %v9240 = vunpack.c.h.b16 %v7154
  %v9241 = vunpack.c.l.b16 %v7155
  %v9242 = vunpack.c.h.b16 %v7155
  %v9243 = vunpack.c.l.b16 %v7156
  %v9244 = vunpack.c.h.b16 %v7156
  %v9245 = vunpack.c.l.b16 %v7157
  %v9246 = vunpack.c.l.b16 %v7158
  %v9247 = vunpack.c.h.b16 %v7158
  %v9248 = vunpack.c.l.b16 %v7159
  %v9249 = vunpack.c.h.b16 %v7159
  %v9250 = vunpack.c.l.b16 %v7160
  %v9251 = vunpack.c.h.b16 %v7160
  %v9252 = vunpack.c.l.b16 %v7161
  %v9253 = vunpack.c.l.b16 %v7162
  %v9254 = vunpack.c.h.b16 %v7162
  %v9255 = vunpack.c.l.b16 %v7163
  %v9256 = vunpack.c.h.b16 %v7163
  %v9257 = vunpack.c.l.b16 %v7164
  %v9258 = vunpack.c.h.b16 %v7164
  %v9259 = vunpack.c.l.b16 %v7165
  %v9260 = vunpack.c.l.b16 %v7166
  %v9261 = vunpack.c.h.b16 %v7166
  %v9262 = vunpack.c.l.b16 %v7167
  %v9263 = vunpack.c.h.b16 %v7167
  %v9264 = vunpack.c.l.b16 %v7168
  %v9265 = vunpack.c.h.b16 %v7168
  %v9266 = vunpack.c.l.b16 %v7169
  %v9267 = vunpack.c.l.b16 %v7170
  %v9268 = vunpack.c.h.b16 %v7170
  %v9269 = vunpack.c.l.b16 %v7171
  %v9270 = vunpack.c.h.b16 %v7171
  %v9271 = vunpack.c.l.b16 %v7172
  %v9272 = vunpack.c.h.b16 %v7172
  %v9273 = vunpack.c.l.b16 %v7173
  %v9274 = vunpack.c.l.b16 %v7174
  %v9275 = vunpack.c.h.b16 %v7174
  %v9276 = vunpack.c.l.b16 %v7175
  %v9277 = vunpack.c.h.b16 %v7175
  %v9278 = vunpack.c.l.b16 %v7176
  %v9279 = vunpack.c.h.b16 %v7176
  %v9280 = vunpack.c.l.b16 %v7177
  %v9281 = vunpack.c.l.b16 %v7178
  %v9282 = vunpack.c.h.b16 %v7178
  %v9283 = vunpack.c.l.b16 %v7179
  %v9284 = vunpack.c.h.b16 %v7179
  %v9285 = vunpack.c.l.b16 %v7180
  %v9286 = vunpack.c.h.b16 %v7180
  %v9287 = vunpack.c.l.b16 %v7181
  %v9288 = vunpack.c.l.b16 %v7182
  %v9289 = vunpack.c.h.b16 %v7182
  %v9290 = vunpack.c.l.b16 %v7183
  %v9291 = vunpack.c.h.b16 %v7183
  %v9292 = vunpack.c.l.b16 %v7184
  %v9293 = vunpack.c.h.b16 %v7184
  %v9294 = vunpack.c.l.b16 %v7185
  %v9295 = vunpack.c.l.b16 %v7186
  %v9296 = vunpack.c.h.b16 %v7186
  %v9297 = vunpack.c.l.b16 %v7187
  %v9298 = vunpack.c.h.b16 %v7187
  %v9299 = vunpack.c.l.b16 %v7188
  %v9300 = vunpack.c.h.b16 %v7188
  %v9301 = vunpack.c.l.b16 %v7189
  %v9302 = vunpack.c.l.b16 %v7190
  %v9303 = vunpack.c.h.b16 %v7190
  %v9304 = vunpack.c.l.b16 %v7191
  %v9305 = vunpack.c.h.b16 %v7191
  %v9306 = vunpack.c.l.b16 %v7192
  %v9307 = vunpack.c.h.b16 %v7192
  %v9308 = vunpack.c.l.b16 %v7193
  %v9309 = vunpack.c.l.b16 %v7194
  %v9310 = vunpack.c.h.b16 %v7194
  %v9311 = vunpack.c.l.b16 %v7195
  %v9312 = vunpack.c.h.b16 %v7195
  %v9313 = vunpack.c.l.b16 %v7196
  %v9314 = vunpack.c.h.b16 %v7196
  %v9315 = vunpack.c.l.b16 %v7197
  %v9316 = vunpack.c.l.b16 %v7198
  %v9317 = vunpack.c.h.b16 %v7198
  %v9318 = vunpack.c.l.b16 %v7199
  %v9319 = vunpack.c.h.b16 %v7199
  %v9320 = vunpack.c.l.b16 %v7200
  %v9321 = vunpack.c.h.b16 %v7200
  %v9322 = vunpack.c.l.b16 %v7201
  %v9323 = vunpack.c.l.b16 %v7202
  %v9324 = vunpack.c.h.b16 %v7202
  %v9325 = vunpack.c.l.b16 %v7203
  %v9326 = vunpack.c.h.b16 %v7203
  %v9327 = vunpack.c.l.b16 %v7204
  %v9328 = vunpack.c.h.b16 %v7204
  %v9329 = vunpack.c.l.b16 %v7205
  %v9330 = vunpack.c.l.b16 %v7206
  %v9331 = vunpack.c.h.b16 %v7206
  %v9332 = vunpack.c.l.b16 %v7207
  %v9333 = vunpack.c.h.b16 %v7207
  %v9334 = vunpack.c.l.b16 %v7208
  %v9335 = vunpack.c.h.b16 %v7208
  %v9336 = vunpack.c.l.b16 %v7209
  %v9337 = vunpack.c.l.b16 %v7210
  %v9338 = vunpack.c.h.b16 %v7210
  %v9339 = vunpack.c.l.b16 %v7211
  %v9340 = vunpack.c.h.b16 %v7211
  %v9341 = vunpack.c.l.b16 %v7212
  %v9342 = vunpack.c.h.b16 %v7212
  %v9343 = vunpack.c.l.b16 %v7213
  %v9344 = vunpack.c.l.b16 %v7214
  %v9345 = vunpack.c.h.b16 %v7214
  %v9346 = vunpack.c.l.b16 %v7215
  %v9347 = vunpack.c.h.b16 %v7215
  %v9348 = vunpack.c.l.b16 %v7216
  %v9349 = vunpack.c.h.b16 %v7216
  %v9350 = vunpack.c.l.b16 %v7217
  %v9351 = vunpack.c.l.b16 %v7218
  %v9352 = vunpack.c.h.b16 %v7218
  %v9353 = vunpack.c.l.b16 %v7219
  %v9354 = vunpack.c.h.b16 %v7219
  %v9355 = vunpack.c.l.b16 %v7220
  %v9356 = vunpack.c.h.b16 %v7220
  %v9357 = vunpack.c.l.b16 %v7221
  %v9358 = vunpack.c.l.b16 %v7222
  %v9359 = vunpack.c.h.b16 %v7222
  %v9360 = vunpack.c.l.b16 %v7223
  %v9361 = vunpack.c.h.b16 %v7223
  %v9362 = vunpack.c.l.b16 %v7224
  %v9363 = vunpack.c.h.b16 %v7224
  %v9364 = vunpack.c.l.b16 %v7225
  %v9365 = vunpack.c.l.b16 %v7226
  %v9366 = vunpack.c.h.b16 %v7226
  %v9367 = vunpack.c.l.b16 %v7227
  %v9368 = vunpack.c.h.b16 %v7227
  %v9369 = vunpack.c.l.b16 %v7228
  %v9370 = vunpack.c.h.b16 %v7228
  %v9371 = vunpack.c.l.b16 %v7229
  %v9372 = vunpack.c.l.b16 %v7230
  %v9373 = vunpack.c.h.b16 %v7230
  %v9374 = vunpack.c.l.b16 %v7231
  %v9375 = vunpack.c.h.b16 %v7231
  %v9376 = vunpack.c.l.b16 %v7232
  %v9377 = vunpack.c.h.b16 %v7232
  %v9378 = vunpack.c.l.b16 %v7233
  %v9379 = vunpack.c.l.b16 %v7234
  %v9380 = vunpack.c.h.b16 %v7234
  %v9381 = vunpack.c.l.b16 %v7235
  %v9382 = vunpack.c.h.b16 %v7235
  %v9383 = vunpack.c.l.b16 %v7236
  %v9384 = vunpack.c.h.b16 %v7236
  %v9385 = vunpack.c.l.b16 %v7237
  %v9386 = vunpack.c.l.b16 %v7238
  %v9387 = vunpack.c.h.b16 %v7238
  %v9388 = vunpack.c.l.b16 %v7239
  %v9389 = vunpack.c.h.b16 %v7239
  %v9390 = vunpack.c.l.b16 %v7240
  %v9391 = vunpack.c.h.b16 %v7240
  %v9392 = vunpack.c.l.b16 %v7241
  %v9393 = vunpack.c.l.b16 %v7242
  %v9394 = vunpack.c.h.b16 %v7242
  %v9395 = vunpack.c.l.b16 %v7243
  %v9396 = vunpack.c.h.b16 %v7243
  %v9397 = vunpack.c.l.b16 %v7244
  %v9398 = vunpack.c.h.b16 %v7244
  %v9399 = vunpack.c.l.b16 %v7245
  %v9400 = vunpack.c.l.b16 %v7246
  %v9401 = vunpack.c.h.b16 %v7246
  %v9402 = vunpack.c.l.b16 %v7247
  %v9403 = vunpack.c.h.b16 %v7247
  %v9404 = vunpack.c.l.b16 %v7248
  %v9405 = vunpack.c.h.b16 %v7248
  %v9406 = vunpack.c.l.b16 %v7249
  %v9407 = vunpack.c.l.b16 %v7250
  %v9408 = vunpack.c.h.b16 %v7250
  %v9409 = vunpack.c.l.b16 %v7251
  %v9410 = vunpack.c.h.b16 %v7251
  %v9411 = vunpack.c.l.b16 %v7252
  %v9412 = vunpack.c.h.b16 %v7252
  %v9413 = vunpack.c.l.b16 %v7253
  %v9414 = vunpack.c.l.b16 %v7254
  %v9415 = vunpack.c.h.b16 %v7254
  %v9416 = vunpack.c.l.b16 %v7255
  %v9417 = vunpack.c.h.b16 %v7255
  %v9418 = vunpack.c.l.b16 %v7256
  %v9419 = vunpack.c.h.b16 %v7256
  %v9420 = vunpack.c.l.b16 %v7257
  %v9421 = vunpack.c.l.b16 %v7258
  %v9422 = vunpack.c.h.b16 %v7258
  %v9423 = vunpack.c.l.b16 %v7259
  %v9424 = vunpack.c.h.b16 %v7259
  %v9425 = vunpack.c.l.b16 %v7260
  %v9426 = vunpack.c.h.b16 %v7260
  %v9427 = vunpack.c.l.b16 %v7261
  %v9428 = vunpack.c.l.b16 %v7262
  %v9429 = vunpack.c.h.b16 %v7262
  %v9430 = vunpack.c.l.b16 %v7263
  %v9431 = vunpack.c.h.b16 %v7263
  %v9432 = vunpack.c.l.b16 %v7264
  %v9433 = vunpack.c.h.b16 %v7264
  %v9434 = vunpack.c.l.b16 %v7265
  %v9435 = vunpack.c.l.b16 %v7266
  %v9436 = vunpack.c.h.b16 %v7266
  %v9437 = vunpack.c.l.b16 %v7267
  %v9438 = vunpack.c.h.b16 %v7267
  %v9439 = vunpack.c.l.b16 %v7268
  %v9440 = vunpack.c.h.b16 %v7268
  %v9441 = vunpack.c.l.b16 %v7269
  %v9442 = vunpack.c.l.b16 %v7270
  %v9443 = vunpack.c.h.b16 %v7270
  %v9444 = vunpack.c.l.b16 %v7271
  %v9445 = vunpack.c.h.b16 %v7271
  %v9446 = vunpack.c.l.b16 %v7272
  %v9447 = vunpack.c.h.b16 %v7272
  %v9448 = vunpack.c.l.b16 %v7273
  %v9449 = vunpack.c.l.b16 %v7274
  %v9450 = vunpack.c.h.b16 %v7274
  %v9451 = vunpack.c.l.b16 %v7275
  %v9452 = vunpack.c.h.b16 %v7275
  %v9453 = vunpack.c.l.b16 %v7276
  %v9454 = vunpack.c.h.b16 %v7276
  %v9455 = vunpack.c.l.b16 %v7277
  %v9456 = vunpack.c.l.b16 %v7278
  %v9457 = vunpack.c.h.b16 %v7278
  %v9458 = vunpack.c.l.b16 %v7279
  %v9459 = vunpack.c.h.b16 %v7279
  %v9460 = vunpack.c.l.b16 %v7280
  %v9461 = vunpack.c.h.b16 %v7280
  %v9462 = vunpack.c.l.b16 %v7281
  %v9463 = vunpack.c.l.b16 %v7282
  %v9464 = vunpack.c.h.b16 %v7282
  %v9465 = vunpack.c.l.b16 %v7283
  %v9466 = vunpack.c.h.b16 %v7283
  %v9467 = vunpack.c.l.b16 %v7284
  %v9468 = vunpack.c.h.b16 %v7284
  %v9469 = vunpack.c.l.b16 %v7285
  %v9470 = vunpack.c.l.b16 %v7286
  %v9471 = vunpack.c.h.b16 %v7286
  %v9472 = vunpack.c.l.b16 %v7287
  %v9473 = vunpack.c.h.b16 %v7287
  %v9474 = vunpack.c.l.b16 %v7288
  %v9475 = vunpack.c.h.b16 %v7288
  %v9476 = vunpack.c.l.b16 %v7289
  %v9477 = vunpack.c.l.b16 %v7290
  %v9478 = vunpack.c.h.b16 %v7290
  %v9479 = vunpack.c.l.b16 %v7291
  %v9480 = vunpack.c.h.b16 %v7291
  %v9481 = vunpack.c.l.b16 %v7292
  %v9482 = vunpack.c.h.b16 %v7292
  %v9483 = vunpack.c.l.b16 %v7293
  %v9484 = vunpack.c.l.b16 %v7294
  %v9485 = vunpack.c.h.b16 %v7294
  %v9486 = vunpack.c.l.b16 %v7295
  %v9487 = vunpack.c.h.b16 %v7295
  %v9488 = vunpack.c.l.b16 %v7296
  %v9489 = vunpack.c.h.b16 %v7296
  %v9490 = vunpack.c.l.b16 %v7297
  %v9491 = vpack.c.b16 %v8126, %v8119
  %v9492 = vpack.c.b16 %v8127, %v8120
  %v9493 = vpack.c.b16 %v8128, %v8121
  %v9494 = vpack.c.b16 %v8129, %v8122
  %v9495 = vpack.c.b16 %v8130, %v8123
  %v9496 = vpack.c.b16 %v8131, %v8124
  %v9497 = vpack.c.b16 %v8132, %v8125
  %v9498 = vpack.c.b16 %v8140, %v8133
  %v9499 = vpack.c.b16 %v8141, %v8134
  %v9500 = vpack.c.b16 %v8142, %v8135
  %v9501 = vpack.c.b16 %v8143, %v8136
  %v9502 = vpack.c.b16 %v8144, %v8137
  %v9503 = vpack.c.b16 %v8145, %v8138
  %v9504 = vpack.c.b16 %v8146, %v8139
  %v9505 = vpack.c.b16 %v8154, %v8147
  %v9506 = vpack.c.b16 %v8155, %v8148
  %v9507 = vpack.c.b16 %v8156, %v8149
  %v9508 = vpack.c.b16 %v8157, %v8150
  %v9509 = vpack.c.b16 %v8158, %v8151
  %v9510 = vpack.c.b16 %v8159, %v8152
  %v9511 = vpack.c.b16 %v8160, %v8153
  %v9512 = vpack.c.b16 %v8168, %v8161
  %v9513 = vpack.c.b16 %v8169, %v8162
  %v9514 = vpack.c.b16 %v8170, %v8163
  %v9515 = vpack.c.b16 %v8171, %v8164
  %v9516 = vpack.c.b16 %v8172, %v8165
  %v9517 = vpack.c.b16 %v8173, %v8166
  %v9518 = vpack.c.b16 %v8174, %v8167
  %v9519 = vpack.c.b16 %v8182, %v8175
  %v9520 = vpack.c.b16 %v8183, %v8176
  %v9521 = vpack.c.b16 %v8184, %v8177
  %v9522 = vpack.c.b16 %v8185, %v8178
  %v9523 = vpack.c.b16 %v8186, %v8179
  %v9524 = vpack.c.b16 %v8187, %v8180
  %v9525 = vpack.c.b16 %v8188, %v8181
  %v9526 = vpack.c.b16 %v8196, %v8189
  %v9527 = vpack.c.b16 %v8197, %v8190
  %v9528 = vpack.c.b16 %v8198, %v8191
  %v9529 = vpack.c.b16 %v8199, %v8192
  %v9530 = vpack.c.b16 %v8200, %v8193
  %v9531 = vpack.c.b16 %v8201, %v8194
  %v9532 = vpack.c.b16 %v8202, %v8195
  %v9533 = vpack.c.b16 %v8210, %v8203
  %v9534 = vpack.c.b16 %v8211, %v8204
  %v9535 = vpack.c.b16 %v8212, %v8205
  %v9536 = vpack.c.b16 %v8213, %v8206
  %v9537 = vpack.c.b16 %v8214, %v8207
  %v9538 = vpack.c.b16 %v8215, %v8208
  %v9539 = vpack.c.b16 %v8216, %v8209
  %v9540 = vpack.c.b16 %v8224, %v8217
  %v9541 = vpack.c.b16 %v8225, %v8218
  %v9542 = vpack.c.b16 %v8226, %v8219
  %v9543 = vpack.c.b16 %v8227, %v8220
  %v9544 = vpack.c.b16 %v8228, %v8221
  %v9545 = vpack.c.b16 %v8229, %v8222
  %v9546 = vpack.c.b16 %v8230, %v8223
  %v9547 = vpack.c.b16 %v8238, %v8231
  %v9548 = vpack.c.b16 %v8239, %v8232
  %v9549 = vpack.c.b16 %v8240, %v8233
  %v9550 = vpack.c.b16 %v8241, %v8234
  %v9551 = vpack.c.b16 %v8242, %v8235
  %v9552 = vpack.c.b16 %v8243, %v8236
  %v9553 = vpack.c.b16 %v8244, %v8237
  %v9554 = vpack.c.b16 %v8252, %v8245
  %v9555 = vpack.c.b16 %v8253, %v8246
  %v9556 = vpack.c.b16 %v8254, %v8247
  %v9557 = vpack.c.b16 %v8255, %v8248
  %v9558 = vpack.c.b16 %v8256, %v8249
  %v9559 = vpack.c.b16 %v8257, %v8250
  %v9560 = vpack.c.b16 %v8258, %v8251
  %v9561 = vpack.c.b16 %v8266, %v8259
  %v9562 = vpack.c.b16 %v8267, %v8260
  %v9563 = vpack.c.b16 %v8268, %v8261
  %v9564 = vpack.c.b16 %v8269, %v8262
  %v9565 = vpack.c.b16 %v8270, %v8263
  %v9566 = vpack.c.b16 %v8271, %v8264
  %v9567 = vpack.c.b16 %v8272, %v8265
  %v9568 = vpack.c.b16 %v8280, %v8273
  %v9569 = vpack.c.b16 %v8281, %v8274
  %v9570 = vpack.c.b16 %v8282, %v8275
  %v9571 = vpack.c.b16 %v8283, %v8276
  %v9572 = vpack.c.b16 %v8284, %v8277
  %v9573 = vpack.c.b16 %v8285, %v8278
  %v9574 = vpack.c.b16 %v8286, %v8279
  %v9575 = vpack.c.b16 %v8294, %v8287
  %v9576 = vpack.c.b16 %v8295, %v8288
  %v9577 = vpack.c.b16 %v8296, %v8289
  %v9578 = vpack.c.b16 %v8297, %v8290
  %v9579 = vpack.c.b16 %v8298, %v8291
  %v9580 = vpack.c.b16 %v8299, %v8292
  %v9581 = vpack.c.b16 %v8300, %v8293
  %v9582 = vpack.c.b16 %v8308, %v8301
  %v9583 = vpack.c.b16 %v8309, %v8302
  %v9584 = vpack.c.b16 %v8310, %v8303
  %v9585 = vpack.c.b16 %v8311, %v8304
  %v9586 = vpack.c.b16 %v8312, %v8305
  %v9587 = vpack.c.b16 %v8313, %v8306
  %v9588 = vpack.c.b16 %v8314, %v8307
  %v9589 = vpack.c.b16 %v8322, %v8315
  %v9590 = vpack.c.b16 %v8323, %v8316
  %v9591 = vpack.c.b16 %v8324, %v8317
  %v9592 = vpack.c.b16 %v8325, %v8318
  %v9593 = vpack.c.b16 %v8326, %v8319
  %v9594 = vpack.c.b16 %v8327, %v8320
  %v9595 = vpack.c.b16 %v8328, %v8321
  %v9596 = vpack.c.b16 %v8336, %v8329
  %v9597 = vpack.c.b16 %v8337, %v8330
  %v9598 = vpack.c.b16 %v8338, %v8331
  %v9599 = vpack.c.b16 %v8339, %v8332
  %v9600 = vpack.c.b16 %v8340, %v8333
  %v9601 = vpack.c.b16 %v8341, %v8334
  %v9602 = vpack.c.b16 %v8342, %v8335
  %v9603 = vpack.c.b16 %v8350, %v8343
  %v9604 = vpack.c.b16 %v8351, %v8344
  %v9605 = vpack.c.b16 %v8352, %v8345
  %v9606 = vpack.c.b16 %v8353, %v8346
  %v9607 = vpack.c.b16 %v8354, %v8347
  %v9608 = vpack.c.b16 %v8355, %v8348
  %v9609 = vpack.c.b16 %v8356, %v8349
  %v9610 = vpack.c.b16 %v8364, %v8357
  %v9611 = vpack.c.b16 %v8365, %v8358
  %v9612 = vpack.c.b16 %v8366, %v8359
  %v9613 = vpack.c.b16 %v8367, %v8360
  %v9614 = vpack.c.b16 %v8368, %v8361
  %v9615 = vpack.c.b16 %v8369, %v8362
  %v9616 = vpack.c.b16 %v8370, %v8363
  %v9617 = vpack.c.b16 %v8378, %v8371
  %v9618 = vpack.c.b16 %v8379, %v8372
  %v9619 = vpack.c.b16 %v8380, %v8373
  %v9620 = vpack.c.b16 %v8381, %v8374
  %v9621 = vpack.c.b16 %v8382, %v8375
  %v9622 = vpack.c.b16 %v8383, %v8376
  %v9623 = vpack.c.b16 %v8384, %v8377
  %v9624 = vpack.c.b16 %v8392, %v8385
  %v9625 = vpack.c.b16 %v8393, %v8386
  %v9626 = vpack.c.b16 %v8394, %v8387
  %v9627 = vpack.c.b16 %v8395, %v8388
  %v9628 = vpack.c.b16 %v8396, %v8389
  %v9629 = vpack.c.b16 %v8397, %v8390
  %v9630 = vpack.c.b16 %v8398, %v8391
  %v9631 = vpack.c.b16 %v8406, %v8399
  %v9632 = vpack.c.b16 %v8407, %v8400
  %v9633 = vpack.c.b16 %v8408, %v8401
  %v9634 = vpack.c.b16 %v8409, %v8402
  %v9635 = vpack.c.b16 %v8410, %v8403
  %v9636 = vpack.c.b16 %v8411, %v8404
  %v9637 = vpack.c.b16 %v8412, %v8405
  %v9638 = vpack.c.b16 %v8420, %v8413
  %v9639 = vpack.c.b16 %v8421, %v8414
  %v9640 = vpack.c.b16 %v8422, %v8415
  %v9641 = vpack.c.b16 %v8423, %v8416
  %v9642 = vpack.c.b16 %v8424, %v8417
  %v9643 = vpack.c.b16 %v8425, %v8418
  %v9644 = vpack.c.b16 %v8426, %v8419
  %v9645 = vpack.c.b16 %v8434, %v8427
  %v9646 = vpack.c.b16 %v8435, %v8428
  %v9647 = vpack.c.b16 %v8436, %v8429
  %v9648 = vpack.c.b16 %v8437, %v8430
  %v9649 = vpack.c.b16 %v8438, %v8431
  %v9650 = vpack.c.b16 %v8439, %v8432
  %v9651 = vpack.c.b16 %v8440, %v8433
  %v9652 = vpack.c.b16 %v8448, %v8441
  %v9653 = vpack.c.b16 %v8449, %v8442
  %v9654 = vpack.c.b16 %v8450, %v8443
  %v9655 = vpack.c.b16 %v8451, %v8444
  %v9656 = vpack.c.b16 %v8452, %v8445
  %v9657 = vpack.c.b16 %v8453, %v8446
  %v9658 = vpack.c.b16 %v8454, %v8447
  %v9659 = vpack.c.b16 %v8462, %v8455
  %v9660 = vpack.c.b16 %v8463, %v8456
  %v9661 = vpack.c.b16 %v8464, %v8457
  %v9662 = vpack.c.b16 %v8465, %v8458
  %v9663 = vpack.c.b16 %v8466, %v8459
  %v9664 = vpack.c.b16 %v8467, %v8460
  %v9665 = vpack.c.b16 %v8468, %v8461
  %v9666 = vpack.c.b16 %v8476, %v8469
  %v9667 = vpack.c.b16 %v8477, %v8470
  %v9668 = vpack.c.b16 %v8478, %v8471
  %v9669 = vpack.c.b16 %v8479, %v8472
  %v9670 = vpack.c.b16 %v8480, %v8473
  %v9671 = vpack.c.b16 %v8481, %v8474
  %v9672 = vpack.c.b16 %v8482, %v8475
  %v9673 = vpack.c.b16 %v8490, %v8483
  %v9674 = vpack.c.b16 %v8491, %v8484
  %v9675 = vpack.c.b16 %v8492, %v8485
  %v9676 = vpack.c.b16 %v8493, %v8486
  %v9677 = vpack.c.b16 %v8494, %v8487
  %v9678 = vpack.c.b16 %v8495, %v8488
  %v9679 = vpack.c.b16 %v8496, %v8489
  %v9680 = vpack.c.b16 %v8504, %v8497
  %v9681 = vpack.c.b16 %v8505, %v8498
  %v9682 = vpack.c.b16 %v8506, %v8499
  %v9683 = vpack.c.b16 %v8507, %v8500
  %v9684 = vpack.c.b16 %v8508, %v8501
  %v9685 = vpack.c.b16 %v8509, %v8502
  %v9686 = vpack.c.b16 %v8510, %v8503
  %v9687 = vpack.c.b16 %v8518, %v8511
  %v9688 = vpack.c.b16 %v8519, %v8512
  %v9689 = vpack.c.b16 %v8520, %v8513
  %v9690 = vpack.c.b16 %v8521, %v8514
  %v9691 = vpack.c.b16 %v8522, %v8515
  %v9692 = vpack.c.b16 %v8523, %v8516
  %v9693 = vpack.c.b16 %v8524, %v8517
  %v9694 = vpack.c.b16 %v8532, %v8525
  %v9695 = vpack.c.b16 %v8533, %v8526
  %v9696 = vpack.c.b16 %v8534, %v8527
  %v9697 = vpack.c.b16 %v8535, %v8528
  %v9698 = vpack.c.b16 %v8536, %v8529
  %v9699 = vpack.c.b16 %v8537, %v8530
  %v9700 = vpack.c.b16 %v8538, %v8531
  %v9701 = vpack.c.b16 %v8546, %v8539
  %v9702 = vpack.c.b16 %v8547, %v8540
  %v9703 = vpack.c.b16 %v8548, %v8541
  %v9704 = vpack.c.b16 %v8549, %v8542
  %v9705 = vpack.c.b16 %v8550, %v8543
  %v9706 = vpack.c.b16 %v8551, %v8544
  %v9707 = vpack.c.b16 %v8552, %v8545
  %v9708 = vpack.c.b16 %v8560, %v8553
  %v9709 = vpack.c.b16 %v8561, %v8554
  %v9710 = vpack.c.b16 %v8562, %v8555
  %v9711 = vpack.c.b16 %v8563, %v8556
  %v9712 = vpack.c.b16 %v8564, %v8557
  %v9713 = vpack.c.b16 %v8565, %v8558
  %v9714 = vpack.c.b16 %v8566, %v8559
  %v9715 = vpack.c.b16 %v8574, %v8567
  %v9716 = vpack.c.b16 %v8575, %v8568
  %v9717 = vpack.c.b16 %v8576, %v8569
  %v9718 = vpack.c.b16 %v8577, %v8570
  %v9719 = vpack.c.b16 %v8578, %v8571
  %v9720 = vpack.c.b16 %v8579, %v8572
  %v9721 = vpack.c.b16 %v8580, %v8573
  %v9722 = vpack.c.b16 %v8588, %v8581
  %v9723 = vpack.c.b16 %v8589, %v8582
  %v9724 = vpack.c.b16 %v8590, %v8583
  %v9725 = vpack.c.b16 %v8591, %v8584
  %v9726 = vpack.c.b16 %v8592, %v8585
  %v9727 = vpack.c.b16 %v8593, %v8586
  %v9728 = vpack.c.b16 %v8594, %v8587
  %v9729 = vpack.c.b16 %v8602, %v8595
  %v9730 = vpack.c.b16 %v8603, %v8596
  %v9731 = vpack.c.b16 %v8604, %v8597
  %v9732 = vpack.c.b16 %v8605, %v8598
  %v9733 = vpack.c.b16 %v8606, %v8599
  %v9734 = vpack.c.b16 %v8607, %v8600
  %v9735 = vpack.c.b16 %v8608, %v8601
  %v9736 = vpack.c.b16 %v8616, %v8609
  %v9737 = vpack.c.b16 %v8617, %v8610
  %v9738 = vpack.c.b16 %v8618, %v8611
  %v9739 = vpack.c.b16 %v8619, %v8612
  %v9740 = vpack.c.b16 %v8620, %v8613
  %v9741 = vpack.c.b16 %v8621, %v8614
  %v9742 = vpack.c.b16 %v8622, %v8615
  %v9743 = vpack.c.b16 %v8630, %v8623
  %v9744 = vpack.c.b16 %v8631, %v8624
  %v9745 = vpack.c.b16 %v8632, %v8625
  %v9746 = vpack.c.b16 %v8633, %v8626
  %v9747 = vpack.c.b16 %v8634, %v8627
  %v9748 = vpack.c.b16 %v8635, %v8628
  %v9749 = vpack.c.b16 %v8636, %v8629
  %v9750 = vpack.c.b16 %v8644, %v8637
  %v9751 = vpack.c.b16 %v8645, %v8638
  %v9752 = vpack.c.b16 %v8646, %v8639
  %v9753 = vpack.c.b16 %v8647, %v8640
  %v9754 = vpack.c.b16 %v8648, %v8641
  %v9755 = vpack.c.b16 %v8649, %v8642
  %v9756 = vpack.c.b16 %v8650, %v8643
  %v9757 = vpack.c.b16 %v8658, %v8651
  %v9758 = vpack.c.b16 %v8659, %v8652
  %v9759 = vpack.c.b16 %v8660, %v8653
  %v9760 = vpack.c.b16 %v8661, %v8654
  %v9761 = vpack.c.b16 %v8662, %v8655
  %v9762 = vpack.c.b16 %v8663, %v8656
  %v9763 = vpack.c.b16 %v8664, %v8657
  %v9764 = vpack.c.b16 %v8672, %v8665
  %v9765 = vpack.c.b16 %v8673, %v8666
  %v9766 = vpack.c.b16 %v8674, %v8667
  %v9767 = vpack.c.b16 %v8675, %v8668
  %v9768 = vpack.c.b16 %v8676, %v8669
  %v9769 = vpack.c.b16 %v8677, %v8670
  %v9770 = vpack.c.b16 %v8678, %v8671
  %v9771 = vpack.c.b16 %v8686, %v8679
  %v9772 = vpack.c.b16 %v8687, %v8680
  %v9773 = vpack.c.b16 %v8688, %v8681
  %v9774 = vpack.c.b16 %v8689, %v8682
  %v9775 = vpack.c.b16 %v8690, %v8683
  %v9776 = vpack.c.b16 %v8691, %v8684
  %v9777 = vpack.c.b16 %v8692, %v8685
  %v9778 = vpack.c.b16 %v8700, %v8693
  %v9779 = vpack.c.b16 %v8701, %v8694
  %v9780 = vpack.c.b16 %v8702, %v8695
  %v9781 = vpack.c.b16 %v8703, %v8696
  %v9782 = vpack.c.b16 %v8704, %v8697
  %v9783 = vpack.c.b16 %v8705, %v8698
  %v9784 = vpack.c.b16 %v8706, %v8699
  %v9785 = vpack.c.b16 %v8714, %v8707
  %v9786 = vpack.c.b16 %v8715, %v8708
  %v9787 = vpack.c.b16 %v8716, %v8709
  %v9788 = vpack.c.b16 %v8717, %v8710
  %v9789 = vpack.c.b16 %v8718, %v8711
  %v9790 = vpack.c.b16 %v8719, %v8712
  %v9791 = vpack.c.b16 %v8720, %v8713
  %v9792 = vpack.c.b16 %v8728, %v8721
  %v9793 = vpack.c.b16 %v8729, %v8722
  %v9794 = vpack.c.b16 %v8730, %v8723
  %v9795 = vpack.c.b16 %v8731, %v8724
  %v9796 = vpack.c.b16 %v8732, %v8725
  %v9797 = vpack.c.b16 %v8733, %v8726
  %v9798 = vpack.c.b16 %v8734, %v8727
  %v9799 = vpack.c.b16 %v8742, %v8735
  %v9800 = vpack.c.b16 %v8743, %v8736
  %v9801 = vpack.c.b16 %v8744, %v8737
  %v9802 = vpack.c.b16 %v8745, %v8738
  %v9803 = vpack.c.b16 %v8746, %v8739
  %v9804 = vpack.c.b16 %v8747, %v8740
  %v9805 = vpack.c.b16 %v8748, %v8741
  %v9806 = vpack.c.b16 %v8756, %v8749
  %v9807 = vpack.c.b16 %v8757, %v8750
  %v9808 = vpack.c.b16 %v8758, %v8751
  %v9809 = vpack.c.b16 %v8759, %v8752
  %v9810 = vpack.c.b16 %v8760, %v8753
  %v9811 = vpack.c.b16 %v8761, %v8754
  %v9812 = vpack.c.b16 %v8762, %v8755
  %v9813 = vpack.c.b16 %v8770, %v8763
  %v9814 = vpack.c.b16 %v8771, %v8764
  %v9815 = vpack.c.b16 %v8772, %v8765
  %v9816 = vpack.c.b16 %v8773, %v8766
  %v9817 = vpack.c.b16 %v8774, %v8767
  %v9818 = vpack.c.b16 %v8775, %v8768
  %v9819 = vpack.c.b16 %v8776, %v8769
  %v9820 = vpack.c.b16 %v8784, %v8777
  %v9821 = vpack.c.b16 %v8785, %v8778
  %v9822 = vpack.c.b16 %v8786, %v8779
  %v9823 = vpack.c.b16 %v8787, %v8780
  %v9824 = vpack.c.b16 %v8788, %v8781
  %v9825 = vpack.c.b16 %v8789, %v8782
  %v9826 = vpack.c.b16 %v8790, %v8783
  %v9827 = vpack.c.b16 %v8798, %v8791
  %v9828 = vpack.c.b16 %v8799, %v8792
  %v9829 = vpack.c.b16 %v8800, %v8793
  %v9830 = vpack.c.b16 %v8801, %v8794
  %v9831 = vpack.c.b16 %v8802, %v8795
  %v9832 = vpack.c.b16 %v8803, %v8796
  %v9833 = vpack.c.b16 %v8804, %v8797
  %v9834 = vpack.c.b16 %v8812, %v8805
  %v9835 = vpack.c.b16 %v8813, %v8806
  %v9836 = vpack.c.b16 %v8814, %v8807
  %v9837 = vpack.c.b16 %v8815, %v8808
  %v9838 = vpack.c.b16 %v8816, %v8809
  %v9839 = vpack.c.b16 %v8817, %v8810
  %v9840 = vpack.c.b16 %v8818, %v8811
  %v9841 = vpack.c.b16 %v8826, %v8819
  %v9842 = vpack.c.b16 %v8827, %v8820
  %v9843 = vpack.c.b16 %v8828, %v8821
  %v9844 = vpack.c.b16 %v8829, %v8822
  %v9845 = vpack.c.b16 %v8830, %v8823
  %v9846 = vpack.c.b16 %v8831, %v8824
  %v9847 = vpack.c.b16 %v8832, %v8825
  %v9848 = vpack.c.b16 %v8840, %v8833
  %v9849 = vpack.c.b16 %v8841, %v8834
  %v9850 = vpack.c.b16 %v8842, %v8835
  %v9851 = vpack.c.b16 %v8843, %v8836
  %v9852 = vpack.c.b16 %v8844, %v8837
  %v9853 = vpack.c.b16 %v8845, %v8838
  %v9854 = vpack.c.b16 %v8846, %v8839
  %v9855 = vpack.c.b16 %v8854, %v8847
  %v9856 = vpack.c.b16 %v8855, %v8848
  %v9857 = vpack.c.b16 %v8856, %v8849
  %v9858 = vpack.c.b16 %v8857, %v8850
  %v9859 = vpack.c.b16 %v8858, %v8851
  %v9860 = vpack.c.b16 %v8859, %v8852
  %v9861 = vpack.c.b16 %v8860, %v8853
  %v9862 = vpack.c.b16 %v8868, %v8861
  %v9863 = vpack.c.b16 %v8869, %v8862
  %v9864 = vpack.c.b16 %v8870, %v8863
  %v9865 = vpack.c.b16 %v8871, %v8864
  %v9866 = vpack.c.b16 %v8872, %v8865
  %v9867 = vpack.c.b16 %v8873, %v8866
  %v9868 = vpack.c.b16 %v8874, %v8867
  %v9869 = vpack.c.b16 %v8882, %v8875
  %v9870 = vpack.c.b16 %v8883, %v8876
  %v9871 = vpack.c.b16 %v8884, %v8877
  %v9872 = vpack.c.b16 %v8885, %v8878
  %v9873 = vpack.c.b16 %v8886, %v8879
  %v9874 = vpack.c.b16 %v8887, %v8880
  %v9875 = vpack.c.b16 %v8888, %v8881
  %v9876 = vpack.c.b16 %v8896, %v8889
  %v9877 = vpack.c.b16 %v8897, %v8890
  %v9878 = vpack.c.b16 %v8898, %v8891
  %v9879 = vpack.c.b16 %v8899, %v8892
  %v9880 = vpack.c.b16 %v8900, %v8893
  %v9881 = vpack.c.b16 %v8901, %v8894
  %v9882 = vpack.c.b16 %v8902, %v8895
  %v9883 = vpack.c.b16 %v8910, %v8903
  %v9884 = vpack.c.b16 %v8911, %v8904
  %v9885 = vpack.c.b16 %v8912, %v8905
  %v9886 = vpack.c.b16 %v8913, %v8906
  %v9887 = vpack.c.b16 %v8914, %v8907
  %v9888 = vpack.c.b16 %v8915, %v8908
  %v9889 = vpack.c.b16 %v8916, %v8909
  %v9890 = vpack.c.b16 %v8924, %v8917
  %v9891 = vpack.c.b16 %v8925, %v8918
  %v9892 = vpack.c.b16 %v8926, %v8919
  %v9893 = vpack.c.b16 %v8927, %v8920
  %v9894 = vpack.c.b16 %v8928, %v8921
  %v9895 = vpack.c.b16 %v8929, %v8922
  %v9896 = vpack.c.b16 %v8930, %v8923
  %v9897 = vpack.c.b16 %v8938, %v8931
  %v9898 = vpack.c.b16 %v8939, %v8932
  %v9899 = vpack.c.b16 %v8940, %v8933
  %v9900 = vpack.c.b16 %v8941, %v8934
  %v9901 = vpack.c.b16 %v8942, %v8935
  %v9902 = vpack.c.b16 %v8943, %v8936
  %v9903 = vpack.c.b16 %v8944, %v8937
  %v9904 = vpack.c.b16 %v8952, %v8945
  %v9905 = vpack.c.b16 %v8953, %v8946
  %v9906 = vpack.c.b16 %v8954, %v8947
  %v9907 = vpack.c.b16 %v8955, %v8948
  %v9908 = vpack.c.b16 %v8956, %v8949
  %v9909 = vpack.c.b16 %v8957, %v8950
  %v9910 = vpack.c.b16 %v8958, %v8951
  %v9911 = vpack.c.b16 %v8966, %v8959
  %v9912 = vpack.c.b16 %v8967, %v8960
  %v9913 = vpack.c.b16 %v8968, %v8961
  %v9914 = vpack.c.b16 %v8969, %v8962
  %v9915 = vpack.c.b16 %v8970, %v8963
  %v9916 = vpack.c.b16 %v8971, %v8964
  %v9917 = vpack.c.b16 %v8972, %v8965
  %v9918 = vpack.c.b16 %v8980, %v8973
  %v9919 = vpack.c.b16 %v8981, %v8974
  %v9920 = vpack.c.b16 %v8982, %v8975
  %v9921 = vpack.c.b16 %v8983, %v8976
  %v9922 = vpack.c.b16 %v8984, %v8977
  %v9923 = vpack.c.b16 %v8985, %v8978
  %v9924 = vpack.c.b16 %v8986, %v8979
  %v9925 = vpack.c.b16 %v8994, %v8987
  %v9926 = vpack.c.b16 %v8995, %v8988
  %v9927 = vpack.c.b16 %v8996, %v8989
  %v9928 = vpack.c.b16 %v8997, %v8990
  %v9929 = vpack.c.b16 %v8998, %v8991
  %v9930 = vpack.c.b16 %v8999, %v8992
  %v9931 = vpack.c.b16 %v9000, %v8993
  %v9932 = vpack.c.b16 %v9008, %v9001
  %v9933 = vpack.c.b16 %v9009, %v9002
  %v9934 = vpack.c.b16 %v9010, %v9003
  %v9935 = vpack.c.b16 %v9011, %v9004
  %v9936 = vpack.c.b16 %v9012, %v9005
  %v9937 = vpack.c.b16 %v9013, %v9006
  %v9938 = vpack.c.b16 %v9014, %v9007
  %v9939 = vpack.c.b16 %v9022, %v9015
  %v9940 = vpack.c.b16 %v9023, %v9016
  %v9941 = vpack.c.b16 %v9024, %v9017
  %v9942 = vpack.c.b16 %v9025, %v9018
  %v9943 = vpack.c.b16 %v9026, %v9019
  %v9944 = vpack.c.b16 %v9027, %v9020
  %v9945 = vpack.c.b16 %v9028, %v9021
  %v9946 = vpack.c.b16 %v9036, %v9029
  %v9947 = vpack.c.b16 %v9037, %v9030
  %v9948 = vpack.c.b16 %v9038, %v9031
  %v9949 = vpack.c.b16 %v9039, %v9032
  %v9950 = vpack.c.b16 %v9040, %v9033
  %v9951 = vpack.c.b16 %v9041, %v9034
  %v9952 = vpack.c.b16 %v9042, %v9035
  %v9953 = vpack.c.b16 %v9050, %v9043
  %v9954 = vpack.c.b16 %v9051, %v9044
  %v9955 = vpack.c.b16 %v9052, %v9045
  %v9956 = vpack.c.b16 %v9053, %v9046
  %v9957 = vpack.c.b16 %v9054, %v9047
  %v9958 = vpack.c.b16 %v9055, %v9048
  %v9959 = vpack.c.b16 %v9056, %v9049
  %v9960 = vpack.c.b16 %v9064, %v9057
  %v9961 = vpack.c.b16 %v9065, %v9058
  %v9962 = vpack.c.b16 %v9066, %v9059
  %v9963 = vpack.c.b16 %v9067, %v9060
  %v9964 = vpack.c.b16 %v9068, %v9061
  %v9965 = vpack.c.b16 %v9069, %v9062
  %v9966 = vpack.c.b16 %v9070, %v9063
  %v9967 = vpack.c.b16 %v9078, %v9071
  %v9968 = vpack.c.b16 %v9079, %v9072
  %v9969 = vpack.c.b16 %v9080, %v9073
  %v9970 = vpack.c.b16 %v9081, %v9074
  %v9971 = vpack.c.b16 %v9082, %v9075
  %v9972 = vpack.c.b16 %v9083, %v9076
  %v9973 = vpack.c.b16 %v9084, %v9077
  %v9974 = vpack.c.b16 %v9092, %v9085
  %v9975 = vpack.c.b16 %v9093, %v9086
  %v9976 = vpack.c.b16 %v9094, %v9087
  %v9977 = vpack.c.b16 %v9095, %v9088
  %v9978 = vpack.c.b16 %v9096, %v9089
  %v9979 = vpack.c.b16 %v9097, %v9090
  %v9980 = vpack.c.b16 %v9098, %v9091
  %v9981 = vpack.c.b16 %v9106, %v9099
  %v9982 = vpack.c.b16 %v9107, %v9100
  %v9983 = vpack.c.b16 %v9108, %v9101
  %v9984 = vpack.c.b16 %v9109, %v9102
  %v9985 = vpack.c.b16 %v9110, %v9103
  %v9986 = vpack.c.b16 %v9111, %v9104
  %v9987 = vpack.c.b16 %v9112, %v9105
  %v9988 = vpack.c.b16 %v9120, %v9113
  %v9989 = vpack.c.b16 %v9121, %v9114
  %v9990 = vpack.c.b16 %v9122, %v9115
  %v9991 = vpack.c.b16 %v9123, %v9116
  %v9992 = vpack.c.b16 %v9124, %v9117
  %v9993 = vpack.c.b16 %v9125, %v9118
  %v9994 = vpack.c.b16 %v9126, %v9119
  %v9995 = vpack.c.b16 %v9134, %v9127
  %v9996 = vpack.c.b16 %v9135, %v9128
  %v9997 = vpack.c.b16 %v9136, %v9129
  %v9998 = vpack.c.b16 %v9137, %v9130
  %v9999 = vpack.c.b16 %v9138, %v9131
  %v10000 = vpack.c.b16 %v9139, %v9132
  %v10001 = vpack.c.b16 %v9140, %v9133
  %v10002 = vpack.c.b16 %v9148, %v9141
  %v10003 = vpack.c.b16 %v9149, %v9142
  %v10004 = vpack.c.b16 %v9150, %v9143
  %v10005 = vpack.c.b16 %v9151, %v9144
  %v10006 = vpack.c.b16 %v9152, %v9145
  %v10007 = vpack.c.b16 %v9153, %v9146
  %v10008 = vpack.c.b16 %v9154, %v9147
  %v10009 = vpack.c.b16 %v9162, %v9155
  %v10010 = vpack.c.b16 %v9163, %v9156
  %v10011 = vpack.c.b16 %v9164, %v9157
  %v10012 = vpack.c.b16 %v9165, %v9158
  %v10013 = vpack.c.b16 %v9166, %v9159
  %v10014 = vpack.c.b16 %v9167, %v9160
  %v10015 = vpack.c.b16 %v9168, %v9161
  %v10016 = vpack.c.b16 %v9176, %v9169
  %v10017 = vpack.c.b16 %v9177, %v9170
  %v10018 = vpack.c.b16 %v9178, %v9171
  %v10019 = vpack.c.b16 %v9179, %v9172
  %v10020 = vpack.c.b16 %v9180, %v9173
  %v10021 = vpack.c.b16 %v9181, %v9174
  %v10022 = vpack.c.b16 %v9182, %v9175
  %v10023 = vpack.c.b16 %v9190, %v9183
  %v10024 = vpack.c.b16 %v9191, %v9184
  %v10025 = vpack.c.b16 %v9192, %v9185
  %v10026 = vpack.c.b16 %v9193, %v9186
  %v10027 = vpack.c.b16 %v9194, %v9187
  %v10028 = vpack.c.b16 %v9195, %v9188
  %v10029 = vpack.c.b16 %v9196, %v9189
  %v10030 = vpack.c.b16 %v9204, %v9197
  %v10031 = vpack.c.b16 %v9205, %v9198
  %v10032 = vpack.c.b16 %v9206, %v9199
  %v10033 = vpack.c.b16 %v9207, %v9200
  %v10034 = vpack.c.b16 %v9208, %v9201
  %v10035 = vpack.c.b16 %v9209, %v9202
  %v10036 = vpack.c.b16 %v9210, %v9203
  %v10037 = vpack.c.b16 %v9218, %v9211
  %v10038 = vpack.c.b16 %v9219, %v9212
  %v10039 = vpack.c.b16 %v9220, %v9213
  %v10040 = vpack.c.b16 %v9221, %v9214
  %v10041 = vpack.c.b16 %v9222, %v9215
  %v10042 = vpack.c.b16 %v9223, %v9216
  %v10043 = vpack.c.b16 %v9224, %v9217
  %v10044 = vpack.c.b16 %v9232, %v9225
  %v10045 = vpack.c.b16 %v9233, %v9226
  %v10046 = vpack.c.b16 %v9234, %v9227
  %v10047 = vpack.c.b16 %v9235, %v9228
  %v10048 = vpack.c.b16 %v9236, %v9229
  %v10049 = vpack.c.b16 %v9237, %v9230
  %v10050 = vpack.c.b16 %v9238, %v9231
  %v10051 = vpack.c.b16 %v9246, %v9239
  %v10052 = vpack.c.b16 %v9247, %v9240
  %v10053 = vpack.c.b16 %v9248, %v9241
  %v10054 = vpack.c.b16 %v9249, %v9242
  %v10055 = vpack.c.b16 %v9250, %v9243
  %v10056 = vpack.c.b16 %v9251, %v9244
  %v10057 = vpack.c.b16 %v9252, %v9245
  %v10058 = vpack.c.b16 %v9260, %v9253
  %v10059 = vpack.c.b16 %v9261, %v9254
  %v10060 = vpack.c.b16 %v9262, %v9255
  %v10061 = vpack.c.b16 %v9263, %v9256
  %v10062 = vpack.c.b16 %v9264, %v9257
  %v10063 = vpack.c.b16 %v9265, %v9258
  %v10064 = vpack.c.b16 %v9266, %v9259
  %v10065 = vpack.c.b16 %v9274, %v9267
  %v10066 = vpack.c.b16 %v9275, %v9268
  %v10067 = vpack.c.b16 %v9276, %v9269
  %v10068 = vpack.c.b16 %v9277, %v9270
  %v10069 = vpack.c.b16 %v9278, %v9271
  %v10070 = vpack.c.b16 %v9279, %v9272
  %v10071 = vpack.c.b16 %v9280, %v9273
  %v10072 = vpack.c.b16 %v9288, %v9281
  %v10073 = vpack.c.b16 %v9289, %v9282
  %v10074 = vpack.c.b16 %v9290, %v9283
  %v10075 = vpack.c.b16 %v9291, %v9284
  %v10076 = vpack.c.b16 %v9292, %v9285
  %v10077 = vpack.c.b16 %v9293, %v9286
  %v10078 = vpack.c.b16 %v9294, %v9287
  %v10079 = vpack.c.b16 %v9302, %v9295
  %v10080 = vpack.c.b16 %v9303, %v9296
  %v10081 = vpack.c.b16 %v9304, %v9297
  %v10082 = vpack.c.b16 %v9305, %v9298
  %v10083 = vpack.c.b16 %v9306, %v9299
  %v10084 = vpack.c.b16 %v9307, %v9300
  %v10085 = vpack.c.b16 %v9308, %v9301
  %v10086 = vpack.c.b16 %v9316, %v9309
  %v10087 = vpack.c.b16 %v9317, %v9310
  %v10088 = vpack.c.b16 %v9318, %v9311
  %v10089 = vpack.c.b16 %v9319, %v9312
  %v10090 = vpack.c.b16 %v9320, %v9313
  %v10091 = vpack.c.b16 %v9321, %v9314
  %v10092 = vpack.c.b16 %v9322, %v9315
  %v10093 = vpack.c.b16 %v9330, %v9323
  %v10094 = vpack.c.b16 %v9331, %v9324
  %v10095 = vpack.c.b16 %v9332, %v9325
  %v10096 = vpack.c.b16 %v9333, %v9326
  %v10097 = vpack.c.b16 %v9334, %v9327
  %v10098 = vpack.c.b16 %v9335, %v9328
  %v10099 = vpack.c.b16 %v9336, %v9329
  %v10100 = vpack.c.b16 %v9344, %v9337
  %v10101 = vpack.c.b16 %v9345, %v9338
  %v10102 = vpack.c.b16 %v9346, %v9339
  %v10103 = vpack.c.b16 %v9347, %v9340
  %v10104 = vpack.c.b16 %v9348, %v9341
  %v10105 = vpack.c.b16 %v9349, %v9342
  %v10106 = vpack.c.b16 %v9350, %v9343
  %v10107 = vpack.c.b16 %v9358, %v9351
  %v10108 = vpack.c.b16 %v9359, %v9352
  %v10109 = vpack.c.b16 %v9360, %v9353
  %v10110 = vpack.c.b16 %v9361, %v9354
  %v10111 = vpack.c.b16 %v9362, %v9355
  %v10112 = vpack.c.b16 %v9363, %v9356
  %v10113 = vpack.c.b16 %v9364, %v9357
  %v10114 = vpack.c.b16 %v9372, %v9365
  %v10115 = vpack.c.b16 %v9373, %v9366
  %v10116 = vpack.c.b16 %v9374, %v9367
  %v10117 = vpack.c.b16 %v9375, %v9368
  %v10118 = vpack.c.b16 %v9376, %v9369
  %v10119 = vpack.c.b16 %v9377, %v9370
  %v10120 = vpack.c.b16 %v9378, %v9371
  %v10121 = vpack.c.b16 %v9386, %v9379
  %v10122 = vpack.c.b16 %v9387, %v9380
  %v10123 = vpack.c.b16 %v9388, %v9381
  %v10124 = vpack.c.b16 %v9389, %v9382
  %v10125 = vpack.c.b16 %v9390, %v9383
  %v10126 = vpack.c.b16 %v9391, %v9384
  %v10127 = vpack.c.b16 %v9392, %v9385
  %v10128 = vpack.c.b16 %v9400, %v9393
  %v10129 = vpack.c.b16 %v9401, %v9394
  %v10130 = vpack.c.b16 %v9402, %v9395
  %v10131 = vpack.c.b16 %v9403, %v9396
  %v10132 = vpack.c.b16 %v9404, %v9397
  %v10133 = vpack.c.b16 %v9405, %v9398
  %v10134 = vpack.c.b16 %v9406, %v9399
  %v10135 = vpack.c.b16 %v9414, %v9407
  %v10136 = vpack.c.b16 %v9415, %v9408
  %v10137 = vpack.c.b16 %v9416, %v9409
  %v10138 = vpack.c.b16 %v9417, %v9410
  %v10139 = vpack.c.b16 %v9418, %v9411
  %v10140 = vpack.c.b16 %v9419, %v9412
  %v10141 = vpack.c.b16 %v9420, %v9413
  %v10142 = vpack.c.b16 %v9428, %v9421
  %v10143 = vpack.c.b16 %v9429, %v9422
  %v10144 = vpack.c.b16 %v9430, %v9423
  %v10145 = vpack.c.b16 %v9431, %v9424
  %v10146 = vpack.c.b16 %v9432, %v9425
  %v10147 = vpack.c.b16 %v9433, %v9426
  %v10148 = vpack.c.b16 %v9434, %v9427
  %v10149 = vpack.c.b16 %v9442, %v9435
  %v10150 = vpack.c.b16 %v9443, %v9436
  %v10151 = vpack.c.b16 %v9444, %v9437
  %v10152 = vpack.c.b16 %v9445, %v9438
  %v10153 = vpack.c.b16 %v9446, %v9439
  %v10154 = vpack.c.b16 %v9447, %v9440
  %v10155 = vpack.c.b16 %v9448, %v9441
  %v10156 = vpack.c.b16 %v9456, %v9449
  %v10157 = vpack.c.b16 %v9457, %v9450
  %v10158 = vpack.c.b16 %v9458, %v9451
  %v10159 = vpack.c.b16 %v9459, %v9452
  %v10160 = vpack.c.b16 %v9460, %v9453
  %v10161 = vpack.c.b16 %v9461, %v9454
  %v10162 = vpack.c.b16 %v9462, %v9455
  %v10163 = vpack.c.b16 %v9470, %v9463
  %v10164 = vpack.c.b16 %v9471, %v9464
  %v10165 = vpack.c.b16 %v9472, %v9465
  %v10166 = vpack.c.b16 %v9473, %v9466
  %v10167 = vpack.c.b16 %v9474, %v9467
  %v10168 = vpack.c.b16 %v9475, %v9468
  %v10169 = vpack.c.b16 %v9476, %v9469
  %v10170 = vpack.c.b16 %v9484, %v9477
  %v10171 = vpack.c.b16 %v9485, %v9478
  %v10172 = vpack.c.b16 %v9486, %v9479
  %v10173 = vpack.c.b16 %v9487, %v9480
  %v10174 = vpack.c.b16 %v9488, %v9481
  %v10175 = vpack.c.b16 %v9489, %v9482
  %v10176 = vpack.c.b16 %v9490, %v9483
  %v10864 = vsel %vm1007, %v6513, 0
  %10866 = vmatprep.subr.bf16.mxu0 %v9541
  %10867 = vmatpush1.bf16.msra.mxu0 %v9540
  %10868 = vmatprep.subr.bf16.mxu0 %v9534
  %10869 = vmatpush1.bf16.msra.mxu0 %v9533
  %10870 = vmatprep.subr.bf16.mxu0 %v9527
  %10871 = vmatpush1.bf16.msra.mxu0 %v9526
  %10872 = vmatprep.subr.bf16.mxu0 %v9520
  %10873 = vmatpush1.bf16.msra.mxu0 %v9519
  %10874 = vmatprep.subr.bf16.mxu0 %v9513
  %10875 = vmatpush1.bf16.msra.mxu0 %v9512
  %10876 = vmatprep.subr.bf16.mxu0 %v9506
  %10877 = vmatpush1.bf16.msra.mxu0 %v9505
  %10878 = vmatprep.subr.bf16.mxu0 %v9499
  %10879 = vmatpush1.bf16.msra.mxu0 %v9498
  %10880 = vmatprep.subr.bf16.mxu0 %v9492
  %10881 = vmatpush1.bf16.msra.mxu0 %v9491
  %10882 = vmatprep.subr.bf16.mxu0 %v9597
  %10883 = vmatpush2.bf16.msra.mxu0 %v9596
  %10884 = vmatprep.subr.bf16.mxu0 %v9590
  %10885 = vmatpush2.bf16.msra.mxu0 %v9589
  %10886 = vmatprep.subr.bf16.mxu0 %v9583
  %10887 = vmatpush2.bf16.msra.mxu0 %v9582
  %10888 = vmatprep.subr.bf16.mxu0 %v9576
  %10889 = vmatpush2.bf16.msra.mxu0 %v9575
  %10890 = vmatprep.subr.bf16.mxu0 %v9569
  %10891 = vmatpush2.bf16.msra.mxu0 %v9568
  %10892 = vmatprep.subr.bf16.mxu0 %v9562
  %10893 = vmatpush2.bf16.msra.mxu0 %v9561
  %10894 = vmatprep.subr.bf16.mxu0 %v9555
  %10895 = vmatpush2.bf16.msra.mxu0 %v9554
  %10896 = vmatprep.subr.bf16.mxu0 %v9548
  %10897 = vmatpush2.bf16.msra.mxu0 %v9547
  %10898 = vmatprep.mubr.bf16.mxu0 %v6502
  %10899 = vmatmul.mubr.bf16.gmra.mxu0 %v6501
  %v10900 = vpop.f32.mrf.mxu0
  %v10901 = vadd.f32 %v7303, %v10900
  %v10902 = vpop.f32.mrf.mxu0
  %v10903 = vadd.f32 %v7307, %v10902
  %v10904 = vpop.f32.mrf.mxu0
  %v10905 = vpop.f32.mrf.mxu0
  %10906 = vdwg.mxu0
  %10907 = vmatprep.subr.bf16.mxu0 %v9653
  %10908 = vmatpush1.bf16.msra.mxu0 %v9652
  %10909 = vmatprep.subr.bf16.mxu0 %v9646
  %10910 = vmatpush1.bf16.msra.mxu0 %v9645
  %10911 = vmatprep.subr.bf16.mxu0 %v9639
  %10912 = vmatpush1.bf16.msra.mxu0 %v9638
  %10913 = vmatprep.subr.bf16.mxu0 %v9632
  %10914 = vmatpush1.bf16.msra.mxu0 %v9631
  %10915 = vmatprep.subr.bf16.mxu0 %v9625
  %10916 = vmatpush1.bf16.msra.mxu0 %v9624
  %10917 = vmatprep.subr.bf16.mxu0 %v9618
  %10918 = vmatpush1.bf16.msra.mxu0 %v9617
  %10919 = vmatprep.subr.bf16.mxu0 %v9611
  %10920 = vmatpush1.bf16.msra.mxu0 %v9610
  %10921 = vmatprep.subr.bf16.mxu0 %v9604
  %10922 = vmatpush1.bf16.msra.mxu0 %v9603
  %10923 = vmatprep.subr.bf16.mxu0 %v9709
  %10924 = vmatpush2.bf16.msra.mxu0 %v9708
  %10925 = vmatprep.subr.bf16.mxu0 %v9702
  %10926 = vmatpush2.bf16.msra.mxu0 %v9701
  %10927 = vmatprep.subr.bf16.mxu0 %v9695
  %10928 = vmatpush2.bf16.msra.mxu0 %v9694
  %10929 = vmatprep.subr.bf16.mxu0 %v9688
  %10930 = vmatpush2.bf16.msra.mxu0 %v9687
  %10931 = vmatprep.subr.bf16.mxu0 %v9681
  %10932 = vmatpush2.bf16.msra.mxu0 %v9680
  %10933 = vmatprep.subr.bf16.mxu0 %v9674
  %10934 = vmatpush2.bf16.msra.mxu0 %v9673
  %10935 = vmatprep.subr.bf16.mxu0 %v9667
  %10936 = vmatpush2.bf16.msra.mxu0 %v9666
  %10937 = vmatprep.subr.bf16.mxu0 %v9660
  %10938 = vmatpush2.bf16.msra.mxu0 %v9659
  %10939 = vmatprep.mubr.bf16.mxu0 %v6504
  %10940 = vmatmul.mubr.bf16.gmra.mxu0 %v6503
  %v10941 = vpop.f32.mrf.mxu0
  %v10942 = vadd.f32 %v10901, %v10941
  %v10943 = vpop.f32.mrf.mxu0
  %v10944 = vadd.f32 %v10903, %v10943
  %v10945 = vpop.f32.mrf.mxu0
  %v10946 = vpop.f32.mrf.mxu0
  %10947 = vdwg.mxu0
  %10948 = vmatprep.subr.bf16.mxu0 %v9765
  %10949 = vmatpush1.bf16.msra.mxu0 %v9764
  %10950 = vmatprep.subr.bf16.mxu0 %v9758
  %10951 = vmatpush1.bf16.msra.mxu0 %v9757
  %10952 = vmatprep.subr.bf16.mxu0 %v9751
  %10953 = vmatpush1.bf16.msra.mxu0 %v9750
  %10954 = vmatprep.subr.bf16.mxu0 %v9744
  %10955 = vmatpush1.bf16.msra.mxu0 %v9743
  %10956 = vmatprep.subr.bf16.mxu0 %v9737
  %10957 = vmatpush1.bf16.msra.mxu0 %v9736
  %10958 = vmatprep.subr.bf16.mxu0 %v9730
  %10959 = vmatpush1.bf16.msra.mxu0 %v9729
  %10960 = vmatprep.subr.bf16.mxu0 %v9723
  %10961 = vmatpush1.bf16.msra.mxu0 %v9722
  %10962 = vmatprep.subr.bf16.mxu0 %v9716
  %10963 = vmatpush1.bf16.msra.mxu0 %v9715
  %10964 = vmatprep.subr.bf16.mxu0 %v9821
  %10965 = vmatpush2.bf16.msra.mxu0 %v9820
  %10966 = vmatprep.subr.bf16.mxu0 %v9814
  %10967 = vmatpush2.bf16.msra.mxu0 %v9813
  %10968 = vmatprep.subr.bf16.mxu0 %v9807
  %10969 = vmatpush2.bf16.msra.mxu0 %v9806
  %10970 = vmatprep.subr.bf16.mxu0 %v9800
  %10971 = vmatpush2.bf16.msra.mxu0 %v9799
  %10972 = vmatprep.subr.bf16.mxu0 %v9793
  %10973 = vmatpush2.bf16.msra.mxu0 %v9792
  %10974 = vmatprep.subr.bf16.mxu0 %v9786
  %10975 = vmatpush2.bf16.msra.mxu0 %v9785
  %10976 = vmatprep.subr.bf16.mxu0 %v9779
  %10977 = vmatpush2.bf16.msra.mxu0 %v9778
  %10978 = vmatprep.subr.bf16.mxu0 %v9772
  %10979 = vmatpush2.bf16.msra.mxu0 %v9771
  %10980 = vmatprep.mubr.bf16.mxu0 %v6506
  %10981 = vmatmul.mubr.bf16.gmra.mxu0 %v6505
  %v10982 = vpop.f32.mrf.mxu0
  %v10983 = vadd.f32 %v10942, %v10982
  %v10984 = vpop.f32.mrf.mxu0
  %v10985 = vadd.f32 %v10944, %v10984
  %v10986 = vpop.f32.mrf.mxu0
  %v10987 = vpop.f32.mrf.mxu0
  %10988 = vdwg.mxu0
  %10989 = vmatprep.subr.bf16.mxu0 %v9877
  %10990 = vmatpush1.bf16.msra.mxu0 %v9876
  %10991 = vmatprep.subr.bf16.mxu0 %v9870
  %10992 = vmatpush1.bf16.msra.mxu0 %v9869
  %10993 = vmatprep.subr.bf16.mxu0 %v9863
  %10994 = vmatpush1.bf16.msra.mxu0 %v9862
  %10995 = vmatprep.subr.bf16.mxu0 %v9856
  %10996 = vmatpush1.bf16.msra.mxu0 %v9855
  %10997 = vmatprep.subr.bf16.mxu0 %v9849
  %10998 = vmatpush1.bf16.msra.mxu0 %v9848
  %10999 = vmatprep.subr.bf16.mxu0 %v9842
  %11000 = vmatpush1.bf16.msra.mxu0 %v9841
  %11001 = vmatprep.subr.bf16.mxu0 %v9835
  %11002 = vmatpush1.bf16.msra.mxu0 %v9834
  %11003 = vmatprep.subr.bf16.mxu0 %v9828
  %11004 = vmatpush1.bf16.msra.mxu0 %v9827
  %11005 = vmatprep.subr.bf16.mxu0 %v9933
  %11006 = vmatpush2.bf16.msra.mxu0 %v9932
  %11007 = vmatprep.subr.bf16.mxu0 %v9926
  %11008 = vmatpush2.bf16.msra.mxu0 %v9925
  %11009 = vmatprep.subr.bf16.mxu0 %v9919
  %11010 = vmatpush2.bf16.msra.mxu0 %v9918
  %11011 = vmatprep.subr.bf16.mxu0 %v9912
  %11012 = vmatpush2.bf16.msra.mxu0 %v9911
  %11013 = vmatprep.subr.bf16.mxu0 %v9905
  %11014 = vmatpush2.bf16.msra.mxu0 %v9904
  %11015 = vmatprep.subr.bf16.mxu0 %v9898
  %11016 = vmatpush2.bf16.msra.mxu0 %v9897
  %11017 = vmatprep.subr.bf16.mxu0 %v9891
  %11018 = vmatpush2.bf16.msra.mxu0 %v9890
  %11019 = vmatprep.subr.bf16.mxu0 %v9884
  %11020 = vmatpush2.bf16.msra.mxu0 %v9883
  %11021 = vmatprep.mubr.bf16.mxu0 %v6508
  %11022 = vmatmul.mubr.bf16.gmra.mxu0 %v6507
  %v11023 = vpop.f32.mrf.mxu0
  %v11024 = vadd.f32 %v10983, %v11023
  %v11025 = vpop.f32.mrf.mxu0
  %v11026 = vadd.f32 %v10985, %v11025
  %v11027 = vpop.f32.mrf.mxu0
  %v11028 = vpop.f32.mrf.mxu0
  %11029 = vdwg.mxu0
  %11030 = vmatprep.subr.bf16.mxu0 %v9989
  %11031 = vmatpush1.bf16.msra.mxu0 %v9988
  %11032 = vmatprep.subr.bf16.mxu0 %v9982
  %11033 = vmatpush1.bf16.msra.mxu0 %v9981
  %11034 = vmatprep.subr.bf16.mxu0 %v9975
  %11035 = vmatpush1.bf16.msra.mxu0 %v9974
  %11036 = vmatprep.subr.bf16.mxu0 %v9968
  %11037 = vmatpush1.bf16.msra.mxu0 %v9967
  %11038 = vmatprep.subr.bf16.mxu0 %v9961
  %11039 = vmatpush1.bf16.msra.mxu0 %v9960
  %11040 = vmatprep.subr.bf16.mxu0 %v9954
  %11041 = vmatpush1.bf16.msra.mxu0 %v9953
  %11042 = vmatprep.subr.bf16.mxu0 %v9947
  %11043 = vmatpush1.bf16.msra.mxu0 %v9946
  %11044 = vmatprep.subr.bf16.mxu0 %v9940
  %11045 = vmatpush1.bf16.msra.mxu0 %v9939
  %11046 = vmatprep.subr.bf16.mxu0 %v10045
  %11047 = vmatpush2.bf16.msra.mxu0 %v10044
  %11048 = vmatprep.subr.bf16.mxu0 %v10038
  %11049 = vmatpush2.bf16.msra.mxu0 %v10037
  %11050 = vmatprep.subr.bf16.mxu0 %v10031
  %11051 = vmatpush2.bf16.msra.mxu0 %v10030
  %11052 = vmatprep.subr.bf16.mxu0 %v10024
  %11053 = vmatpush2.bf16.msra.mxu0 %v10023
  %11054 = vmatprep.subr.bf16.mxu0 %v10017
  %11055 = vmatpush2.bf16.msra.mxu0 %v10016
  %11056 = vmatprep.subr.bf16.mxu0 %v10010
  %11057 = vmatpush2.bf16.msra.mxu0 %v10009
  %11058 = vmatprep.subr.bf16.mxu0 %v10003
  %11059 = vmatpush2.bf16.msra.mxu0 %v10002
  %11060 = vmatprep.subr.bf16.mxu0 %v9996
  %11061 = vmatpush2.bf16.msra.mxu0 %v9995
  %11062 = vmatprep.mubr.bf16.mxu0 %v6510
  %11063 = vmatmul.mubr.bf16.gmra.mxu0 %v6509
  %v11064 = vpop.f32.mrf.mxu0
  %v11065 = vadd.f32 %v11024, %v11064
  %v11066 = vpop.f32.mrf.mxu0
  %v11067 = vadd.f32 %v11026, %v11066
  %v11068 = vpop.f32.mrf.mxu0
  %v11069 = vpop.f32.mrf.mxu0
  %11070 = vdwg.mxu0
  %11071 = vmatprep.subr.bf16.mxu0 %v10101
  %11072 = vmatpush1.bf16.msra.mxu0 %v10100
  %11073 = vmatprep.subr.bf16.mxu0 %v10094
  %11074 = vmatpush1.bf16.msra.mxu0 %v10093
  %11075 = vmatprep.subr.bf16.mxu0 %v10087
  %11076 = vmatpush1.bf16.msra.mxu0 %v10086
  %11077 = vmatprep.subr.bf16.mxu0 %v10080
  %11078 = vmatpush1.bf16.msra.mxu0 %v10079
  %11079 = vmatprep.subr.bf16.mxu0 %v10073
  %11080 = vmatpush1.bf16.msra.mxu0 %v10072
  %11081 = vmatprep.subr.bf16.mxu0 %v10066
  %11082 = vmatpush1.bf16.msra.mxu0 %v10065
  %11083 = vmatprep.subr.bf16.mxu0 %v10059
  %11084 = vmatpush1.bf16.msra.mxu0 %v10058
  %11085 = vmatprep.subr.bf16.mxu0 %v10052
  %11086 = vmatpush1.bf16.msra.mxu0 %v10051
  %11087 = vmatprep.subr.bf16.mxu0 %v10157
  %11088 = vmatpush2.bf16.msra.mxu0 %v10156
  %11089 = vmatprep.subr.bf16.mxu0 %v10150
  %11090 = vmatpush2.bf16.msra.mxu0 %v10149
  %11091 = vmatprep.subr.bf16.mxu0 %v10143
  %11092 = vmatpush2.bf16.msra.mxu0 %v10142
  %11093 = vmatprep.subr.bf16.mxu0 %v10136
  %11094 = vmatpush2.bf16.msra.mxu0 %v10135
  %11095 = vmatprep.subr.bf16.mxu0 %v10129
  %11096 = vmatpush2.bf16.msra.mxu0 %v10128
  %11097 = vmatprep.subr.bf16.mxu0 %v10122
  %11098 = vmatpush2.bf16.msra.mxu0 %v10121
  %11099 = vmatprep.subr.bf16.mxu0 %v10115
  %11100 = vmatpush2.bf16.msra.mxu0 %v10114
  %11101 = vmatprep.subr.bf16.mxu0 %v10108
  %11102 = vmatpush2.bf16.msra.mxu0 %v10107
  %11103 = vmatprep.mubr.bf16.mxu0 %v6512
  %11104 = vmatmul.mubr.bf16.gmra.mxu0 %v6511
  %v11105 = vpop.f32.mrf.mxu0
  %v11106 = vadd.f32 %v11065, %v11105
  %v11107 = vpop.f32.mrf.mxu0
  %v11108 = vadd.f32 %v11067, %v11107
  %v11109 = vpop.f32.mrf.mxu0
  %v11110 = vpop.f32.mrf.mxu0
  %11111 = vdwg.mxu0
  %11112 = vmatprep.subr.bf16.mxu0 0
  %11113 = vmatpush1.bf16.msra.mxu0 0
  %11114 = vmatprep.subr.bf16.mxu0 0
  %11115 = vmatpush1.bf16.msra.mxu0 0
  %11116 = vmatprep.subr.bf16.mxu0 0
  %11117 = vmatpush1.bf16.msra.mxu0 0
  %11118 = vmatprep.subr.bf16.mxu0 0
  %11119 = vmatpush1.bf16.msra.mxu0 0
  %11120 = vmatprep.subr.bf16.mxu0 0
  %11121 = vmatpush1.bf16.msra.mxu0 0
  %11122 = vmatprep.subr.bf16.mxu0 0
  %11123 = vmatpush1.bf16.msra.mxu0 0
  %11124 = vmatprep.subr.bf16.mxu0 %v10171
  %11125 = vmatpush1.bf16.msra.mxu0 %v10170
  %11126 = vmatprep.subr.bf16.mxu0 %v10164
  %11127 = vmatpush1.bf16.msra.mxu0 %v10163
  %11128 = vmatprep.subr.bf16.mxu0 0
  %11129 = vmatpush2.bf16.msra.mxu0 0
  %11130 = vmatprep.subr.bf16.mxu0 0
  %11131 = vmatpush2.bf16.msra.mxu0 0
  %11132 = vmatprep.subr.bf16.mxu0 0
  %11133 = vmatpush2.bf16.msra.mxu0 0
  %11134 = vmatprep.subr.bf16.mxu0 0
  %11135 = vmatpush2.bf16.msra.mxu0 0
  %11136 = vmatprep.subr.bf16.mxu0 0
  %11137 = vmatpush2.bf16.msra.mxu0 0
  %11138 = vmatprep.subr.bf16.mxu0 0
  %11139 = vmatpush2.bf16.msra.mxu0 0
  %11140 = vmatprep.subr.bf16.mxu0 0
  %11141 = vmatpush2.bf16.msra.mxu0 0
  %11142 = vmatprep.subr.bf16.mxu0 0
  %11143 = vmatpush2.bf16.msra.mxu0 0
  %11144 = vmatprep.mubr.bf16.mxu0 0
  %11145 = vmatmul.mubr.bf16.gmra.mxu0 %v10864
  %v11146 = vpop.f32.mrf.mxu0
  %v11147 = vadd.f32 %v11106, %v11146
  %v11148 = vpop.f32.mrf.mxu0
  %v11149 = vadd.f32 %v11108, %v11148
  %v11150 = vpop.f32.mrf.mxu0
  %v11151 = vpop.f32.mrf.mxu0
  %11152 = vdwg.mxu0
  %11153 = vmatprep.subr.bf16.mxu0 %v9543
  %11154 = vmatpush1.bf16.msra.mxu0 %v9542
  %11155 = vmatprep.subr.bf16.mxu0 %v9536
  %11156 = vmatpush1.bf16.msra.mxu0 %v9535
  %11157 = vmatprep.subr.bf16.mxu0 %v9529
  %11158 = vmatpush1.bf16.msra.mxu0 %v9528
  %11159 = vmatprep.subr.bf16.mxu0 %v9522
  %11160 = vmatpush1.bf16.msra.mxu0 %v9521
  %11161 = vmatprep.subr.bf16.mxu0 %v9515
  %11162 = vmatpush1.bf16.msra.mxu0 %v9514
  %11163 = vmatprep.subr.bf16.mxu0 %v9508
  %11164 = vmatpush1.bf16.msra.mxu0 %v9507
  %11165 = vmatprep.subr.bf16.mxu0 %v9501
  %11166 = vmatpush1.bf16.msra.mxu0 %v9500
  %11167 = vmatprep.subr.bf16.mxu0 %v9494
  %11168 = vmatpush1.bf16.msra.mxu0 %v9493
  %11169 = vmatprep.subr.bf16.mxu0 %v9599
  %11170 = vmatpush2.bf16.msra.mxu0 %v9598
  %11171 = vmatprep.subr.bf16.mxu0 %v9592
  %11172 = vmatpush2.bf16.msra.mxu0 %v9591
  %11173 = vmatprep.subr.bf16.mxu0 %v9585
  %11174 = vmatpush2.bf16.msra.mxu0 %v9584
  %11175 = vmatprep.subr.bf16.mxu0 %v9578
  %11176 = vmatpush2.bf16.msra.mxu0 %v9577
  %11177 = vmatprep.subr.bf16.mxu0 %v9571
  %11178 = vmatpush2.bf16.msra.mxu0 %v9570
  %11179 = vmatprep.subr.bf16.mxu0 %v9564
  %11180 = vmatpush2.bf16.msra.mxu0 %v9563
  %11181 = vmatprep.subr.bf16.mxu0 %v9557
  %11182 = vmatpush2.bf16.msra.mxu0 %v9556
  %11183 = vmatprep.subr.bf16.mxu0 %v9550
  %11184 = vmatpush2.bf16.msra.mxu0 %v9549
  %11185 = vmatprep.mubr.bf16.mxu0 %v6502
  %11186 = vmatmul.mubr.bf16.gmra.mxu0 %v6501
  %v11187 = vpop.f32.mrf.mxu0
  %v11188 = vadd.f32 %v7311, %v11187
  %v11189 = vpop.f32.mrf.mxu0
  %v11190 = vadd.f32 %v7315, %v11189
  %v11191 = vpop.f32.mrf.mxu0
  %v11192 = vpop.f32.mrf.mxu0
  %11193 = vdwg.mxu0
  %11194 = vmatprep.subr.bf16.mxu0 %v9655
  %11195 = vmatpush1.bf16.msra.mxu0 %v9654
  %11196 = vmatprep.subr.bf16.mxu0 %v9648
  %11197 = vmatpush1.bf16.msra.mxu0 %v9647
  %11198 = vmatprep.subr.bf16.mxu0 %v9641
  %11199 = vmatpush1.bf16.msra.mxu0 %v9640
  %11200 = vmatprep.subr.bf16.mxu0 %v9634
  %11201 = vmatpush1.bf16.msra.mxu0 %v9633
  %11202 = vmatprep.subr.bf16.mxu0 %v9627
  %11203 = vmatpush1.bf16.msra.mxu0 %v9626
  %11204 = vmatprep.subr.bf16.mxu0 %v9620
  %11205 = vmatpush1.bf16.msra.mxu0 %v9619
  %11206 = vmatprep.subr.bf16.mxu0 %v9613
  %11207 = vmatpush1.bf16.msra.mxu0 %v9612
  %11208 = vmatprep.subr.bf16.mxu0 %v9606
  %11209 = vmatpush1.bf16.msra.mxu0 %v9605
  %11210 = vmatprep.subr.bf16.mxu0 %v9711
  %11211 = vmatpush2.bf16.msra.mxu0 %v9710
  %11212 = vmatprep.subr.bf16.mxu0 %v9704
  %11213 = vmatpush2.bf16.msra.mxu0 %v9703
  %11214 = vmatprep.subr.bf16.mxu0 %v9697
  %11215 = vmatpush2.bf16.msra.mxu0 %v9696
  %11216 = vmatprep.subr.bf16.mxu0 %v9690
  %11217 = vmatpush2.bf16.msra.mxu0 %v9689
  %11218 = vmatprep.subr.bf16.mxu0 %v9683
  %11219 = vmatpush2.bf16.msra.mxu0 %v9682
  %11220 = vmatprep.subr.bf16.mxu0 %v9676
  %11221 = vmatpush2.bf16.msra.mxu0 %v9675
  %11222 = vmatprep.subr.bf16.mxu0 %v9669
  %11223 = vmatpush2.bf16.msra.mxu0 %v9668
  %11224 = vmatprep.subr.bf16.mxu0 %v9662
  %11225 = vmatpush2.bf16.msra.mxu0 %v9661
  %11226 = vmatprep.mubr.bf16.mxu0 %v6504
  %11227 = vmatmul.mubr.bf16.gmra.mxu0 %v6503
  %v11228 = vpop.f32.mrf.mxu0
  %v11229 = vadd.f32 %v11188, %v11228
  %v11230 = vpop.f32.mrf.mxu0
  %v11231 = vadd.f32 %v11190, %v11230
  %v11232 = vpop.f32.mrf.mxu0
  %v11233 = vpop.f32.mrf.mxu0
  %11234 = vdwg.mxu0
  %11235 = vmatprep.subr.bf16.mxu0 %v9767
  %11236 = vmatpush1.bf16.msra.mxu0 %v9766
  %11237 = vmatprep.subr.bf16.mxu0 %v9760
  %11238 = vmatpush1.bf16.msra.mxu0 %v9759
  %11239 = vmatprep.subr.bf16.mxu0 %v9753
  %11240 = vmatpush1.bf16.msra.mxu0 %v9752
  %11241 = vmatprep.subr.bf16.mxu0 %v9746
  %11242 = vmatpush1.bf16.msra.mxu0 %v9745
  %11243 = vmatprep.subr.bf16.mxu0 %v9739
  %11244 = vmatpush1.bf16.msra.mxu0 %v9738
  %11245 = vmatprep.subr.bf16.mxu0 %v9732
  %11246 = vmatpush1.bf16.msra.mxu0 %v9731
  %11247 = vmatprep.subr.bf16.mxu0 %v9725
  %11248 = vmatpush1.bf16.msra.mxu0 %v9724
  %11249 = vmatprep.subr.bf16.mxu0 %v9718
  %11250 = vmatpush1.bf16.msra.mxu0 %v9717
  %11251 = vmatprep.subr.bf16.mxu0 %v9823
  %11252 = vmatpush2.bf16.msra.mxu0 %v9822
  %11253 = vmatprep.subr.bf16.mxu0 %v9816
  %11254 = vmatpush2.bf16.msra.mxu0 %v9815
  %11255 = vmatprep.subr.bf16.mxu0 %v9809
  %11256 = vmatpush2.bf16.msra.mxu0 %v9808
  %11257 = vmatprep.subr.bf16.mxu0 %v9802
  %11258 = vmatpush2.bf16.msra.mxu0 %v9801
  %11259 = vmatprep.subr.bf16.mxu0 %v9795
  %11260 = vmatpush2.bf16.msra.mxu0 %v9794
  %11261 = vmatprep.subr.bf16.mxu0 %v9788
  %11262 = vmatpush2.bf16.msra.mxu0 %v9787
  %11263 = vmatprep.subr.bf16.mxu0 %v9781
  %11264 = vmatpush2.bf16.msra.mxu0 %v9780
  %11265 = vmatprep.subr.bf16.mxu0 %v9774
  %11266 = vmatpush2.bf16.msra.mxu0 %v9773
  %11267 = vmatprep.mubr.bf16.mxu0 %v6506
  %11268 = vmatmul.mubr.bf16.gmra.mxu0 %v6505
  %v11269 = vpop.f32.mrf.mxu0
  %v11270 = vadd.f32 %v11229, %v11269
  %v11271 = vpop.f32.mrf.mxu0
  %v11272 = vadd.f32 %v11231, %v11271
  %v11273 = vpop.f32.mrf.mxu0
  %v11274 = vpop.f32.mrf.mxu0
  %11275 = vdwg.mxu0
  %11276 = vmatprep.subr.bf16.mxu0 %v9879
  %11277 = vmatpush1.bf16.msra.mxu0 %v9878
  %11278 = vmatprep.subr.bf16.mxu0 %v9872
  %11279 = vmatpush1.bf16.msra.mxu0 %v9871
  %11280 = vmatprep.subr.bf16.mxu0 %v9865
  %11281 = vmatpush1.bf16.msra.mxu0 %v9864
  %11282 = vmatprep.subr.bf16.mxu0 %v9858
  %11283 = vmatpush1.bf16.msra.mxu0 %v9857
  %11284 = vmatprep.subr.bf16.mxu0 %v9851
  %11285 = vmatpush1.bf16.msra.mxu0 %v9850
  %11286 = vmatprep.subr.bf16.mxu0 %v9844
  %11287 = vmatpush1.bf16.msra.mxu0 %v9843
  %11288 = vmatprep.subr.bf16.mxu0 %v9837
  %11289 = vmatpush1.bf16.msra.mxu0 %v9836
  %11290 = vmatprep.subr.bf16.mxu0 %v9830
  %11291 = vmatpush1.bf16.msra.mxu0 %v9829
  %11292 = vmatprep.subr.bf16.mxu0 %v9935
  %11293 = vmatpush2.bf16.msra.mxu0 %v9934
  %11294 = vmatprep.subr.bf16.mxu0 %v9928
  %11295 = vmatpush2.bf16.msra.mxu0 %v9927
  %11296 = vmatprep.subr.bf16.mxu0 %v9921
  %11297 = vmatpush2.bf16.msra.mxu0 %v9920
  %11298 = vmatprep.subr.bf16.mxu0 %v9914
  %11299 = vmatpush2.bf16.msra.mxu0 %v9913
  %11300 = vmatprep.subr.bf16.mxu0 %v9907
  %11301 = vmatpush2.bf16.msra.mxu0 %v9906
  %11302 = vmatprep.subr.bf16.mxu0 %v9900
  %11303 = vmatpush2.bf16.msra.mxu0 %v9899
  %11304 = vmatprep.subr.bf16.mxu0 %v9893
  %11305 = vmatpush2.bf16.msra.mxu0 %v9892
  %11306 = vmatprep.subr.bf16.mxu0 %v9886
  %11307 = vmatpush2.bf16.msra.mxu0 %v9885
  %11308 = vmatprep.mubr.bf16.mxu0 %v6508
  %11309 = vmatmul.mubr.bf16.gmra.mxu0 %v6507
  %v11310 = vpop.f32.mrf.mxu0
  %v11311 = vadd.f32 %v11270, %v11310
  %v11312 = vpop.f32.mrf.mxu0
  %v11313 = vadd.f32 %v11272, %v11312
  %v11314 = vpop.f32.mrf.mxu0
  %v11315 = vpop.f32.mrf.mxu0
  %11316 = vdwg.mxu0
  %11317 = vmatprep.subr.bf16.mxu0 %v9991
  %11318 = vmatpush1.bf16.msra.mxu0 %v9990
  %11319 = vmatprep.subr.bf16.mxu0 %v9984
  %11320 = vmatpush1.bf16.msra.mxu0 %v9983
  %11321 = vmatprep.subr.bf16.mxu0 %v9977
  %11322 = vmatpush1.bf16.msra.mxu0 %v9976
  %11323 = vmatprep.subr.bf16.mxu0 %v9970
  %11324 = vmatpush1.bf16.msra.mxu0 %v9969
  %11325 = vmatprep.subr.bf16.mxu0 %v9963
  %11326 = vmatpush1.bf16.msra.mxu0 %v9962
  %11327 = vmatprep.subr.bf16.mxu0 %v9956
  %11328 = vmatpush1.bf16.msra.mxu0 %v9955
  %11329 = vmatprep.subr.bf16.mxu0 %v9949
  %11330 = vmatpush1.bf16.msra.mxu0 %v9948
  %11331 = vmatprep.subr.bf16.mxu0 %v9942
  %11332 = vmatpush1.bf16.msra.mxu0 %v9941
  %11333 = vmatprep.subr.bf16.mxu0 %v10047
  %11334 = vmatpush2.bf16.msra.mxu0 %v10046
  %11335 = vmatprep.subr.bf16.mxu0 %v10040
  %11336 = vmatpush2.bf16.msra.mxu0 %v10039
  %11337 = vmatprep.subr.bf16.mxu0 %v10033
  %11338 = vmatpush2.bf16.msra.mxu0 %v10032
  %11339 = vmatprep.subr.bf16.mxu0 %v10026
  %11340 = vmatpush2.bf16.msra.mxu0 %v10025
  %11341 = vmatprep.subr.bf16.mxu0 %v10019
  %11342 = vmatpush2.bf16.msra.mxu0 %v10018
  %11343 = vmatprep.subr.bf16.mxu0 %v10012
  %11344 = vmatpush2.bf16.msra.mxu0 %v10011
  %11345 = vmatprep.subr.bf16.mxu0 %v10005
  %11346 = vmatpush2.bf16.msra.mxu0 %v10004
  %11347 = vmatprep.subr.bf16.mxu0 %v9998
  %11348 = vmatpush2.bf16.msra.mxu0 %v9997
  %11349 = vmatprep.mubr.bf16.mxu0 %v6510
  %11350 = vmatmul.mubr.bf16.gmra.mxu0 %v6509
  %v11351 = vpop.f32.mrf.mxu0
  %v11352 = vadd.f32 %v11311, %v11351
  %v11353 = vpop.f32.mrf.mxu0
  %v11354 = vadd.f32 %v11313, %v11353
  %v11355 = vpop.f32.mrf.mxu0
  %v11356 = vpop.f32.mrf.mxu0
  %11357 = vdwg.mxu0
  %11358 = vmatprep.subr.bf16.mxu0 %v10103
  %11359 = vmatpush1.bf16.msra.mxu0 %v10102
  %11360 = vmatprep.subr.bf16.mxu0 %v10096
  %11361 = vmatpush1.bf16.msra.mxu0 %v10095
  %11362 = vmatprep.subr.bf16.mxu0 %v10089
  %11363 = vmatpush1.bf16.msra.mxu0 %v10088
  %11364 = vmatprep.subr.bf16.mxu0 %v10082
  %11365 = vmatpush1.bf16.msra.mxu0 %v10081
  %11366 = vmatprep.subr.bf16.mxu0 %v10075
  %11367 = vmatpush1.bf16.msra.mxu0 %v10074
  %11368 = vmatprep.subr.bf16.mxu0 %v10068
  %11369 = vmatpush1.bf16.msra.mxu0 %v10067
  %11370 = vmatprep.subr.bf16.mxu0 %v10061
  %11371 = vmatpush1.bf16.msra.mxu0 %v10060
  %11372 = vmatprep.subr.bf16.mxu0 %v10054
  %11373 = vmatpush1.bf16.msra.mxu0 %v10053
  %11374 = vmatprep.subr.bf16.mxu0 %v10159
  %11375 = vmatpush2.bf16.msra.mxu0 %v10158
  %11376 = vmatprep.subr.bf16.mxu0 %v10152
  %11377 = vmatpush2.bf16.msra.mxu0 %v10151
  %11378 = vmatprep.subr.bf16.mxu0 %v10145
  %11379 = vmatpush2.bf16.msra.mxu0 %v10144
  %11380 = vmatprep.subr.bf16.mxu0 %v10138
  %11381 = vmatpush2.bf16.msra.mxu0 %v10137
  %11382 = vmatprep.subr.bf16.mxu0 %v10131
  %11383 = vmatpush2.bf16.msra.mxu0 %v10130
  %11384 = vmatprep.subr.bf16.mxu0 %v10124
  %11385 = vmatpush2.bf16.msra.mxu0 %v10123
  %11386 = vmatprep.subr.bf16.mxu0 %v10117
  %11387 = vmatpush2.bf16.msra.mxu0 %v10116
  %11388 = vmatprep.subr.bf16.mxu0 %v10110
  %11389 = vmatpush2.bf16.msra.mxu0 %v10109
  %11390 = vmatprep.mubr.bf16.mxu0 %v6512
  %11391 = vmatmul.mubr.bf16.gmra.mxu0 %v6511
  %v11392 = vpop.f32.mrf.mxu0
  %v11393 = vadd.f32 %v11352, %v11392
  %v11394 = vpop.f32.mrf.mxu0
  %v11395 = vadd.f32 %v11354, %v11394
  %v11396 = vpop.f32.mrf.mxu0
  %v11397 = vpop.f32.mrf.mxu0
  %11398 = vdwg.mxu0
  %11399 = vmatprep.subr.bf16.mxu0 0
  %11400 = vmatpush1.bf16.msra.mxu0 0
  %11401 = vmatprep.subr.bf16.mxu0 0
  %11402 = vmatpush1.bf16.msra.mxu0 0
  %11403 = vmatprep.subr.bf16.mxu0 0
  %11404 = vmatpush1.bf16.msra.mxu0 0
  %11405 = vmatprep.subr.bf16.mxu0 0
  %11406 = vmatpush1.bf16.msra.mxu0 0
  %11407 = vmatprep.subr.bf16.mxu0 0
  %11408 = vmatpush1.bf16.msra.mxu0 0
  %11409 = vmatprep.subr.bf16.mxu0 0
  %11410 = vmatpush1.bf16.msra.mxu0 0
  %11411 = vmatprep.subr.bf16.mxu0 %v10173
  %11412 = vmatpush1.bf16.msra.mxu0 %v10172
  %11413 = vmatprep.subr.bf16.mxu0 %v10166
  %11414 = vmatpush1.bf16.msra.mxu0 %v10165
  %11415 = vmatprep.subr.bf16.mxu0 0
  %11416 = vmatpush2.bf16.msra.mxu0 0
  %11417 = vmatprep.subr.bf16.mxu0 0
  %11418 = vmatpush2.bf16.msra.mxu0 0
  %11419 = vmatprep.subr.bf16.mxu0 0
  %11420 = vmatpush2.bf16.msra.mxu0 0
  %11421 = vmatprep.subr.bf16.mxu0 0
  %11422 = vmatpush2.bf16.msra.mxu0 0
  %11423 = vmatprep.subr.bf16.mxu0 0
  %11424 = vmatpush2.bf16.msra.mxu0 0
  %11425 = vmatprep.subr.bf16.mxu0 0
  %11426 = vmatpush2.bf16.msra.mxu0 0
  %11427 = vmatprep.subr.bf16.mxu0 0
  %11428 = vmatpush2.bf16.msra.mxu0 0
  %11429 = vmatprep.subr.bf16.mxu0 0
  %11430 = vmatpush2.bf16.msra.mxu0 0
  %11431 = vmatprep.mubr.bf16.mxu0 0
  %11432 = vmatmul.mubr.bf16.gmra.mxu0 %v10864
  %v11433 = vpop.f32.mrf.mxu0
  %v11434 = vadd.f32 %v11393, %v11433
  %v11435 = vpop.f32.mrf.mxu0
  %v11436 = vadd.f32 %v11395, %v11435
  %v11437 = vpop.f32.mrf.mxu0
  %v11438 = vpop.f32.mrf.mxu0
  %11439 = vdwg.mxu0
  %11440 = vmatprep.subr.bf16.mxu0 %v9545
  %11441 = vmatpush1.bf16.msra.mxu0 %v9544
  %11442 = vmatprep.subr.bf16.mxu0 %v9538
  %11443 = vmatpush1.bf16.msra.mxu0 %v9537
  %11444 = vmatprep.subr.bf16.mxu0 %v9531
  %11445 = vmatpush1.bf16.msra.mxu0 %v9530
  %11446 = vmatprep.subr.bf16.mxu0 %v9524
  %11447 = vmatpush1.bf16.msra.mxu0 %v9523
  %11448 = vmatprep.subr.bf16.mxu0 %v9517
  %11449 = vmatpush1.bf16.msra.mxu0 %v9516
  %11450 = vmatprep.subr.bf16.mxu0 %v9510
  %11451 = vmatpush1.bf16.msra.mxu0 %v9509
  %11452 = vmatprep.subr.bf16.mxu0 %v9503
  %11453 = vmatpush1.bf16.msra.mxu0 %v9502
  %11454 = vmatprep.subr.bf16.mxu0 %v9496
  %11455 = vmatpush1.bf16.msra.mxu0 %v9495
  %11456 = vmatprep.subr.bf16.mxu0 %v9601
  %11457 = vmatpush2.bf16.msra.mxu0 %v9600
  %11458 = vmatprep.subr.bf16.mxu0 %v9594
  %11459 = vmatpush2.bf16.msra.mxu0 %v9593
  %11460 = vmatprep.subr.bf16.mxu0 %v9587
  %11461 = vmatpush2.bf16.msra.mxu0 %v9586
  %11462 = vmatprep.subr.bf16.mxu0 %v9580
  %11463 = vmatpush2.bf16.msra.mxu0 %v9579
  %11464 = vmatprep.subr.bf16.mxu0 %v9573
  %11465 = vmatpush2.bf16.msra.mxu0 %v9572
  %11466 = vmatprep.subr.bf16.mxu0 %v9566
  %11467 = vmatpush2.bf16.msra.mxu0 %v9565
  %11468 = vmatprep.subr.bf16.mxu0 %v9559
  %11469 = vmatpush2.bf16.msra.mxu0 %v9558
  %11470 = vmatprep.subr.bf16.mxu0 %v9552
  %11471 = vmatpush2.bf16.msra.mxu0 %v9551
  %11472 = vmatprep.mubr.bf16.mxu0 %v6502
  %11473 = vmatmul.mubr.bf16.gmra.mxu0 %v6501
  %v11474 = vpop.f32.mrf.mxu0
  %v11475 = vadd.f32 %v7319, %v11474
  %v11476 = vpop.f32.mrf.mxu0
  %v11477 = vadd.f32 %v7323, %v11476
  %v11478 = vpop.f32.mrf.mxu0
  %v11479 = vpop.f32.mrf.mxu0
  %11480 = vdwg.mxu0
  %11481 = vmatprep.subr.bf16.mxu0 %v9657
  %11482 = vmatpush1.bf16.msra.mxu0 %v9656
  %11483 = vmatprep.subr.bf16.mxu0 %v9650
  %11484 = vmatpush1.bf16.msra.mxu0 %v9649
  %11485 = vmatprep.subr.bf16.mxu0 %v9643
  %11486 = vmatpush1.bf16.msra.mxu0 %v9642
  %11487 = vmatprep.subr.bf16.mxu0 %v9636
  %11488 = vmatpush1.bf16.msra.mxu0 %v9635
  %11489 = vmatprep.subr.bf16.mxu0 %v9629
  %11490 = vmatpush1.bf16.msra.mxu0 %v9628
  %11491 = vmatprep.subr.bf16.mxu0 %v9622
  %11492 = vmatpush1.bf16.msra.mxu0 %v9621
  %11493 = vmatprep.subr.bf16.mxu0 %v9615
  %11494 = vmatpush1.bf16.msra.mxu0 %v9614
  %11495 = vmatprep.subr.bf16.mxu0 %v9608
  %11496 = vmatpush1.bf16.msra.mxu0 %v9607
  %11497 = vmatprep.subr.bf16.mxu0 %v9713
  %11498 = vmatpush2.bf16.msra.mxu0 %v9712
  %11499 = vmatprep.subr.bf16.mxu0 %v9706
  %11500 = vmatpush2.bf16.msra.mxu0 %v9705
  %11501 = vmatprep.subr.bf16.mxu0 %v9699
  %11502 = vmatpush2.bf16.msra.mxu0 %v9698
  %11503 = vmatprep.subr.bf16.mxu0 %v9692
  %11504 = vmatpush2.bf16.msra.mxu0 %v9691
  %11505 = vmatprep.subr.bf16.mxu0 %v9685
  %11506 = vmatpush2.bf16.msra.mxu0 %v9684
  %11507 = vmatprep.subr.bf16.mxu0 %v9678
  %11508 = vmatpush2.bf16.msra.mxu0 %v9677
  %11509 = vmatprep.subr.bf16.mxu0 %v9671
  %11510 = vmatpush2.bf16.msra.mxu0 %v9670
  %11511 = vmatprep.subr.bf16.mxu0 %v9664
  %11512 = vmatpush2.bf16.msra.mxu0 %v9663
  %11513 = vmatprep.mubr.bf16.mxu0 %v6504
  %11514 = vmatmul.mubr.bf16.gmra.mxu0 %v6503
  %v11515 = vpop.f32.mrf.mxu0
  %v11516 = vadd.f32 %v11475, %v11515
  %v11517 = vpop.f32.mrf.mxu0
  %v11518 = vadd.f32 %v11477, %v11517
  %v11519 = vpop.f32.mrf.mxu0
  %v11520 = vpop.f32.mrf.mxu0
  %11521 = vdwg.mxu0
  %11522 = vmatprep.subr.bf16.mxu0 %v9769
  %11523 = vmatpush1.bf16.msra.mxu0 %v9768
  %11524 = vmatprep.subr.bf16.mxu0 %v9762
  %11525 = vmatpush1.bf16.msra.mxu0 %v9761
  %11526 = vmatprep.subr.bf16.mxu0 %v9755
  %11527 = vmatpush1.bf16.msra.mxu0 %v9754
  %11528 = vmatprep.subr.bf16.mxu0 %v9748
  %11529 = vmatpush1.bf16.msra.mxu0 %v9747
  %11530 = vmatprep.subr.bf16.mxu0 %v9741
  %11531 = vmatpush1.bf16.msra.mxu0 %v9740
  %11532 = vmatprep.subr.bf16.mxu0 %v9734
  %11533 = vmatpush1.bf16.msra.mxu0 %v9733
  %11534 = vmatprep.subr.bf16.mxu0 %v9727
  %11535 = vmatpush1.bf16.msra.mxu0 %v9726
  %11536 = vmatprep.subr.bf16.mxu0 %v9720
  %11537 = vmatpush1.bf16.msra.mxu0 %v9719
  %11538 = vmatprep.subr.bf16.mxu0 %v9825
  %11539 = vmatpush2.bf16.msra.mxu0 %v9824
  %11540 = vmatprep.subr.bf16.mxu0 %v9818
  %11541 = vmatpush2.bf16.msra.mxu0 %v9817
  %11542 = vmatprep.subr.bf16.mxu0 %v9811
  %11543 = vmatpush2.bf16.msra.mxu0 %v9810
  %11544 = vmatprep.subr.bf16.mxu0 %v9804
  %11545 = vmatpush2.bf16.msra.mxu0 %v9803
  %11546 = vmatprep.subr.bf16.mxu0 %v9797
  %11547 = vmatpush2.bf16.msra.mxu0 %v9796
  %11548 = vmatprep.subr.bf16.mxu0 %v9790
  %11549 = vmatpush2.bf16.msra.mxu0 %v9789
  %11550 = vmatprep.subr.bf16.mxu0 %v9783
  %11551 = vmatpush2.bf16.msra.mxu0 %v9782
  %11552 = vmatprep.subr.bf16.mxu0 %v9776
  %11553 = vmatpush2.bf16.msra.mxu0 %v9775
  %11554 = vmatprep.mubr.bf16.mxu0 %v6506
  %11555 = vmatmul.mubr.bf16.gmra.mxu0 %v6505
  %v11556 = vpop.f32.mrf.mxu0
  %v11557 = vadd.f32 %v11516, %v11556
  %v11558 = vpop.f32.mrf.mxu0
  %v11559 = vadd.f32 %v11518, %v11558
  %v11560 = vpop.f32.mrf.mxu0
  %v11561 = vpop.f32.mrf.mxu0
  %11562 = vdwg.mxu0
  %11563 = vmatprep.subr.bf16.mxu0 %v9881
  %11564 = vmatpush1.bf16.msra.mxu0 %v9880
  %11565 = vmatprep.subr.bf16.mxu0 %v9874
  %11566 = vmatpush1.bf16.msra.mxu0 %v9873
  %11567 = vmatprep.subr.bf16.mxu0 %v9867
  %11568 = vmatpush1.bf16.msra.mxu0 %v9866
  %11569 = vmatprep.subr.bf16.mxu0 %v9860
  %11570 = vmatpush1.bf16.msra.mxu0 %v9859
  %11571 = vmatprep.subr.bf16.mxu0 %v9853
  %11572 = vmatpush1.bf16.msra.mxu0 %v9852
  %11573 = vmatprep.subr.bf16.mxu0 %v9846
  %11574 = vmatpush1.bf16.msra.mxu0 %v9845
  %11575 = vmatprep.subr.bf16.mxu0 %v9839
  %11576 = vmatpush1.bf16.msra.mxu0 %v9838
  %11577 = vmatprep.subr.bf16.mxu0 %v9832
  %11578 = vmatpush1.bf16.msra.mxu0 %v9831
  %11579 = vmatprep.subr.bf16.mxu0 %v9937
  %11580 = vmatpush2.bf16.msra.mxu0 %v9936
  %11581 = vmatprep.subr.bf16.mxu0 %v9930
  %11582 = vmatpush2.bf16.msra.mxu0 %v9929
  %11583 = vmatprep.subr.bf16.mxu0 %v9923
  %11584 = vmatpush2.bf16.msra.mxu0 %v9922
  %11585 = vmatprep.subr.bf16.mxu0 %v9916
  %11586 = vmatpush2.bf16.msra.mxu0 %v9915
  %11587 = vmatprep.subr.bf16.mxu0 %v9909
  %11588 = vmatpush2.bf16.msra.mxu0 %v9908
  %11589 = vmatprep.subr.bf16.mxu0 %v9902
  %11590 = vmatpush2.bf16.msra.mxu0 %v9901
  %11591 = vmatprep.subr.bf16.mxu0 %v9895
  %11592 = vmatpush2.bf16.msra.mxu0 %v9894
  %11593 = vmatprep.subr.bf16.mxu0 %v9888
  %11594 = vmatpush2.bf16.msra.mxu0 %v9887
  %11595 = vmatprep.mubr.bf16.mxu0 %v6508
  %11596 = vmatmul.mubr.bf16.gmra.mxu0 %v6507
  %v11597 = vpop.f32.mrf.mxu0
  %v11598 = vadd.f32 %v11557, %v11597
  %v11599 = vpop.f32.mrf.mxu0
  %v11600 = vadd.f32 %v11559, %v11599
  %v11601 = vpop.f32.mrf.mxu0
  %v11602 = vpop.f32.mrf.mxu0
  %11603 = vdwg.mxu0
  %11604 = vmatprep.subr.bf16.mxu0 %v9993
  %11605 = vmatpush1.bf16.msra.mxu0 %v9992
  %11606 = vmatprep.subr.bf16.mxu0 %v9986
  %11607 = vmatpush1.bf16.msra.mxu0 %v9985
  %11608 = vmatprep.subr.bf16.mxu0 %v9979
  %11609 = vmatpush1.bf16.msra.mxu0 %v9978
  %11610 = vmatprep.subr.bf16.mxu0 %v9972
  %11611 = vmatpush1.bf16.msra.mxu0 %v9971
  %11612 = vmatprep.subr.bf16.mxu0 %v9965
  %11613 = vmatpush1.bf16.msra.mxu0 %v9964
  %11614 = vmatprep.subr.bf16.mxu0 %v9958
  %11615 = vmatpush1.bf16.msra.mxu0 %v9957
  %11616 = vmatprep.subr.bf16.mxu0 %v9951
  %11617 = vmatpush1.bf16.msra.mxu0 %v9950
  %11618 = vmatprep.subr.bf16.mxu0 %v9944
  %11619 = vmatpush1.bf16.msra.mxu0 %v9943
  %11620 = vmatprep.subr.bf16.mxu0 %v10049
  %11621 = vmatpush2.bf16.msra.mxu0 %v10048
  %11622 = vmatprep.subr.bf16.mxu0 %v10042
  %11623 = vmatpush2.bf16.msra.mxu0 %v10041
  %11624 = vmatprep.subr.bf16.mxu0 %v10035
  %11625 = vmatpush2.bf16.msra.mxu0 %v10034
  %11626 = vmatprep.subr.bf16.mxu0 %v10028
  %11627 = vmatpush2.bf16.msra.mxu0 %v10027
  %11628 = vmatprep.subr.bf16.mxu0 %v10021
  %11629 = vmatpush2.bf16.msra.mxu0 %v10020
  %11630 = vmatprep.subr.bf16.mxu0 %v10014
  %11631 = vmatpush2.bf16.msra.mxu0 %v10013
  %11632 = vmatprep.subr.bf16.mxu0 %v10007
  %11633 = vmatpush2.bf16.msra.mxu0 %v10006
  %11634 = vmatprep.subr.bf16.mxu0 %v10000
  %11635 = vmatpush2.bf16.msra.mxu0 %v9999
  %11636 = vmatprep.mubr.bf16.mxu0 %v6510
  %11637 = vmatmul.mubr.bf16.gmra.mxu0 %v6509
  %v11638 = vpop.f32.mrf.mxu0
  %v11639 = vadd.f32 %v11598, %v11638
  %v11640 = vpop.f32.mrf.mxu0
  %v11641 = vadd.f32 %v11600, %v11640
  %v11642 = vpop.f32.mrf.mxu0
  %v11643 = vpop.f32.mrf.mxu0
  %11644 = vdwg.mxu0
  %11645 = vmatprep.subr.bf16.mxu0 %v10105
  %11646 = vmatpush1.bf16.msra.mxu0 %v10104
  %11647 = vmatprep.subr.bf16.mxu0 %v10098
  %11648 = vmatpush1.bf16.msra.mxu0 %v10097
  %11649 = vmatprep.subr.bf16.mxu0 %v10091
  %11650 = vmatpush1.bf16.msra.mxu0 %v10090
  %11651 = vmatprep.subr.bf16.mxu0 %v10084
  %11652 = vmatpush1.bf16.msra.mxu0 %v10083
  %11653 = vmatprep.subr.bf16.mxu0 %v10077
  %11654 = vmatpush1.bf16.msra.mxu0 %v10076
  %11655 = vmatprep.subr.bf16.mxu0 %v10070
  %11656 = vmatpush1.bf16.msra.mxu0 %v10069
  %11657 = vmatprep.subr.bf16.mxu0 %v10063
  %11658 = vmatpush1.bf16.msra.mxu0 %v10062
  %11659 = vmatprep.subr.bf16.mxu0 %v10056
  %11660 = vmatpush1.bf16.msra.mxu0 %v10055
  %11661 = vmatprep.subr.bf16.mxu0 %v10161
  %11662 = vmatpush2.bf16.msra.mxu0 %v10160
  %11663 = vmatprep.subr.bf16.mxu0 %v10154
  %11664 = vmatpush2.bf16.msra.mxu0 %v10153
  %11665 = vmatprep.subr.bf16.mxu0 %v10147
  %11666 = vmatpush2.bf16.msra.mxu0 %v10146
  %11667 = vmatprep.subr.bf16.mxu0 %v10140
  %11668 = vmatpush2.bf16.msra.mxu0 %v10139
  %11669 = vmatprep.subr.bf16.mxu0 %v10133
  %11670 = vmatpush2.bf16.msra.mxu0 %v10132
  %11671 = vmatprep.subr.bf16.mxu0 %v10126
  %11672 = vmatpush2.bf16.msra.mxu0 %v10125
  %11673 = vmatprep.subr.bf16.mxu0 %v10119
  %11674 = vmatpush2.bf16.msra.mxu0 %v10118
  %11675 = vmatprep.subr.bf16.mxu0 %v10112
  %11676 = vmatpush2.bf16.msra.mxu0 %v10111
  %11677 = vmatprep.mubr.bf16.mxu0 %v6512
  %11678 = vmatmul.mubr.bf16.gmra.mxu0 %v6511
  %v11679 = vpop.f32.mrf.mxu0
  %v11680 = vadd.f32 %v11639, %v11679
  %v11681 = vpop.f32.mrf.mxu0
  %v11682 = vadd.f32 %v11641, %v11681
  %v11683 = vpop.f32.mrf.mxu0
  %v11684 = vpop.f32.mrf.mxu0
  %11685 = vdwg.mxu0
  %11686 = vmatprep.subr.bf16.mxu0 0
  %11687 = vmatpush1.bf16.msra.mxu0 0
  %11688 = vmatprep.subr.bf16.mxu0 0
  %11689 = vmatpush1.bf16.msra.mxu0 0
  %11690 = vmatprep.subr.bf16.mxu0 0
  %11691 = vmatpush1.bf16.msra.mxu0 0
  %11692 = vmatprep.subr.bf16.mxu0 0
  %11693 = vmatpush1.bf16.msra.mxu0 0
  %11694 = vmatprep.subr.bf16.mxu0 0
  %11695 = vmatpush1.bf16.msra.mxu0 0
  %11696 = vmatprep.subr.bf16.mxu0 0
  %11697 = vmatpush1.bf16.msra.mxu0 0
  %11698 = vmatprep.subr.bf16.mxu0 %v10175
  %11699 = vmatpush1.bf16.msra.mxu0 %v10174
  %11700 = vmatprep.subr.bf16.mxu0 %v10168
  %11701 = vmatpush1.bf16.msra.mxu0 %v10167
  %11702 = vmatprep.subr.bf16.mxu0 0
  %11703 = vmatpush2.bf16.msra.mxu0 0
  %11704 = vmatprep.subr.bf16.mxu0 0
  %11705 = vmatpush2.bf16.msra.mxu0 0
  %11706 = vmatprep.subr.bf16.mxu0 0
  %11707 = vmatpush2.bf16.msra.mxu0 0
  %11708 = vmatprep.subr.bf16.mxu0 0
  %11709 = vmatpush2.bf16.msra.mxu0 0
  %11710 = vmatprep.subr.bf16.mxu0 0
  %11711 = vmatpush2.bf16.msra.mxu0 0
  %11712 = vmatprep.subr.bf16.mxu0 0
  %11713 = vmatpush2.bf16.msra.mxu0 0
  %11714 = vmatprep.subr.bf16.mxu0 0
  %11715 = vmatpush2.bf16.msra.mxu0 0
  %11716 = vmatprep.subr.bf16.mxu0 0
  %11717 = vmatpush2.bf16.msra.mxu0 0
  %11718 = vmatprep.mubr.bf16.mxu0 0
  %11719 = vmatmul.mubr.bf16.gmra.mxu0 %v10864
  %v11720 = vpop.f32.mrf.mxu0
  %v11721 = vadd.f32 %v11680, %v11720
  %v11722 = vpop.f32.mrf.mxu0
  %v11723 = vadd.f32 %v11682, %v11722
  %v11724 = vpop.f32.mrf.mxu0
  %v11725 = vpop.f32.mrf.mxu0
  %11726 = vdwg.mxu0
  %11727 = vmatprep.subr.bf16.mxu0 0
  %11728 = vmatpush1.bf16.msra.mxu0 %v9546
  %11729 = vmatprep.subr.bf16.mxu0 0
  %11730 = vmatpush1.bf16.msra.mxu0 %v9539
  %11731 = vmatprep.subr.bf16.mxu0 0
  %11732 = vmatpush1.bf16.msra.mxu0 %v9532
  %11733 = vmatprep.subr.bf16.mxu0 0
  %11734 = vmatpush1.bf16.msra.mxu0 %v9525
  %11735 = vmatprep.subr.bf16.mxu0 0
  %11736 = vmatpush1.bf16.msra.mxu0 %v9518
  %11737 = vmatprep.subr.bf16.mxu0 0
  %11738 = vmatpush1.bf16.msra.mxu0 %v9511
  %11739 = vmatprep.subr.bf16.mxu0 0
  %11740 = vmatpush1.bf16.msra.mxu0 %v9504
  %11741 = vmatprep.subr.bf16.mxu0 0
  %11742 = vmatpush1.bf16.msra.mxu0 %v9497
  %11743 = vmatprep.subr.bf16.mxu0 0
  %11744 = vmatpush2.bf16.msra.mxu0 %v9602
  %11745 = vmatprep.subr.bf16.mxu0 0
  %11746 = vmatpush2.bf16.msra.mxu0 %v9595
  %11747 = vmatprep.subr.bf16.mxu0 0
  %11748 = vmatpush2.bf16.msra.mxu0 %v9588
  %11749 = vmatprep.subr.bf16.mxu0 0
  %11750 = vmatpush2.bf16.msra.mxu0 %v9581
  %11751 = vmatprep.subr.bf16.mxu0 0
  %11752 = vmatpush2.bf16.msra.mxu0 %v9574
  %11753 = vmatprep.subr.bf16.mxu0 0
  %11754 = vmatpush2.bf16.msra.mxu0 %v9567
  %11755 = vmatprep.subr.bf16.mxu0 0
  %11756 = vmatpush2.bf16.msra.mxu0 %v9560
  %11757 = vmatprep.subr.bf16.mxu0 0
  %11758 = vmatpush2.bf16.msra.mxu0 %v9553
  %11759 = vmatprep.mubr.bf16.mxu0 %v6502
  %11760 = vmatmul.mubr.bf16.gmra.mxu0 %v6501
  %v11761 = vpop.f32.mrf.mxu0
  %v11762 = vadd.f32 %v7327, %v11761
  %v11763 = vpop.f32.mrf.mxu0
  %v11764 = vpop.f32.mrf.mxu0
  %v11765 = vpop.f32.mrf.mxu0
  %11766 = vdwg.mxu0
  %11767 = vmatprep.subr.bf16.mxu0 0
  %11768 = vmatpush1.bf16.msra.mxu0 %v9658
  %11769 = vmatprep.subr.bf16.mxu0 0
  %11770 = vmatpush1.bf16.msra.mxu0 %v9651
  %11771 = vmatprep.subr.bf16.mxu0 0
  %11772 = vmatpush1.bf16.msra.mxu0 %v9644
  %11773 = vmatprep.subr.bf16.mxu0 0
  %11774 = vmatpush1.bf16.msra.mxu0 %v9637
  %11775 = vmatprep.subr.bf16.mxu0 0
  %11776 = vmatpush1.bf16.msra.mxu0 %v9630
  %11777 = vmatprep.subr.bf16.mxu0 0
  %11778 = vmatpush1.bf16.msra.mxu0 %v9623
  %11779 = vmatprep.subr.bf16.mxu0 0
  %11780 = vmatpush1.bf16.msra.mxu0 %v9616
  %11781 = vmatprep.subr.bf16.mxu0 0
  %11782 = vmatpush1.bf16.msra.mxu0 %v9609
  %11783 = vmatprep.subr.bf16.mxu0 0
  %11784 = vmatpush2.bf16.msra.mxu0 %v9714
  %11785 = vmatprep.subr.bf16.mxu0 0
  %11786 = vmatpush2.bf16.msra.mxu0 %v9707
  %11787 = vmatprep.subr.bf16.mxu0 0
  %11788 = vmatpush2.bf16.msra.mxu0 %v9700
  %11789 = vmatprep.subr.bf16.mxu0 0
  %11790 = vmatpush2.bf16.msra.mxu0 %v9693
  %11791 = vmatprep.subr.bf16.mxu0 0
  %11792 = vmatpush2.bf16.msra.mxu0 %v9686
  %11793 = vmatprep.subr.bf16.mxu0 0
  %11794 = vmatpush2.bf16.msra.mxu0 %v9679
  %11795 = vmatprep.subr.bf16.mxu0 0
  %11796 = vmatpush2.bf16.msra.mxu0 %v9672
  %11797 = vmatprep.subr.bf16.mxu0 0
  %11798 = vmatpush2.bf16.msra.mxu0 %v9665
  %11799 = vmatprep.mubr.bf16.mxu0 %v6504
  %11800 = vmatmul.mubr.bf16.gmra.mxu0 %v6503
  %v11801 = vpop.f32.mrf.mxu0
  %v11802 = vadd.f32 %v11762, %v11801
  %v11803 = vpop.f32.mrf.mxu0
  %v11804 = vpop.f32.mrf.mxu0
  %v11805 = vpop.f32.mrf.mxu0
  %11806 = vdwg.mxu0
  %11807 = vmatprep.subr.bf16.mxu0 0
  %11808 = vmatpush1.bf16.msra.mxu0 %v9770
  %11809 = vmatprep.subr.bf16.mxu0 0
  %11810 = vmatpush1.bf16.msra.mxu0 %v9763
  %11811 = vmatprep.subr.bf16.mxu0 0
  %11812 = vmatpush1.bf16.msra.mxu0 %v9756
  %11813 = vmatprep.subr.bf16.mxu0 0
  %11814 = vmatpush1.bf16.msra.mxu0 %v9749
  %11815 = vmatprep.subr.bf16.mxu0 0
  %11816 = vmatpush1.bf16.msra.mxu0 %v9742
  %11817 = vmatprep.subr.bf16.mxu0 0
  %11818 = vmatpush1.bf16.msra.mxu0 %v9735
  %11819 = vmatprep.subr.bf16.mxu0 0
  %11820 = vmatpush1.bf16.msra.mxu0 %v9728
  %11821 = vmatprep.subr.bf16.mxu0 0
  %11822 = vmatpush1.bf16.msra.mxu0 %v9721
  %11823 = vmatprep.subr.bf16.mxu0 0
  %11824 = vmatpush2.bf16.msra.mxu0 %v9826
  %11825 = vmatprep.subr.bf16.mxu0 0
  %11826 = vmatpush2.bf16.msra.mxu0 %v9819
  %11827 = vmatprep.subr.bf16.mxu0 0
  %11828 = vmatpush2.bf16.msra.mxu0 %v9812
  %11829 = vmatprep.subr.bf16.mxu0 0
  %11830 = vmatpush2.bf16.msra.mxu0 %v9805
  %11831 = vmatprep.subr.bf16.mxu0 0
  %11832 = vmatpush2.bf16.msra.mxu0 %v9798
  %11833 = vmatprep.subr.bf16.mxu0 0
  %11834 = vmatpush2.bf16.msra.mxu0 %v9791
  %11835 = vmatprep.subr.bf16.mxu0 0
  %11836 = vmatpush2.bf16.msra.mxu0 %v9784
  %11837 = vmatprep.subr.bf16.mxu0 0
  %11838 = vmatpush2.bf16.msra.mxu0 %v9777
  %11839 = vmatprep.mubr.bf16.mxu0 %v6506
  %11840 = vmatmul.mubr.bf16.gmra.mxu0 %v6505
  %v11841 = vpop.f32.mrf.mxu0
  %v11842 = vadd.f32 %v11802, %v11841
  %v11843 = vpop.f32.mrf.mxu0
  %v11844 = vpop.f32.mrf.mxu0
  %v11845 = vpop.f32.mrf.mxu0
  %11846 = vdwg.mxu0
  %11847 = vmatprep.subr.bf16.mxu0 0
  %11848 = vmatpush1.bf16.msra.mxu0 %v9882
  %11849 = vmatprep.subr.bf16.mxu0 0
  %11850 = vmatpush1.bf16.msra.mxu0 %v9875
  %11851 = vmatprep.subr.bf16.mxu0 0
  %11852 = vmatpush1.bf16.msra.mxu0 %v9868
  %11853 = vmatprep.subr.bf16.mxu0 0
  %11854 = vmatpush1.bf16.msra.mxu0 %v9861
  %11855 = vmatprep.subr.bf16.mxu0 0
  %11856 = vmatpush1.bf16.msra.mxu0 %v9854
  %11857 = vmatprep.subr.bf16.mxu0 0
  %11858 = vmatpush1.bf16.msra.mxu0 %v9847
  %11859 = vmatprep.subr.bf16.mxu0 0
  %11860 = vmatpush1.bf16.msra.mxu0 %v9840
  %11861 = vmatprep.subr.bf16.mxu0 0
  %11862 = vmatpush1.bf16.msra.mxu0 %v9833
  %11863 = vmatprep.subr.bf16.mxu0 0
  %11864 = vmatpush2.bf16.msra.mxu0 %v9938
  %11865 = vmatprep.subr.bf16.mxu0 0
  %11866 = vmatpush2.bf16.msra.mxu0 %v9931
  %11867 = vmatprep.subr.bf16.mxu0 0
  %11868 = vmatpush2.bf16.msra.mxu0 %v9924
  %11869 = vmatprep.subr.bf16.mxu0 0
  %11870 = vmatpush2.bf16.msra.mxu0 %v9917
  %11871 = vmatprep.subr.bf16.mxu0 0
  %11872 = vmatpush2.bf16.msra.mxu0 %v9910
  %11873 = vmatprep.subr.bf16.mxu0 0
  %11874 = vmatpush2.bf16.msra.mxu0 %v9903
  %11875 = vmatprep.subr.bf16.mxu0 0
  %11876 = vmatpush2.bf16.msra.mxu0 %v9896
  %11877 = vmatprep.subr.bf16.mxu0 0
  %11878 = vmatpush2.bf16.msra.mxu0 %v9889
  %11879 = vmatprep.mubr.bf16.mxu0 %v6508
  %11880 = vmatmul.mubr.bf16.gmra.mxu0 %v6507
  %v11881 = vpop.f32.mrf.mxu0
  %v11882 = vadd.f32 %v11842, %v11881
  %v11883 = vpop.f32.mrf.mxu0
  %v11884 = vpop.f32.mrf.mxu0
  %v11885 = vpop.f32.mrf.mxu0
  %11886 = vdwg.mxu0
  %11887 = vmatprep.subr.bf16.mxu0 0
  %11888 = vmatpush1.bf16.msra.mxu0 %v9994
  %11889 = vmatprep.subr.bf16.mxu0 0
  %11890 = vmatpush1.bf16.msra.mxu0 %v9987
  %11891 = vmatprep.subr.bf16.mxu0 0
  %11892 = vmatpush1.bf16.msra.mxu0 %v9980
  %11893 = vmatprep.subr.bf16.mxu0 0
  %11894 = vmatpush1.bf16.msra.mxu0 %v9973
  %11895 = vmatprep.subr.bf16.mxu0 0
  %11896 = vmatpush1.bf16.msra.mxu0 %v9966
  %11897 = vmatprep.subr.bf16.mxu0 0
  %11898 = vmatpush1.bf16.msra.mxu0 %v9959
  %11899 = vmatprep.subr.bf16.mxu0 0
  %11900 = vmatpush1.bf16.msra.mxu0 %v9952
  %11901 = vmatprep.subr.bf16.mxu0 0
  %11902 = vmatpush1.bf16.msra.mxu0 %v9945
  %11903 = vmatprep.subr.bf16.mxu0 0
  %11904 = vmatpush2.bf16.msra.mxu0 %v10050
  %11905 = vmatprep.subr.bf16.mxu0 0
  %11906 = vmatpush2.bf16.msra.mxu0 %v10043
  %11907 = vmatprep.subr.bf16.mxu0 0
  %11908 = vmatpush2.bf16.msra.mxu0 %v10036
  %11909 = vmatprep.subr.bf16.mxu0 0
  %11910 = vmatpush2.bf16.msra.mxu0 %v10029
  %11911 = vmatprep.subr.bf16.mxu0 0
  %11912 = vmatpush2.bf16.msra.mxu0 %v10022
  %11913 = vmatprep.subr.bf16.mxu0 0
  %11914 = vmatpush2.bf16.msra.mxu0 %v10015
  %11915 = vmatprep.subr.bf16.mxu0 0
  %11916 = vmatpush2.bf16.msra.mxu0 %v10008
  %11917 = vmatprep.subr.bf16.mxu0 0
  %11918 = vmatpush2.bf16.msra.mxu0 %v10001
  %11919 = vmatprep.mubr.bf16.mxu0 %v6510
  %11920 = vmatmul.mubr.bf16.gmra.mxu0 %v6509
  %v11921 = vpop.f32.mrf.mxu0
  %v11922 = vadd.f32 %v11882, %v11921
  %v11923 = vpop.f32.mrf.mxu0
  %v11924 = vpop.f32.mrf.mxu0
  %v11925 = vpop.f32.mrf.mxu0
  %11926 = vdwg.mxu0
  %11927 = vmatprep.subr.bf16.mxu0 0
  %11928 = vmatpush1.bf16.msra.mxu0 %v10106
  %11929 = vmatprep.subr.bf16.mxu0 0
  %11930 = vmatpush1.bf16.msra.mxu0 %v10099
  %11931 = vmatprep.subr.bf16.mxu0 0
  %11932 = vmatpush1.bf16.msra.mxu0 %v10092
  %11933 = vmatprep.subr.bf16.mxu0 0
  %11934 = vmatpush1.bf16.msra.mxu0 %v10085
  %11935 = vmatprep.subr.bf16.mxu0 0
  %11936 = vmatpush1.bf16.msra.mxu0 %v10078
  %11937 = vmatprep.subr.bf16.mxu0 0
  %11938 = vmatpush1.bf16.msra.mxu0 %v10071
  %11939 = vmatprep.subr.bf16.mxu0 0
  %11940 = vmatpush1.bf16.msra.mxu0 %v10064
  %11941 = vmatprep.subr.bf16.mxu0 0
  %11942 = vmatpush1.bf16.msra.mxu0 %v10057
  %11943 = vmatprep.subr.bf16.mxu0 0
  %11944 = vmatpush2.bf16.msra.mxu0 %v10162
  %11945 = vmatprep.subr.bf16.mxu0 0
  %11946 = vmatpush2.bf16.msra.mxu0 %v10155
  %11947 = vmatprep.subr.bf16.mxu0 0
  %11948 = vmatpush2.bf16.msra.mxu0 %v10148
  %11949 = vmatprep.subr.bf16.mxu0 0
  %11950 = vmatpush2.bf16.msra.mxu0 %v10141
  %11951 = vmatprep.subr.bf16.mxu0 0
  %11952 = vmatpush2.bf16.msra.mxu0 %v10134
  %11953 = vmatprep.subr.bf16.mxu0 0
  %11954 = vmatpush2.bf16.msra.mxu0 %v10127
  %11955 = vmatprep.subr.bf16.mxu0 0
  %11956 = vmatpush2.bf16.msra.mxu0 %v10120
  %11957 = vmatprep.subr.bf16.mxu0 0
  %11958 = vmatpush2.bf16.msra.mxu0 %v10113
  %11959 = vmatprep.mubr.bf16.mxu0 %v6512
  %11960 = vmatmul.mubr.bf16.gmra.mxu0 %v6511
  %v11961 = vpop.f32.mrf.mxu0
  %v11962 = vadd.f32 %v11922, %v11961
  %v11963 = vpop.f32.mrf.mxu0
  %v11964 = vpop.f32.mrf.mxu0
  %v11965 = vpop.f32.mrf.mxu0
  %11966 = vdwg.mxu0
  %11967 = vmatprep.subr.bf16.mxu0 0
  %11968 = vmatpush1.bf16.msra.mxu0 0
  %11969 = vmatprep.subr.bf16.mxu0 0
  %11970 = vmatpush1.bf16.msra.mxu0 0
  %11971 = vmatprep.subr.bf16.mxu0 0
  %11972 = vmatpush1.bf16.msra.mxu0 0
  %11973 = vmatprep.subr.bf16.mxu0 0
  %11974 = vmatpush1.bf16.msra.mxu0 0
  %11975 = vmatprep.subr.bf16.mxu0 0
  %11976 = vmatpush1.bf16.msra.mxu0 0
  %11977 = vmatprep.subr.bf16.mxu0 0
  %11978 = vmatpush1.bf16.msra.mxu0 0
  %11979 = vmatprep.subr.bf16.mxu0 0
  %11980 = vmatpush1.bf16.msra.mxu0 %v10176
  %11981 = vmatprep.subr.bf16.mxu0 0
  %11982 = vmatpush1.bf16.msra.mxu0 %v10169
  %11983 = vmatprep.subr.bf16.mxu0 0
  %11984 = vmatpush2.bf16.msra.mxu0 0
  %11985 = vmatprep.subr.bf16.mxu0 0
  %11986 = vmatpush2.bf16.msra.mxu0 0
  %11987 = vmatprep.subr.bf16.mxu0 0
  %11988 = vmatpush2.bf16.msra.mxu0 0
  %11989 = vmatprep.subr.bf16.mxu0 0
  %11990 = vmatpush2.bf16.msra.mxu0 0
  %11991 = vmatprep.subr.bf16.mxu0 0
  %11992 = vmatpush2.bf16.msra.mxu0 0
  %11993 = vmatprep.subr.bf16.mxu0 0
  %11994 = vmatpush2.bf16.msra.mxu0 0
  %11995 = vmatprep.subr.bf16.mxu0 0
  %11996 = vmatpush2.bf16.msra.mxu0 0
  %11997 = vmatprep.subr.bf16.mxu0 0
  %11998 = vmatpush2.bf16.msra.mxu0 0
  %11999 = vmatprep.mubr.bf16.mxu0 0
  %12000 = vmatmul.mubr.bf16.gmra.mxu0 %v10864
  %v12001 = vpop.f32.mrf.mxu0
  %v12002 = vadd.f32 %v11962, %v12001
  %v12003 = vpop.f32.mrf.mxu0
  %v12004 = vpop.f32.mrf.mxu0
  %v12005 = vpop.f32.mrf.mxu0
  %12006 = vdwg.mxu0
  %v12007 = vsub.f32 0.0, %v11147
  %v12008 = vsub.f32 0.0, %v11149
  %v12009 = vsub.f32 0.0, %v11434
  %v12010 = vsub.f32 0.0, %v11436
  %v12011 = vsub.f32 0.0, %v11721
  %v12012 = vsub.f32 0.0, %v11723
  %v12013 = vsub.f32 0.0, %v12002
  %v12014 = vmul.f32 %v12007, 1.442695
  %v12015 = vpow.pop %v12014
  %v12016 = vmul.f32 %v12008, 1.442695
  %v12017 = vpow.pop %v12016
  %v12018 = vmul.f32 %v12009, 1.442695
  %v12019 = vpow.pop %v12018
  %v12020 = vmul.f32 %v12010, 1.442695
  %v12021 = vpow.pop %v12020
  %v12022 = vmul.f32 %v12011, 1.442695
  %v12023 = vpow.pop %v12022
  %v12024 = vmul.f32 %v12012, 1.442695
  %v12025 = vpow.pop %v12024
  %v12026 = vmul.f32 %v12013, 1.442695
  %v12027 = vpow.pop %v12026
  %v12028 = vadd.f32 %v12015, 1.0
  %v12029 = vadd.f32 %v12017, 1.0
  %v12030 = vadd.f32 %v12019, 1.0
  %v12031 = vadd.f32 %v12021, 1.0
  %v12032 = vadd.f32 %v12023, 1.0
  %v12033 = vadd.f32 %v12025, 1.0
  %v12034 = vadd.f32 %v12027, 1.0
  %v12035 = vrcp.pop %v12028
  %v12036 = vrcp.pop %v12029
  %v12037 = vrcp.pop %v12030
  %v12038 = vrcp.pop %v12031
  %v12039 = vrcp.pop %v12032
  %v12040 = vrcp.pop %v12033
  %v12041 = vrcp.pop %v12034
  %v12042 = vmax.f32 %v12035, 0.0
  %v12043 = vmax.f32 %v12036, 0.0
  %v12044 = vmax.f32 %v12037, 0.0
  %v12045 = vmax.f32 %v12038, 0.0
  %v12046 = vmax.f32 %v12039, 0.0
  %v12047 = vmax.f32 %v12040, 0.0
  %v12048 = vmax.f32 %v12041, 0.0
  %v12049 = vmin.f32 %v12042, 1.0
  %v12050 = vmin.f32 %v12043, 1.0
  %v12051 = vmin.f32 %v12044, 1.0
  %v12052 = vmin.f32 %v12045, 1.0
  %v12053 = vmin.f32 %v12046, 1.0
  %v12054 = vmin.f32 %v12047, 1.0
  %v12055 = vmin.f32 %v12048, 1.0
  %12056 = vst [vmem:[%s9] sm:$0xff] %v12049
  %12057 = vst [vmem:[%s9 + $0x8] sm:$0xff] %v12050
  %12058 = vst [vmem:[%s9 + $0x10] sm:$0xff] %v12051
  %12059 = vst [vmem:[%s9 + $0x18] sm:$0xff] %v12052
  %12060 = vst [vmem:[%s9 + $0x20] sm:$0xff] %v12053
  %12061 = vst [vmem:[%s9 + $0x28] sm:$0xff] %v12054
  %12062 = vst.msk [vmem:[%s9 + $0x30] sm:$0xff] %vm5340, %v12055
  // Predicated region
  $region38: #{decoder_forward.1} parent=0 // pred_check
    _
  $region39: #{decoder_forward.1} parent=0 // pred_check_branch
    %12064 = sbr.rel (0) target = $region41
  $region40: #{decoder_forward.1} parent=0 // pred_region
    _
  $region41: #{decoder_forward.1} parent=0 // pred_fallthru
    _
  // Predicated region
  $region42: #{decoder_forward.1} parent=0 // pred_check
    _
  $region43: #{decoder_forward.1} parent=0 // pred_check_branch
    %12066 = sbr.rel (0) target = $region45
  $region44: #{decoder_forward.1} parent=0 // pred_region
    _
  $region45: #{decoder_forward.1} parent=0 // pred_fallthru
    _

</llo_original>
